<compile_context>
chip_gen: v7x
topology: tpu7x:2x2x1
jax: 0.10.0
libtpu: 0.0.40
codegen_flags: <defaults>
</compile_context>

<pallas_src>
import jax
import jax.numpy as jnp
from jax.experimental import pallas as pl
from jax.experimental.pallas import tpu as pltpu

# --- model hyper-parameters (match the PyTorch module constants) ---
BLOCK_SIZE = 8          # T
N_EMBED = 32            # C
NUM_HEADS = 4
HEAD_SIZE = N_EMBED // NUM_HEADS
N_LAYER = 3
VOCAB_SIZE = 65         # tokenizer.vocab_size (synthetic, char-level-ish)
VOCAB_PAD = 128         # lane-dense padded logits width
QKV_PAD = 128           # 3 * N_EMBED = 96 -> padded to 128 lanes
LN_EPS = 1e-5           # PyTorch nn.LayerNorm default
NEG_MASK = -1e30        # finite mask value (avoids inf-inf NaNs)


def _layernorm(x, g, b, eps=LN_EPS):
    mu = jnp.mean(x, axis=-1, keepdims=True)
    var = jnp.mean((x - mu) ** 2, axis=-1, keepdims=True)
    return (x - mu) * jax.lax.rsqrt(var + eps) * g + b


def bigram_forward_kernel(
    x_ref,        # (B*T, C)         tok_emb + pos_emb, flattened over batch*seq
    qkvw_ref,     # (L, C, QKV_PAD)  [Wq | Wk | Wv] packed along output lanes (zero-padded)
    projw_ref,    # (L, C, C)        attention output projection (no per-head split needed)
    w1_ref,       # (L, C, 4C)
    b1_ref,       # (L, 1, 4C)
    w2_ref,       # (L, 4C, C)
    vec_ref,      # (6*L + 2, C)     per layer: [ln1_g, ln1_b, ln2_g, ln2_b, bproj, b2]; then [lnf_g, lnf_b]
    lm_ref,       # (1 + C, VOCAB_PAD)  row 0 = lm_b (padded), rows 1..C = lm_w (padded)
    o_ref,        # (B*T, VOCAB_PAD)    padded logits (lane-dense)
):
    x = x_ref[...]                                # (M, C)
    M, C = x.shape
    T = BLOCK_SIZE
    B = M // T
    H, hs = NUM_HEADS, HEAD_SIZE
    G = H * B                                     # merged head*batch axis for attention

    vecs = vec_ref[...]                           # (6L+2, C), loaded once

    # causal mask over the merged (H*B) batch axis, built once
    row = jax.lax.broadcasted_iota(jnp.int32, (G, T, T), 1)
    col = jax.lax.broadcasted_iota(jnp.int32, (G, T, T), 2)
    causal = row >= col
    # NOTE: scaled by n_embed (C), NOT head_size — intentional, matches Head.forward.
    scale = C ** (-0.5)

    def heads_to_batch(y):
        # (M, C) -> (H*B, T, hs): head-major over the merged batch axis
        parts = [y[:, h * hs:(h + 1) * hs].reshape(B, T, hs) for h in range(H)]
        return jnp.concatenate(parts, axis=0)

    def batch_to_lanes(y):
        # (H*B, T, hs) -> (M, C): concat-head lane layout (lane = h*hs + d), matches torch.cat
        parts = [y[h * B:(h + 1) * B].reshape(M, hs) for h in range(H)]
        return jnp.concatenate(parts, axis=-1)

    for l in range(N_LAYER):
        base = 6 * l
        ln1_g, ln1_b = vecs[base + 0:base + 1], vecs[base + 1:base + 2]
        ln2_g, ln2_b = vecs[base + 2:base + 3], vecs[base + 3:base + 4]
        bproj, b2 = vecs[base + 4:base + 5], vecs[base + 5:base + 6]

        # ---- multi-head causal self-attention (pre-LN); dropout = identity (eval) ----
        h1 = _layernorm(x, ln1_g, ln1_b)                                        # (M, C)
        # one lane-dense QKV matmul per layer: (M, 32) @ (32, 128)
        qkv = jnp.dot(h1, qkvw_ref[l], preferred_element_type=jnp.float32)      # (M, 128)
        q = heads_to_batch(qkv[:, 0:C])                                         # (G, T, hs)
        k = heads_to_batch(qkv[:, C:2 * C])
        v = heads_to_batch(qkv[:, 2 * C:3 * C])

        wei = jnp.einsum('gtd,gsd->gts', q, k,
                         preferred_element_type=jnp.float32) * scale            # (G, T, T)
        wei = jnp.where(causal, wei, NEG_MASK)
        wei = wei - jnp.max(wei, axis=-1, keepdims=True)
        p = jnp.exp(wei)
        p = p * pl.reciprocal(jnp.sum(p, axis=-1, keepdims=True), approx=False)
        ctx = jnp.einsum('gts,gsd->gtd', p, v,
                         preferred_element_type=jnp.float32)                    # (G, T, hs)

        # single concat-heads output projection: (M, 32) @ (32, 32)
        sa = jnp.dot(batch_to_lanes(ctx), projw_ref[l],
                     preferred_element_type=jnp.float32)                        # (M, C)
        x = x + sa + bproj

        # ---- position-wise feed-forward (pre-LN); dropout = identity (eval) ----
        h2 = _layernorm(x, ln2_g, ln2_b)
        ff = jnp.dot(h2, w1_ref[l], preferred_element_type=jnp.float32) + b1_ref[l]
        ff = jnp.maximum(ff, 0.0)
        ff = jnp.dot(ff, w2_ref[l], preferred_element_type=jnp.float32) + b2
        x = x + ff

    # ---- final layernorm + lm head (lane-dense padded vocab; bias folded into row 0) ----
    fin = 6 * N_LAYER
    x = _layernorm(x, vecs[fin:fin + 1], vecs[fin + 1:fin + 2])
    lm = lm_ref[...]                                                            # (C+1, VOCAB_PAD)
    o_ref[...] = jnp.dot(x, lm[1:1 + C, :], preferred_element_type=jnp.float32) + lm[0:1, :]


def _full_spec(shape):
    nd = len(shape)
    return pl.BlockSpec(shape, lambda i, nd=nd: (0,) * nd)


# ---------------- one-time weight repacking (hoisted out of the per-call path) --------
def pack_params(p):
    """Repack the 17 original weight tensors into a handful of contiguous slabs. Run ONCE."""
    L, C, V = N_LAYER, N_EMBED, VOCAB_SIZE

    qkvw = jnp.zeros((L, C, QKV_PAD), jnp.float32)
    qkvw = qkvw.at[:, :, 0:C].set(p["wq"])
    qkvw = qkvw.at[:, :, C:2 * C].set(p["wk"])
    qkvw = qkvw.at[:, :, 2 * C:3 * C].set(p["wv"])

    per_layer = []
    for l in range(L):
        per_layer.append(jnp.stack(
            [p["ln1_g"][l, 0], p["ln1_b"][l, 0],
             p["ln2_g"][l, 0], p["ln2_b"][l, 0],
             p["bproj"][l, 0], p["b2"][l, 0]], axis=0))                  # (6, C)
    vecs = jnp.concatenate(
        per_layer + [p["lnf_g"].reshape(1, C), p["lnf_b"].reshape(1, C)], axis=0)  # (6L+2, C)

    lm = jnp.zeros((1 + C, VOCAB_PAD), jnp.float32)
    lm = lm.at[0, :V].set(p["lm_b"].reshape(V))
    lm = lm.at[1:, :V].set(p["lm_w"])

    return {
        "qkvw": qkvw,                 # (L, C, 128)
        "projw": p["wproj"],          # (L, C, C)
        "w1": p["w1"],                # (L, C, 4C)
        "b1": p["b1"],                # (L, 1, 4C)
        "w2": p["w2"],                # (L, 4C, C)
        "vecs": vecs,                 # (6L+2, C)
        "lm": lm,                     # (C+1, 128)
    }


@jax.jit
def bigram_forward(x_emb, packed):
    """x_emb: (B, T, C) float32 = tok_emb + pos_emb.  Returns logits (B, T, VOCAB_SIZE)."""
    B, T, C = x_emb.shape
    M = B * T
    x_flat = x_emb.reshape(M, C)

    inputs = [x_flat, packed["qkvw"], packed["projw"], packed["w1"], packed["b1"],
              packed["w2"], packed["vecs"], packed["lm"]]

    out_pad = pl.pallas_call(
        bigram_forward_kernel,
        out_shape=jax.ShapeDtypeStruct((M, VOCAB_PAD), jnp.float32),
        grid=(1,),
        in_specs=[_full_spec(a.shape) for a in inputs],
        out_specs=pl.BlockSpec((M, VOCAB_PAD), lambda i: (0, 0)),
        compiler_params=pltpu.CompilerParams(dimension_semantics=("arbitrary",)),
    )(*inputs)

    # TODO(synk): on v7x with much larger B*T, add a leading "parallel" batch grid axis to
    # engage the second TensorCore; at B*T=16 the per-step grid overhead cancels the gain.
    return out_pad.reshape(B, T, VOCAB_PAD)[:, :, :VOCAB_SIZE]


# ---------------- parameter init (deterministic, synthetic) ----------------
def init_params(key):
    ks = list(jax.random.split(key, 16))
    std = 0.02
    L, C, H4, V = N_LAYER, N_EMBED, 4 * N_EMBED, VOCAB_SIZE
    p = {
        "tok_emb": jax.random.normal(ks[0], (V, C), jnp.float32) * std,
        "pos_emb": jax.random.normal(ks[1], (BLOCK_SIZE, C), jnp.float32) * std,
        "ln1_g": jnp.ones((L, 1, C), jnp.float32),
        "ln1_b": jnp.zeros((L, 1, C), jnp.float32),
        "wq": jax.random.normal(ks[2], (L, C, C), jnp.float32) * std,
        "wk": jax.random.normal(ks[3], (L, C, C), jnp.float32) * std,
        "wv": jax.random.normal(ks[4], (L, C, C), jnp.float32) * std,
        "wproj": jax.random.normal(ks[5], (L, C, C), jnp.float32) * std,
        "bproj": jax.random.normal(ks[6], (L, 1, C), jnp.float32) * std,
        "ln2_g": jnp.ones((L, 1, C), jnp.float32),
        "ln2_b": jnp.zeros((L, 1, C), jnp.float32),
        "w1": jax.random.normal(ks[7], (L, C, H4), jnp.float32) * std,
        "b1": jax.random.normal(ks[8], (L, 1, H4), jnp.float32) * std,
        "w2": jax.random.normal(ks[9], (L, H4, C), jnp.float32) * std,
        "b2": jax.random.normal(ks[10], (L, 1, C), jnp.float32) * std,
        "lnf_g": jnp.ones((1, C), jnp.float32),
        "lnf_b": jnp.zeros((1, C), jnp.float32),
        "lm_w": jax.random.normal(ks[11], (C, V), jnp.float32) * std,
        "lm_b": jax.random.normal(ks[12], (1, V), jnp.float32) * std,
    }
    return p


# ---------------- pure-JAX reference (for a correctness sanity check) -------
def reference_forward(x, p):
    row = jnp.arange(BLOCK_SIZE)[:, None]
    col = jnp.arange(BLOCK_SIZE)[None, :]
    causal = row >= col
    scale = N_EMBED ** (-0.5)

    def ln(x, g, b):
        mu = x.mean(-1, keepdims=True)
        var = ((x - mu) ** 2).mean(-1, keepdims=True)
        return (x - mu) / jnp.sqrt(var + LN_EPS) * g + b

    for l in range(N_LAYER):
        h = ln(x, p["ln1_g"][l], p["ln1_b"][l])
        q = h @ p["wq"][l]; k = h @ p["wk"][l]; v = h @ p["wv"][l]
        outs = []
        for hd in range(NUM_HEADS):
            s = hd * HEAD_SIZE
            wei = q[..., s:s + HEAD_SIZE] @ jnp.swapaxes(k[..., s:s + HEAD_SIZE], -1, -2) * scale
            wei = jnp.where(causal, wei, -jnp.inf)
            wei = jax.nn.softmax(wei, axis=-1)
            outs.append(wei @ v[..., s:s + HEAD_SIZE])
        sa = jnp.concatenate(outs, -1) @ p["wproj"][l] + p["bproj"][l]
        x = x + sa
        h2 = ln(x, p["ln2_g"][l], p["ln2_b"][l])
        ff = jax.nn.relu(h2 @ p["w1"][l] + p["b1"][l]) @ p["w2"][l] + p["b2"][l]
        x = x + ff
    x = ln(x, p["lnf_g"], p["lnf_b"])
    return x @ p["lm_w"] + p["lm_b"]


def cross_entropy_loss(logits, targets):
    # plain-JAX glue, equivalent to F.cross_entropy on (B*T, V) / (B*T,)
    B, T, V = logits.shape
    lf = logits.reshape(B * T, V)
    tf = targets.reshape(B * T)
    logp = jax.nn.log_softmax(lf, axis=-1)
    return -jnp.take_along_axis(logp, tf[:, None], axis=-1).mean()


if __name__ == "__main__":
    key = jax.random.PRNGKey(0)
    kp, ki, kt = jax.random.split(key, 3)
    params = init_params(kp)

    # one-time weight repacking (NOT in the per-call path)
    packed = pack_params(params)
    packed = jax.tree_util.tree_map(jax.block_until_ready, packed)

    B, T = 2, BLOCK_SIZE
    idx = jax.random.randint(ki, (B, T), 0, VOCAB_SIZE)          # token ids
    targets = jax.random.randint(kt, (B, T), 0, VOCAB_SIZE)

    # embedding lookups (gathers) stay in plain JAX glue
    tok_emb = params["tok_emb"][idx]                              # (B, T, C)
    pos_emb = params["pos_emb"][:T]                               # (T, C)
    x_emb = tok_emb + pos_emb                                     # (B, T, C)

    logits = bigram_forward(x_emb, packed)                        # (B, T, V)
    logits = jax.block_until_ready(logits)

    # sanity check vs pure-JAX reference
    ref = reference_forward(x_emb, params)
    assert logits.shape == (B, T, VOCAB_SIZE)
    assert jnp.allclose(logits, ref, atol=2e-3, rtol=2e-3), "mismatch vs reference"

    # optional loss path (like forward(idx, targets)) — computed in JAX glue
    loss = jax.block_until_ready(cross_entropy_loss(logits, targets))
    assert jnp.isfinite(loss)

    # TODO(synk): generate()'s torch.multinomial sampling loop is host-side control
    # flow and not part of the forward kernel; not implemented here.
    print("KERNEL_OK")
</pallas_src>

<mosaic_0001>
module attributes {stable_mosaic.version = 11 : i64} {
  func.func @bigram_forward_kernel(%arg0: i32, %arg1: memref<16x32xf32, #tpu.memory_space<vmem>>, %arg2: memref<3x32x128xf32, #tpu.memory_space<vmem>>, %arg3: memref<3x32x32xf32, #tpu.memory_space<vmem>>, %arg4: memref<3x32x128xf32, #tpu.memory_space<vmem>>, %arg5: memref<3x1x128xf32, #tpu.memory_space<vmem>>, %arg6: memref<3x128x32xf32, #tpu.memory_space<vmem>>, %arg7: memref<20x32xf32, #tpu.memory_space<vmem>>, %arg8: memref<33x128xf32, #tpu.memory_space<vmem>>, %arg9: memref<16x128xf32, #tpu.memory_space<vmem>>) attributes {dimension_semantics = [#tpu.dimension_semantics<arbitrary>], iteration_bounds = array<i64: 1>, scalar_prefetch = 0 : i64, scratch_operands = 0 : i64, tpu.core_type = #tpu.core_type<tc>, window_params = [{pipeline_mode = #tpu.pipeline_mode<synchronous>, transform_indices = @transform_0, window_bounds = array<i64: 16, 32>}, {pipeline_mode = #tpu.pipeline_mode<synchronous>, transform_indices = @transform_1, window_bounds = array<i64: 3, 32, 128>}, {pipeline_mode = #tpu.pipeline_mode<synchronous>, transform_indices = @transform_2, window_bounds = array<i64: 3, 32, 32>}, {pipeline_mode = #tpu.pipeline_mode<synchronous>, transform_indices = @transform_3, window_bounds = array<i64: 3, 32, 128>}, {pipeline_mode = #tpu.pipeline_mode<synchronous>, transform_indices = @transform_4, window_bounds = array<i64: 3, 1, 128>}, {pipeline_mode = #tpu.pipeline_mode<synchronous>, transform_indices = @transform_5, window_bounds = array<i64: 3, 128, 32>}, {pipeline_mode = #tpu.pipeline_mode<synchronous>, transform_indices = @transform_6, window_bounds = array<i64: 20, 32>}, {pipeline_mode = #tpu.pipeline_mode<synchronous>, transform_indices = @transform_7, window_bounds = array<i64: 33, 128>}, {pipeline_mode = #tpu.pipeline_mode<synchronous>, transform_indices = @transform_8, window_bounds = array<i64: 16, 128>}]} {
    %c0 = arith.constant 0 : index
    %c0_0 = arith.constant 0 : index
    %0 = vector.load %arg1[%c0, %c0_0] : memref<16x32xf32, #tpu.memory_space<vmem>>, vector<16x32xf32>
    %c0_1 = arith.constant 0 : index
    %c0_2 = arith.constant 0 : index
    %1 = vector.load %arg7[%c0_1, %c0_2] : memref<20x32xf32, #tpu.memory_space<vmem>>, vector<20x32xf32>
    %2 = tpu.iota {dimensions = array<i32: 1>} : vector<8x8x8xi32>
    %3 = tpu.iota {dimensions = array<i32: 2>} : vector<8x8x8xi32>
    %4 = arith.cmpi sge, %2, %3 : vector<8x8x8xi32>
    %5 = vector.extract_strided_slice %1 {offsets = [0, 0], sizes = [1, 32], strides = [1, 1]} : vector<20x32xf32> to vector<1x32xf32>
    %6 = vector.extract_strided_slice %1 {offsets = [1, 0], sizes = [1, 32], strides = [1, 1]} : vector<20x32xf32> to vector<1x32xf32>
    %7 = vector.extract_strided_slice %1 {offsets = [2, 0], sizes = [1, 32], strides = [1, 1]} : vector<20x32xf32> to vector<1x32xf32>
    %8 = vector.extract_strided_slice %1 {offsets = [3, 0], sizes = [1, 32], strides = [1, 1]} : vector<20x32xf32> to vector<1x32xf32>
    %9 = vector.extract_strided_slice %1 {offsets = [4, 0], sizes = [1, 32], strides = [1, 1]} : vector<20x32xf32> to vector<1x32xf32>
    %10 = vector.extract_strided_slice %1 {offsets = [5, 0], sizes = [1, 32], strides = [1, 1]} : vector<20x32xf32> to vector<1x32xf32>
    %cst = arith.constant dense<0.000000e+00> : vector<16xf32>
    %11 = vector.multi_reduction <add>, %0, %cst [1] : vector<16x32xf32> to vector<16xf32>
    %12 = vector.shape_cast %11 : vector<16xf32> to vector<16x1xf32>
    %cst_3 = arith.constant 3.200000e+01 : f32
    %13 = vector.broadcast %cst_3 : f32 to vector<16x1xf32>
    %14 = arith.divf %12, %13 : vector<16x1xf32>
    %15 = vector.broadcast %14 : vector<16x1xf32> to vector<16x32xf32>
    %16 = arith.subf %0, %15 : vector<16x32xf32>
    %17 = arith.mulf %16, %16 : vector<16x32xf32>
    %cst_4 = arith.constant dense<0.000000e+00> : vector<16xf32>
    %18 = vector.multi_reduction <add>, %17, %cst_4 [1] : vector<16x32xf32> to vector<16xf32>
    %19 = vector.shape_cast %18 : vector<16xf32> to vector<16x1xf32>
    %cst_5 = arith.constant 3.200000e+01 : f32
    %20 = vector.broadcast %cst_5 : f32 to vector<16x1xf32>
    %21 = arith.divf %19, %20 : vector<16x1xf32>
    %22 = vector.broadcast %14 : vector<16x1xf32> to vector<16x32xf32>
    %23 = arith.subf %0, %22 : vector<16x32xf32>
    %cst_6 = arith.constant 9.99999974E-6 : f32
    %24 = vector.broadcast %cst_6 : f32 to vector<16x1xf32>
    %25 = arith.addf %21, %24 : vector<16x1xf32>
    %26 = math.rsqrt %25 : vector<16x1xf32>
    %27 = vector.broadcast %26 : vector<16x1xf32> to vector<16x32xf32>
    %28 = arith.mulf %23, %27 : vector<16x32xf32>
    %29 = vector.broadcast %5 : vector<1x32xf32> to vector<16x32xf32>
    %30 = arith.mulf %28, %29 : vector<16x32xf32>
    %31 = vector.broadcast %6 : vector<1x32xf32> to vector<16x32xf32>
    %32 = arith.addf %30, %31 : vector<16x32xf32>
    %c0_7 = arith.constant 0 : index
    %c0_8 = arith.constant 0 : index
    %c0_9 = arith.constant 0 : index
    %33 = vector.load %arg2[%c0_7, %c0_8, %c0_9] : memref<3x32x128xf32, #tpu.memory_space<vmem>>, vector<1x32x128xf32>
    %34 = vector.shape_cast %33 : vector<1x32x128xf32> to vector<32x128xf32>
    %cst_10 = arith.constant dense<0.000000e+00> : vector<16x128xf32>
    %35 = tpu.matmul %32, %34, %cst_10 {dimension_numbers = #tpu.dot_dimension_numbers<[1], [0], [0], [1], [0, 0, 1, 1], [], []>} : vector<16x32xf32>, vector<32x128xf32>, vector<16x128xf32> -> vector<16x128xf32>
    %36 = vector.extract_strided_slice %35 {offsets = [0, 0], sizes = [16, 32], strides = [1, 1]} : vector<16x128xf32> to vector<16x32xf32>
    %37 = vector.extract_strided_slice %36 {offsets = [0, 0], sizes = [16, 8], strides = [1, 1]} : vector<16x32xf32> to vector<16x8xf32>
    %38 = vector.shape_cast %37 : vector<16x8xf32> to vector<2x8x8xf32>
    %39 = vector.extract_strided_slice %36 {offsets = [0, 8], sizes = [16, 8], strides = [1, 1]} : vector<16x32xf32> to vector<16x8xf32>
    %40 = vector.shape_cast %39 : vector<16x8xf32> to vector<2x8x8xf32>
    %41 = vector.extract_strided_slice %36 {offsets = [0, 16], sizes = [16, 8], strides = [1, 1]} : vector<16x32xf32> to vector<16x8xf32>
    %42 = vector.shape_cast %41 : vector<16x8xf32> to vector<2x8x8xf32>
    %43 = vector.extract_strided_slice %36 {offsets = [0, 24], sizes = [16, 8], strides = [1, 1]} : vector<16x32xf32> to vector<16x8xf32>
    %44 = vector.shape_cast %43 : vector<16x8xf32> to vector<2x8x8xf32>
    %45 = tpu.concatenate %38, %40, %42, %44 in 0 : vector<2x8x8xf32>, vector<2x8x8xf32>, vector<2x8x8xf32>, vector<2x8x8xf32> -> vector<8x8x8xf32>
    %46 = vector.extract_strided_slice %35 {offsets = [0, 32], sizes = [16, 32], strides = [1, 1]} : vector<16x128xf32> to vector<16x32xf32>
    %47 = vector.extract_strided_slice %46 {offsets = [0, 0], sizes = [16, 8], strides = [1, 1]} : vector<16x32xf32> to vector<16x8xf32>
    %48 = vector.shape_cast %47 : vector<16x8xf32> to vector<2x8x8xf32>
    %49 = vector.extract_strided_slice %46 {offsets = [0, 8], sizes = [16, 8], strides = [1, 1]} : vector<16x32xf32> to vector<16x8xf32>
    %50 = vector.shape_cast %49 : vector<16x8xf32> to vector<2x8x8xf32>
    %51 = vector.extract_strided_slice %46 {offsets = [0, 16], sizes = [16, 8], strides = [1, 1]} : vector<16x32xf32> to vector<16x8xf32>
    %52 = vector.shape_cast %51 : vector<16x8xf32> to vector<2x8x8xf32>
    %53 = vector.extract_strided_slice %46 {offsets = [0, 24], sizes = [16, 8], strides = [1, 1]} : vector<16x32xf32> to vector<16x8xf32>
    %54 = vector.shape_cast %53 : vector<16x8xf32> to vector<2x8x8xf32>
    %55 = tpu.concatenate %48, %50, %52, %54 in 0 : vector<2x8x8xf32>, vector<2x8x8xf32>, vector<2x8x8xf32>, vector<2x8x8xf32> -> vector<8x8x8xf32>
    %56 = vector.extract_strided_slice %35 {offsets = [0, 64], sizes = [16, 32], strides = [1, 1]} : vector<16x128xf32> to vector<16x32xf32>
    %57 = vector.extract_strided_slice %56 {offsets = [0, 0], sizes = [16, 8], strides = [1, 1]} : vector<16x32xf32> to vector<16x8xf32>
    %58 = vector.shape_cast %57 : vector<16x8xf32> to vector<2x8x8xf32>
    %59 = vector.extract_strided_slice %56 {offsets = [0, 8], sizes = [16, 8], strides = [1, 1]} : vector<16x32xf32> to vector<16x8xf32>
    %60 = vector.shape_cast %59 : vector<16x8xf32> to vector<2x8x8xf32>
    %61 = vector.extract_strided_slice %56 {offsets = [0, 16], sizes = [16, 8], strides = [1, 1]} : vector<16x32xf32> to vector<16x8xf32>
    %62 = vector.shape_cast %61 : vector<16x8xf32> to vector<2x8x8xf32>
    %63 = vector.extract_strided_slice %56 {offsets = [0, 24], sizes = [16, 8], strides = [1, 1]} : vector<16x32xf32> to vector<16x8xf32>
    %64 = vector.shape_cast %63 : vector<16x8xf32> to vector<2x8x8xf32>
    %65 = tpu.concatenate %58, %60, %62, %64 in 0 : vector<2x8x8xf32>, vector<2x8x8xf32>, vector<2x8x8xf32>, vector<2x8x8xf32> -> vector<8x8x8xf32>
    "tpu.trace_start"() <{level = 10 : i32, message = "gtd,gsd->gts"}> : () -> ()
    %cst_11 = arith.constant dense<0.000000e+00> : vector<8x8x8xf32>
    %66 = tpu.matmul %45, %55, %cst_11 {dimension_numbers = #tpu.dot_dimension_numbers<[2], [2], [1], [1], [0, 0, 0, 1, 1, 1], [0], [0]>} : vector<8x8x8xf32>, vector<8x8x8xf32>, vector<8x8x8xf32> -> vector<8x8x8xf32>
    "tpu.trace_stop"() : () -> ()
    %cst_12 = arith.constant 0.176776692 : f32
    %67 = vector.broadcast %cst_12 : f32 to vector<8x8x8xf32>
    %68 = arith.mulf %66, %67 : vector<8x8x8xf32>
    %cst_13 = arith.constant -1.000000e+30 : f32
    %69 = vector.broadcast %cst_13 : f32 to vector<8x8x8xf32>
    %70 = arith.select %4, %68, %69 : vector<8x8x8xi1>, vector<8x8x8xf32>
    %cst_14 = arith.constant dense<0xFF800000> : vector<8x8xf32>
    %71 = vector.multi_reduction <maximumf>, %70, %cst_14 [2] : vector<8x8x8xf32> to vector<8x8xf32>
    %72 = vector.shape_cast %71 : vector<8x8xf32> to vector<8x8x1xf32>
    %73 = vector.broadcast %72 : vector<8x8x1xf32> to vector<8x8x8xf32>
    %74 = arith.subf %70, %73 : vector<8x8x8xf32>
    %75 = math.exp %74 : vector<8x8x8xf32>
    %cst_15 = arith.constant dense<0.000000e+00> : vector<8x8xf32>
    %76 = vector.multi_reduction <add>, %75, %cst_15 [2] : vector<8x8x8xf32> to vector<8x8xf32>
    %77 = vector.shape_cast %76 : vector<8x8xf32> to vector<8x8x1xf32>
    %78 = tpu.reciprocal %77 : vector<8x8x1xf32> -> vector<8x8x1xf32>
    %79 = vector.broadcast %78 : vector<8x8x1xf32> to vector<8x8x8xf32>
    %80 = arith.mulf %75, %79 : vector<8x8x8xf32>
    "tpu.trace_start"() <{level = 10 : i32, message = "gts,gsd->gtd"}> : () -> ()
    %cst_16 = arith.constant dense<0.000000e+00> : vector<8x8x8xf32>
    %81 = tpu.matmul %80, %65, %cst_16 {dimension_numbers = #tpu.dot_dimension_numbers<[2], [1], [1], [2], [0, 0, 0, 1, 1, 2], [0], [0]>} : vector<8x8x8xf32>, vector<8x8x8xf32>, vector<8x8x8xf32> -> vector<8x8x8xf32>
    "tpu.trace_stop"() : () -> ()
    %82 = vector.extract_strided_slice %81 {offsets = [0, 0, 0], sizes = [2, 8, 8], strides = [1, 1, 1]} : vector<8x8x8xf32> to vector<2x8x8xf32>
    %83 = vector.shape_cast %82 : vector<2x8x8xf32> to vector<16x8xf32>
    %84 = vector.extract_strided_slice %81 {offsets = [2, 0, 0], sizes = [2, 8, 8], strides = [1, 1, 1]} : vector<8x8x8xf32> to vector<2x8x8xf32>
    %85 = vector.shape_cast %84 : vector<2x8x8xf32> to vector<16x8xf32>
    %86 = vector.extract_strided_slice %81 {offsets = [4, 0, 0], sizes = [2, 8, 8], strides = [1, 1, 1]} : vector<8x8x8xf32> to vector<2x8x8xf32>
    %87 = vector.shape_cast %86 : vector<2x8x8xf32> to vector<16x8xf32>
    %88 = vector.extract_strided_slice %81 {offsets = [6, 0, 0], sizes = [2, 8, 8], strides = [1, 1, 1]} : vector<8x8x8xf32> to vector<2x8x8xf32>
    %89 = vector.shape_cast %88 : vector<2x8x8xf32> to vector<16x8xf32>
    %90 = tpu.concatenate %83, %85, %87, %89 in 1 : vector<16x8xf32>, vector<16x8xf32>, vector<16x8xf32>, vector<16x8xf32> -> vector<16x32xf32>
    %c0_17 = arith.constant 0 : index
    %c0_18 = arith.constant 0 : index
    %c0_19 = arith.constant 0 : index
    %91 = vector.load %arg3[%c0_17, %c0_18, %c0_19] : memref<3x32x32xf32, #tpu.memory_space<vmem>>, vector<1x32x32xf32>
    %92 = vector.shape_cast %91 : vector<1x32x32xf32> to vector<32x32xf32>
    %cst_20 = arith.constant dense<0.000000e+00> : vector<16x32xf32>
    %93 = tpu.matmul %90, %92, %cst_20 {dimension_numbers = #tpu.dot_dimension_numbers<[1], [0], [0], [1], [0, 0, 1, 1], [], []>} : vector<16x32xf32>, vector<32x32xf32>, vector<16x32xf32> -> vector<16x32xf32>
    %94 = arith.addf %0, %93 : vector<16x32xf32>
    %95 = vector.broadcast %9 : vector<1x32xf32> to vector<16x32xf32>
    %96 = arith.addf %94, %95 : vector<16x32xf32>
    %cst_21 = arith.constant dense<0.000000e+00> : vector<16xf32>
    %97 = vector.multi_reduction <add>, %96, %cst_21 [1] : vector<16x32xf32> to vector<16xf32>
    %98 = vector.shape_cast %97 : vector<16xf32> to vector<16x1xf32>
    %cst_22 = arith.constant 3.200000e+01 : f32
    %99 = vector.broadcast %cst_22 : f32 to vector<16x1xf32>
    %100 = arith.divf %98, %99 : vector<16x1xf32>
    %101 = vector.broadcast %100 : vector<16x1xf32> to vector<16x32xf32>
    %102 = arith.subf %96, %101 : vector<16x32xf32>
    %103 = arith.mulf %102, %102 : vector<16x32xf32>
    %cst_23 = arith.constant dense<0.000000e+00> : vector<16xf32>
    %104 = vector.multi_reduction <add>, %103, %cst_23 [1] : vector<16x32xf32> to vector<16xf32>
    %105 = vector.shape_cast %104 : vector<16xf32> to vector<16x1xf32>
    %cst_24 = arith.constant 3.200000e+01 : f32
    %106 = vector.broadcast %cst_24 : f32 to vector<16x1xf32>
    %107 = arith.divf %105, %106 : vector<16x1xf32>
    %108 = vector.broadcast %100 : vector<16x1xf32> to vector<16x32xf32>
    %109 = arith.subf %96, %108 : vector<16x32xf32>
    %cst_25 = arith.constant 9.99999974E-6 : f32
    %110 = vector.broadcast %cst_25 : f32 to vector<16x1xf32>
    %111 = arith.addf %107, %110 : vector<16x1xf32>
    %112 = math.rsqrt %111 : vector<16x1xf32>
    %113 = vector.broadcast %112 : vector<16x1xf32> to vector<16x32xf32>
    %114 = arith.mulf %109, %113 : vector<16x32xf32>
    %115 = vector.broadcast %7 : vector<1x32xf32> to vector<16x32xf32>
    %116 = arith.mulf %114, %115 : vector<16x32xf32>
    %117 = vector.broadcast %8 : vector<1x32xf32> to vector<16x32xf32>
    %118 = arith.addf %116, %117 : vector<16x32xf32>
    %c0_26 = arith.constant 0 : index
    %c0_27 = arith.constant 0 : index
    %c0_28 = arith.constant 0 : index
    %119 = vector.load %arg4[%c0_26, %c0_27, %c0_28] : memref<3x32x128xf32, #tpu.memory_space<vmem>>, vector<1x32x128xf32>
    %120 = vector.shape_cast %119 : vector<1x32x128xf32> to vector<32x128xf32>
    %cst_29 = arith.constant dense<0.000000e+00> : vector<16x128xf32>
    %121 = tpu.matmul %118, %120, %cst_29 {dimension_numbers = #tpu.dot_dimension_numbers<[1], [0], [0], [1], [0, 0, 1, 1], [], []>} : vector<16x32xf32>, vector<32x128xf32>, vector<16x128xf32> -> vector<16x128xf32>
    %c0_30 = arith.constant 0 : index
    %c0_31 = arith.constant 0 : index
    %c0_32 = arith.constant 0 : index
    %122 = vector.load %arg5[%c0_30, %c0_31, %c0_32] : memref<3x1x128xf32, #tpu.memory_space<vmem>>, vector<1x1x128xf32>
    %123 = vector.shape_cast %122 : vector<1x1x128xf32> to vector<1x128xf32>
    %124 = vector.broadcast %123 : vector<1x128xf32> to vector<16x128xf32>
    %125 = arith.addf %121, %124 : vector<16x128xf32>
    %cst_33 = arith.constant 0.000000e+00 : f32
    %126 = vector.broadcast %cst_33 : f32 to vector<16x128xf32>
    %127 = arith.maximumf %125, %126 : vector<16x128xf32>
    %c0_34 = arith.constant 0 : index
    %c0_35 = arith.constant 0 : index
    %c0_36 = arith.constant 0 : index
    %128 = vector.load %arg6[%c0_34, %c0_35, %c0_36] : memref<3x128x32xf32, #tpu.memory_space<vmem>>, vector<1x128x32xf32>
    %129 = vector.shape_cast %128 : vector<1x128x32xf32> to vector<128x32xf32>
    %cst_37 = arith.constant dense<0.000000e+00> : vector<16x32xf32>
    %130 = tpu.matmul %127, %129, %cst_37 {dimension_numbers = #tpu.dot_dimension_numbers<[1], [0], [0], [1], [0, 0, 1, 1], [], []>} : vector<16x128xf32>, vector<128x32xf32>, vector<16x32xf32> -> vector<16x32xf32>
    %131 = vector.broadcast %10 : vector<1x32xf32> to vector<16x32xf32>
    %132 = arith.addf %130, %131 : vector<16x32xf32>
    %133 = arith.addf %96, %132 : vector<16x32xf32>
    %134 = vector.extract_strided_slice %1 {offsets = [6, 0], sizes = [1, 32], strides = [1, 1]} : vector<20x32xf32> to vector<1x32xf32>
    %135 = vector.extract_strided_slice %1 {offsets = [7, 0], sizes = [1, 32], strides = [1, 1]} : vector<20x32xf32> to vector<1x32xf32>
    %136 = vector.extract_strided_slice %1 {offsets = [8, 0], sizes = [1, 32], strides = [1, 1]} : vector<20x32xf32> to vector<1x32xf32>
    %137 = vector.extract_strided_slice %1 {offsets = [9, 0], sizes = [1, 32], strides = [1, 1]} : vector<20x32xf32> to vector<1x32xf32>
    %138 = vector.extract_strided_slice %1 {offsets = [10, 0], sizes = [1, 32], strides = [1, 1]} : vector<20x32xf32> to vector<1x32xf32>
    %139 = vector.extract_strided_slice %1 {offsets = [11, 0], sizes = [1, 32], strides = [1, 1]} : vector<20x32xf32> to vector<1x32xf32>
    %cst_38 = arith.constant dense<0.000000e+00> : vector<16xf32>
    %140 = vector.multi_reduction <add>, %133, %cst_38 [1] : vector<16x32xf32> to vector<16xf32>
    %141 = vector.shape_cast %140 : vector<16xf32> to vector<16x1xf32>
    %cst_39 = arith.constant 3.200000e+01 : f32
    %142 = vector.broadcast %cst_39 : f32 to vector<16x1xf32>
    %143 = arith.divf %141, %142 : vector<16x1xf32>
    %144 = vector.broadcast %143 : vector<16x1xf32> to vector<16x32xf32>
    %145 = arith.subf %133, %144 : vector<16x32xf32>
    %146 = arith.mulf %145, %145 : vector<16x32xf32>
    %cst_40 = arith.constant dense<0.000000e+00> : vector<16xf32>
    %147 = vector.multi_reduction <add>, %146, %cst_40 [1] : vector<16x32xf32> to vector<16xf32>
    %148 = vector.shape_cast %147 : vector<16xf32> to vector<16x1xf32>
    %cst_41 = arith.constant 3.200000e+01 : f32
    %149 = vector.broadcast %cst_41 : f32 to vector<16x1xf32>
    %150 = arith.divf %148, %149 : vector<16x1xf32>
    %151 = vector.broadcast %143 : vector<16x1xf32> to vector<16x32xf32>
    %152 = arith.subf %133, %151 : vector<16x32xf32>
    %cst_42 = arith.constant 9.99999974E-6 : f32
    %153 = vector.broadcast %cst_42 : f32 to vector<16x1xf32>
    %154 = arith.addf %150, %153 : vector<16x1xf32>
    %155 = math.rsqrt %154 : vector<16x1xf32>
    %156 = vector.broadcast %155 : vector<16x1xf32> to vector<16x32xf32>
    %157 = arith.mulf %152, %156 : vector<16x32xf32>
    %158 = vector.broadcast %134 : vector<1x32xf32> to vector<16x32xf32>
    %159 = arith.mulf %157, %158 : vector<16x32xf32>
    %160 = vector.broadcast %135 : vector<1x32xf32> to vector<16x32xf32>
    %161 = arith.addf %159, %160 : vector<16x32xf32>
    %c1 = arith.constant 1 : index
    %c0_43 = arith.constant 0 : index
    %c0_44 = arith.constant 0 : index
    %162 = vector.load %arg2[%c1, %c0_43, %c0_44] : memref<3x32x128xf32, #tpu.memory_space<vmem>>, vector<1x32x128xf32>
    %163 = vector.shape_cast %162 : vector<1x32x128xf32> to vector<32x128xf32>
    %cst_45 = arith.constant dense<0.000000e+00> : vector<16x128xf32>
    %164 = tpu.matmul %161, %163, %cst_45 {dimension_numbers = #tpu.dot_dimension_numbers<[1], [0], [0], [1], [0, 0, 1, 1], [], []>} : vector<16x32xf32>, vector<32x128xf32>, vector<16x128xf32> -> vector<16x128xf32>
    %165 = vector.extract_strided_slice %164 {offsets = [0, 0], sizes = [16, 32], strides = [1, 1]} : vector<16x128xf32> to vector<16x32xf32>
    %166 = vector.extract_strided_slice %165 {offsets = [0, 0], sizes = [16, 8], strides = [1, 1]} : vector<16x32xf32> to vector<16x8xf32>
    %167 = vector.shape_cast %166 : vector<16x8xf32> to vector<2x8x8xf32>
    %168 = vector.extract_strided_slice %165 {offsets = [0, 8], sizes = [16, 8], strides = [1, 1]} : vector<16x32xf32> to vector<16x8xf32>
    %169 = vector.shape_cast %168 : vector<16x8xf32> to vector<2x8x8xf32>
    %170 = vector.extract_strided_slice %165 {offsets = [0, 16], sizes = [16, 8], strides = [1, 1]} : vector<16x32xf32> to vector<16x8xf32>
    %171 = vector.shape_cast %170 : vector<16x8xf32> to vector<2x8x8xf32>
    %172 = vector.extract_strided_slice %165 {offsets = [0, 24], sizes = [16, 8], strides = [1, 1]} : vector<16x32xf32> to vector<16x8xf32>
    %173 = vector.shape_cast %172 : vector<16x8xf32> to vector<2x8x8xf32>
    %174 = tpu.concatenate %167, %169, %171, %173 in 0 : vector<2x8x8xf32>, vector<2x8x8xf32>, vector<2x8x8xf32>, vector<2x8x8xf32> -> vector<8x8x8xf32>
    %175 = vector.extract_strided_slice %164 {offsets = [0, 32], sizes = [16, 32], strides = [1, 1]} : vector<16x128xf32> to vector<16x32xf32>
    %176 = vector.extract_strided_slice %175 {offsets = [0, 0], sizes = [16, 8], strides = [1, 1]} : vector<16x32xf32> to vector<16x8xf32>
    %177 = vector.shape_cast %176 : vector<16x8xf32> to vector<2x8x8xf32>
    %178 = vector.extract_strided_slice %175 {offsets = [0, 8], sizes = [16, 8], strides = [1, 1]} : vector<16x32xf32> to vector<16x8xf32>
    %179 = vector.shape_cast %178 : vector<16x8xf32> to vector<2x8x8xf32>
    %180 = vector.extract_strided_slice %175 {offsets = [0, 16], sizes = [16, 8], strides = [1, 1]} : vector<16x32xf32> to vector<16x8xf32>
    %181 = vector.shape_cast %180 : vector<16x8xf32> to vector<2x8x8xf32>
    %182 = vector.extract_strided_slice %175 {offsets = [0, 24], sizes = [16, 8], strides = [1, 1]} : vector<16x32xf32> to vector<16x8xf32>
    %183 = vector.shape_cast %182 : vector<16x8xf32> to vector<2x8x8xf32>
    %184 = tpu.concatenate %177, %179, %181, %183 in 0 : vector<2x8x8xf32>, vector<2x8x8xf32>, vector<2x8x8xf32>, vector<2x8x8xf32> -> vector<8x8x8xf32>
    %185 = vector.extract_strided_slice %164 {offsets = [0, 64], sizes = [16, 32], strides = [1, 1]} : vector<16x128xf32> to vector<16x32xf32>
    %186 = vector.extract_strided_slice %185 {offsets = [0, 0], sizes = [16, 8], strides = [1, 1]} : vector<16x32xf32> to vector<16x8xf32>
    %187 = vector.shape_cast %186 : vector<16x8xf32> to vector<2x8x8xf32>
    %188 = vector.extract_strided_slice %185 {offsets = [0, 8], sizes = [16, 8], strides = [1, 1]} : vector<16x32xf32> to vector<16x8xf32>
    %189 = vector.shape_cast %188 : vector<16x8xf32> to vector<2x8x8xf32>
    %190 = vector.extract_strided_slice %185 {offsets = [0, 16], sizes = [16, 8], strides = [1, 1]} : vector<16x32xf32> to vector<16x8xf32>
    %191 = vector.shape_cast %190 : vector<16x8xf32> to vector<2x8x8xf32>
    %192 = vector.extract_strided_slice %185 {offsets = [0, 24], sizes = [16, 8], strides = [1, 1]} : vector<16x32xf32> to vector<16x8xf32>
    %193 = vector.shape_cast %192 : vector<16x8xf32> to vector<2x8x8xf32>
    %194 = tpu.concatenate %187, %189, %191, %193 in 0 : vector<2x8x8xf32>, vector<2x8x8xf32>, vector<2x8x8xf32>, vector<2x8x8xf32> -> vector<8x8x8xf32>
    "tpu.trace_start"() <{level = 10 : i32, message = "gtd,gsd->gts"}> : () -> ()
    %cst_46 = arith.constant dense<0.000000e+00> : vector<8x8x8xf32>
    %195 = tpu.matmul %174, %184, %cst_46 {dimension_numbers = #tpu.dot_dimension_numbers<[2], [2], [1], [1], [0, 0, 0, 1, 1, 1], [0], [0]>} : vector<8x8x8xf32>, vector<8x8x8xf32>, vector<8x8x8xf32> -> vector<8x8x8xf32>
    "tpu.trace_stop"() : () -> ()
    %cst_47 = arith.constant 0.176776692 : f32
    %196 = vector.broadcast %cst_47 : f32 to vector<8x8x8xf32>
    %197 = arith.mulf %195, %196 : vector<8x8x8xf32>
    %cst_48 = arith.constant -1.000000e+30 : f32
    %198 = vector.broadcast %cst_48 : f32 to vector<8x8x8xf32>
    %199 = arith.select %4, %197, %198 : vector<8x8x8xi1>, vector<8x8x8xf32>
    %cst_49 = arith.constant dense<0xFF800000> : vector<8x8xf32>
    %200 = vector.multi_reduction <maximumf>, %199, %cst_49 [2] : vector<8x8x8xf32> to vector<8x8xf32>
    %201 = vector.shape_cast %200 : vector<8x8xf32> to vector<8x8x1xf32>
    %202 = vector.broadcast %201 : vector<8x8x1xf32> to vector<8x8x8xf32>
    %203 = arith.subf %199, %202 : vector<8x8x8xf32>
    %204 = math.exp %203 : vector<8x8x8xf32>
    %cst_50 = arith.constant dense<0.000000e+00> : vector<8x8xf32>
    %205 = vector.multi_reduction <add>, %204, %cst_50 [2] : vector<8x8x8xf32> to vector<8x8xf32>
    %206 = vector.shape_cast %205 : vector<8x8xf32> to vector<8x8x1xf32>
    %207 = tpu.reciprocal %206 : vector<8x8x1xf32> -> vector<8x8x1xf32>
    %208 = vector.broadcast %207 : vector<8x8x1xf32> to vector<8x8x8xf32>
    %209 = arith.mulf %204, %208 : vector<8x8x8xf32>
    "tpu.trace_start"() <{level = 10 : i32, message = "gts,gsd->gtd"}> : () -> ()
    %cst_51 = arith.constant dense<0.000000e+00> : vector<8x8x8xf32>
    %210 = tpu.matmul %209, %194, %cst_51 {dimension_numbers = #tpu.dot_dimension_numbers<[2], [1], [1], [2], [0, 0, 0, 1, 1, 2], [0], [0]>} : vector<8x8x8xf32>, vector<8x8x8xf32>, vector<8x8x8xf32> -> vector<8x8x8xf32>
    "tpu.trace_stop"() : () -> ()
    %211 = vector.extract_strided_slice %210 {offsets = [0, 0, 0], sizes = [2, 8, 8], strides = [1, 1, 1]} : vector<8x8x8xf32> to vector<2x8x8xf32>
    %212 = vector.shape_cast %211 : vector<2x8x8xf32> to vector<16x8xf32>
    %213 = vector.extract_strided_slice %210 {offsets = [2, 0, 0], sizes = [2, 8, 8], strides = [1, 1, 1]} : vector<8x8x8xf32> to vector<2x8x8xf32>
    %214 = vector.shape_cast %213 : vector<2x8x8xf32> to vector<16x8xf32>
    %215 = vector.extract_strided_slice %210 {offsets = [4, 0, 0], sizes = [2, 8, 8], strides = [1, 1, 1]} : vector<8x8x8xf32> to vector<2x8x8xf32>
    %216 = vector.shape_cast %215 : vector<2x8x8xf32> to vector<16x8xf32>
    %217 = vector.extract_strided_slice %210 {offsets = [6, 0, 0], sizes = [2, 8, 8], strides = [1, 1, 1]} : vector<8x8x8xf32> to vector<2x8x8xf32>
    %218 = vector.shape_cast %217 : vector<2x8x8xf32> to vector<16x8xf32>
    %219 = tpu.concatenate %212, %214, %216, %218 in 1 : vector<16x8xf32>, vector<16x8xf32>, vector<16x8xf32>, vector<16x8xf32> -> vector<16x32xf32>
    %c1_52 = arith.constant 1 : index
    %c0_53 = arith.constant 0 : index
    %c0_54 = arith.constant 0 : index
    %220 = vector.load %arg3[%c1_52, %c0_53, %c0_54] : memref<3x32x32xf32, #tpu.memory_space<vmem>>, vector<1x32x32xf32>
    %221 = vector.shape_cast %220 : vector<1x32x32xf32> to vector<32x32xf32>
    %cst_55 = arith.constant dense<0.000000e+00> : vector<16x32xf32>
    %222 = tpu.matmul %219, %221, %cst_55 {dimension_numbers = #tpu.dot_dimension_numbers<[1], [0], [0], [1], [0, 0, 1, 1], [], []>} : vector<16x32xf32>, vector<32x32xf32>, vector<16x32xf32> -> vector<16x32xf32>
    %223 = arith.addf %133, %222 : vector<16x32xf32>
    %224 = vector.broadcast %138 : vector<1x32xf32> to vector<16x32xf32>
    %225 = arith.addf %223, %224 : vector<16x32xf32>
    %cst_56 = arith.constant dense<0.000000e+00> : vector<16xf32>
    %226 = vector.multi_reduction <add>, %225, %cst_56 [1] : vector<16x32xf32> to vector<16xf32>
    %227 = vector.shape_cast %226 : vector<16xf32> to vector<16x1xf32>
    %cst_57 = arith.constant 3.200000e+01 : f32
    %228 = vector.broadcast %cst_57 : f32 to vector<16x1xf32>
    %229 = arith.divf %227, %228 : vector<16x1xf32>
    %230 = vector.broadcast %229 : vector<16x1xf32> to vector<16x32xf32>
    %231 = arith.subf %225, %230 : vector<16x32xf32>
    %232 = arith.mulf %231, %231 : vector<16x32xf32>
    %cst_58 = arith.constant dense<0.000000e+00> : vector<16xf32>
    %233 = vector.multi_reduction <add>, %232, %cst_58 [1] : vector<16x32xf32> to vector<16xf32>
    %234 = vector.shape_cast %233 : vector<16xf32> to vector<16x1xf32>
    %cst_59 = arith.constant 3.200000e+01 : f32
    %235 = vector.broadcast %cst_59 : f32 to vector<16x1xf32>
    %236 = arith.divf %234, %235 : vector<16x1xf32>
    %237 = vector.broadcast %229 : vector<16x1xf32> to vector<16x32xf32>
    %238 = arith.subf %225, %237 : vector<16x32xf32>
    %cst_60 = arith.constant 9.99999974E-6 : f32
    %239 = vector.broadcast %cst_60 : f32 to vector<16x1xf32>
    %240 = arith.addf %236, %239 : vector<16x1xf32>
    %241 = math.rsqrt %240 : vector<16x1xf32>
    %242 = vector.broadcast %241 : vector<16x1xf32> to vector<16x32xf32>
    %243 = arith.mulf %238, %242 : vector<16x32xf32>
    %244 = vector.broadcast %136 : vector<1x32xf32> to vector<16x32xf32>
    %245 = arith.mulf %243, %244 : vector<16x32xf32>
    %246 = vector.broadcast %137 : vector<1x32xf32> to vector<16x32xf32>
    %247 = arith.addf %245, %246 : vector<16x32xf32>
    %c1_61 = arith.constant 1 : index
    %c0_62 = arith.constant 0 : index
    %c0_63 = arith.constant 0 : index
    %248 = vector.load %arg4[%c1_61, %c0_62, %c0_63] : memref<3x32x128xf32, #tpu.memory_space<vmem>>, vector<1x32x128xf32>
    %249 = vector.shape_cast %248 : vector<1x32x128xf32> to vector<32x128xf32>
    %cst_64 = arith.constant dense<0.000000e+00> : vector<16x128xf32>
    %250 = tpu.matmul %247, %249, %cst_64 {dimension_numbers = #tpu.dot_dimension_numbers<[1], [0], [0], [1], [0, 0, 1, 1], [], []>} : vector<16x32xf32>, vector<32x128xf32>, vector<16x128xf32> -> vector<16x128xf32>
    %c1_65 = arith.constant 1 : index
    %c0_66 = arith.constant 0 : index
    %c0_67 = arith.constant 0 : index
    %251 = vector.load %arg5[%c1_65, %c0_66, %c0_67] : memref<3x1x128xf32, #tpu.memory_space<vmem>>, vector<1x1x128xf32>
    %252 = vector.shape_cast %251 : vector<1x1x128xf32> to vector<1x128xf32>
    %253 = vector.broadcast %252 : vector<1x128xf32> to vector<16x128xf32>
    %254 = arith.addf %250, %253 : vector<16x128xf32>
    %cst_68 = arith.constant 0.000000e+00 : f32
    %255 = vector.broadcast %cst_68 : f32 to vector<16x128xf32>
    %256 = arith.maximumf %254, %255 : vector<16x128xf32>
    %c1_69 = arith.constant 1 : index
    %c0_70 = arith.constant 0 : index
    %c0_71 = arith.constant 0 : index
    %257 = vector.load %arg6[%c1_69, %c0_70, %c0_71] : memref<3x128x32xf32, #tpu.memory_space<vmem>>, vector<1x128x32xf32>
    %258 = vector.shape_cast %257 : vector<1x128x32xf32> to vector<128x32xf32>
    %cst_72 = arith.constant dense<0.000000e+00> : vector<16x32xf32>
    %259 = tpu.matmul %256, %258, %cst_72 {dimension_numbers = #tpu.dot_dimension_numbers<[1], [0], [0], [1], [0, 0, 1, 1], [], []>} : vector<16x128xf32>, vector<128x32xf32>, vector<16x32xf32> -> vector<16x32xf32>
    %260 = vector.broadcast %139 : vector<1x32xf32> to vector<16x32xf32>
    %261 = arith.addf %259, %260 : vector<16x32xf32>
    %262 = arith.addf %225, %261 : vector<16x32xf32>
    %263 = vector.extract_strided_slice %1 {offsets = [12, 0], sizes = [1, 32], strides = [1, 1]} : vector<20x32xf32> to vector<1x32xf32>
    %264 = vector.extract_strided_slice %1 {offsets = [13, 0], sizes = [1, 32], strides = [1, 1]} : vector<20x32xf32> to vector<1x32xf32>
    %265 = vector.extract_strided_slice %1 {offsets = [14, 0], sizes = [1, 32], strides = [1, 1]} : vector<20x32xf32> to vector<1x32xf32>
    %266 = vector.extract_strided_slice %1 {offsets = [15, 0], sizes = [1, 32], strides = [1, 1]} : vector<20x32xf32> to vector<1x32xf32>
    %267 = vector.extract_strided_slice %1 {offsets = [16, 0], sizes = [1, 32], strides = [1, 1]} : vector<20x32xf32> to vector<1x32xf32>
    %268 = vector.extract_strided_slice %1 {offsets = [17, 0], sizes = [1, 32], strides = [1, 1]} : vector<20x32xf32> to vector<1x32xf32>
    %cst_73 = arith.constant dense<0.000000e+00> : vector<16xf32>
    %269 = vector.multi_reduction <add>, %262, %cst_73 [1] : vector<16x32xf32> to vector<16xf32>
    %270 = vector.shape_cast %269 : vector<16xf32> to vector<16x1xf32>
    %cst_74 = arith.constant 3.200000e+01 : f32
    %271 = vector.broadcast %cst_74 : f32 to vector<16x1xf32>
    %272 = arith.divf %270, %271 : vector<16x1xf32>
    %273 = vector.broadcast %272 : vector<16x1xf32> to vector<16x32xf32>
    %274 = arith.subf %262, %273 : vector<16x32xf32>
    %275 = arith.mulf %274, %274 : vector<16x32xf32>
    %cst_75 = arith.constant dense<0.000000e+00> : vector<16xf32>
    %276 = vector.multi_reduction <add>, %275, %cst_75 [1] : vector<16x32xf32> to vector<16xf32>
    %277 = vector.shape_cast %276 : vector<16xf32> to vector<16x1xf32>
    %cst_76 = arith.constant 3.200000e+01 : f32
    %278 = vector.broadcast %cst_76 : f32 to vector<16x1xf32>
    %279 = arith.divf %277, %278 : vector<16x1xf32>
    %280 = vector.broadcast %272 : vector<16x1xf32> to vector<16x32xf32>
    %281 = arith.subf %262, %280 : vector<16x32xf32>
    %cst_77 = arith.constant 9.99999974E-6 : f32
    %282 = vector.broadcast %cst_77 : f32 to vector<16x1xf32>
    %283 = arith.addf %279, %282 : vector<16x1xf32>
    %284 = math.rsqrt %283 : vector<16x1xf32>
    %285 = vector.broadcast %284 : vector<16x1xf32> to vector<16x32xf32>
    %286 = arith.mulf %281, %285 : vector<16x32xf32>
    %287 = vector.broadcast %263 : vector<1x32xf32> to vector<16x32xf32>
    %288 = arith.mulf %286, %287 : vector<16x32xf32>
    %289 = vector.broadcast %264 : vector<1x32xf32> to vector<16x32xf32>
    %290 = arith.addf %288, %289 : vector<16x32xf32>
    %c2 = arith.constant 2 : index
    %c0_78 = arith.constant 0 : index
    %c0_79 = arith.constant 0 : index
    %291 = vector.load %arg2[%c2, %c0_78, %c0_79] : memref<3x32x128xf32, #tpu.memory_space<vmem>>, vector<1x32x128xf32>
    %292 = vector.shape_cast %291 : vector<1x32x128xf32> to vector<32x128xf32>
    %cst_80 = arith.constant dense<0.000000e+00> : vector<16x128xf32>
    %293 = tpu.matmul %290, %292, %cst_80 {dimension_numbers = #tpu.dot_dimension_numbers<[1], [0], [0], [1], [0, 0, 1, 1], [], []>} : vector<16x32xf32>, vector<32x128xf32>, vector<16x128xf32> -> vector<16x128xf32>
    %294 = vector.extract_strided_slice %293 {offsets = [0, 0], sizes = [16, 32], strides = [1, 1]} : vector<16x128xf32> to vector<16x32xf32>
    %295 = vector.extract_strided_slice %294 {offsets = [0, 0], sizes = [16, 8], strides = [1, 1]} : vector<16x32xf32> to vector<16x8xf32>
    %296 = vector.shape_cast %295 : vector<16x8xf32> to vector<2x8x8xf32>
    %297 = vector.extract_strided_slice %294 {offsets = [0, 8], sizes = [16, 8], strides = [1, 1]} : vector<16x32xf32> to vector<16x8xf32>
    %298 = vector.shape_cast %297 : vector<16x8xf32> to vector<2x8x8xf32>
    %299 = vector.extract_strided_slice %294 {offsets = [0, 16], sizes = [16, 8], strides = [1, 1]} : vector<16x32xf32> to vector<16x8xf32>
    %300 = vector.shape_cast %299 : vector<16x8xf32> to vector<2x8x8xf32>
    %301 = vector.extract_strided_slice %294 {offsets = [0, 24], sizes = [16, 8], strides = [1, 1]} : vector<16x32xf32> to vector<16x8xf32>
    %302 = vector.shape_cast %301 : vector<16x8xf32> to vector<2x8x8xf32>
    %303 = tpu.concatenate %296, %298, %300, %302 in 0 : vector<2x8x8xf32>, vector<2x8x8xf32>, vector<2x8x8xf32>, vector<2x8x8xf32> -> vector<8x8x8xf32>
    %304 = vector.extract_strided_slice %293 {offsets = [0, 32], sizes = [16, 32], strides = [1, 1]} : vector<16x128xf32> to vector<16x32xf32>
    %305 = vector.extract_strided_slice %304 {offsets = [0, 0], sizes = [16, 8], strides = [1, 1]} : vector<16x32xf32> to vector<16x8xf32>
    %306 = vector.shape_cast %305 : vector<16x8xf32> to vector<2x8x8xf32>
    %307 = vector.extract_strided_slice %304 {offsets = [0, 8], sizes = [16, 8], strides = [1, 1]} : vector<16x32xf32> to vector<16x8xf32>
    %308 = vector.shape_cast %307 : vector<16x8xf32> to vector<2x8x8xf32>
    %309 = vector.extract_strided_slice %304 {offsets = [0, 16], sizes = [16, 8], strides = [1, 1]} : vector<16x32xf32> to vector<16x8xf32>
    %310 = vector.shape_cast %309 : vector<16x8xf32> to vector<2x8x8xf32>
    %311 = vector.extract_strided_slice %304 {offsets = [0, 24], sizes = [16, 8], strides = [1, 1]} : vector<16x32xf32> to vector<16x8xf32>
    %312 = vector.shape_cast %311 : vector<16x8xf32> to vector<2x8x8xf32>
    %313 = tpu.concatenate %306, %308, %310, %312 in 0 : vector<2x8x8xf32>, vector<2x8x8xf32>, vector<2x8x8xf32>, vector<2x8x8xf32> -> vector<8x8x8xf32>
    %314 = vector.extract_strided_slice %293 {offsets = [0, 64], sizes = [16, 32], strides = [1, 1]} : vector<16x128xf32> to vector<16x32xf32>
    %315 = vector.extract_strided_slice %314 {offsets = [0, 0], sizes = [16, 8], strides = [1, 1]} : vector<16x32xf32> to vector<16x8xf32>
    %316 = vector.shape_cast %315 : vector<16x8xf32> to vector<2x8x8xf32>
    %317 = vector.extract_strided_slice %314 {offsets = [0, 8], sizes = [16, 8], strides = [1, 1]} : vector<16x32xf32> to vector<16x8xf32>
    %318 = vector.shape_cast %317 : vector<16x8xf32> to vector<2x8x8xf32>
    %319 = vector.extract_strided_slice %314 {offsets = [0, 16], sizes = [16, 8], strides = [1, 1]} : vector<16x32xf32> to vector<16x8xf32>
    %320 = vector.shape_cast %319 : vector<16x8xf32> to vector<2x8x8xf32>
    %321 = vector.extract_strided_slice %314 {offsets = [0, 24], sizes = [16, 8], strides = [1, 1]} : vector<16x32xf32> to vector<16x8xf32>
    %322 = vector.shape_cast %321 : vector<16x8xf32> to vector<2x8x8xf32>
    %323 = tpu.concatenate %316, %318, %320, %322 in 0 : vector<2x8x8xf32>, vector<2x8x8xf32>, vector<2x8x8xf32>, vector<2x8x8xf32> -> vector<8x8x8xf32>
    "tpu.trace_start"() <{level = 10 : i32, message = "gtd,gsd->gts"}> : () -> ()
    %cst_81 = arith.constant dense<0.000000e+00> : vector<8x8x8xf32>
    %324 = tpu.matmul %303, %313, %cst_81 {dimension_numbers = #tpu.dot_dimension_numbers<[2], [2], [1], [1], [0, 0, 0, 1, 1, 1], [0], [0]>} : vector<8x8x8xf32>, vector<8x8x8xf32>, vector<8x8x8xf32> -> vector<8x8x8xf32>
    "tpu.trace_stop"() : () -> ()
    %cst_82 = arith.constant 0.176776692 : f32
    %325 = vector.broadcast %cst_82 : f32 to vector<8x8x8xf32>
    %326 = arith.mulf %324, %325 : vector<8x8x8xf32>
    %cst_83 = arith.constant -1.000000e+30 : f32
    %327 = vector.broadcast %cst_83 : f32 to vector<8x8x8xf32>
    %328 = arith.select %4, %326, %327 : vector<8x8x8xi1>, vector<8x8x8xf32>
    %cst_84 = arith.constant dense<0xFF800000> : vector<8x8xf32>
    %329 = vector.multi_reduction <maximumf>, %328, %cst_84 [2] : vector<8x8x8xf32> to vector<8x8xf32>
    %330 = vector.shape_cast %329 : vector<8x8xf32> to vector<8x8x1xf32>
    %331 = vector.broadcast %330 : vector<8x8x1xf32> to vector<8x8x8xf32>
    %332 = arith.subf %328, %331 : vector<8x8x8xf32>
    %333 = math.exp %332 : vector<8x8x8xf32>
    %cst_85 = arith.constant dense<0.000000e+00> : vector<8x8xf32>
    %334 = vector.multi_reduction <add>, %333, %cst_85 [2] : vector<8x8x8xf32> to vector<8x8xf32>
    %335 = vector.shape_cast %334 : vector<8x8xf32> to vector<8x8x1xf32>
    %336 = tpu.reciprocal %335 : vector<8x8x1xf32> -> vector<8x8x1xf32>
    %337 = vector.broadcast %336 : vector<8x8x1xf32> to vector<8x8x8xf32>
    %338 = arith.mulf %333, %337 : vector<8x8x8xf32>
    "tpu.trace_start"() <{level = 10 : i32, message = "gts,gsd->gtd"}> : () -> ()
    %cst_86 = arith.constant dense<0.000000e+00> : vector<8x8x8xf32>
    %339 = tpu.matmul %338, %323, %cst_86 {dimension_numbers = #tpu.dot_dimension_numbers<[2], [1], [1], [2], [0, 0, 0, 1, 1, 2], [0], [0]>} : vector<8x8x8xf32>, vector<8x8x8xf32>, vector<8x8x8xf32> -> vector<8x8x8xf32>
    "tpu.trace_stop"() : () -> ()
    %340 = vector.extract_strided_slice %339 {offsets = [0, 0, 0], sizes = [2, 8, 8], strides = [1, 1, 1]} : vector<8x8x8xf32> to vector<2x8x8xf32>
    %341 = vector.shape_cast %340 : vector<2x8x8xf32> to vector<16x8xf32>
    %342 = vector.extract_strided_slice %339 {offsets = [2, 0, 0], sizes = [2, 8, 8], strides = [1, 1, 1]} : vector<8x8x8xf32> to vector<2x8x8xf32>
    %343 = vector.shape_cast %342 : vector<2x8x8xf32> to vector<16x8xf32>
    %344 = vector.extract_strided_slice %339 {offsets = [4, 0, 0], sizes = [2, 8, 8], strides = [1, 1, 1]} : vector<8x8x8xf32> to vector<2x8x8xf32>
    %345 = vector.shape_cast %344 : vector<2x8x8xf32> to vector<16x8xf32>
    %346 = vector.extract_strided_slice %339 {offsets = [6, 0, 0], sizes = [2, 8, 8], strides = [1, 1, 1]} : vector<8x8x8xf32> to vector<2x8x8xf32>
    %347 = vector.shape_cast %346 : vector<2x8x8xf32> to vector<16x8xf32>
    %348 = tpu.concatenate %341, %343, %345, %347 in 1 : vector<16x8xf32>, vector<16x8xf32>, vector<16x8xf32>, vector<16x8xf32> -> vector<16x32xf32>
    %c2_87 = arith.constant 2 : index
    %c0_88 = arith.constant 0 : index
    %c0_89 = arith.constant 0 : index
    %349 = vector.load %arg3[%c2_87, %c0_88, %c0_89] : memref<3x32x32xf32, #tpu.memory_space<vmem>>, vector<1x32x32xf32>
    %350 = vector.shape_cast %349 : vector<1x32x32xf32> to vector<32x32xf32>
    %cst_90 = arith.constant dense<0.000000e+00> : vector<16x32xf32>
    %351 = tpu.matmul %348, %350, %cst_90 {dimension_numbers = #tpu.dot_dimension_numbers<[1], [0], [0], [1], [0, 0, 1, 1], [], []>} : vector<16x32xf32>, vector<32x32xf32>, vector<16x32xf32> -> vector<16x32xf32>
    %352 = arith.addf %262, %351 : vector<16x32xf32>
    %353 = vector.broadcast %267 : vector<1x32xf32> to vector<16x32xf32>
    %354 = arith.addf %352, %353 : vector<16x32xf32>
    %cst_91 = arith.constant dense<0.000000e+00> : vector<16xf32>
    %355 = vector.multi_reduction <add>, %354, %cst_91 [1] : vector<16x32xf32> to vector<16xf32>
    %356 = vector.shape_cast %355 : vector<16xf32> to vector<16x1xf32>
    %cst_92 = arith.constant 3.200000e+01 : f32
    %357 = vector.broadcast %cst_92 : f32 to vector<16x1xf32>
    %358 = arith.divf %356, %357 : vector<16x1xf32>
    %359 = vector.broadcast %358 : vector<16x1xf32> to vector<16x32xf32>
    %360 = arith.subf %354, %359 : vector<16x32xf32>
    %361 = arith.mulf %360, %360 : vector<16x32xf32>
    %cst_93 = arith.constant dense<0.000000e+00> : vector<16xf32>
    %362 = vector.multi_reduction <add>, %361, %cst_93 [1] : vector<16x32xf32> to vector<16xf32>
    %363 = vector.shape_cast %362 : vector<16xf32> to vector<16x1xf32>
    %cst_94 = arith.constant 3.200000e+01 : f32
    %364 = vector.broadcast %cst_94 : f32 to vector<16x1xf32>
    %365 = arith.divf %363, %364 : vector<16x1xf32>
    %366 = vector.broadcast %358 : vector<16x1xf32> to vector<16x32xf32>
    %367 = arith.subf %354, %366 : vector<16x32xf32>
    %cst_95 = arith.constant 9.99999974E-6 : f32
    %368 = vector.broadcast %cst_95 : f32 to vector<16x1xf32>
    %369 = arith.addf %365, %368 : vector<16x1xf32>
    %370 = math.rsqrt %369 : vector<16x1xf32>
    %371 = vector.broadcast %370 : vector<16x1xf32> to vector<16x32xf32>
    %372 = arith.mulf %367, %371 : vector<16x32xf32>
    %373 = vector.broadcast %265 : vector<1x32xf32> to vector<16x32xf32>
    %374 = arith.mulf %372, %373 : vector<16x32xf32>
    %375 = vector.broadcast %266 : vector<1x32xf32> to vector<16x32xf32>
    %376 = arith.addf %374, %375 : vector<16x32xf32>
    %c2_96 = arith.constant 2 : index
    %c0_97 = arith.constant 0 : index
    %c0_98 = arith.constant 0 : index
    %377 = vector.load %arg4[%c2_96, %c0_97, %c0_98] : memref<3x32x128xf32, #tpu.memory_space<vmem>>, vector<1x32x128xf32>
    %378 = vector.shape_cast %377 : vector<1x32x128xf32> to vector<32x128xf32>
    %cst_99 = arith.constant dense<0.000000e+00> : vector<16x128xf32>
    %379 = tpu.matmul %376, %378, %cst_99 {dimension_numbers = #tpu.dot_dimension_numbers<[1], [0], [0], [1], [0, 0, 1, 1], [], []>} : vector<16x32xf32>, vector<32x128xf32>, vector<16x128xf32> -> vector<16x128xf32>
    %c2_100 = arith.constant 2 : index
    %c0_101 = arith.constant 0 : index
    %c0_102 = arith.constant 0 : index
    %380 = vector.load %arg5[%c2_100, %c0_101, %c0_102] : memref<3x1x128xf32, #tpu.memory_space<vmem>>, vector<1x1x128xf32>
    %381 = vector.shape_cast %380 : vector<1x1x128xf32> to vector<1x128xf32>
    %382 = vector.broadcast %381 : vector<1x128xf32> to vector<16x128xf32>
    %383 = arith.addf %379, %382 : vector<16x128xf32>
    %cst_103 = arith.constant 0.000000e+00 : f32
    %384 = vector.broadcast %cst_103 : f32 to vector<16x128xf32>
    %385 = arith.maximumf %383, %384 : vector<16x128xf32>
    %c2_104 = arith.constant 2 : index
    %c0_105 = arith.constant 0 : index
    %c0_106 = arith.constant 0 : index
    %386 = vector.load %arg6[%c2_104, %c0_105, %c0_106] : memref<3x128x32xf32, #tpu.memory_space<vmem>>, vector<1x128x32xf32>
    %387 = vector.shape_cast %386 : vector<1x128x32xf32> to vector<128x32xf32>
    %cst_107 = arith.constant dense<0.000000e+00> : vector<16x32xf32>
    %388 = tpu.matmul %385, %387, %cst_107 {dimension_numbers = #tpu.dot_dimension_numbers<[1], [0], [0], [1], [0, 0, 1, 1], [], []>} : vector<16x128xf32>, vector<128x32xf32>, vector<16x32xf32> -> vector<16x32xf32>
    %389 = vector.broadcast %268 : vector<1x32xf32> to vector<16x32xf32>
    %390 = arith.addf %388, %389 : vector<16x32xf32>
    %391 = arith.addf %354, %390 : vector<16x32xf32>
    %392 = vector.extract_strided_slice %1 {offsets = [18, 0], sizes = [1, 32], strides = [1, 1]} : vector<20x32xf32> to vector<1x32xf32>
    %393 = vector.extract_strided_slice %1 {offsets = [19, 0], sizes = [1, 32], strides = [1, 1]} : vector<20x32xf32> to vector<1x32xf32>
    %cst_108 = arith.constant dense<0.000000e+00> : vector<16xf32>
    %394 = vector.multi_reduction <add>, %391, %cst_108 [1] : vector<16x32xf32> to vector<16xf32>
    %395 = vector.shape_cast %394 : vector<16xf32> to vector<16x1xf32>
    %cst_109 = arith.constant 3.200000e+01 : f32
    %396 = vector.broadcast %cst_109 : f32 to vector<16x1xf32>
    %397 = arith.divf %395, %396 : vector<16x1xf32>
    %398 = vector.broadcast %397 : vector<16x1xf32> to vector<16x32xf32>
    %399 = arith.subf %391, %398 : vector<16x32xf32>
    %400 = arith.mulf %399, %399 : vector<16x32xf32>
    %cst_110 = arith.constant dense<0.000000e+00> : vector<16xf32>
    %401 = vector.multi_reduction <add>, %400, %cst_110 [1] : vector<16x32xf32> to vector<16xf32>
    %402 = vector.shape_cast %401 : vector<16xf32> to vector<16x1xf32>
    %cst_111 = arith.constant 3.200000e+01 : f32
    %403 = vector.broadcast %cst_111 : f32 to vector<16x1xf32>
    %404 = arith.divf %402, %403 : vector<16x1xf32>
    %405 = vector.broadcast %397 : vector<16x1xf32> to vector<16x32xf32>
    %406 = arith.subf %391, %405 : vector<16x32xf32>
    %cst_112 = arith.constant 9.99999974E-6 : f32
    %407 = vector.broadcast %cst_112 : f32 to vector<16x1xf32>
    %408 = arith.addf %404, %407 : vector<16x1xf32>
    %409 = math.rsqrt %408 : vector<16x1xf32>
    %410 = vector.broadcast %409 : vector<16x1xf32> to vector<16x32xf32>
    %411 = arith.mulf %406, %410 : vector<16x32xf32>
    %412 = vector.broadcast %392 : vector<1x32xf32> to vector<16x32xf32>
    %413 = arith.mulf %411, %412 : vector<16x32xf32>
    %414 = vector.broadcast %393 : vector<1x32xf32> to vector<16x32xf32>
    %415 = arith.addf %413, %414 : vector<16x32xf32>
    %c0_113 = arith.constant 0 : index
    %c0_114 = arith.constant 0 : index
    %416 = vector.load %arg8[%c0_113, %c0_114] : memref<33x128xf32, #tpu.memory_space<vmem>>, vector<33x128xf32>
    %417 = vector.extract_strided_slice %416 {offsets = [1, 0], sizes = [32, 128], strides = [1, 1]} : vector<33x128xf32> to vector<32x128xf32>
    %cst_115 = arith.constant dense<0.000000e+00> : vector<16x128xf32>
    %418 = tpu.matmul %415, %417, %cst_115 {dimension_numbers = #tpu.dot_dimension_numbers<[1], [0], [0], [1], [0, 0, 1, 1], [], []>} : vector<16x32xf32>, vector<32x128xf32>, vector<16x128xf32> -> vector<16x128xf32>
    %419 = vector.extract_strided_slice %416 {offsets = [0, 0], sizes = [1, 128], strides = [1, 1]} : vector<33x128xf32> to vector<1x128xf32>
    %420 = vector.broadcast %419 : vector<1x128xf32> to vector<16x128xf32>
    %421 = arith.addf %418, %420 : vector<16x128xf32>
    %c0_116 = arith.constant 0 : index
    %c0_117 = arith.constant 0 : index
    %422 = vector.load %arg9[%c0_116, %c0_117] : memref<16x128xf32, #tpu.memory_space<vmem>>, vector<16x128xf32>
    tpu.vector_store %arg9[%c0_116, %c0_117], %421 {strides = array<i32>} : memref<16x128xf32, #tpu.memory_space<vmem>>, vector<16x128xf32>,
    return
  }
  func.func @transform_0(%arg0: i32) -> (i32, i32) {
    %c0_i32 = arith.constant 0 : i32
    %c0_i32_0 = arith.constant 0 : i32
    %c0_i32_1 = arith.constant 0 : i32
    return %c0_i32, %c0_i32_0 : i32, i32
  }
  func.func @transform_1(%arg0: i32) -> (i32, i32, i32) {
    %c0_i32 = arith.constant 0 : i32
    %c0_i32_0 = arith.constant 0 : i32
    %c0_i32_1 = arith.constant 0 : i32
    %c0_i32_2 = arith.constant 0 : i32
    return %c0_i32, %c0_i32_0, %c0_i32_1 : i32, i32, i32
  }
  func.func @transform_2(%arg0: i32) -> (i32, i32, i32) {
    %c0_i32 = arith.constant 0 : i32
    %c0_i32_0 = arith.constant 0 : i32
    %c0_i32_1 = arith.constant 0 : i32
    %c0_i32_2 = arith.constant 0 : i32
    return %c0_i32, %c0_i32_0, %c0_i32_1 : i32, i32, i32
  }
  func.func @transform_3(%arg0: i32) -> (i32, i32, i32) {
    %c0_i32 = arith.constant 0 : i32
    %c0_i32_0 = arith.constant 0 : i32
    %c0_i32_1 = arith.constant 0 : i32
    %c0_i32_2 = arith.constant 0 : i32
    return %c0_i32, %c0_i32_0, %c0_i32_1 : i32, i32, i32
  }
  func.func @transform_4(%arg0: i32) -> (i32, i32, i32) {
    %c0_i32 = arith.constant 0 : i32
    %c0_i32_0 = arith.constant 0 : i32
    %c0_i32_1 = arith.constant 0 : i32
    %c0_i32_2 = arith.constant 0 : i32
    return %c0_i32, %c0_i32_0, %c0_i32_1 : i32, i32, i32
  }
  func.func @transform_5(%arg0: i32) -> (i32, i32, i32) {
    %c0_i32 = arith.constant 0 : i32
    %c0_i32_0 = arith.constant 0 : i32
    %c0_i32_1 = arith.constant 0 : i32
    %c0_i32_2 = arith.constant 0 : i32
    return %c0_i32, %c0_i32_0, %c0_i32_1 : i32, i32, i32
  }
  func.func @transform_6(%arg0: i32) -> (i32, i32) {
    %c0_i32 = arith.constant 0 : i32
    %c0_i32_0 = arith.constant 0 : i32
    %c0_i32_1 = arith.constant 0 : i32
    return %c0_i32, %c0_i32_0 : i32, i32
  }
  func.func @transform_7(%arg0: i32) -> (i32, i32) {
    %c0_i32 = arith.constant 0 : i32
    %c0_i32_0 = arith.constant 0 : i32
    %c0_i32_1 = arith.constant 0 : i32
    return %c0_i32, %c0_i32_0 : i32, i32
  }
  func.func @transform_8(%arg0: i32) -> (i32, i32) {
    %c0_i32 = arith.constant 0 : i32
    %c0_i32_0 = arith.constant 0 : i32
    %c0_i32_1 = arith.constant 0 : i32
    return %c0_i32, %c0_i32_0 : i32, i32
  }
}

</mosaic_0001>

<llo_original>
// kernel: bigram_forward.1
$region0: #{bigram_forward.1}
  #allocation0 [shape = 'u32[]', space=smem, size = 0x4, offset = 0x4, fixed_abs, tag = 'smem constant byte address 0x4 - core index']
  #allocation1 [shape = 'u32[144,128]{1,0:T(1,128)}', space=vmem, size = 0x12000, scoped, tag = 'internal scratch']
  %s0 = inlined_call_operand.vmem [shape: f32[16,32], index: 0, kind: input, shape index: {}]
  %s1 = inlined_call_operand.vmem [shape: f32[3,32,128], index: 1, kind: input, shape index: {}]
  %s2 = inlined_call_operand.vmem [shape: f32[3,32,32], index: 2, kind: input, shape index: {}]
  %s3 = inlined_call_operand.vmem [shape: f32[3,32,128], index: 3, kind: input, shape index: {}]
  %s4 = inlined_call_operand.vmem [shape: f32[3,1,128], index: 4, kind: input, shape index: {}]
  %s5 = inlined_call_operand.vmem [shape: f32[3,128,32], index: 5, kind: input, shape index: {}]
  %s6 = inlined_call_operand.vmem [shape: f32[20,32], index: 6, kind: input, shape index: {}]
  %s7 = inlined_call_operand.vmem [shape: f32[33,128], index: 7, kind: input, shape index: {}]
  %s8 = inlined_call_operand.hbm [shape: f32[16,128], index: 8, kind: output, shape index: {}]
  %s9 = sld [smem:[#allocation0]]
  $region42: #{bigram_forward.1} parent=0
    _
  %s11 = ssub.s32 1, %s9
  %s12 = scalar_select 0, %s11, %s9
  $region1: #{bigram_forward.1} parent=0
    #allocation2 [shape = 'u8[8192]{0}', space=vmem, size = 0x2000, scoped, tag = 'output window, operand 0, single buffered']
    #allocation3 [shape = 's32[1]{0}', space=sflag, size = 0x4, scoped, tag = 'scoped memory for bigram_forward.1']
    %13 = vsyncpa [#allocation3], 0
    // Predicated region
    $region2: #{bigram_forward.1} parent=1 // pred_check
      _
    $region3: #{bigram_forward.1} parent=1 // pred_check_branch
      %15 = sbr.rel (0) target = $region5
    $region4: #{bigram_forward.1} parent=1 // pred_region
      _
    $region5: #{bigram_forward.1} parent=1 // pred_fallthru
      _
    // Predicated region
    $region6: #{bigram_forward.1} parent=1 // pred_check
      _
    $region7: #{bigram_forward.1} parent=1 // pred_check_branch
      %17 = sbr.rel (0) target = $region9
    $region8: #{bigram_forward.1} parent=1 // pred_region
      _
    $region9: #{bigram_forward.1} parent=1 // pred_fallthru
      _
    // Predicated region
    $region10: #{bigram_forward.1} parent=1 // pred_check
      _
    $region11: #{bigram_forward.1} parent=1 // pred_check_branch
      %19 = sbr.rel (0) target = $region13
    $region12: #{bigram_forward.1} parent=1 // pred_region
      _
    $region13: #{bigram_forward.1} parent=1 // pred_fallthru
      _
    // Predicated region
    $region14: #{bigram_forward.1} parent=1 // pred_check
      _
    $region15: #{bigram_forward.1} parent=1 // pred_check_branch
      %21 = sbr.rel (0) target = $region17
    $region16: #{bigram_forward.1} parent=1 // pred_region
      _
    $region17: #{bigram_forward.1} parent=1 // pred_fallthru
      _
    // Predicated region
    $region18: #{bigram_forward.1} parent=1 // pred_check
      _
    $region19: #{bigram_forward.1} parent=1 // pred_check_branch
      %23 = sbr.rel (0) target = $region21
    $region20: #{bigram_forward.1} parent=1 // pred_region
      _
    $region21: #{bigram_forward.1} parent=1 // pred_fallthru
      _
    // Predicated region
    $region22: #{bigram_forward.1} parent=1 // pred_check
      _
    $region23: #{bigram_forward.1} parent=1 // pred_check_branch
      %25 = sbr.rel (0) target = $region25
    $region24: #{bigram_forward.1} parent=1 // pred_region
      _
    $region25: #{bigram_forward.1} parent=1 // pred_fallthru
      _
    // Predicated region
    $region26: #{bigram_forward.1} parent=1 // pred_check
      _
    $region27: #{bigram_forward.1} parent=1 // pred_check_branch
      %27 = sbr.rel (0) target = $region29
    $region28: #{bigram_forward.1} parent=1 // pred_region
      _
    $region29: #{bigram_forward.1} parent=1 // pred_fallthru
      _
    // Predicated region
    $region30: #{bigram_forward.1} parent=1 // pred_check
      _
    $region31: #{bigram_forward.1} parent=1 // pred_check_branch
      %29 = sbr.rel (0) target = $region33
    $region32: #{bigram_forward.1} parent=1 // pred_region
      _
    $region33: #{bigram_forward.1} parent=1 // pred_fallthru
      _
    %v30 = vld [vmem:[%s0] sm:$0xff]
    %v31 = vld [vmem:[%s0 + $0x8] sm:$0xff]
    %v32 = vld [vmem:[%s6] sm:$0xff]
    %v33 = vld [vmem:[%s6 + $0x8] sm:$0xff]
    %v34 = vld [vmem:[%s6 + $0x10] sm:$0xf]
    %v35 = vlaneseq
    %v36 = vshrl.u32 %v35, 7
    %v37 = vlaneseq
    %v38 = vand.u32 %v37, 127
    %vm39 = vcmp.ge.s32.totalorder %v36, %v38
    %vm40 = vcmask 261120
    %v41 = vsel %vm40, %v30, 0.0
    %42 = vadd.xlane.f32.xlu0 %v41
    %v43 = vpop.xlane.xlu0 %42
    %v44 = vsel %vm40, %v31, 0.0
    %45 = vadd.xlane.f32.xlu0 %v44
    %v46 = vpop.xlane.xlu0 %45
    %v47 = vrcp.pop 32.0
    %v48 = vmul.f32 %v43, %v47
    %v49 = vmul.f32 %v46, %v47
    %v50 = vsub.f32 %v30, %v48
    %v51 = vsub.f32 %v31, %v49
    %v52 = vmul.f32 %v50, %v50
    %v53 = vmul.f32 %v51, %v51
    %v54 = vsel %vm40, %v52, 0.0
    %55 = vadd.xlane.f32.xlu0 %v54
    %v56 = vpop.xlane.xlu0 %55
    %v57 = vsel %vm40, %v53, 0.0
    %58 = vadd.xlane.f32.xlu0 %v57
    %v59 = vpop.xlane.xlu0 %58
    %v60 = vmul.f32 %v56, %v47
    %v61 = vmul.f32 %v59, %v47
    %v62 = vadd.f32 %v60, 1e-05
    %v63 = vadd.f32 %v61, 1e-05
    %v64 = vrsqrt.pop %v62
    %v65 = vrsqrt.pop %v63
    %v66 = vmul.f32 %v50, %v64
    %v67 = vmul.f32 %v51, %v65
    %v68 = vlaneseq
    %v69 = vshrl.u32 %v68, 7
    %v70 = vsub.s32 0, %v69
    %v71 = vrot.slane %v32, %v70
    %v72 = vmul.f32 %v66, %v71
    %v73 = vmul.f32 %v67, %v71
    %v74 = vlaneseq
    %v75 = vshrl.u32 %v74, 7
    %v76 = vsub.s32 1, %v75
    %v77 = vrot.slane %v32, %v76
    %v78 = vadd.f32 %v72, %v77
    %v79 = vadd.f32 %v73, %v77
    %v80 = vld [vmem:[%s1] sm:$0xff]
    %v81 = vld [vmem:[%s1 + $0x8] sm:$0xff]
    %v82 = vld [vmem:[%s1 + $0x10] sm:$0xff]
    %v83 = vld [vmem:[%s1 + $0x18] sm:$0xff]
    %v85 = vsel %vm40, %v78, 0
    %v88 = vsel %vm40, %v79, 0
    %90 = vmatprep.subr.mxu0 0.0
    %91 = vmatpush1.msra.mxu0 %v80
    %92 = vmatprep.subr.mxu0 0.0
    %93 = vmatpush1.msra.mxu0 %v81
    %94 = vmatprep.subr.mxu0 0.0
    %95 = vmatpush1.msra.mxu0 %v82
    %96 = vmatprep.subr.mxu0 0.0
    %97 = vmatpush1.msra.mxu0 %v83
    %98 = vmatprep.subr.mxu0 0.0
    %99 = vmatpush1.msra.mxu0 0.0
    %100 = vmatprep.subr.mxu0 0.0
    %101 = vmatpush1.msra.mxu0 0.0
    %102 = vmatprep.subr.mxu0 0.0
    %103 = vmatpush1.msra.mxu0 0.0
    %104 = vmatprep.subr.mxu0 0.0
    %105 = vmatpush1.msra.mxu0 0.0
    %106 = vmatprep.subr.mxu0 0.0
    %107 = vmatpush1.msra.mxu0 0.0
    %108 = vmatprep.subr.mxu0 0.0
    %109 = vmatpush1.msra.mxu0 0.0
    %110 = vmatprep.subr.mxu0 0.0
    %111 = vmatpush1.msra.mxu0 0.0
    %112 = vmatprep.subr.mxu0 0.0
    %113 = vmatpush1.msra.mxu0 0.0
    %114 = vmatprep.subr.mxu0 0.0
    %115 = vmatpush1.msra.mxu0 0.0
    %116 = vmatprep.subr.mxu0 0.0
    %117 = vmatpush1.msra.mxu0 0.0
    %118 = vmatprep.subr.mxu0 0.0
    %119 = vmatpush1.msra.mxu0 0.0
    %120 = vmatprep.subr.mxu0 0.0
    %121 = vmatpush1.msra.mxu0 0.0
    %122 = vmatprep.subr.mxu0 0.0
    %123 = vmatpush1.msra.mxu0 0.0
    %124 = vmatprep.subr.mxu0 0.0
    %125 = vmatpush1.msra.mxu0 0.0
    %126 = vmatprep.subr.mxu0 0.0
    %127 = vmatpush1.msra.mxu0 0.0
    %128 = vmatprep.subr.mxu0 0.0
    %129 = vmatpush1.msra.mxu0 0.0
    %130 = vmatprep.subr.mxu0 0.0
    %131 = vmatpush1.msra.mxu0 0.0
    %132 = vmatprep.subr.mxu0 0.0
    %133 = vmatpush1.msra.mxu0 0.0
    %134 = vmatprep.subr.mxu0 0.0
    %135 = vmatpush1.msra.mxu0 0.0
    %136 = vmatprep.subr.mxu0 0.0
    %137 = vmatpush1.msra.mxu0 0.0
    %138 = vmatprep.subr.mxu0 0.0
    %139 = vmatpush1.msra.mxu0 0.0
    %140 = vmatprep.subr.mxu0 0.0
    %141 = vmatpush1.msra.mxu0 0.0
    %142 = vmatprep.subr.mxu0 0.0
    %143 = vmatpush1.msra.mxu0 0.0
    %144 = vmatprep.subr.mxu0 0.0
    %145 = vmatpush1.msra.mxu0 0.0
    %146 = vmatprep.subr.mxu0 0.0
    %147 = vmatpush1.msra.mxu0 0.0
    %148 = vmatprep.subr.mxu0 0.0
    %149 = vmatpush1.msra.mxu0 0.0
    %150 = vmatprep.subr.mxu0 0.0
    %151 = vmatpush1.msra.mxu0 0.0
    %152 = vmatprep.subr.mxu0 0.0
    %153 = vmatpush1.msra.mxu0 0.0
    %154 = vmatprep.mubr.f32.mxu0 0.0
    %155 = vmatmul.mubr.f32.gmra.mrb[0].mxu0 %v85
    %v156 = vpop.f32.mrb[0].mxu0
    %v157 = vadd.f32 0.0, %v156
    %v158 = vpop.f32.mrb[0].mxu0
    %159 = vmatprep.mubr.f32.mxu0 0.0
    %160 = vmatmul.mubr.f32.gmra.mrb[0].mxu0 %v88
    %v161 = vpop.f32.mrb[0].mxu0
    %v162 = vadd.f32 0.0, %v161
    %v163 = vpop.f32.mrb[0].mxu0
    %164 = vdwg.mxu0
    %167 = vrot.lane.b32.xlu0 %v157, 120
    %v168 = vpop.permute.xlu0 %167
    %169 = vrot.lane.b32.xlu0 %v162, 120
    %v170 = vpop.permute.xlu0 %169
    %171 = vrot.lane.b32.xlu0 %v157, 112
    %v172 = vpop.permute.xlu0 %171
    %173 = vrot.lane.b32.xlu0 %v162, 112
    %v174 = vpop.permute.xlu0 %173
    %175 = vrot.lane.b32.xlu0 %v157, 104
    %v176 = vpop.permute.xlu0 %175
    %177 = vrot.lane.b32.xlu0 %v162, 104
    %v178 = vpop.permute.xlu0 %177
    %179 = vrot.lane.b32.xlu0 %v157, 96
    %v180 = vpop.permute.xlu0 %179
    %vm181 = vcmask 64512
    %v182 = vsel %vm181, %v157, 0
    %v184 = vsel %vm181, %v180, 0
    %186 = vmatprep.subr.mxu0 0.0
    %187 = vmatpush1.xpose.msra.mxu0 %v184
    %188 = vmatprep.subr.mxu0 0.0
    %189 = vmatpush1.xpose.msra.mxu0 0.0
    %190 = vmatprep.subr.mxu0 0.0
    %191 = vmatpush1.xpose.msra.mxu0 0.0
    %192 = vmatprep.subr.mxu0 0.0
    %193 = vmatpush1.xpose.msra.mxu0 0.0
    %194 = vmatprep.subr.mxu0 0.0
    %195 = vmatpush1.xpose.msra.mxu0 0.0
    %196 = vmatprep.subr.mxu0 0.0
    %197 = vmatpush1.xpose.msra.mxu0 0.0
    %198 = vmatprep.subr.mxu0 0.0
    %199 = vmatpush1.xpose.msra.mxu0 0.0
    %200 = vmatprep.subr.mxu0 0.0
    %201 = vmatpush1.xpose.msra.mxu0 0.0
    %202 = vmatprep.subr.mxu0 0.0
    %203 = vmatpush1.xpose.msra.mxu0 0.0
    %204 = vmatprep.subr.mxu0 0.0
    %205 = vmatpush1.xpose.msra.mxu0 0.0
    %206 = vmatprep.subr.mxu0 0.0
    %207 = vmatpush1.xpose.msra.mxu0 0.0
    %208 = vmatprep.subr.mxu0 0.0
    %209 = vmatpush1.xpose.msra.mxu0 0.0
    %210 = vmatprep.subr.mxu0 0.0
    %211 = vmatpush1.xpose.msra.mxu0 0.0
    %212 = vmatprep.subr.mxu0 0.0
    %213 = vmatpush1.xpose.msra.mxu0 0.0
    %214 = vmatprep.subr.mxu0 0.0
    %215 = vmatpush1.xpose.msra.mxu0 0.0
    %216 = vmatprep.subr.mxu0 0.0
    %217 = vmatpush1.xpose.msra.mxu0 0.0
    %218 = vmatprep.subr.mxu0 0.0
    %219 = vmatpush1.xpose.msra.mxu0 0.0
    %220 = vmatprep.subr.mxu0 0.0
    %221 = vmatpush1.xpose.msra.mxu0 0.0
    %222 = vmatprep.subr.mxu0 0.0
    %223 = vmatpush1.xpose.msra.mxu0 0.0
    %224 = vmatprep.subr.mxu0 0.0
    %225 = vmatpush1.xpose.msra.mxu0 0.0
    %226 = vmatprep.subr.mxu0 0.0
    %227 = vmatpush1.xpose.msra.mxu0 0.0
    %228 = vmatprep.subr.mxu0 0.0
    %229 = vmatpush1.xpose.msra.mxu0 0.0
    %230 = vmatprep.subr.mxu0 0.0
    %231 = vmatpush1.xpose.msra.mxu0 0.0
    %232 = vmatprep.subr.mxu0 0.0
    %233 = vmatpush1.xpose.msra.mxu0 0.0
    %234 = vmatprep.subr.mxu0 0.0
    %235 = vmatpush1.xpose.msra.mxu0 0.0
    %236 = vmatprep.subr.mxu0 0.0
    %237 = vmatpush1.xpose.msra.mxu0 0.0
    %238 = vmatprep.subr.mxu0 0.0
    %239 = vmatpush1.xpose.msra.mxu0 0.0
    %240 = vmatprep.subr.mxu0 0.0
    %241 = vmatpush1.xpose.msra.mxu0 0.0
    %242 = vmatprep.subr.mxu0 0.0
    %243 = vmatpush1.xpose.msra.mxu0 0.0
    %244 = vmatprep.subr.mxu0 0.0
    %245 = vmatpush1.xpose.msra.mxu0 0.0
    %246 = vmatprep.subr.mxu0 0.0
    %247 = vmatpush1.xpose.msra.mxu0 0.0
    %248 = vmatprep.subr.mxu0 0.0
    %249 = vmatpush1.xpose.msra.mxu0 0.0
    %250 = vmatprep.mubr.f32.mxu0 0.0
    %251 = vmatmul.mubr.f32.gmra.mrb[0].mxu0 %v182
    %v252 = vpop.f32.mrb[0].mxu0
    %v253 = vadd.f32 0.0, %v252
    %v254 = vpop.f32.mrb[0].mxu0
    %255 = vdwg.mxu0
    %256 = vrot.lane.b32.xlu0 %v162, 96
    %v257 = vpop.permute.xlu0 %256
    %v258 = vsel %vm181, %v162, 0
    %v260 = vsel %vm181, %v257, 0
    %262 = vmatprep.subr.mxu0 0.0
    %263 = vmatpush1.xpose.msra.mxu0 %v260
    %264 = vmatprep.subr.mxu0 0.0
    %265 = vmatpush1.xpose.msra.mxu0 0.0
    %266 = vmatprep.subr.mxu0 0.0
    %267 = vmatpush1.xpose.msra.mxu0 0.0
    %268 = vmatprep.subr.mxu0 0.0
    %269 = vmatpush1.xpose.msra.mxu0 0.0
    %270 = vmatprep.subr.mxu0 0.0
    %271 = vmatpush1.xpose.msra.mxu0 0.0
    %272 = vmatprep.subr.mxu0 0.0
    %273 = vmatpush1.xpose.msra.mxu0 0.0
    %274 = vmatprep.subr.mxu0 0.0
    %275 = vmatpush1.xpose.msra.mxu0 0.0
    %276 = vmatprep.subr.mxu0 0.0
    %277 = vmatpush1.xpose.msra.mxu0 0.0
    %278 = vmatprep.subr.mxu0 0.0
    %279 = vmatpush1.xpose.msra.mxu0 0.0
    %280 = vmatprep.subr.mxu0 0.0
    %281 = vmatpush1.xpose.msra.mxu0 0.0
    %282 = vmatprep.subr.mxu0 0.0
    %283 = vmatpush1.xpose.msra.mxu0 0.0
    %284 = vmatprep.subr.mxu0 0.0
    %285 = vmatpush1.xpose.msra.mxu0 0.0
    %286 = vmatprep.subr.mxu0 0.0
    %287 = vmatpush1.xpose.msra.mxu0 0.0
    %288 = vmatprep.subr.mxu0 0.0
    %289 = vmatpush1.xpose.msra.mxu0 0.0
    %290 = vmatprep.subr.mxu0 0.0
    %291 = vmatpush1.xpose.msra.mxu0 0.0
    %292 = vmatprep.subr.mxu0 0.0
    %293 = vmatpush1.xpose.msra.mxu0 0.0
    %294 = vmatprep.subr.mxu0 0.0
    %295 = vmatpush1.xpose.msra.mxu0 0.0
    %296 = vmatprep.subr.mxu0 0.0
    %297 = vmatpush1.xpose.msra.mxu0 0.0
    %298 = vmatprep.subr.mxu0 0.0
    %299 = vmatpush1.xpose.msra.mxu0 0.0
    %300 = vmatprep.subr.mxu0 0.0
    %301 = vmatpush1.xpose.msra.mxu0 0.0
    %302 = vmatprep.subr.mxu0 0.0
    %303 = vmatpush1.xpose.msra.mxu0 0.0
    %304 = vmatprep.subr.mxu0 0.0
    %305 = vmatpush1.xpose.msra.mxu0 0.0
    %306 = vmatprep.subr.mxu0 0.0
    %307 = vmatpush1.xpose.msra.mxu0 0.0
    %308 = vmatprep.subr.mxu0 0.0
    %309 = vmatpush1.xpose.msra.mxu0 0.0
    %310 = vmatprep.subr.mxu0 0.0
    %311 = vmatpush1.xpose.msra.mxu0 0.0
    %312 = vmatprep.subr.mxu0 0.0
    %313 = vmatpush1.xpose.msra.mxu0 0.0
    %314 = vmatprep.subr.mxu0 0.0
    %315 = vmatpush1.xpose.msra.mxu0 0.0
    %316 = vmatprep.subr.mxu0 0.0
    %317 = vmatpush1.xpose.msra.mxu0 0.0
    %318 = vmatprep.subr.mxu0 0.0
    %319 = vmatpush1.xpose.msra.mxu0 0.0
    %320 = vmatprep.subr.mxu0 0.0
    %321 = vmatpush1.xpose.msra.mxu0 0.0
    %322 = vmatprep.subr.mxu0 0.0
    %323 = vmatpush1.xpose.msra.mxu0 0.0
    %324 = vmatprep.subr.mxu0 0.0
    %325 = vmatpush1.xpose.msra.mxu0 0.0
    %326 = vmatprep.mubr.f32.mxu0 0.0
    %327 = vmatmul.mubr.f32.gmra.mrb[0].mxu0 %v258
    %v328 = vpop.f32.mrb[0].mxu0
    %v329 = vadd.f32 0.0, %v328
    %v330 = vpop.f32.mrb[0].mxu0
    %331 = vdwg.mxu0
    %332 = vrot.lane.b32.xlu0 %v168, 96
    %v333 = vpop.permute.xlu0 %332
    %v334 = vsel %vm181, %v168, 0
    %v336 = vsel %vm181, %v333, 0
    %338 = vmatprep.subr.mxu0 0.0
    %339 = vmatpush1.xpose.msra.mxu0 %v336
    %340 = vmatprep.subr.mxu0 0.0
    %341 = vmatpush1.xpose.msra.mxu0 0.0
    %342 = vmatprep.subr.mxu0 0.0
    %343 = vmatpush1.xpose.msra.mxu0 0.0
    %344 = vmatprep.subr.mxu0 0.0
    %345 = vmatpush1.xpose.msra.mxu0 0.0
    %346 = vmatprep.subr.mxu0 0.0
    %347 = vmatpush1.xpose.msra.mxu0 0.0
    %348 = vmatprep.subr.mxu0 0.0
    %349 = vmatpush1.xpose.msra.mxu0 0.0
    %350 = vmatprep.subr.mxu0 0.0
    %351 = vmatpush1.xpose.msra.mxu0 0.0
    %352 = vmatprep.subr.mxu0 0.0
    %353 = vmatpush1.xpose.msra.mxu0 0.0
    %354 = vmatprep.subr.mxu0 0.0
    %355 = vmatpush1.xpose.msra.mxu0 0.0
    %356 = vmatprep.subr.mxu0 0.0
    %357 = vmatpush1.xpose.msra.mxu0 0.0
    %358 = vmatprep.subr.mxu0 0.0
    %359 = vmatpush1.xpose.msra.mxu0 0.0
    %360 = vmatprep.subr.mxu0 0.0
    %361 = vmatpush1.xpose.msra.mxu0 0.0
    %362 = vmatprep.subr.mxu0 0.0
    %363 = vmatpush1.xpose.msra.mxu0 0.0
    %364 = vmatprep.subr.mxu0 0.0
    %365 = vmatpush1.xpose.msra.mxu0 0.0
    %366 = vmatprep.subr.mxu0 0.0
    %367 = vmatpush1.xpose.msra.mxu0 0.0
    %368 = vmatprep.subr.mxu0 0.0
    %369 = vmatpush1.xpose.msra.mxu0 0.0
    %370 = vmatprep.subr.mxu0 0.0
    %371 = vmatpush1.xpose.msra.mxu0 0.0
    %372 = vmatprep.subr.mxu0 0.0
    %373 = vmatpush1.xpose.msra.mxu0 0.0
    %374 = vmatprep.subr.mxu0 0.0
    %375 = vmatpush1.xpose.msra.mxu0 0.0
    %376 = vmatprep.subr.mxu0 0.0
    %377 = vmatpush1.xpose.msra.mxu0 0.0
    %378 = vmatprep.subr.mxu0 0.0
    %379 = vmatpush1.xpose.msra.mxu0 0.0
    %380 = vmatprep.subr.mxu0 0.0
    %381 = vmatpush1.xpose.msra.mxu0 0.0
    %382 = vmatprep.subr.mxu0 0.0
    %383 = vmatpush1.xpose.msra.mxu0 0.0
    %384 = vmatprep.subr.mxu0 0.0
    %385 = vmatpush1.xpose.msra.mxu0 0.0
    %386 = vmatprep.subr.mxu0 0.0
    %387 = vmatpush1.xpose.msra.mxu0 0.0
    %388 = vmatprep.subr.mxu0 0.0
    %389 = vmatpush1.xpose.msra.mxu0 0.0
    %390 = vmatprep.subr.mxu0 0.0
    %391 = vmatpush1.xpose.msra.mxu0 0.0
    %392 = vmatprep.subr.mxu0 0.0
    %393 = vmatpush1.xpose.msra.mxu0 0.0
    %394 = vmatprep.subr.mxu0 0.0
    %395 = vmatpush1.xpose.msra.mxu0 0.0
    %396 = vmatprep.subr.mxu0 0.0
    %397 = vmatpush1.xpose.msra.mxu0 0.0
    %398 = vmatprep.subr.mxu0 0.0
    %399 = vmatpush1.xpose.msra.mxu0 0.0
    %400 = vmatprep.subr.mxu0 0.0
    %401 = vmatpush1.xpose.msra.mxu0 0.0
    %402 = vmatprep.mubr.f32.mxu0 0.0
    %403 = vmatmul.mubr.f32.gmra.mrb[0].mxu0 %v334
    %v404 = vpop.f32.mrb[0].mxu0
    %v405 = vadd.f32 0.0, %v404
    %v406 = vpop.f32.mrb[0].mxu0
    %407 = vdwg.mxu0
    %408 = vrot.lane.b32.xlu0 %v170, 96
    %v409 = vpop.permute.xlu0 %408
    %v410 = vsel %vm181, %v170, 0
    %v412 = vsel %vm181, %v409, 0
    %414 = vmatprep.subr.mxu0 0.0
    %415 = vmatpush1.xpose.msra.mxu0 %v412
    %416 = vmatprep.subr.mxu0 0.0
    %417 = vmatpush1.xpose.msra.mxu0 0.0
    %418 = vmatprep.subr.mxu0 0.0
    %419 = vmatpush1.xpose.msra.mxu0 0.0
    %420 = vmatprep.subr.mxu0 0.0
    %421 = vmatpush1.xpose.msra.mxu0 0.0
    %422 = vmatprep.subr.mxu0 0.0
    %423 = vmatpush1.xpose.msra.mxu0 0.0
    %424 = vmatprep.subr.mxu0 0.0
    %425 = vmatpush1.xpose.msra.mxu0 0.0
    %426 = vmatprep.subr.mxu0 0.0
    %427 = vmatpush1.xpose.msra.mxu0 0.0
    %428 = vmatprep.subr.mxu0 0.0
    %429 = vmatpush1.xpose.msra.mxu0 0.0
    %430 = vmatprep.subr.mxu0 0.0
    %431 = vmatpush1.xpose.msra.mxu0 0.0
    %432 = vmatprep.subr.mxu0 0.0
    %433 = vmatpush1.xpose.msra.mxu0 0.0
    %434 = vmatprep.subr.mxu0 0.0
    %435 = vmatpush1.xpose.msra.mxu0 0.0
    %436 = vmatprep.subr.mxu0 0.0
    %437 = vmatpush1.xpose.msra.mxu0 0.0
    %438 = vmatprep.subr.mxu0 0.0
    %439 = vmatpush1.xpose.msra.mxu0 0.0
    %440 = vmatprep.subr.mxu0 0.0
    %441 = vmatpush1.xpose.msra.mxu0 0.0
    %442 = vmatprep.subr.mxu0 0.0
    %443 = vmatpush1.xpose.msra.mxu0 0.0
    %444 = vmatprep.subr.mxu0 0.0
    %445 = vmatpush1.xpose.msra.mxu0 0.0
    %446 = vmatprep.subr.mxu0 0.0
    %447 = vmatpush1.xpose.msra.mxu0 0.0
    %448 = vmatprep.subr.mxu0 0.0
    %449 = vmatpush1.xpose.msra.mxu0 0.0
    %450 = vmatprep.subr.mxu0 0.0
    %451 = vmatpush1.xpose.msra.mxu0 0.0
    %452 = vmatprep.subr.mxu0 0.0
    %453 = vmatpush1.xpose.msra.mxu0 0.0
    %454 = vmatprep.subr.mxu0 0.0
    %455 = vmatpush1.xpose.msra.mxu0 0.0
    %456 = vmatprep.subr.mxu0 0.0
    %457 = vmatpush1.xpose.msra.mxu0 0.0
    %458 = vmatprep.subr.mxu0 0.0
    %459 = vmatpush1.xpose.msra.mxu0 0.0
    %460 = vmatprep.subr.mxu0 0.0
    %461 = vmatpush1.xpose.msra.mxu0 0.0
    %462 = vmatprep.subr.mxu0 0.0
    %463 = vmatpush1.xpose.msra.mxu0 0.0
    %464 = vmatprep.subr.mxu0 0.0
    %465 = vmatpush1.xpose.msra.mxu0 0.0
    %466 = vmatprep.subr.mxu0 0.0
    %467 = vmatpush1.xpose.msra.mxu0 0.0
    %468 = vmatprep.subr.mxu0 0.0
    %469 = vmatpush1.xpose.msra.mxu0 0.0
    %470 = vmatprep.subr.mxu0 0.0
    %471 = vmatpush1.xpose.msra.mxu0 0.0
    %472 = vmatprep.subr.mxu0 0.0
    %473 = vmatpush1.xpose.msra.mxu0 0.0
    %474 = vmatprep.subr.mxu0 0.0
    %475 = vmatpush1.xpose.msra.mxu0 0.0
    %476 = vmatprep.subr.mxu0 0.0
    %477 = vmatpush1.xpose.msra.mxu0 0.0
    %478 = vmatprep.mubr.f32.mxu0 0.0
    %479 = vmatmul.mubr.f32.gmra.mrb[0].mxu0 %v410
    %v480 = vpop.f32.mrb[0].mxu0
    %v481 = vadd.f32 0.0, %v480
    %v482 = vpop.f32.mrb[0].mxu0
    %483 = vdwg.mxu0
    %484 = vrot.lane.b32.xlu0 %v172, 96
    %v485 = vpop.permute.xlu0 %484
    %v486 = vsel %vm181, %v172, 0
    %v488 = vsel %vm181, %v485, 0
    %490 = vmatprep.subr.mxu0 0.0
    %491 = vmatpush1.xpose.msra.mxu0 %v488
    %492 = vmatprep.subr.mxu0 0.0
    %493 = vmatpush1.xpose.msra.mxu0 0.0
    %494 = vmatprep.subr.mxu0 0.0
    %495 = vmatpush1.xpose.msra.mxu0 0.0
    %496 = vmatprep.subr.mxu0 0.0
    %497 = vmatpush1.xpose.msra.mxu0 0.0
    %498 = vmatprep.subr.mxu0 0.0
    %499 = vmatpush1.xpose.msra.mxu0 0.0
    %500 = vmatprep.subr.mxu0 0.0
    %501 = vmatpush1.xpose.msra.mxu0 0.0
    %502 = vmatprep.subr.mxu0 0.0
    %503 = vmatpush1.xpose.msra.mxu0 0.0
    %504 = vmatprep.subr.mxu0 0.0
    %505 = vmatpush1.xpose.msra.mxu0 0.0
    %506 = vmatprep.subr.mxu0 0.0
    %507 = vmatpush1.xpose.msra.mxu0 0.0
    %508 = vmatprep.subr.mxu0 0.0
    %509 = vmatpush1.xpose.msra.mxu0 0.0
    %510 = vmatprep.subr.mxu0 0.0
    %511 = vmatpush1.xpose.msra.mxu0 0.0
    %512 = vmatprep.subr.mxu0 0.0
    %513 = vmatpush1.xpose.msra.mxu0 0.0
    %514 = vmatprep.subr.mxu0 0.0
    %515 = vmatpush1.xpose.msra.mxu0 0.0
    %516 = vmatprep.subr.mxu0 0.0
    %517 = vmatpush1.xpose.msra.mxu0 0.0
    %518 = vmatprep.subr.mxu0 0.0
    %519 = vmatpush1.xpose.msra.mxu0 0.0
    %520 = vmatprep.subr.mxu0 0.0
    %521 = vmatpush1.xpose.msra.mxu0 0.0
    %522 = vmatprep.subr.mxu0 0.0
    %523 = vmatpush1.xpose.msra.mxu0 0.0
    %524 = vmatprep.subr.mxu0 0.0
    %525 = vmatpush1.xpose.msra.mxu0 0.0
    %526 = vmatprep.subr.mxu0 0.0
    %527 = vmatpush1.xpose.msra.mxu0 0.0
    %528 = vmatprep.subr.mxu0 0.0
    %529 = vmatpush1.xpose.msra.mxu0 0.0
    %530 = vmatprep.subr.mxu0 0.0
    %531 = vmatpush1.xpose.msra.mxu0 0.0
    %532 = vmatprep.subr.mxu0 0.0
    %533 = vmatpush1.xpose.msra.mxu0 0.0
    %534 = vmatprep.subr.mxu0 0.0
    %535 = vmatpush1.xpose.msra.mxu0 0.0
    %536 = vmatprep.subr.mxu0 0.0
    %537 = vmatpush1.xpose.msra.mxu0 0.0
    %538 = vmatprep.subr.mxu0 0.0
    %539 = vmatpush1.xpose.msra.mxu0 0.0
    %540 = vmatprep.subr.mxu0 0.0
    %541 = vmatpush1.xpose.msra.mxu0 0.0
    %542 = vmatprep.subr.mxu0 0.0
    %543 = vmatpush1.xpose.msra.mxu0 0.0
    %544 = vmatprep.subr.mxu0 0.0
    %545 = vmatpush1.xpose.msra.mxu0 0.0
    %546 = vmatprep.subr.mxu0 0.0
    %547 = vmatpush1.xpose.msra.mxu0 0.0
    %548 = vmatprep.subr.mxu0 0.0
    %549 = vmatpush1.xpose.msra.mxu0 0.0
    %550 = vmatprep.subr.mxu0 0.0
    %551 = vmatpush1.xpose.msra.mxu0 0.0
    %552 = vmatprep.subr.mxu0 0.0
    %553 = vmatpush1.xpose.msra.mxu0 0.0
    %554 = vmatprep.mubr.f32.mxu0 0.0
    %555 = vmatmul.mubr.f32.gmra.mrb[0].mxu0 %v486
    %v556 = vpop.f32.mrb[0].mxu0
    %v557 = vadd.f32 0.0, %v556
    %v558 = vpop.f32.mrb[0].mxu0
    %559 = vdwg.mxu0
    %560 = vrot.lane.b32.xlu0 %v174, 96
    %v561 = vpop.permute.xlu0 %560
    %v562 = vsel %vm181, %v174, 0
    %v564 = vsel %vm181, %v561, 0
    %566 = vmatprep.subr.mxu0 0.0
    %567 = vmatpush1.xpose.msra.mxu0 %v564
    %568 = vmatprep.subr.mxu0 0.0
    %569 = vmatpush1.xpose.msra.mxu0 0.0
    %570 = vmatprep.subr.mxu0 0.0
    %571 = vmatpush1.xpose.msra.mxu0 0.0
    %572 = vmatprep.subr.mxu0 0.0
    %573 = vmatpush1.xpose.msra.mxu0 0.0
    %574 = vmatprep.subr.mxu0 0.0
    %575 = vmatpush1.xpose.msra.mxu0 0.0
    %576 = vmatprep.subr.mxu0 0.0
    %577 = vmatpush1.xpose.msra.mxu0 0.0
    %578 = vmatprep.subr.mxu0 0.0
    %579 = vmatpush1.xpose.msra.mxu0 0.0
    %580 = vmatprep.subr.mxu0 0.0
    %581 = vmatpush1.xpose.msra.mxu0 0.0
    %582 = vmatprep.subr.mxu0 0.0
    %583 = vmatpush1.xpose.msra.mxu0 0.0
    %584 = vmatprep.subr.mxu0 0.0
    %585 = vmatpush1.xpose.msra.mxu0 0.0
    %586 = vmatprep.subr.mxu0 0.0
    %587 = vmatpush1.xpose.msra.mxu0 0.0
    %588 = vmatprep.subr.mxu0 0.0
    %589 = vmatpush1.xpose.msra.mxu0 0.0
    %590 = vmatprep.subr.mxu0 0.0
    %591 = vmatpush1.xpose.msra.mxu0 0.0
    %592 = vmatprep.subr.mxu0 0.0
    %593 = vmatpush1.xpose.msra.mxu0 0.0
    %594 = vmatprep.subr.mxu0 0.0
    %595 = vmatpush1.xpose.msra.mxu0 0.0
    %596 = vmatprep.subr.mxu0 0.0
    %597 = vmatpush1.xpose.msra.mxu0 0.0
    %598 = vmatprep.subr.mxu0 0.0
    %599 = vmatpush1.xpose.msra.mxu0 0.0
    %600 = vmatprep.subr.mxu0 0.0
    %601 = vmatpush1.xpose.msra.mxu0 0.0
    %602 = vmatprep.subr.mxu0 0.0
    %603 = vmatpush1.xpose.msra.mxu0 0.0
    %604 = vmatprep.subr.mxu0 0.0
    %605 = vmatpush1.xpose.msra.mxu0 0.0
    %606 = vmatprep.subr.mxu0 0.0
    %607 = vmatpush1.xpose.msra.mxu0 0.0
    %608 = vmatprep.subr.mxu0 0.0
    %609 = vmatpush1.xpose.msra.mxu0 0.0
    %610 = vmatprep.subr.mxu0 0.0
    %611 = vmatpush1.xpose.msra.mxu0 0.0
    %612 = vmatprep.subr.mxu0 0.0
    %613 = vmatpush1.xpose.msra.mxu0 0.0
    %614 = vmatprep.subr.mxu0 0.0
    %615 = vmatpush1.xpose.msra.mxu0 0.0
    %616 = vmatprep.subr.mxu0 0.0
    %617 = vmatpush1.xpose.msra.mxu0 0.0
    %618 = vmatprep.subr.mxu0 0.0
    %619 = vmatpush1.xpose.msra.mxu0 0.0
    %620 = vmatprep.subr.mxu0 0.0
    %621 = vmatpush1.xpose.msra.mxu0 0.0
    %622 = vmatprep.subr.mxu0 0.0
    %623 = vmatpush1.xpose.msra.mxu0 0.0
    %624 = vmatprep.subr.mxu0 0.0
    %625 = vmatpush1.xpose.msra.mxu0 0.0
    %626 = vmatprep.subr.mxu0 0.0
    %627 = vmatpush1.xpose.msra.mxu0 0.0
    %628 = vmatprep.subr.mxu0 0.0
    %629 = vmatpush1.xpose.msra.mxu0 0.0
    %630 = vmatprep.mubr.f32.mxu0 0.0
    %631 = vmatmul.mubr.f32.gmra.mrb[0].mxu0 %v562
    %v632 = vpop.f32.mrb[0].mxu0
    %v633 = vadd.f32 0.0, %v632
    %v634 = vpop.f32.mrb[0].mxu0
    %635 = vdwg.mxu0
    %636 = vrot.lane.b32.xlu0 %v176, 96
    %v637 = vpop.permute.xlu0 %636
    %v638 = vsel %vm181, %v176, 0
    %v640 = vsel %vm181, %v637, 0
    %642 = vmatprep.subr.mxu0 0.0
    %643 = vmatpush1.xpose.msra.mxu0 %v640
    %644 = vmatprep.subr.mxu0 0.0
    %645 = vmatpush1.xpose.msra.mxu0 0.0
    %646 = vmatprep.subr.mxu0 0.0
    %647 = vmatpush1.xpose.msra.mxu0 0.0
    %648 = vmatprep.subr.mxu0 0.0
    %649 = vmatpush1.xpose.msra.mxu0 0.0
    %650 = vmatprep.subr.mxu0 0.0
    %651 = vmatpush1.xpose.msra.mxu0 0.0
    %652 = vmatprep.subr.mxu0 0.0
    %653 = vmatpush1.xpose.msra.mxu0 0.0
    %654 = vmatprep.subr.mxu0 0.0
    %655 = vmatpush1.xpose.msra.mxu0 0.0
    %656 = vmatprep.subr.mxu0 0.0
    %657 = vmatpush1.xpose.msra.mxu0 0.0
    %658 = vmatprep.subr.mxu0 0.0
    %659 = vmatpush1.xpose.msra.mxu0 0.0
    %660 = vmatprep.subr.mxu0 0.0
    %661 = vmatpush1.xpose.msra.mxu0 0.0
    %662 = vmatprep.subr.mxu0 0.0
    %663 = vmatpush1.xpose.msra.mxu0 0.0
    %664 = vmatprep.subr.mxu0 0.0
    %665 = vmatpush1.xpose.msra.mxu0 0.0
    %666 = vmatprep.subr.mxu0 0.0
    %667 = vmatpush1.xpose.msra.mxu0 0.0
    %668 = vmatprep.subr.mxu0 0.0
    %669 = vmatpush1.xpose.msra.mxu0 0.0
    %670 = vmatprep.subr.mxu0 0.0
    %671 = vmatpush1.xpose.msra.mxu0 0.0
    %672 = vmatprep.subr.mxu0 0.0
    %673 = vmatpush1.xpose.msra.mxu0 0.0
    %674 = vmatprep.subr.mxu0 0.0
    %675 = vmatpush1.xpose.msra.mxu0 0.0
    %676 = vmatprep.subr.mxu0 0.0
    %677 = vmatpush1.xpose.msra.mxu0 0.0
    %678 = vmatprep.subr.mxu0 0.0
    %679 = vmatpush1.xpose.msra.mxu0 0.0
    %680 = vmatprep.subr.mxu0 0.0
    %681 = vmatpush1.xpose.msra.mxu0 0.0
    %682 = vmatprep.subr.mxu0 0.0
    %683 = vmatpush1.xpose.msra.mxu0 0.0
    %684 = vmatprep.subr.mxu0 0.0
    %685 = vmatpush1.xpose.msra.mxu0 0.0
    %686 = vmatprep.subr.mxu0 0.0
    %687 = vmatpush1.xpose.msra.mxu0 0.0
    %688 = vmatprep.subr.mxu0 0.0
    %689 = vmatpush1.xpose.msra.mxu0 0.0
    %690 = vmatprep.subr.mxu0 0.0
    %691 = vmatpush1.xpose.msra.mxu0 0.0
    %692 = vmatprep.subr.mxu0 0.0
    %693 = vmatpush1.xpose.msra.mxu0 0.0
    %694 = vmatprep.subr.mxu0 0.0
    %695 = vmatpush1.xpose.msra.mxu0 0.0
    %696 = vmatprep.subr.mxu0 0.0
    %697 = vmatpush1.xpose.msra.mxu0 0.0
    %698 = vmatprep.subr.mxu0 0.0
    %699 = vmatpush1.xpose.msra.mxu0 0.0
    %700 = vmatprep.subr.mxu0 0.0
    %701 = vmatpush1.xpose.msra.mxu0 0.0
    %702 = vmatprep.subr.mxu0 0.0
    %703 = vmatpush1.xpose.msra.mxu0 0.0
    %704 = vmatprep.subr.mxu0 0.0
    %705 = vmatpush1.xpose.msra.mxu0 0.0
    %706 = vmatprep.mubr.f32.mxu0 0.0
    %707 = vmatmul.mubr.f32.gmra.mrb[0].mxu0 %v638
    %v708 = vpop.f32.mrb[0].mxu0
    %v709 = vadd.f32 0.0, %v708
    %v710 = vpop.f32.mrb[0].mxu0
    %711 = vdwg.mxu0
    %712 = vrot.lane.b32.xlu0 %v178, 96
    %v713 = vpop.permute.xlu0 %712
    %v714 = vsel %vm181, %v178, 0
    %v716 = vsel %vm181, %v713, 0
    %718 = vmatprep.subr.mxu0 0.0
    %719 = vmatpush1.xpose.msra.mxu0 %v716
    %720 = vmatprep.subr.mxu0 0.0
    %721 = vmatpush1.xpose.msra.mxu0 0.0
    %722 = vmatprep.subr.mxu0 0.0
    %723 = vmatpush1.xpose.msra.mxu0 0.0
    %724 = vmatprep.subr.mxu0 0.0
    %725 = vmatpush1.xpose.msra.mxu0 0.0
    %726 = vmatprep.subr.mxu0 0.0
    %727 = vmatpush1.xpose.msra.mxu0 0.0
    %728 = vmatprep.subr.mxu0 0.0
    %729 = vmatpush1.xpose.msra.mxu0 0.0
    %730 = vmatprep.subr.mxu0 0.0
    %731 = vmatpush1.xpose.msra.mxu0 0.0
    %732 = vmatprep.subr.mxu0 0.0
    %733 = vmatpush1.xpose.msra.mxu0 0.0
    %734 = vmatprep.subr.mxu0 0.0
    %735 = vmatpush1.xpose.msra.mxu0 0.0
    %736 = vmatprep.subr.mxu0 0.0
    %737 = vmatpush1.xpose.msra.mxu0 0.0
    %738 = vmatprep.subr.mxu0 0.0
    %739 = vmatpush1.xpose.msra.mxu0 0.0
    %740 = vmatprep.subr.mxu0 0.0
    %741 = vmatpush1.xpose.msra.mxu0 0.0
    %742 = vmatprep.subr.mxu0 0.0
    %743 = vmatpush1.xpose.msra.mxu0 0.0
    %744 = vmatprep.subr.mxu0 0.0
    %745 = vmatpush1.xpose.msra.mxu0 0.0
    %746 = vmatprep.subr.mxu0 0.0
    %747 = vmatpush1.xpose.msra.mxu0 0.0
    %748 = vmatprep.subr.mxu0 0.0
    %749 = vmatpush1.xpose.msra.mxu0 0.0
    %750 = vmatprep.subr.mxu0 0.0
    %751 = vmatpush1.xpose.msra.mxu0 0.0
    %752 = vmatprep.subr.mxu0 0.0
    %753 = vmatpush1.xpose.msra.mxu0 0.0
    %754 = vmatprep.subr.mxu0 0.0
    %755 = vmatpush1.xpose.msra.mxu0 0.0
    %756 = vmatprep.subr.mxu0 0.0
    %757 = vmatpush1.xpose.msra.mxu0 0.0
    %758 = vmatprep.subr.mxu0 0.0
    %759 = vmatpush1.xpose.msra.mxu0 0.0
    %760 = vmatprep.subr.mxu0 0.0
    %761 = vmatpush1.xpose.msra.mxu0 0.0
    %762 = vmatprep.subr.mxu0 0.0
    %763 = vmatpush1.xpose.msra.mxu0 0.0
    %764 = vmatprep.subr.mxu0 0.0
    %765 = vmatpush1.xpose.msra.mxu0 0.0
    %766 = vmatprep.subr.mxu0 0.0
    %767 = vmatpush1.xpose.msra.mxu0 0.0
    %768 = vmatprep.subr.mxu0 0.0
    %769 = vmatpush1.xpose.msra.mxu0 0.0
    %770 = vmatprep.subr.mxu0 0.0
    %771 = vmatpush1.xpose.msra.mxu0 0.0
    %772 = vmatprep.subr.mxu0 0.0
    %773 = vmatpush1.xpose.msra.mxu0 0.0
    %774 = vmatprep.subr.mxu0 0.0
    %775 = vmatpush1.xpose.msra.mxu0 0.0
    %776 = vmatprep.subr.mxu0 0.0
    %777 = vmatpush1.xpose.msra.mxu0 0.0
    %778 = vmatprep.subr.mxu0 0.0
    %779 = vmatpush1.xpose.msra.mxu0 0.0
    %780 = vmatprep.subr.mxu0 0.0
    %781 = vmatpush1.xpose.msra.mxu0 0.0
    %782 = vmatprep.mubr.f32.mxu0 0.0
    %783 = vmatmul.mubr.f32.gmra.mrb[0].mxu0 %v714
    %v784 = vpop.f32.mrb[0].mxu0
    %v785 = vadd.f32 0.0, %v784
    %v786 = vpop.f32.mrb[0].mxu0
    %787 = vdwg.mxu0
    %v788 = vmul.f32 %v253, 0.17677669
    %v789 = vmul.f32 %v329, 0.17677669
    %v790 = vmul.f32 %v405, 0.17677669
    %v791 = vmul.f32 %v481, 0.17677669
    %v792 = vmul.f32 %v557, 0.17677669
    %v793 = vmul.f32 %v633, 0.17677669
    %v794 = vmul.f32 %v709, 0.17677669
    %v795 = vmul.f32 %v785, 0.17677669
    %v796 = vsel %vm39, %v788, -1e+30
    %v797 = vsel %vm39, %v789, -1e+30
    %v798 = vsel %vm39, %v790, -1e+30
    %v799 = vsel %vm39, %v791, -1e+30
    %v800 = vsel %vm39, %v792, -1e+30
    %v801 = vsel %vm39, %v793, -1e+30
    %v802 = vsel %vm39, %v794, -1e+30
    %v803 = vsel %vm39, %v795, -1e+30
    %v804 = vsel %vm181, %v796, -inf
    %805 = vmax.xlane.f32.xlu0 %v804
    %v806 = vpop.xlane.xlu0 %805
    %v807 = vsel %vm181, %v797, -inf
    %808 = vmax.xlane.f32.xlu0 %v807
    %v809 = vpop.xlane.xlu0 %808
    %v810 = vsel %vm181, %v798, -inf
    %811 = vmax.xlane.f32.xlu0 %v810
    %v812 = vpop.xlane.xlu0 %811
    %v813 = vsel %vm181, %v799, -inf
    %814 = vmax.xlane.f32.xlu0 %v813
    %v815 = vpop.xlane.xlu0 %814
    %v816 = vsel %vm181, %v800, -inf
    %817 = vmax.xlane.f32.xlu0 %v816
    %v818 = vpop.xlane.xlu0 %817
    %v819 = vsel %vm181, %v801, -inf
    %820 = vmax.xlane.f32.xlu0 %v819
    %v821 = vpop.xlane.xlu0 %820
    %v822 = vsel %vm181, %v802, -inf
    %823 = vmax.xlane.f32.xlu0 %v822
    %v824 = vpop.xlane.xlu0 %823
    %v825 = vsel %vm181, %v803, -inf
    %826 = vmax.xlane.f32.xlu0 %v825
    %v827 = vpop.xlane.xlu0 %826
    %v828 = vsub.f32 %v796, %v806
    %v829 = vsub.f32 %v797, %v809
    %v830 = vsub.f32 %v798, %v812
    %v831 = vsub.f32 %v799, %v815
    %v832 = vsub.f32 %v800, %v818
    %v833 = vsub.f32 %v801, %v821
    %v834 = vsub.f32 %v802, %v824
    %v835 = vsub.f32 %v803, %v827
    %v836 = vmul.f32 %v828, 1.442695
    %v837 = vpow.pop %v836
    %v838 = vmul.f32 %v829, 1.442695
    %v839 = vpow.pop %v838
    %v840 = vmul.f32 %v830, 1.442695
    %v841 = vpow.pop %v840
    %v842 = vmul.f32 %v831, 1.442695
    %v843 = vpow.pop %v842
    %v844 = vmul.f32 %v832, 1.442695
    %v845 = vpow.pop %v844
    %v846 = vmul.f32 %v833, 1.442695
    %v847 = vpow.pop %v846
    %v848 = vmul.f32 %v834, 1.442695
    %v849 = vpow.pop %v848
    %v850 = vmul.f32 %v835, 1.442695
    %v851 = vpow.pop %v850
    %v852 = vsel %vm181, %v837, 0.0
    %853 = vadd.xlane.f32.xlu0 %v852
    %v854 = vpop.xlane.xlu0 %853
    %v855 = vsel %vm181, %v839, 0.0
    %856 = vadd.xlane.f32.xlu0 %v855
    %v857 = vpop.xlane.xlu0 %856
    %v858 = vsel %vm181, %v841, 0.0
    %859 = vadd.xlane.f32.xlu0 %v858
    %v860 = vpop.xlane.xlu0 %859
    %v861 = vsel %vm181, %v843, 0.0
    %862 = vadd.xlane.f32.xlu0 %v861
    %v863 = vpop.xlane.xlu0 %862
    %v864 = vsel %vm181, %v845, 0.0
    %865 = vadd.xlane.f32.xlu0 %v864
    %v866 = vpop.xlane.xlu0 %865
    %v867 = vsel %vm181, %v847, 0.0
    %868 = vadd.xlane.f32.xlu0 %v867
    %v869 = vpop.xlane.xlu0 %868
    %v870 = vsel %vm181, %v849, 0.0
    %871 = vadd.xlane.f32.xlu0 %v870
    %v872 = vpop.xlane.xlu0 %871
    %v873 = vsel %vm181, %v851, 0.0
    %874 = vadd.xlane.f32.xlu0 %v873
    %v875 = vpop.xlane.xlu0 %874
    %v876 = vrcp.pop %v854
    %v877 = vrcp.pop %v857
    %v878 = vrcp.pop %v860
    %v879 = vrcp.pop %v863
    %v880 = vrcp.pop %v866
    %v881 = vrcp.pop %v869
    %v882 = vrcp.pop %v872
    %v883 = vrcp.pop %v875
    %v884 = vmul.f32 %v837, %v876
    %v885 = vmul.f32 %v839, %v877
    %v886 = vmul.f32 %v841, %v878
    %v887 = vmul.f32 %v843, %v879
    %v888 = vmul.f32 %v845, %v880
    %v889 = vmul.f32 %v847, %v881
    %v890 = vmul.f32 %v849, %v882
    %v891 = vmul.f32 %v851, %v883
    %892 = vrot.lane.b32.xlu0 %v157, 64
    %v893 = vpop.permute.xlu0 %892
    %v896 = vsel %vm181, %v884, 0
    %898 = vmatprep.subr.mxu0 0.0
    %899 = vmatpush1.msra.mxu0 %v893
    %900 = vmatprep.subr.mxu0 0.0
    %901 = vmatpush1.msra.mxu0 0.0
    %902 = vmatprep.subr.mxu0 0.0
    %903 = vmatpush1.msra.mxu0 0.0
    %904 = vmatprep.subr.mxu0 0.0
    %905 = vmatpush1.msra.mxu0 0.0
    %906 = vmatprep.subr.mxu0 0.0
    %907 = vmatpush1.msra.mxu0 0.0
    %908 = vmatprep.subr.mxu0 0.0
    %909 = vmatpush1.msra.mxu0 0.0
    %910 = vmatprep.subr.mxu0 0.0
    %911 = vmatpush1.msra.mxu0 0.0
    %912 = vmatprep.subr.mxu0 0.0
    %913 = vmatpush1.msra.mxu0 0.0
    %914 = vmatprep.subr.mxu0 0.0
    %915 = vmatpush1.msra.mxu0 0.0
    %916 = vmatprep.subr.mxu0 0.0
    %917 = vmatpush1.msra.mxu0 0.0
    %918 = vmatprep.subr.mxu0 0.0
    %919 = vmatpush1.msra.mxu0 0.0
    %920 = vmatprep.subr.mxu0 0.0
    %921 = vmatpush1.msra.mxu0 0.0
    %922 = vmatprep.subr.mxu0 0.0
    %923 = vmatpush1.msra.mxu0 0.0
    %924 = vmatprep.subr.mxu0 0.0
    %925 = vmatpush1.msra.mxu0 0.0
    %926 = vmatprep.subr.mxu0 0.0
    %927 = vmatpush1.msra.mxu0 0.0
    %928 = vmatprep.subr.mxu0 0.0
    %929 = vmatpush1.msra.mxu0 0.0
    %930 = vmatprep.subr.mxu0 0.0
    %931 = vmatpush1.msra.mxu0 0.0
    %932 = vmatprep.subr.mxu0 0.0
    %933 = vmatpush1.msra.mxu0 0.0
    %934 = vmatprep.subr.mxu0 0.0
    %935 = vmatpush1.msra.mxu0 0.0
    %936 = vmatprep.subr.mxu0 0.0
    %937 = vmatpush1.msra.mxu0 0.0
    %938 = vmatprep.subr.mxu0 0.0
    %939 = vmatpush1.msra.mxu0 0.0
    %940 = vmatprep.subr.mxu0 0.0
    %941 = vmatpush1.msra.mxu0 0.0
    %942 = vmatprep.subr.mxu0 0.0
    %943 = vmatpush1.msra.mxu0 0.0
    %944 = vmatprep.subr.mxu0 0.0
    %945 = vmatpush1.msra.mxu0 0.0
    %946 = vmatprep.subr.mxu0 0.0
    %947 = vmatpush1.msra.mxu0 0.0
    %948 = vmatprep.subr.mxu0 0.0
    %949 = vmatpush1.msra.mxu0 0.0
    %950 = vmatprep.subr.mxu0 0.0
    %951 = vmatpush1.msra.mxu0 0.0
    %952 = vmatprep.subr.mxu0 0.0
    %953 = vmatpush1.msra.mxu0 0.0
    %954 = vmatprep.subr.mxu0 0.0
    %955 = vmatpush1.msra.mxu0 0.0
    %956 = vmatprep.subr.mxu0 0.0
    %957 = vmatpush1.msra.mxu0 0.0
    %958 = vmatprep.subr.mxu0 0.0
    %959 = vmatpush1.msra.mxu0 0.0
    %960 = vmatprep.subr.mxu0 0.0
    %961 = vmatpush1.msra.mxu0 0.0
    %962 = vmatprep.mubr.f32.mxu0 0.0
    %963 = vmatmul.mubr.f32.gmra.mrb[0].mxu0 %v896
    %v964 = vpop.f32.mrb[0].mxu0
    %v965 = vadd.f32 0.0, %v964
    %v966 = vpop.f32.mrb[0].mxu0
    %967 = vdwg.mxu0
    %968 = vrot.lane.b32.xlu0 %v162, 64
    %v969 = vpop.permute.xlu0 %968
    %v972 = vsel %vm181, %v885, 0
    %974 = vmatprep.subr.mxu0 0.0
    %975 = vmatpush1.msra.mxu0 %v969
    %976 = vmatprep.subr.mxu0 0.0
    %977 = vmatpush1.msra.mxu0 0.0
    %978 = vmatprep.subr.mxu0 0.0
    %979 = vmatpush1.msra.mxu0 0.0
    %980 = vmatprep.subr.mxu0 0.0
    %981 = vmatpush1.msra.mxu0 0.0
    %982 = vmatprep.subr.mxu0 0.0
    %983 = vmatpush1.msra.mxu0 0.0
    %984 = vmatprep.subr.mxu0 0.0
    %985 = vmatpush1.msra.mxu0 0.0
    %986 = vmatprep.subr.mxu0 0.0
    %987 = vmatpush1.msra.mxu0 0.0
    %988 = vmatprep.subr.mxu0 0.0
    %989 = vmatpush1.msra.mxu0 0.0
    %990 = vmatprep.subr.mxu0 0.0
    %991 = vmatpush1.msra.mxu0 0.0
    %992 = vmatprep.subr.mxu0 0.0
    %993 = vmatpush1.msra.mxu0 0.0
    %994 = vmatprep.subr.mxu0 0.0
    %995 = vmatpush1.msra.mxu0 0.0
    %996 = vmatprep.subr.mxu0 0.0
    %997 = vmatpush1.msra.mxu0 0.0
    %998 = vmatprep.subr.mxu0 0.0
    %999 = vmatpush1.msra.mxu0 0.0
    %1000 = vmatprep.subr.mxu0 0.0
    %1001 = vmatpush1.msra.mxu0 0.0
    %1002 = vmatprep.subr.mxu0 0.0
    %1003 = vmatpush1.msra.mxu0 0.0
    %1004 = vmatprep.subr.mxu0 0.0
    %1005 = vmatpush1.msra.mxu0 0.0
    %1006 = vmatprep.subr.mxu0 0.0
    %1007 = vmatpush1.msra.mxu0 0.0
    %1008 = vmatprep.subr.mxu0 0.0
    %1009 = vmatpush1.msra.mxu0 0.0
    %1010 = vmatprep.subr.mxu0 0.0
    %1011 = vmatpush1.msra.mxu0 0.0
    %1012 = vmatprep.subr.mxu0 0.0
    %1013 = vmatpush1.msra.mxu0 0.0
    %1014 = vmatprep.subr.mxu0 0.0
    %1015 = vmatpush1.msra.mxu0 0.0
    %1016 = vmatprep.subr.mxu0 0.0
    %1017 = vmatpush1.msra.mxu0 0.0
    %1018 = vmatprep.subr.mxu0 0.0
    %1019 = vmatpush1.msra.mxu0 0.0
    %1020 = vmatprep.subr.mxu0 0.0
    %1021 = vmatpush1.msra.mxu0 0.0
    %1022 = vmatprep.subr.mxu0 0.0
    %1023 = vmatpush1.msra.mxu0 0.0
    %1024 = vmatprep.subr.mxu0 0.0
    %1025 = vmatpush1.msra.mxu0 0.0
    %1026 = vmatprep.subr.mxu0 0.0
    %1027 = vmatpush1.msra.mxu0 0.0
    %1028 = vmatprep.subr.mxu0 0.0
    %1029 = vmatpush1.msra.mxu0 0.0
    %1030 = vmatprep.subr.mxu0 0.0
    %1031 = vmatpush1.msra.mxu0 0.0
    %1032 = vmatprep.subr.mxu0 0.0
    %1033 = vmatpush1.msra.mxu0 0.0
    %1034 = vmatprep.subr.mxu0 0.0
    %1035 = vmatpush1.msra.mxu0 0.0
    %1036 = vmatprep.subr.mxu0 0.0
    %1037 = vmatpush1.msra.mxu0 0.0
    %1038 = vmatprep.mubr.f32.mxu0 0.0
    %1039 = vmatmul.mubr.f32.gmra.mrb[0].mxu0 %v972
    %v1040 = vpop.f32.mrb[0].mxu0
    %v1041 = vadd.f32 0.0, %v1040
    %v1042 = vpop.f32.mrb[0].mxu0
    %1043 = vdwg.mxu0
    %1044 = vrot.lane.b32.xlu0 %v168, 64
    %v1045 = vpop.permute.xlu0 %1044
    %v1048 = vsel %vm181, %v886, 0
    %1050 = vmatprep.subr.mxu0 0.0
    %1051 = vmatpush1.msra.mxu0 %v1045
    %1052 = vmatprep.subr.mxu0 0.0
    %1053 = vmatpush1.msra.mxu0 0.0
    %1054 = vmatprep.subr.mxu0 0.0
    %1055 = vmatpush1.msra.mxu0 0.0
    %1056 = vmatprep.subr.mxu0 0.0
    %1057 = vmatpush1.msra.mxu0 0.0
    %1058 = vmatprep.subr.mxu0 0.0
    %1059 = vmatpush1.msra.mxu0 0.0
    %1060 = vmatprep.subr.mxu0 0.0
    %1061 = vmatpush1.msra.mxu0 0.0
    %1062 = vmatprep.subr.mxu0 0.0
    %1063 = vmatpush1.msra.mxu0 0.0
    %1064 = vmatprep.subr.mxu0 0.0
    %1065 = vmatpush1.msra.mxu0 0.0
    %1066 = vmatprep.subr.mxu0 0.0
    %1067 = vmatpush1.msra.mxu0 0.0
    %1068 = vmatprep.subr.mxu0 0.0
    %1069 = vmatpush1.msra.mxu0 0.0
    %1070 = vmatprep.subr.mxu0 0.0
    %1071 = vmatpush1.msra.mxu0 0.0
    %1072 = vmatprep.subr.mxu0 0.0
    %1073 = vmatpush1.msra.mxu0 0.0
    %1074 = vmatprep.subr.mxu0 0.0
    %1075 = vmatpush1.msra.mxu0 0.0
    %1076 = vmatprep.subr.mxu0 0.0
    %1077 = vmatpush1.msra.mxu0 0.0
    %1078 = vmatprep.subr.mxu0 0.0
    %1079 = vmatpush1.msra.mxu0 0.0
    %1080 = vmatprep.subr.mxu0 0.0
    %1081 = vmatpush1.msra.mxu0 0.0
    %1082 = vmatprep.subr.mxu0 0.0
    %1083 = vmatpush1.msra.mxu0 0.0
    %1084 = vmatprep.subr.mxu0 0.0
    %1085 = vmatpush1.msra.mxu0 0.0
    %1086 = vmatprep.subr.mxu0 0.0
    %1087 = vmatpush1.msra.mxu0 0.0
    %1088 = vmatprep.subr.mxu0 0.0
    %1089 = vmatpush1.msra.mxu0 0.0
    %1090 = vmatprep.subr.mxu0 0.0
    %1091 = vmatpush1.msra.mxu0 0.0
    %1092 = vmatprep.subr.mxu0 0.0
    %1093 = vmatpush1.msra.mxu0 0.0
    %1094 = vmatprep.subr.mxu0 0.0
    %1095 = vmatpush1.msra.mxu0 0.0
    %1096 = vmatprep.subr.mxu0 0.0
    %1097 = vmatpush1.msra.mxu0 0.0
    %1098 = vmatprep.subr.mxu0 0.0
    %1099 = vmatpush1.msra.mxu0 0.0
    %1100 = vmatprep.subr.mxu0 0.0
    %1101 = vmatpush1.msra.mxu0 0.0
    %1102 = vmatprep.subr.mxu0 0.0
    %1103 = vmatpush1.msra.mxu0 0.0
    %1104 = vmatprep.subr.mxu0 0.0
    %1105 = vmatpush1.msra.mxu0 0.0
    %1106 = vmatprep.subr.mxu0 0.0
    %1107 = vmatpush1.msra.mxu0 0.0
    %1108 = vmatprep.subr.mxu0 0.0
    %1109 = vmatpush1.msra.mxu0 0.0
    %1110 = vmatprep.subr.mxu0 0.0
    %1111 = vmatpush1.msra.mxu0 0.0
    %1112 = vmatprep.subr.mxu0 0.0
    %1113 = vmatpush1.msra.mxu0 0.0
    %1114 = vmatprep.mubr.f32.mxu0 0.0
    %1115 = vmatmul.mubr.f32.gmra.mrb[0].mxu0 %v1048
    %v1116 = vpop.f32.mrb[0].mxu0
    %v1117 = vadd.f32 0.0, %v1116
    %v1118 = vpop.f32.mrb[0].mxu0
    %1119 = vdwg.mxu0
    %1120 = vrot.lane.b32.xlu0 %v170, 64
    %v1121 = vpop.permute.xlu0 %1120
    %v1124 = vsel %vm181, %v887, 0
    %1126 = vmatprep.subr.mxu0 0.0
    %1127 = vmatpush1.msra.mxu0 %v1121
    %1128 = vmatprep.subr.mxu0 0.0
    %1129 = vmatpush1.msra.mxu0 0.0
    %1130 = vmatprep.subr.mxu0 0.0
    %1131 = vmatpush1.msra.mxu0 0.0
    %1132 = vmatprep.subr.mxu0 0.0
    %1133 = vmatpush1.msra.mxu0 0.0
    %1134 = vmatprep.subr.mxu0 0.0
    %1135 = vmatpush1.msra.mxu0 0.0
    %1136 = vmatprep.subr.mxu0 0.0
    %1137 = vmatpush1.msra.mxu0 0.0
    %1138 = vmatprep.subr.mxu0 0.0
    %1139 = vmatpush1.msra.mxu0 0.0
    %1140 = vmatprep.subr.mxu0 0.0
    %1141 = vmatpush1.msra.mxu0 0.0
    %1142 = vmatprep.subr.mxu0 0.0
    %1143 = vmatpush1.msra.mxu0 0.0
    %1144 = vmatprep.subr.mxu0 0.0
    %1145 = vmatpush1.msra.mxu0 0.0
    %1146 = vmatprep.subr.mxu0 0.0
    %1147 = vmatpush1.msra.mxu0 0.0
    %1148 = vmatprep.subr.mxu0 0.0
    %1149 = vmatpush1.msra.mxu0 0.0
    %1150 = vmatprep.subr.mxu0 0.0
    %1151 = vmatpush1.msra.mxu0 0.0
    %1152 = vmatprep.subr.mxu0 0.0
    %1153 = vmatpush1.msra.mxu0 0.0
    %1154 = vmatprep.subr.mxu0 0.0
    %1155 = vmatpush1.msra.mxu0 0.0
    %1156 = vmatprep.subr.mxu0 0.0
    %1157 = vmatpush1.msra.mxu0 0.0
    %1158 = vmatprep.subr.mxu0 0.0
    %1159 = vmatpush1.msra.mxu0 0.0
    %1160 = vmatprep.subr.mxu0 0.0
    %1161 = vmatpush1.msra.mxu0 0.0
    %1162 = vmatprep.subr.mxu0 0.0
    %1163 = vmatpush1.msra.mxu0 0.0
    %1164 = vmatprep.subr.mxu0 0.0
    %1165 = vmatpush1.msra.mxu0 0.0
    %1166 = vmatprep.subr.mxu0 0.0
    %1167 = vmatpush1.msra.mxu0 0.0
    %1168 = vmatprep.subr.mxu0 0.0
    %1169 = vmatpush1.msra.mxu0 0.0
    %1170 = vmatprep.subr.mxu0 0.0
    %1171 = vmatpush1.msra.mxu0 0.0
    %1172 = vmatprep.subr.mxu0 0.0
    %1173 = vmatpush1.msra.mxu0 0.0
    %1174 = vmatprep.subr.mxu0 0.0
    %1175 = vmatpush1.msra.mxu0 0.0
    %1176 = vmatprep.subr.mxu0 0.0
    %1177 = vmatpush1.msra.mxu0 0.0
    %1178 = vmatprep.subr.mxu0 0.0
    %1179 = vmatpush1.msra.mxu0 0.0
    %1180 = vmatprep.subr.mxu0 0.0
    %1181 = vmatpush1.msra.mxu0 0.0
    %1182 = vmatprep.subr.mxu0 0.0
    %1183 = vmatpush1.msra.mxu0 0.0
    %1184 = vmatprep.subr.mxu0 0.0
    %1185 = vmatpush1.msra.mxu0 0.0
    %1186 = vmatprep.subr.mxu0 0.0
    %1187 = vmatpush1.msra.mxu0 0.0
    %1188 = vmatprep.subr.mxu0 0.0
    %1189 = vmatpush1.msra.mxu0 0.0
    %1190 = vmatprep.mubr.f32.mxu0 0.0
    %1191 = vmatmul.mubr.f32.gmra.mrb[0].mxu0 %v1124
    %v1192 = vpop.f32.mrb[0].mxu0
    %v1193 = vadd.f32 0.0, %v1192
    %v1194 = vpop.f32.mrb[0].mxu0
    %1195 = vdwg.mxu0
    %1196 = vrot.lane.b32.xlu0 %v172, 64
    %v1197 = vpop.permute.xlu0 %1196
    %v1200 = vsel %vm181, %v888, 0
    %1202 = vmatprep.subr.mxu0 0.0
    %1203 = vmatpush1.msra.mxu0 %v1197
    %1204 = vmatprep.subr.mxu0 0.0
    %1205 = vmatpush1.msra.mxu0 0.0
    %1206 = vmatprep.subr.mxu0 0.0
    %1207 = vmatpush1.msra.mxu0 0.0
    %1208 = vmatprep.subr.mxu0 0.0
    %1209 = vmatpush1.msra.mxu0 0.0
    %1210 = vmatprep.subr.mxu0 0.0
    %1211 = vmatpush1.msra.mxu0 0.0
    %1212 = vmatprep.subr.mxu0 0.0
    %1213 = vmatpush1.msra.mxu0 0.0
    %1214 = vmatprep.subr.mxu0 0.0
    %1215 = vmatpush1.msra.mxu0 0.0
    %1216 = vmatprep.subr.mxu0 0.0
    %1217 = vmatpush1.msra.mxu0 0.0
    %1218 = vmatprep.subr.mxu0 0.0
    %1219 = vmatpush1.msra.mxu0 0.0
    %1220 = vmatprep.subr.mxu0 0.0
    %1221 = vmatpush1.msra.mxu0 0.0
    %1222 = vmatprep.subr.mxu0 0.0
    %1223 = vmatpush1.msra.mxu0 0.0
    %1224 = vmatprep.subr.mxu0 0.0
    %1225 = vmatpush1.msra.mxu0 0.0
    %1226 = vmatprep.subr.mxu0 0.0
    %1227 = vmatpush1.msra.mxu0 0.0
    %1228 = vmatprep.subr.mxu0 0.0
    %1229 = vmatpush1.msra.mxu0 0.0
    %1230 = vmatprep.subr.mxu0 0.0
    %1231 = vmatpush1.msra.mxu0 0.0
    %1232 = vmatprep.subr.mxu0 0.0
    %1233 = vmatpush1.msra.mxu0 0.0
    %1234 = vmatprep.subr.mxu0 0.0
    %1235 = vmatpush1.msra.mxu0 0.0
    %1236 = vmatprep.subr.mxu0 0.0
    %1237 = vmatpush1.msra.mxu0 0.0
    %1238 = vmatprep.subr.mxu0 0.0
    %1239 = vmatpush1.msra.mxu0 0.0
    %1240 = vmatprep.subr.mxu0 0.0
    %1241 = vmatpush1.msra.mxu0 0.0
    %1242 = vmatprep.subr.mxu0 0.0
    %1243 = vmatpush1.msra.mxu0 0.0
    %1244 = vmatprep.subr.mxu0 0.0
    %1245 = vmatpush1.msra.mxu0 0.0
    %1246 = vmatprep.subr.mxu0 0.0
    %1247 = vmatpush1.msra.mxu0 0.0
    %1248 = vmatprep.subr.mxu0 0.0
    %1249 = vmatpush1.msra.mxu0 0.0
    %1250 = vmatprep.subr.mxu0 0.0
    %1251 = vmatpush1.msra.mxu0 0.0
    %1252 = vmatprep.subr.mxu0 0.0
    %1253 = vmatpush1.msra.mxu0 0.0
    %1254 = vmatprep.subr.mxu0 0.0
    %1255 = vmatpush1.msra.mxu0 0.0
    %1256 = vmatprep.subr.mxu0 0.0
    %1257 = vmatpush1.msra.mxu0 0.0
    %1258 = vmatprep.subr.mxu0 0.0
    %1259 = vmatpush1.msra.mxu0 0.0
    %1260 = vmatprep.subr.mxu0 0.0
    %1261 = vmatpush1.msra.mxu0 0.0
    %1262 = vmatprep.subr.mxu0 0.0
    %1263 = vmatpush1.msra.mxu0 0.0
    %1264 = vmatprep.subr.mxu0 0.0
    %1265 = vmatpush1.msra.mxu0 0.0
    %1266 = vmatprep.mubr.f32.mxu0 0.0
    %1267 = vmatmul.mubr.f32.gmra.mrb[0].mxu0 %v1200
    %v1268 = vpop.f32.mrb[0].mxu0
    %v1269 = vadd.f32 0.0, %v1268
    %v1270 = vpop.f32.mrb[0].mxu0
    %1271 = vdwg.mxu0
    %1272 = vrot.lane.b32.xlu0 %v174, 64
    %v1273 = vpop.permute.xlu0 %1272
    %v1276 = vsel %vm181, %v889, 0
    %1278 = vmatprep.subr.mxu0 0.0
    %1279 = vmatpush1.msra.mxu0 %v1273
    %1280 = vmatprep.subr.mxu0 0.0
    %1281 = vmatpush1.msra.mxu0 0.0
    %1282 = vmatprep.subr.mxu0 0.0
    %1283 = vmatpush1.msra.mxu0 0.0
    %1284 = vmatprep.subr.mxu0 0.0
    %1285 = vmatpush1.msra.mxu0 0.0
    %1286 = vmatprep.subr.mxu0 0.0
    %1287 = vmatpush1.msra.mxu0 0.0
    %1288 = vmatprep.subr.mxu0 0.0
    %1289 = vmatpush1.msra.mxu0 0.0
    %1290 = vmatprep.subr.mxu0 0.0
    %1291 = vmatpush1.msra.mxu0 0.0
    %1292 = vmatprep.subr.mxu0 0.0
    %1293 = vmatpush1.msra.mxu0 0.0
    %1294 = vmatprep.subr.mxu0 0.0
    %1295 = vmatpush1.msra.mxu0 0.0
    %1296 = vmatprep.subr.mxu0 0.0
    %1297 = vmatpush1.msra.mxu0 0.0
    %1298 = vmatprep.subr.mxu0 0.0
    %1299 = vmatpush1.msra.mxu0 0.0
    %1300 = vmatprep.subr.mxu0 0.0
    %1301 = vmatpush1.msra.mxu0 0.0
    %1302 = vmatprep.subr.mxu0 0.0
    %1303 = vmatpush1.msra.mxu0 0.0
    %1304 = vmatprep.subr.mxu0 0.0
    %1305 = vmatpush1.msra.mxu0 0.0
    %1306 = vmatprep.subr.mxu0 0.0
    %1307 = vmatpush1.msra.mxu0 0.0
    %1308 = vmatprep.subr.mxu0 0.0
    %1309 = vmatpush1.msra.mxu0 0.0
    %1310 = vmatprep.subr.mxu0 0.0
    %1311 = vmatpush1.msra.mxu0 0.0
    %1312 = vmatprep.subr.mxu0 0.0
    %1313 = vmatpush1.msra.mxu0 0.0
    %1314 = vmatprep.subr.mxu0 0.0
    %1315 = vmatpush1.msra.mxu0 0.0
    %1316 = vmatprep.subr.mxu0 0.0
    %1317 = vmatpush1.msra.mxu0 0.0
    %1318 = vmatprep.subr.mxu0 0.0
    %1319 = vmatpush1.msra.mxu0 0.0
    %1320 = vmatprep.subr.mxu0 0.0
    %1321 = vmatpush1.msra.mxu0 0.0
    %1322 = vmatprep.subr.mxu0 0.0
    %1323 = vmatpush1.msra.mxu0 0.0
    %1324 = vmatprep.subr.mxu0 0.0
    %1325 = vmatpush1.msra.mxu0 0.0
    %1326 = vmatprep.subr.mxu0 0.0
    %1327 = vmatpush1.msra.mxu0 0.0
    %1328 = vmatprep.subr.mxu0 0.0
    %1329 = vmatpush1.msra.mxu0 0.0
    %1330 = vmatprep.subr.mxu0 0.0
    %1331 = vmatpush1.msra.mxu0 0.0
    %1332 = vmatprep.subr.mxu0 0.0
    %1333 = vmatpush1.msra.mxu0 0.0
    %1334 = vmatprep.subr.mxu0 0.0
    %1335 = vmatpush1.msra.mxu0 0.0
    %1336 = vmatprep.subr.mxu0 0.0
    %1337 = vmatpush1.msra.mxu0 0.0
    %1338 = vmatprep.subr.mxu0 0.0
    %1339 = vmatpush1.msra.mxu0 0.0
    %1340 = vmatprep.subr.mxu0 0.0
    %1341 = vmatpush1.msra.mxu0 0.0
    %1342 = vmatprep.mubr.f32.mxu0 0.0
    %1343 = vmatmul.mubr.f32.gmra.mrb[0].mxu0 %v1276
    %v1344 = vpop.f32.mrb[0].mxu0
    %v1345 = vadd.f32 0.0, %v1344
    %v1346 = vpop.f32.mrb[0].mxu0
    %1347 = vdwg.mxu0
    %1348 = vrot.lane.b32.xlu0 %v176, 64
    %v1349 = vpop.permute.xlu0 %1348
    %v1352 = vsel %vm181, %v890, 0
    %1354 = vmatprep.subr.mxu0 0.0
    %1355 = vmatpush1.msra.mxu0 %v1349
    %1356 = vmatprep.subr.mxu0 0.0
    %1357 = vmatpush1.msra.mxu0 0.0
    %1358 = vmatprep.subr.mxu0 0.0
    %1359 = vmatpush1.msra.mxu0 0.0
    %1360 = vmatprep.subr.mxu0 0.0
    %1361 = vmatpush1.msra.mxu0 0.0
    %1362 = vmatprep.subr.mxu0 0.0
    %1363 = vmatpush1.msra.mxu0 0.0
    %1364 = vmatprep.subr.mxu0 0.0
    %1365 = vmatpush1.msra.mxu0 0.0
    %1366 = vmatprep.subr.mxu0 0.0
    %1367 = vmatpush1.msra.mxu0 0.0
    %1368 = vmatprep.subr.mxu0 0.0
    %1369 = vmatpush1.msra.mxu0 0.0
    %1370 = vmatprep.subr.mxu0 0.0
    %1371 = vmatpush1.msra.mxu0 0.0
    %1372 = vmatprep.subr.mxu0 0.0
    %1373 = vmatpush1.msra.mxu0 0.0
    %1374 = vmatprep.subr.mxu0 0.0
    %1375 = vmatpush1.msra.mxu0 0.0
    %1376 = vmatprep.subr.mxu0 0.0
    %1377 = vmatpush1.msra.mxu0 0.0
    %1378 = vmatprep.subr.mxu0 0.0
    %1379 = vmatpush1.msra.mxu0 0.0
    %1380 = vmatprep.subr.mxu0 0.0
    %1381 = vmatpush1.msra.mxu0 0.0
    %1382 = vmatprep.subr.mxu0 0.0
    %1383 = vmatpush1.msra.mxu0 0.0
    %1384 = vmatprep.subr.mxu0 0.0
    %1385 = vmatpush1.msra.mxu0 0.0
    %1386 = vmatprep.subr.mxu0 0.0
    %1387 = vmatpush1.msra.mxu0 0.0
    %1388 = vmatprep.subr.mxu0 0.0
    %1389 = vmatpush1.msra.mxu0 0.0
    %1390 = vmatprep.subr.mxu0 0.0
    %1391 = vmatpush1.msra.mxu0 0.0
    %1392 = vmatprep.subr.mxu0 0.0
    %1393 = vmatpush1.msra.mxu0 0.0
    %1394 = vmatprep.subr.mxu0 0.0
    %1395 = vmatpush1.msra.mxu0 0.0
    %1396 = vmatprep.subr.mxu0 0.0
    %1397 = vmatpush1.msra.mxu0 0.0
    %1398 = vmatprep.subr.mxu0 0.0
    %1399 = vmatpush1.msra.mxu0 0.0
    %1400 = vmatprep.subr.mxu0 0.0
    %1401 = vmatpush1.msra.mxu0 0.0
    %1402 = vmatprep.subr.mxu0 0.0
    %1403 = vmatpush1.msra.mxu0 0.0
    %1404 = vmatprep.subr.mxu0 0.0
    %1405 = vmatpush1.msra.mxu0 0.0
    %1406 = vmatprep.subr.mxu0 0.0
    %1407 = vmatpush1.msra.mxu0 0.0
    %1408 = vmatprep.subr.mxu0 0.0
    %1409 = vmatpush1.msra.mxu0 0.0
    %1410 = vmatprep.subr.mxu0 0.0
    %1411 = vmatpush1.msra.mxu0 0.0
    %1412 = vmatprep.subr.mxu0 0.0
    %1413 = vmatpush1.msra.mxu0 0.0
    %1414 = vmatprep.subr.mxu0 0.0
    %1415 = vmatpush1.msra.mxu0 0.0
    %1416 = vmatprep.subr.mxu0 0.0
    %1417 = vmatpush1.msra.mxu0 0.0
    %1418 = vmatprep.mubr.f32.mxu0 0.0
    %1419 = vmatmul.mubr.f32.gmra.mrb[0].mxu0 %v1352
    %v1420 = vpop.f32.mrb[0].mxu0
    %v1421 = vadd.f32 0.0, %v1420
    %v1422 = vpop.f32.mrb[0].mxu0
    %1423 = vdwg.mxu0
    %1424 = vrot.lane.b32.xlu0 %v178, 64
    %v1425 = vpop.permute.xlu0 %1424
    %v1428 = vsel %vm181, %v891, 0
    %1430 = vmatprep.subr.mxu0 0.0
    %1431 = vmatpush1.msra.mxu0 %v1425
    %1432 = vmatprep.subr.mxu0 0.0
    %1433 = vmatpush1.msra.mxu0 0.0
    %1434 = vmatprep.subr.mxu0 0.0
    %1435 = vmatpush1.msra.mxu0 0.0
    %1436 = vmatprep.subr.mxu0 0.0
    %1437 = vmatpush1.msra.mxu0 0.0
    %1438 = vmatprep.subr.mxu0 0.0
    %1439 = vmatpush1.msra.mxu0 0.0
    %1440 = vmatprep.subr.mxu0 0.0
    %1441 = vmatpush1.msra.mxu0 0.0
    %1442 = vmatprep.subr.mxu0 0.0
    %1443 = vmatpush1.msra.mxu0 0.0
    %1444 = vmatprep.subr.mxu0 0.0
    %1445 = vmatpush1.msra.mxu0 0.0
    %1446 = vmatprep.subr.mxu0 0.0
    %1447 = vmatpush1.msra.mxu0 0.0
    %1448 = vmatprep.subr.mxu0 0.0
    %1449 = vmatpush1.msra.mxu0 0.0
    %1450 = vmatprep.subr.mxu0 0.0
    %1451 = vmatpush1.msra.mxu0 0.0
    %1452 = vmatprep.subr.mxu0 0.0
    %1453 = vmatpush1.msra.mxu0 0.0
    %1454 = vmatprep.subr.mxu0 0.0
    %1455 = vmatpush1.msra.mxu0 0.0
    %1456 = vmatprep.subr.mxu0 0.0
    %1457 = vmatpush1.msra.mxu0 0.0
    %1458 = vmatprep.subr.mxu0 0.0
    %1459 = vmatpush1.msra.mxu0 0.0
    %1460 = vmatprep.subr.mxu0 0.0
    %1461 = vmatpush1.msra.mxu0 0.0
    %1462 = vmatprep.subr.mxu0 0.0
    %1463 = vmatpush1.msra.mxu0 0.0
    %1464 = vmatprep.subr.mxu0 0.0
    %1465 = vmatpush1.msra.mxu0 0.0
    %1466 = vmatprep.subr.mxu0 0.0
    %1467 = vmatpush1.msra.mxu0 0.0
    %1468 = vmatprep.subr.mxu0 0.0
    %1469 = vmatpush1.msra.mxu0 0.0
    %1470 = vmatprep.subr.mxu0 0.0
    %1471 = vmatpush1.msra.mxu0 0.0
    %1472 = vmatprep.subr.mxu0 0.0
    %1473 = vmatpush1.msra.mxu0 0.0
    %1474 = vmatprep.subr.mxu0 0.0
    %1475 = vmatpush1.msra.mxu0 0.0
    %1476 = vmatprep.subr.mxu0 0.0
    %1477 = vmatpush1.msra.mxu0 0.0
    %1478 = vmatprep.subr.mxu0 0.0
    %1479 = vmatpush1.msra.mxu0 0.0
    %1480 = vmatprep.subr.mxu0 0.0
    %1481 = vmatpush1.msra.mxu0 0.0
    %1482 = vmatprep.subr.mxu0 0.0
    %1483 = vmatpush1.msra.mxu0 0.0
    %1484 = vmatprep.subr.mxu0 0.0
    %1485 = vmatpush1.msra.mxu0 0.0
    %1486 = vmatprep.subr.mxu0 0.0
    %1487 = vmatpush1.msra.mxu0 0.0
    %1488 = vmatprep.subr.mxu0 0.0
    %1489 = vmatpush1.msra.mxu0 0.0
    %1490 = vmatprep.subr.mxu0 0.0
    %1491 = vmatpush1.msra.mxu0 0.0
    %1492 = vmatprep.subr.mxu0 0.0
    %1493 = vmatpush1.msra.mxu0 0.0
    %1494 = vmatprep.mubr.f32.mxu0 0.0
    %1495 = vmatmul.mubr.f32.gmra.mrb[0].mxu0 %v1428
    %v1496 = vpop.f32.mrb[0].mxu0
    %v1497 = vadd.f32 0.0, %v1496
    %v1498 = vpop.f32.mrb[0].mxu0
    %1499 = vdwg.mxu0
    %1502 = vrot.lane.b32.xlu0 %v1117, 8
    %v1503 = vpop.permute.xlu0 %1502
    %1504 = vrot.lane.b32.xlu0 %v1193, 8
    %v1505 = vpop.permute.xlu0 %1504
    %1510 = vrot.lane.b32.xlu0 %v1269, 16
    %v1511 = vpop.permute.xlu0 %1510
    %1512 = vrot.lane.b32.xlu0 %v1345, 16
    %v1513 = vpop.permute.xlu0 %1512
    %1518 = vrot.lane.b32.xlu0 %v1421, 24
    %v1519 = vpop.permute.xlu0 %1518
    %1520 = vrot.lane.b32.xlu0 %v1497, 24
    %v1521 = vpop.permute.xlu0 %1520
    %v1524 = vsel %vm181, %v965, %v1503
    %v1525 = vsel %vm181, %v1041, %v1505
    %vm1526 = vcmask 130048
    %v1527 = vsel %vm1526, %v1524, %v1511
    %v1528 = vsel %vm1526, %v1525, %v1513
    %vm1529 = vcmask 195584
    %v1530 = vsel %vm1529, %v1527, %v1519
    %v1531 = vsel %vm1529, %v1528, %v1521
    %v1532 = vld [vmem:[%s2] sm:$0xff]
    %v1533 = vld [vmem:[%s2 + $0x8] sm:$0xff]
    %v1534 = vld [vmem:[%s2 + $0x10] sm:$0xff]
    %v1535 = vld [vmem:[%s2 + $0x18] sm:$0xff]
    %v1537 = vsel %vm40, %v1530, 0
    %v1540 = vsel %vm40, %v1531, 0
    %1542 = vmatprep.subr.mxu0 0.0
    %1543 = vmatpush1.msra.mxu0 %v1532
    %1544 = vmatprep.subr.mxu0 0.0
    %1545 = vmatpush1.msra.mxu0 %v1533
    %1546 = vmatprep.subr.mxu0 0.0
    %1547 = vmatpush1.msra.mxu0 %v1534
    %1548 = vmatprep.subr.mxu0 0.0
    %1549 = vmatpush1.msra.mxu0 %v1535
    %1550 = vmatprep.subr.mxu0 0.0
    %1551 = vmatpush1.msra.mxu0 0.0
    %1552 = vmatprep.subr.mxu0 0.0
    %1553 = vmatpush1.msra.mxu0 0.0
    %1554 = vmatprep.subr.mxu0 0.0
    %1555 = vmatpush1.msra.mxu0 0.0
    %1556 = vmatprep.subr.mxu0 0.0
    %1557 = vmatpush1.msra.mxu0 0.0
    %1558 = vmatprep.subr.mxu0 0.0
    %1559 = vmatpush1.msra.mxu0 0.0
    %1560 = vmatprep.subr.mxu0 0.0
    %1561 = vmatpush1.msra.mxu0 0.0
    %1562 = vmatprep.subr.mxu0 0.0
    %1563 = vmatpush1.msra.mxu0 0.0
    %1564 = vmatprep.subr.mxu0 0.0
    %1565 = vmatpush1.msra.mxu0 0.0
    %1566 = vmatprep.subr.mxu0 0.0
    %1567 = vmatpush1.msra.mxu0 0.0
    %1568 = vmatprep.subr.mxu0 0.0
    %1569 = vmatpush1.msra.mxu0 0.0
    %1570 = vmatprep.subr.mxu0 0.0
    %1571 = vmatpush1.msra.mxu0 0.0
    %1572 = vmatprep.subr.mxu0 0.0
    %1573 = vmatpush1.msra.mxu0 0.0
    %1574 = vmatprep.subr.mxu0 0.0
    %1575 = vmatpush1.msra.mxu0 0.0
    %1576 = vmatprep.subr.mxu0 0.0
    %1577 = vmatpush1.msra.mxu0 0.0
    %1578 = vmatprep.subr.mxu0 0.0
    %1579 = vmatpush1.msra.mxu0 0.0
    %1580 = vmatprep.subr.mxu0 0.0
    %1581 = vmatpush1.msra.mxu0 0.0
    %1582 = vmatprep.subr.mxu0 0.0
    %1583 = vmatpush1.msra.mxu0 0.0
    %1584 = vmatprep.subr.mxu0 0.0
    %1585 = vmatpush1.msra.mxu0 0.0
    %1586 = vmatprep.subr.mxu0 0.0
    %1587 = vmatpush1.msra.mxu0 0.0
    %1588 = vmatprep.subr.mxu0 0.0
    %1589 = vmatpush1.msra.mxu0 0.0
    %1590 = vmatprep.subr.mxu0 0.0
    %1591 = vmatpush1.msra.mxu0 0.0
    %1592 = vmatprep.subr.mxu0 0.0
    %1593 = vmatpush1.msra.mxu0 0.0
    %1594 = vmatprep.subr.mxu0 0.0
    %1595 = vmatpush1.msra.mxu0 0.0
    %1596 = vmatprep.subr.mxu0 0.0
    %1597 = vmatpush1.msra.mxu0 0.0
    %1598 = vmatprep.subr.mxu0 0.0
    %1599 = vmatpush1.msra.mxu0 0.0
    %1600 = vmatprep.subr.mxu0 0.0
    %1601 = vmatpush1.msra.mxu0 0.0
    %1602 = vmatprep.subr.mxu0 0.0
    %1603 = vmatpush1.msra.mxu0 0.0
    %1604 = vmatprep.subr.mxu0 0.0
    %1605 = vmatpush1.msra.mxu0 0.0
    %1606 = vmatprep.mubr.f32.mxu0 0.0
    %1607 = vmatmul.mubr.f32.gmra.mrb[0].mxu0 %v1537
    %v1608 = vpop.f32.mrb[0].mxu0
    %v1609 = vadd.f32 0.0, %v1608
    %v1610 = vpop.f32.mrb[0].mxu0
    %1611 = vmatprep.mubr.f32.mxu0 0.0
    %1612 = vmatmul.mubr.f32.gmra.mrb[0].mxu0 %v1540
    %v1613 = vpop.f32.mrb[0].mxu0
    %v1614 = vadd.f32 0.0, %v1613
    %v1615 = vpop.f32.mrb[0].mxu0
    %1616 = vdwg.mxu0
    %v1617 = vadd.f32 %v30, %v1609
    %v1618 = vadd.f32 %v31, %v1614
    %v1619 = vlaneseq
    %v1620 = vshrl.u32 %v1619, 7
    %v1621 = vsub.s32 4, %v1620
    %v1622 = vrot.slane %v32, %v1621
    %v1623 = vadd.f32 %v1617, %v1622
    %v1624 = vadd.f32 %v1618, %v1622
    %v1625 = vsel %vm40, %v1623, 0.0
    %1626 = vadd.xlane.f32.xlu0 %v1625
    %v1627 = vpop.xlane.xlu0 %1626
    %v1628 = vsel %vm40, %v1624, 0.0
    %1629 = vadd.xlane.f32.xlu0 %v1628
    %v1630 = vpop.xlane.xlu0 %1629
    %v1631 = vmul.f32 %v1627, %v47
    %v1632 = vmul.f32 %v1630, %v47
    %v1633 = vsub.f32 %v1623, %v1631
    %v1634 = vsub.f32 %v1624, %v1632
    %v1635 = vmul.f32 %v1633, %v1633
    %v1636 = vmul.f32 %v1634, %v1634
    %v1637 = vsel %vm40, %v1635, 0.0
    %1638 = vadd.xlane.f32.xlu0 %v1637
    %v1639 = vpop.xlane.xlu0 %1638
    %v1640 = vsel %vm40, %v1636, 0.0
    %1641 = vadd.xlane.f32.xlu0 %v1640
    %v1642 = vpop.xlane.xlu0 %1641
    %v1643 = vmul.f32 %v1639, %v47
    %v1644 = vmul.f32 %v1642, %v47
    %v1645 = vadd.f32 %v1643, 1e-05
    %v1646 = vadd.f32 %v1644, 1e-05
    %v1647 = vrsqrt.pop %v1645
    %v1648 = vrsqrt.pop %v1646
    %v1649 = vmul.f32 %v1633, %v1647
    %v1650 = vmul.f32 %v1634, %v1648
    %v1651 = vlaneseq
    %v1652 = vshrl.u32 %v1651, 7
    %v1653 = vsub.s32 2, %v1652
    %v1654 = vrot.slane %v32, %v1653
    %v1655 = vmul.f32 %v1649, %v1654
    %v1656 = vmul.f32 %v1650, %v1654
    %v1657 = vlaneseq
    %v1658 = vshrl.u32 %v1657, 7
    %v1659 = vsub.s32 3, %v1658
    %v1660 = vrot.slane %v32, %v1659
    %v1661 = vadd.f32 %v1655, %v1660
    %v1662 = vadd.f32 %v1656, %v1660
    %v1663 = vld [vmem:[%s3] sm:$0xff]
    %v1664 = vld [vmem:[%s3 + $0x8] sm:$0xff]
    %v1665 = vld [vmem:[%s3 + $0x10] sm:$0xff]
    %v1666 = vld [vmem:[%s3 + $0x18] sm:$0xff]
    %v1667 = vld [vmem:[%s4] sm:$0x1]
    %v1669 = vlaneseq
    %v1670 = vshrl.u32 %v1669, 7
    %v1671 = vsub.s32 0, %v1670
    %v1672 = vrot.slane %v1667, %v1671
    %v1675 = vsel %vm40, %v1661, 0
    %v1678 = vsel %vm40, %v1662, 0
    %1680 = vmatprep.subr.mxu0 0.0
    %1681 = vmatpush1.msra.mxu0 %v1663
    %1682 = vmatprep.subr.mxu0 0.0
    %1683 = vmatpush1.msra.mxu0 %v1664
    %1684 = vmatprep.subr.mxu0 0.0
    %1685 = vmatpush1.msra.mxu0 %v1665
    %1686 = vmatprep.subr.mxu0 0.0
    %1687 = vmatpush1.msra.mxu0 %v1666
    %1688 = vmatprep.subr.mxu0 0.0
    %1689 = vmatpush1.msra.mxu0 0.0
    %1690 = vmatprep.subr.mxu0 0.0
    %1691 = vmatpush1.msra.mxu0 0.0
    %1692 = vmatprep.subr.mxu0 0.0
    %1693 = vmatpush1.msra.mxu0 0.0
    %1694 = vmatprep.subr.mxu0 0.0
    %1695 = vmatpush1.msra.mxu0 0.0
    %1696 = vmatprep.subr.mxu0 0.0
    %1697 = vmatpush1.msra.mxu0 0.0
    %1698 = vmatprep.subr.mxu0 0.0
    %1699 = vmatpush1.msra.mxu0 0.0
    %1700 = vmatprep.subr.mxu0 0.0
    %1701 = vmatpush1.msra.mxu0 0.0
    %1702 = vmatprep.subr.mxu0 0.0
    %1703 = vmatpush1.msra.mxu0 0.0
    %1704 = vmatprep.subr.mxu0 0.0
    %1705 = vmatpush1.msra.mxu0 0.0
    %1706 = vmatprep.subr.mxu0 0.0
    %1707 = vmatpush1.msra.mxu0 0.0
    %1708 = vmatprep.subr.mxu0 0.0
    %1709 = vmatpush1.msra.mxu0 0.0
    %1710 = vmatprep.subr.mxu0 0.0
    %1711 = vmatpush1.msra.mxu0 0.0
    %1712 = vmatprep.subr.mxu0 0.0
    %1713 = vmatpush1.msra.mxu0 0.0
    %1714 = vmatprep.subr.mxu0 0.0
    %1715 = vmatpush1.msra.mxu0 0.0
    %1716 = vmatprep.subr.mxu0 0.0
    %1717 = vmatpush1.msra.mxu0 0.0
    %1718 = vmatprep.subr.mxu0 0.0
    %1719 = vmatpush1.msra.mxu0 0.0
    %1720 = vmatprep.subr.mxu0 0.0
    %1721 = vmatpush1.msra.mxu0 0.0
    %1722 = vmatprep.subr.mxu0 0.0
    %1723 = vmatpush1.msra.mxu0 0.0
    %1724 = vmatprep.subr.mxu0 0.0
    %1725 = vmatpush1.msra.mxu0 0.0
    %1726 = vmatprep.subr.mxu0 0.0
    %1727 = vmatpush1.msra.mxu0 0.0
    %1728 = vmatprep.subr.mxu0 0.0
    %1729 = vmatpush1.msra.mxu0 0.0
    %1730 = vmatprep.subr.mxu0 0.0
    %1731 = vmatpush1.msra.mxu0 0.0
    %1732 = vmatprep.subr.mxu0 0.0
    %1733 = vmatpush1.msra.mxu0 0.0
    %1734 = vmatprep.subr.mxu0 0.0
    %1735 = vmatpush1.msra.mxu0 0.0
    %1736 = vmatprep.subr.mxu0 0.0
    %1737 = vmatpush1.msra.mxu0 0.0
    %1738 = vmatprep.subr.mxu0 0.0
    %1739 = vmatpush1.msra.mxu0 0.0
    %1740 = vmatprep.subr.mxu0 0.0
    %1741 = vmatpush1.msra.mxu0 0.0
    %1742 = vmatprep.subr.mxu0 0.0
    %1743 = vmatpush1.msra.mxu0 0.0
    %1744 = vmatprep.mubr.f32.mxu0 0.0
    %1745 = vmatmul.mubr.f32.gmra.mrb[0].mxu0 %v1675
    %v1746 = vpop.f32.mrb[0].mxu0
    %v1747 = vadd.f32 %v1672, %v1746
    %v1748 = vpop.f32.mrb[0].mxu0
    %1749 = vmatprep.mubr.f32.mxu0 0.0
    %1750 = vmatmul.mubr.f32.gmra.mrb[0].mxu0 %v1678
    %v1751 = vpop.f32.mrb[0].mxu0
    %v1752 = vadd.f32 %v1672, %v1751
    %v1753 = vpop.f32.mrb[0].mxu0
    %1754 = vdwg.mxu0
    %v1755 = vmax.f32 %v1747, 0.0
    %v1756 = vmax.f32 %v1752, 0.0
    %v1757 = vld [vmem:[%s5] sm:$0xff]
    %v1758 = vld [vmem:[%s5 + $0x8] sm:$0xff]
    %v1759 = vld [vmem:[%s5 + $0x10] sm:$0xff]
    %v1760 = vld [vmem:[%s5 + $0x18] sm:$0xff]
    %v1761 = vld [vmem:[%s5 + $0x20] sm:$0xff]
    %v1762 = vld [vmem:[%s5 + $0x28] sm:$0xff]
    %v1763 = vld [vmem:[%s5 + $0x30] sm:$0xff]
    %v1764 = vld [vmem:[%s5 + $0x38] sm:$0xff]
    %v1765 = vld [vmem:[%s5 + $0x40] sm:$0xff]
    %v1766 = vld [vmem:[%s5 + $0x48] sm:$0xff]
    %v1767 = vld [vmem:[%s5 + $0x50] sm:$0xff]
    %v1768 = vld [vmem:[%s5 + $0x58] sm:$0xff]
    %v1769 = vld [vmem:[%s5 + $0x60] sm:$0xff]
    %v1770 = vld [vmem:[%s5 + $0x68] sm:$0xff]
    %v1771 = vld [vmem:[%s5 + $0x70] sm:$0xff]
    %v1772 = vld [vmem:[%s5 + $0x78] sm:$0xff]
    %v1773 = vlaneseq
    %v1774 = vshrl.u32 %v1773, 7
    %v1775 = vsub.s32 5, %v1774
    %v1776 = vrot.slane %v32, %v1775
    %1777 = vmatprep.subr.mxu0 0.0
    %1778 = vmatpush1.msra.mxu0 %v1757
    %1779 = vmatprep.subr.mxu0 0.0
    %1780 = vmatpush1.msra.mxu0 %v1758
    %1781 = vmatprep.subr.mxu0 0.0
    %1782 = vmatpush1.msra.mxu0 %v1759
    %1783 = vmatprep.subr.mxu0 0.0
    %1784 = vmatpush1.msra.mxu0 %v1760
    %1785 = vmatprep.subr.mxu0 0.0
    %1786 = vmatpush1.msra.mxu0 %v1761
    %1787 = vmatprep.subr.mxu0 0.0
    %1788 = vmatpush1.msra.mxu0 %v1762
    %1789 = vmatprep.subr.mxu0 0.0
    %1790 = vmatpush1.msra.mxu0 %v1763
    %1791 = vmatprep.subr.mxu0 0.0
    %1792 = vmatpush1.msra.mxu0 %v1764
    %1793 = vmatprep.subr.mxu0 0.0
    %1794 = vmatpush1.msra.mxu0 %v1765
    %1795 = vmatprep.subr.mxu0 0.0
    %1796 = vmatpush1.msra.mxu0 %v1766
    %1797 = vmatprep.subr.mxu0 0.0
    %1798 = vmatpush1.msra.mxu0 %v1767
    %1799 = vmatprep.subr.mxu0 0.0
    %1800 = vmatpush1.msra.mxu0 %v1768
    %1801 = vmatprep.subr.mxu0 0.0
    %1802 = vmatpush1.msra.mxu0 %v1769
    %1803 = vmatprep.subr.mxu0 0.0
    %1804 = vmatpush1.msra.mxu0 %v1770
    %1805 = vmatprep.subr.mxu0 0.0
    %1806 = vmatpush1.msra.mxu0 %v1771
    %1807 = vmatprep.subr.mxu0 0.0
    %1808 = vmatpush1.msra.mxu0 %v1772
    %1809 = vmatprep.subr.mxu0 0.0
    %1810 = vmatpush1.msra.mxu0 0.0
    %1811 = vmatprep.subr.mxu0 0.0
    %1812 = vmatpush1.msra.mxu0 0.0
    %1813 = vmatprep.subr.mxu0 0.0
    %1814 = vmatpush1.msra.mxu0 0.0
    %1815 = vmatprep.subr.mxu0 0.0
    %1816 = vmatpush1.msra.mxu0 0.0
    %1817 = vmatprep.subr.mxu0 0.0
    %1818 = vmatpush1.msra.mxu0 0.0
    %1819 = vmatprep.subr.mxu0 0.0
    %1820 = vmatpush1.msra.mxu0 0.0
    %1821 = vmatprep.subr.mxu0 0.0
    %1822 = vmatpush1.msra.mxu0 0.0
    %1823 = vmatprep.subr.mxu0 0.0
    %1824 = vmatpush1.msra.mxu0 0.0
    %1825 = vmatprep.subr.mxu0 0.0
    %1826 = vmatpush1.msra.mxu0 0.0
    %1827 = vmatprep.subr.mxu0 0.0
    %1828 = vmatpush1.msra.mxu0 0.0
    %1829 = vmatprep.subr.mxu0 0.0
    %1830 = vmatpush1.msra.mxu0 0.0
    %1831 = vmatprep.subr.mxu0 0.0
    %1832 = vmatpush1.msra.mxu0 0.0
    %1833 = vmatprep.subr.mxu0 0.0
    %1834 = vmatpush1.msra.mxu0 0.0
    %1835 = vmatprep.subr.mxu0 0.0
    %1836 = vmatpush1.msra.mxu0 0.0
    %1837 = vmatprep.subr.mxu0 0.0
    %1838 = vmatpush1.msra.mxu0 0.0
    %1839 = vmatprep.subr.mxu0 0.0
    %1840 = vmatpush1.msra.mxu0 0.0
    %1841 = vmatprep.mubr.f32.mxu0 0.0
    %1842 = vmatmul.mubr.f32.gmra.mrb[0].mxu0 %v1755
    %v1843 = vpop.f32.mrb[0].mxu0
    %v1844 = vadd.f32 %v1776, %v1843
    %v1845 = vpop.f32.mrb[0].mxu0
    %1846 = vmatprep.mubr.f32.mxu0 0.0
    %1847 = vmatmul.mubr.f32.gmra.mrb[0].mxu0 %v1756
    %v1848 = vpop.f32.mrb[0].mxu0
    %v1849 = vadd.f32 %v1776, %v1848
    %v1850 = vpop.f32.mrb[0].mxu0
    %1851 = vdwg.mxu0
    %v1852 = vadd.f32 %v1623, %v1844
    %v1853 = vadd.f32 %v1624, %v1849
    %v1854 = vsel %vm40, %v1852, 0.0
    %1855 = vadd.xlane.f32.xlu0 %v1854
    %v1856 = vpop.xlane.xlu0 %1855
    %v1857 = vsel %vm40, %v1853, 0.0
    %1858 = vadd.xlane.f32.xlu0 %v1857
    %v1859 = vpop.xlane.xlu0 %1858
    %v1860 = vmul.f32 %v1856, %v47
    %v1861 = vmul.f32 %v1859, %v47
    %v1862 = vsub.f32 %v1852, %v1860
    %v1863 = vsub.f32 %v1853, %v1861
    %v1864 = vmul.f32 %v1862, %v1862
    %v1865 = vmul.f32 %v1863, %v1863
    %v1866 = vsel %vm40, %v1864, 0.0
    %1867 = vadd.xlane.f32.xlu0 %v1866
    %v1868 = vpop.xlane.xlu0 %1867
    %v1869 = vsel %vm40, %v1865, 0.0
    %1870 = vadd.xlane.f32.xlu0 %v1869
    %v1871 = vpop.xlane.xlu0 %1870
    %v1872 = vmul.f32 %v1868, %v47
    %v1873 = vmul.f32 %v1871, %v47
    %v1874 = vadd.f32 %v1872, 1e-05
    %v1875 = vadd.f32 %v1873, 1e-05
    %v1876 = vrsqrt.pop %v1874
    %v1877 = vrsqrt.pop %v1875
    %v1878 = vmul.f32 %v1862, %v1876
    %v1879 = vmul.f32 %v1863, %v1877
    %v1880 = vlaneseq
    %v1881 = vshrl.u32 %v1880, 7
    %v1882 = vsub.s32 6, %v1881
    %v1883 = vrot.slane %v32, %v1882
    %v1884 = vmul.f32 %v1878, %v1883
    %v1885 = vmul.f32 %v1879, %v1883
    %v1886 = vlaneseq
    %v1887 = vshrl.u32 %v1886, 7
    %v1888 = vsub.s32 7, %v1887
    %v1889 = vrot.slane %v32, %v1888
    %v1890 = vadd.f32 %v1884, %v1889
    %v1891 = vadd.f32 %v1885, %v1889
    %s1892 = scalar_lea.vmem %s1, 32
    %v1893 = vld [vmem:[%s1892] sm:$0xff]
    %v1894 = vld [vmem:[%s1892 + $0x8] sm:$0xff]
    %v1895 = vld [vmem:[%s1892 + $0x10] sm:$0xff]
    %v1896 = vld [vmem:[%s1892 + $0x18] sm:$0xff]
    %v1898 = vsel %vm40, %v1890, 0
    %v1901 = vsel %vm40, %v1891, 0
    %1903 = vmatprep.subr.mxu0 0.0
    %1904 = vmatpush1.msra.mxu0 %v1893
    %1905 = vmatprep.subr.mxu0 0.0
    %1906 = vmatpush1.msra.mxu0 %v1894
    %1907 = vmatprep.subr.mxu0 0.0
    %1908 = vmatpush1.msra.mxu0 %v1895
    %1909 = vmatprep.subr.mxu0 0.0
    %1910 = vmatpush1.msra.mxu0 %v1896
    %1911 = vmatprep.subr.mxu0 0.0
    %1912 = vmatpush1.msra.mxu0 0.0
    %1913 = vmatprep.subr.mxu0 0.0
    %1914 = vmatpush1.msra.mxu0 0.0
    %1915 = vmatprep.subr.mxu0 0.0
    %1916 = vmatpush1.msra.mxu0 0.0
    %1917 = vmatprep.subr.mxu0 0.0
    %1918 = vmatpush1.msra.mxu0 0.0
    %1919 = vmatprep.subr.mxu0 0.0
    %1920 = vmatpush1.msra.mxu0 0.0
    %1921 = vmatprep.subr.mxu0 0.0
    %1922 = vmatpush1.msra.mxu0 0.0
    %1923 = vmatprep.subr.mxu0 0.0
    %1924 = vmatpush1.msra.mxu0 0.0
    %1925 = vmatprep.subr.mxu0 0.0
    %1926 = vmatpush1.msra.mxu0 0.0
    %1927 = vmatprep.subr.mxu0 0.0
    %1928 = vmatpush1.msra.mxu0 0.0
    %1929 = vmatprep.subr.mxu0 0.0
    %1930 = vmatpush1.msra.mxu0 0.0
    %1931 = vmatprep.subr.mxu0 0.0
    %1932 = vmatpush1.msra.mxu0 0.0
    %1933 = vmatprep.subr.mxu0 0.0
    %1934 = vmatpush1.msra.mxu0 0.0
    %1935 = vmatprep.subr.mxu0 0.0
    %1936 = vmatpush1.msra.mxu0 0.0
    %1937 = vmatprep.subr.mxu0 0.0
    %1938 = vmatpush1.msra.mxu0 0.0
    %1939 = vmatprep.subr.mxu0 0.0
    %1940 = vmatpush1.msra.mxu0 0.0
    %1941 = vmatprep.subr.mxu0 0.0
    %1942 = vmatpush1.msra.mxu0 0.0
    %1943 = vmatprep.subr.mxu0 0.0
    %1944 = vmatpush1.msra.mxu0 0.0
    %1945 = vmatprep.subr.mxu0 0.0
    %1946 = vmatpush1.msra.mxu0 0.0
    %1947 = vmatprep.subr.mxu0 0.0
    %1948 = vmatpush1.msra.mxu0 0.0
    %1949 = vmatprep.subr.mxu0 0.0
    %1950 = vmatpush1.msra.mxu0 0.0
    %1951 = vmatprep.subr.mxu0 0.0
    %1952 = vmatpush1.msra.mxu0 0.0
    %1953 = vmatprep.subr.mxu0 0.0
    %1954 = vmatpush1.msra.mxu0 0.0
    %1955 = vmatprep.subr.mxu0 0.0
    %1956 = vmatpush1.msra.mxu0 0.0
    %1957 = vmatprep.subr.mxu0 0.0
    %1958 = vmatpush1.msra.mxu0 0.0
    %1959 = vmatprep.subr.mxu0 0.0
    %1960 = vmatpush1.msra.mxu0 0.0
    %1961 = vmatprep.subr.mxu0 0.0
    %1962 = vmatpush1.msra.mxu0 0.0
    %1963 = vmatprep.subr.mxu0 0.0
    %1964 = vmatpush1.msra.mxu0 0.0
    %1965 = vmatprep.subr.mxu0 0.0
    %1966 = vmatpush1.msra.mxu0 0.0
    %1967 = vmatprep.mubr.f32.mxu0 0.0
    %1968 = vmatmul.mubr.f32.gmra.mrb[0].mxu0 %v1898
    %v1969 = vpop.f32.mrb[0].mxu0
    %v1970 = vadd.f32 0.0, %v1969
    %v1971 = vpop.f32.mrb[0].mxu0
    %1972 = vmatprep.mubr.f32.mxu0 0.0
    %1973 = vmatmul.mubr.f32.gmra.mrb[0].mxu0 %v1901
    %v1974 = vpop.f32.mrb[0].mxu0
    %v1975 = vadd.f32 0.0, %v1974
    %v1976 = vpop.f32.mrb[0].mxu0
    %1977 = vdwg.mxu0
    %1980 = vrot.lane.b32.xlu0 %v1970, 120
    %v1981 = vpop.permute.xlu0 %1980
    %1982 = vrot.lane.b32.xlu0 %v1975, 120
    %v1983 = vpop.permute.xlu0 %1982
    %1984 = vrot.lane.b32.xlu0 %v1970, 112
    %v1985 = vpop.permute.xlu0 %1984
    %1986 = vrot.lane.b32.xlu0 %v1975, 112
    %v1987 = vpop.permute.xlu0 %1986
    %1988 = vrot.lane.b32.xlu0 %v1970, 104
    %v1989 = vpop.permute.xlu0 %1988
    %1990 = vrot.lane.b32.xlu0 %v1975, 104
    %v1991 = vpop.permute.xlu0 %1990
    %1992 = vrot.lane.b32.xlu0 %v1970, 96
    %v1993 = vpop.permute.xlu0 %1992
    %v1994 = vsel %vm181, %v1970, 0
    %v1996 = vsel %vm181, %v1993, 0
    %1998 = vmatprep.subr.mxu0 0.0
    %1999 = vmatpush1.xpose.msra.mxu0 %v1996
    %2000 = vmatprep.subr.mxu0 0.0
    %2001 = vmatpush1.xpose.msra.mxu0 0.0
    %2002 = vmatprep.subr.mxu0 0.0
    %2003 = vmatpush1.xpose.msra.mxu0 0.0
    %2004 = vmatprep.subr.mxu0 0.0
    %2005 = vmatpush1.xpose.msra.mxu0 0.0
    %2006 = vmatprep.subr.mxu0 0.0
    %2007 = vmatpush1.xpose.msra.mxu0 0.0
    %2008 = vmatprep.subr.mxu0 0.0
    %2009 = vmatpush1.xpose.msra.mxu0 0.0
    %2010 = vmatprep.subr.mxu0 0.0
    %2011 = vmatpush1.xpose.msra.mxu0 0.0
    %2012 = vmatprep.subr.mxu0 0.0
    %2013 = vmatpush1.xpose.msra.mxu0 0.0
    %2014 = vmatprep.subr.mxu0 0.0
    %2015 = vmatpush1.xpose.msra.mxu0 0.0
    %2016 = vmatprep.subr.mxu0 0.0
    %2017 = vmatpush1.xpose.msra.mxu0 0.0
    %2018 = vmatprep.subr.mxu0 0.0
    %2019 = vmatpush1.xpose.msra.mxu0 0.0
    %2020 = vmatprep.subr.mxu0 0.0
    %2021 = vmatpush1.xpose.msra.mxu0 0.0
    %2022 = vmatprep.subr.mxu0 0.0
    %2023 = vmatpush1.xpose.msra.mxu0 0.0
    %2024 = vmatprep.subr.mxu0 0.0
    %2025 = vmatpush1.xpose.msra.mxu0 0.0
    %2026 = vmatprep.subr.mxu0 0.0
    %2027 = vmatpush1.xpose.msra.mxu0 0.0
    %2028 = vmatprep.subr.mxu0 0.0
    %2029 = vmatpush1.xpose.msra.mxu0 0.0
    %2030 = vmatprep.subr.mxu0 0.0
    %2031 = vmatpush1.xpose.msra.mxu0 0.0
    %2032 = vmatprep.subr.mxu0 0.0
    %2033 = vmatpush1.xpose.msra.mxu0 0.0
    %2034 = vmatprep.subr.mxu0 0.0
    %2035 = vmatpush1.xpose.msra.mxu0 0.0
    %2036 = vmatprep.subr.mxu0 0.0
    %2037 = vmatpush1.xpose.msra.mxu0 0.0
    %2038 = vmatprep.subr.mxu0 0.0
    %2039 = vmatpush1.xpose.msra.mxu0 0.0
    %2040 = vmatprep.subr.mxu0 0.0
    %2041 = vmatpush1.xpose.msra.mxu0 0.0
    %2042 = vmatprep.subr.mxu0 0.0
    %2043 = vmatpush1.xpose.msra.mxu0 0.0
    %2044 = vmatprep.subr.mxu0 0.0
    %2045 = vmatpush1.xpose.msra.mxu0 0.0
    %2046 = vmatprep.subr.mxu0 0.0
    %2047 = vmatpush1.xpose.msra.mxu0 0.0
    %2048 = vmatprep.subr.mxu0 0.0
    %2049 = vmatpush1.xpose.msra.mxu0 0.0
    %2050 = vmatprep.subr.mxu0 0.0
    %2051 = vmatpush1.xpose.msra.mxu0 0.0
    %2052 = vmatprep.subr.mxu0 0.0
    %2053 = vmatpush1.xpose.msra.mxu0 0.0
    %2054 = vmatprep.subr.mxu0 0.0
    %2055 = vmatpush1.xpose.msra.mxu0 0.0
    %2056 = vmatprep.subr.mxu0 0.0
    %2057 = vmatpush1.xpose.msra.mxu0 0.0
    %2058 = vmatprep.subr.mxu0 0.0
    %2059 = vmatpush1.xpose.msra.mxu0 0.0
    %2060 = vmatprep.subr.mxu0 0.0
    %2061 = vmatpush1.xpose.msra.mxu0 0.0
    %2062 = vmatprep.mubr.f32.mxu0 0.0
    %2063 = vmatmul.mubr.f32.gmra.mrb[0].mxu0 %v1994
    %v2064 = vpop.f32.mrb[0].mxu0
    %v2065 = vadd.f32 0.0, %v2064
    %v2066 = vpop.f32.mrb[0].mxu0
    %2067 = vdwg.mxu0
    %2068 = vrot.lane.b32.xlu0 %v1975, 96
    %v2069 = vpop.permute.xlu0 %2068
    %v2070 = vsel %vm181, %v1975, 0
    %v2072 = vsel %vm181, %v2069, 0
    %2074 = vmatprep.subr.mxu0 0.0
    %2075 = vmatpush1.xpose.msra.mxu0 %v2072
    %2076 = vmatprep.subr.mxu0 0.0
    %2077 = vmatpush1.xpose.msra.mxu0 0.0
    %2078 = vmatprep.subr.mxu0 0.0
    %2079 = vmatpush1.xpose.msra.mxu0 0.0
    %2080 = vmatprep.subr.mxu0 0.0
    %2081 = vmatpush1.xpose.msra.mxu0 0.0
    %2082 = vmatprep.subr.mxu0 0.0
    %2083 = vmatpush1.xpose.msra.mxu0 0.0
    %2084 = vmatprep.subr.mxu0 0.0
    %2085 = vmatpush1.xpose.msra.mxu0 0.0
    %2086 = vmatprep.subr.mxu0 0.0
    %2087 = vmatpush1.xpose.msra.mxu0 0.0
    %2088 = vmatprep.subr.mxu0 0.0
    %2089 = vmatpush1.xpose.msra.mxu0 0.0
    %2090 = vmatprep.subr.mxu0 0.0
    %2091 = vmatpush1.xpose.msra.mxu0 0.0
    %2092 = vmatprep.subr.mxu0 0.0
    %2093 = vmatpush1.xpose.msra.mxu0 0.0
    %2094 = vmatprep.subr.mxu0 0.0
    %2095 = vmatpush1.xpose.msra.mxu0 0.0
    %2096 = vmatprep.subr.mxu0 0.0
    %2097 = vmatpush1.xpose.msra.mxu0 0.0
    %2098 = vmatprep.subr.mxu0 0.0
    %2099 = vmatpush1.xpose.msra.mxu0 0.0
    %2100 = vmatprep.subr.mxu0 0.0
    %2101 = vmatpush1.xpose.msra.mxu0 0.0
    %2102 = vmatprep.subr.mxu0 0.0
    %2103 = vmatpush1.xpose.msra.mxu0 0.0
    %2104 = vmatprep.subr.mxu0 0.0
    %2105 = vmatpush1.xpose.msra.mxu0 0.0
    %2106 = vmatprep.subr.mxu0 0.0
    %2107 = vmatpush1.xpose.msra.mxu0 0.0
    %2108 = vmatprep.subr.mxu0 0.0
    %2109 = vmatpush1.xpose.msra.mxu0 0.0
    %2110 = vmatprep.subr.mxu0 0.0
    %2111 = vmatpush1.xpose.msra.mxu0 0.0
    %2112 = vmatprep.subr.mxu0 0.0
    %2113 = vmatpush1.xpose.msra.mxu0 0.0
    %2114 = vmatprep.subr.mxu0 0.0
    %2115 = vmatpush1.xpose.msra.mxu0 0.0
    %2116 = vmatprep.subr.mxu0 0.0
    %2117 = vmatpush1.xpose.msra.mxu0 0.0
    %2118 = vmatprep.subr.mxu0 0.0
    %2119 = vmatpush1.xpose.msra.mxu0 0.0
    %2120 = vmatprep.subr.mxu0 0.0
    %2121 = vmatpush1.xpose.msra.mxu0 0.0
    %2122 = vmatprep.subr.mxu0 0.0
    %2123 = vmatpush1.xpose.msra.mxu0 0.0
    %2124 = vmatprep.subr.mxu0 0.0
    %2125 = vmatpush1.xpose.msra.mxu0 0.0
    %2126 = vmatprep.subr.mxu0 0.0
    %2127 = vmatpush1.xpose.msra.mxu0 0.0
    %2128 = vmatprep.subr.mxu0 0.0
    %2129 = vmatpush1.xpose.msra.mxu0 0.0
    %2130 = vmatprep.subr.mxu0 0.0
    %2131 = vmatpush1.xpose.msra.mxu0 0.0
    %2132 = vmatprep.subr.mxu0 0.0
    %2133 = vmatpush1.xpose.msra.mxu0 0.0
    %2134 = vmatprep.subr.mxu0 0.0
    %2135 = vmatpush1.xpose.msra.mxu0 0.0
    %2136 = vmatprep.subr.mxu0 0.0
    %2137 = vmatpush1.xpose.msra.mxu0 0.0
    %2138 = vmatprep.mubr.f32.mxu0 0.0
    %2139 = vmatmul.mubr.f32.gmra.mrb[0].mxu0 %v2070
    %v2140 = vpop.f32.mrb[0].mxu0
    %v2141 = vadd.f32 0.0, %v2140
    %v2142 = vpop.f32.mrb[0].mxu0
    %2143 = vdwg.mxu0
    %2144 = vrot.lane.b32.xlu0 %v1981, 96
    %v2145 = vpop.permute.xlu0 %2144
    %v2146 = vsel %vm181, %v1981, 0
    %v2148 = vsel %vm181, %v2145, 0
    %2150 = vmatprep.subr.mxu0 0.0
    %2151 = vmatpush1.xpose.msra.mxu0 %v2148
    %2152 = vmatprep.subr.mxu0 0.0
    %2153 = vmatpush1.xpose.msra.mxu0 0.0
    %2154 = vmatprep.subr.mxu0 0.0
    %2155 = vmatpush1.xpose.msra.mxu0 0.0
    %2156 = vmatprep.subr.mxu0 0.0
    %2157 = vmatpush1.xpose.msra.mxu0 0.0
    %2158 = vmatprep.subr.mxu0 0.0
    %2159 = vmatpush1.xpose.msra.mxu0 0.0
    %2160 = vmatprep.subr.mxu0 0.0
    %2161 = vmatpush1.xpose.msra.mxu0 0.0
    %2162 = vmatprep.subr.mxu0 0.0
    %2163 = vmatpush1.xpose.msra.mxu0 0.0
    %2164 = vmatprep.subr.mxu0 0.0
    %2165 = vmatpush1.xpose.msra.mxu0 0.0
    %2166 = vmatprep.subr.mxu0 0.0
    %2167 = vmatpush1.xpose.msra.mxu0 0.0
    %2168 = vmatprep.subr.mxu0 0.0
    %2169 = vmatpush1.xpose.msra.mxu0 0.0
    %2170 = vmatprep.subr.mxu0 0.0
    %2171 = vmatpush1.xpose.msra.mxu0 0.0
    %2172 = vmatprep.subr.mxu0 0.0
    %2173 = vmatpush1.xpose.msra.mxu0 0.0
    %2174 = vmatprep.subr.mxu0 0.0
    %2175 = vmatpush1.xpose.msra.mxu0 0.0
    %2176 = vmatprep.subr.mxu0 0.0
    %2177 = vmatpush1.xpose.msra.mxu0 0.0
    %2178 = vmatprep.subr.mxu0 0.0
    %2179 = vmatpush1.xpose.msra.mxu0 0.0
    %2180 = vmatprep.subr.mxu0 0.0
    %2181 = vmatpush1.xpose.msra.mxu0 0.0
    %2182 = vmatprep.subr.mxu0 0.0
    %2183 = vmatpush1.xpose.msra.mxu0 0.0
    %2184 = vmatprep.subr.mxu0 0.0
    %2185 = vmatpush1.xpose.msra.mxu0 0.0
    %2186 = vmatprep.subr.mxu0 0.0
    %2187 = vmatpush1.xpose.msra.mxu0 0.0
    %2188 = vmatprep.subr.mxu0 0.0
    %2189 = vmatpush1.xpose.msra.mxu0 0.0
    %2190 = vmatprep.subr.mxu0 0.0
    %2191 = vmatpush1.xpose.msra.mxu0 0.0
    %2192 = vmatprep.subr.mxu0 0.0
    %2193 = vmatpush1.xpose.msra.mxu0 0.0
    %2194 = vmatprep.subr.mxu0 0.0
    %2195 = vmatpush1.xpose.msra.mxu0 0.0
    %2196 = vmatprep.subr.mxu0 0.0
    %2197 = vmatpush1.xpose.msra.mxu0 0.0
    %2198 = vmatprep.subr.mxu0 0.0
    %2199 = vmatpush1.xpose.msra.mxu0 0.0
    %2200 = vmatprep.subr.mxu0 0.0
    %2201 = vmatpush1.xpose.msra.mxu0 0.0
    %2202 = vmatprep.subr.mxu0 0.0
    %2203 = vmatpush1.xpose.msra.mxu0 0.0
    %2204 = vmatprep.subr.mxu0 0.0
    %2205 = vmatpush1.xpose.msra.mxu0 0.0
    %2206 = vmatprep.subr.mxu0 0.0
    %2207 = vmatpush1.xpose.msra.mxu0 0.0
    %2208 = vmatprep.subr.mxu0 0.0
    %2209 = vmatpush1.xpose.msra.mxu0 0.0
    %2210 = vmatprep.subr.mxu0 0.0
    %2211 = vmatpush1.xpose.msra.mxu0 0.0
    %2212 = vmatprep.subr.mxu0 0.0
    %2213 = vmatpush1.xpose.msra.mxu0 0.0
    %2214 = vmatprep.mubr.f32.mxu0 0.0
    %2215 = vmatmul.mubr.f32.gmra.mrb[0].mxu0 %v2146
    %v2216 = vpop.f32.mrb[0].mxu0
    %v2217 = vadd.f32 0.0, %v2216
    %v2218 = vpop.f32.mrb[0].mxu0
    %2219 = vdwg.mxu0
    %2220 = vrot.lane.b32.xlu0 %v1983, 96
    %v2221 = vpop.permute.xlu0 %2220
    %v2222 = vsel %vm181, %v1983, 0
    %v2224 = vsel %vm181, %v2221, 0
    %2226 = vmatprep.subr.mxu0 0.0
    %2227 = vmatpush1.xpose.msra.mxu0 %v2224
    %2228 = vmatprep.subr.mxu0 0.0
    %2229 = vmatpush1.xpose.msra.mxu0 0.0
    %2230 = vmatprep.subr.mxu0 0.0
    %2231 = vmatpush1.xpose.msra.mxu0 0.0
    %2232 = vmatprep.subr.mxu0 0.0
    %2233 = vmatpush1.xpose.msra.mxu0 0.0
    %2234 = vmatprep.subr.mxu0 0.0
    %2235 = vmatpush1.xpose.msra.mxu0 0.0
    %2236 = vmatprep.subr.mxu0 0.0
    %2237 = vmatpush1.xpose.msra.mxu0 0.0
    %2238 = vmatprep.subr.mxu0 0.0
    %2239 = vmatpush1.xpose.msra.mxu0 0.0
    %2240 = vmatprep.subr.mxu0 0.0
    %2241 = vmatpush1.xpose.msra.mxu0 0.0
    %2242 = vmatprep.subr.mxu0 0.0
    %2243 = vmatpush1.xpose.msra.mxu0 0.0
    %2244 = vmatprep.subr.mxu0 0.0
    %2245 = vmatpush1.xpose.msra.mxu0 0.0
    %2246 = vmatprep.subr.mxu0 0.0
    %2247 = vmatpush1.xpose.msra.mxu0 0.0
    %2248 = vmatprep.subr.mxu0 0.0
    %2249 = vmatpush1.xpose.msra.mxu0 0.0
    %2250 = vmatprep.subr.mxu0 0.0
    %2251 = vmatpush1.xpose.msra.mxu0 0.0
    %2252 = vmatprep.subr.mxu0 0.0
    %2253 = vmatpush1.xpose.msra.mxu0 0.0
    %2254 = vmatprep.subr.mxu0 0.0
    %2255 = vmatpush1.xpose.msra.mxu0 0.0
    %2256 = vmatprep.subr.mxu0 0.0
    %2257 = vmatpush1.xpose.msra.mxu0 0.0
    %2258 = vmatprep.subr.mxu0 0.0
    %2259 = vmatpush1.xpose.msra.mxu0 0.0
    %2260 = vmatprep.subr.mxu0 0.0
    %2261 = vmatpush1.xpose.msra.mxu0 0.0
    %2262 = vmatprep.subr.mxu0 0.0
    %2263 = vmatpush1.xpose.msra.mxu0 0.0
    %2264 = vmatprep.subr.mxu0 0.0
    %2265 = vmatpush1.xpose.msra.mxu0 0.0
    %2266 = vmatprep.subr.mxu0 0.0
    %2267 = vmatpush1.xpose.msra.mxu0 0.0
    %2268 = vmatprep.subr.mxu0 0.0
    %2269 = vmatpush1.xpose.msra.mxu0 0.0
    %2270 = vmatprep.subr.mxu0 0.0
    %2271 = vmatpush1.xpose.msra.mxu0 0.0
    %2272 = vmatprep.subr.mxu0 0.0
    %2273 = vmatpush1.xpose.msra.mxu0 0.0
    %2274 = vmatprep.subr.mxu0 0.0
    %2275 = vmatpush1.xpose.msra.mxu0 0.0
    %2276 = vmatprep.subr.mxu0 0.0
    %2277 = vmatpush1.xpose.msra.mxu0 0.0
    %2278 = vmatprep.subr.mxu0 0.0
    %2279 = vmatpush1.xpose.msra.mxu0 0.0
    %2280 = vmatprep.subr.mxu0 0.0
    %2281 = vmatpush1.xpose.msra.mxu0 0.0
    %2282 = vmatprep.subr.mxu0 0.0
    %2283 = vmatpush1.xpose.msra.mxu0 0.0
    %2284 = vmatprep.subr.mxu0 0.0
    %2285 = vmatpush1.xpose.msra.mxu0 0.0
    %2286 = vmatprep.subr.mxu0 0.0
    %2287 = vmatpush1.xpose.msra.mxu0 0.0
    %2288 = vmatprep.subr.mxu0 0.0
    %2289 = vmatpush1.xpose.msra.mxu0 0.0
    %2290 = vmatprep.mubr.f32.mxu0 0.0
    %2291 = vmatmul.mubr.f32.gmra.mrb[0].mxu0 %v2222
    %v2292 = vpop.f32.mrb[0].mxu0
    %v2293 = vadd.f32 0.0, %v2292
    %v2294 = vpop.f32.mrb[0].mxu0
    %2295 = vdwg.mxu0
    %2296 = vrot.lane.b32.xlu0 %v1985, 96
    %v2297 = vpop.permute.xlu0 %2296
    %v2298 = vsel %vm181, %v1985, 0
    %v2300 = vsel %vm181, %v2297, 0
    %2302 = vmatprep.subr.mxu0 0.0
    %2303 = vmatpush1.xpose.msra.mxu0 %v2300
    %2304 = vmatprep.subr.mxu0 0.0
    %2305 = vmatpush1.xpose.msra.mxu0 0.0
    %2306 = vmatprep.subr.mxu0 0.0
    %2307 = vmatpush1.xpose.msra.mxu0 0.0
    %2308 = vmatprep.subr.mxu0 0.0
    %2309 = vmatpush1.xpose.msra.mxu0 0.0
    %2310 = vmatprep.subr.mxu0 0.0
    %2311 = vmatpush1.xpose.msra.mxu0 0.0
    %2312 = vmatprep.subr.mxu0 0.0
    %2313 = vmatpush1.xpose.msra.mxu0 0.0
    %2314 = vmatprep.subr.mxu0 0.0
    %2315 = vmatpush1.xpose.msra.mxu0 0.0
    %2316 = vmatprep.subr.mxu0 0.0
    %2317 = vmatpush1.xpose.msra.mxu0 0.0
    %2318 = vmatprep.subr.mxu0 0.0
    %2319 = vmatpush1.xpose.msra.mxu0 0.0
    %2320 = vmatprep.subr.mxu0 0.0
    %2321 = vmatpush1.xpose.msra.mxu0 0.0
    %2322 = vmatprep.subr.mxu0 0.0
    %2323 = vmatpush1.xpose.msra.mxu0 0.0
    %2324 = vmatprep.subr.mxu0 0.0
    %2325 = vmatpush1.xpose.msra.mxu0 0.0
    %2326 = vmatprep.subr.mxu0 0.0
    %2327 = vmatpush1.xpose.msra.mxu0 0.0
    %2328 = vmatprep.subr.mxu0 0.0
    %2329 = vmatpush1.xpose.msra.mxu0 0.0
    %2330 = vmatprep.subr.mxu0 0.0
    %2331 = vmatpush1.xpose.msra.mxu0 0.0
    %2332 = vmatprep.subr.mxu0 0.0
    %2333 = vmatpush1.xpose.msra.mxu0 0.0
    %2334 = vmatprep.subr.mxu0 0.0
    %2335 = vmatpush1.xpose.msra.mxu0 0.0
    %2336 = vmatprep.subr.mxu0 0.0
    %2337 = vmatpush1.xpose.msra.mxu0 0.0
    %2338 = vmatprep.subr.mxu0 0.0
    %2339 = vmatpush1.xpose.msra.mxu0 0.0
    %2340 = vmatprep.subr.mxu0 0.0
    %2341 = vmatpush1.xpose.msra.mxu0 0.0
    %2342 = vmatprep.subr.mxu0 0.0
    %2343 = vmatpush1.xpose.msra.mxu0 0.0
    %2344 = vmatprep.subr.mxu0 0.0
    %2345 = vmatpush1.xpose.msra.mxu0 0.0
    %2346 = vmatprep.subr.mxu0 0.0
    %2347 = vmatpush1.xpose.msra.mxu0 0.0
    %2348 = vmatprep.subr.mxu0 0.0
    %2349 = vmatpush1.xpose.msra.mxu0 0.0
    %2350 = vmatprep.subr.mxu0 0.0
    %2351 = vmatpush1.xpose.msra.mxu0 0.0
    %2352 = vmatprep.subr.mxu0 0.0
    %2353 = vmatpush1.xpose.msra.mxu0 0.0
    %2354 = vmatprep.subr.mxu0 0.0
    %2355 = vmatpush1.xpose.msra.mxu0 0.0
    %2356 = vmatprep.subr.mxu0 0.0
    %2357 = vmatpush1.xpose.msra.mxu0 0.0
    %2358 = vmatprep.subr.mxu0 0.0
    %2359 = vmatpush1.xpose.msra.mxu0 0.0
    %2360 = vmatprep.subr.mxu0 0.0
    %2361 = vmatpush1.xpose.msra.mxu0 0.0
    %2362 = vmatprep.subr.mxu0 0.0
    %2363 = vmatpush1.xpose.msra.mxu0 0.0
    %2364 = vmatprep.subr.mxu0 0.0
    %2365 = vmatpush1.xpose.msra.mxu0 0.0
    %2366 = vmatprep.mubr.f32.mxu0 0.0
    %2367 = vmatmul.mubr.f32.gmra.mrb[0].mxu0 %v2298
    %v2368 = vpop.f32.mrb[0].mxu0
    %v2369 = vadd.f32 0.0, %v2368
    %v2370 = vpop.f32.mrb[0].mxu0
    %2371 = vdwg.mxu0
    %2372 = vrot.lane.b32.xlu0 %v1987, 96
    %v2373 = vpop.permute.xlu0 %2372
    %v2374 = vsel %vm181, %v1987, 0
    %v2376 = vsel %vm181, %v2373, 0
    %2378 = vmatprep.subr.mxu0 0.0
    %2379 = vmatpush1.xpose.msra.mxu0 %v2376
    %2380 = vmatprep.subr.mxu0 0.0
    %2381 = vmatpush1.xpose.msra.mxu0 0.0
    %2382 = vmatprep.subr.mxu0 0.0
    %2383 = vmatpush1.xpose.msra.mxu0 0.0
    %2384 = vmatprep.subr.mxu0 0.0
    %2385 = vmatpush1.xpose.msra.mxu0 0.0
    %2386 = vmatprep.subr.mxu0 0.0
    %2387 = vmatpush1.xpose.msra.mxu0 0.0
    %2388 = vmatprep.subr.mxu0 0.0
    %2389 = vmatpush1.xpose.msra.mxu0 0.0
    %2390 = vmatprep.subr.mxu0 0.0
    %2391 = vmatpush1.xpose.msra.mxu0 0.0
    %2392 = vmatprep.subr.mxu0 0.0
    %2393 = vmatpush1.xpose.msra.mxu0 0.0
    %2394 = vmatprep.subr.mxu0 0.0
    %2395 = vmatpush1.xpose.msra.mxu0 0.0
    %2396 = vmatprep.subr.mxu0 0.0
    %2397 = vmatpush1.xpose.msra.mxu0 0.0
    %2398 = vmatprep.subr.mxu0 0.0
    %2399 = vmatpush1.xpose.msra.mxu0 0.0
    %2400 = vmatprep.subr.mxu0 0.0
    %2401 = vmatpush1.xpose.msra.mxu0 0.0
    %2402 = vmatprep.subr.mxu0 0.0
    %2403 = vmatpush1.xpose.msra.mxu0 0.0
    %2404 = vmatprep.subr.mxu0 0.0
    %2405 = vmatpush1.xpose.msra.mxu0 0.0
    %2406 = vmatprep.subr.mxu0 0.0
    %2407 = vmatpush1.xpose.msra.mxu0 0.0
    %2408 = vmatprep.subr.mxu0 0.0
    %2409 = vmatpush1.xpose.msra.mxu0 0.0
    %2410 = vmatprep.subr.mxu0 0.0
    %2411 = vmatpush1.xpose.msra.mxu0 0.0
    %2412 = vmatprep.subr.mxu0 0.0
    %2413 = vmatpush1.xpose.msra.mxu0 0.0
    %2414 = vmatprep.subr.mxu0 0.0
    %2415 = vmatpush1.xpose.msra.mxu0 0.0
    %2416 = vmatprep.subr.mxu0 0.0
    %2417 = vmatpush1.xpose.msra.mxu0 0.0
    %2418 = vmatprep.subr.mxu0 0.0
    %2419 = vmatpush1.xpose.msra.mxu0 0.0
    %2420 = vmatprep.subr.mxu0 0.0
    %2421 = vmatpush1.xpose.msra.mxu0 0.0
    %2422 = vmatprep.subr.mxu0 0.0
    %2423 = vmatpush1.xpose.msra.mxu0 0.0
    %2424 = vmatprep.subr.mxu0 0.0
    %2425 = vmatpush1.xpose.msra.mxu0 0.0
    %2426 = vmatprep.subr.mxu0 0.0
    %2427 = vmatpush1.xpose.msra.mxu0 0.0
    %2428 = vmatprep.subr.mxu0 0.0
    %2429 = vmatpush1.xpose.msra.mxu0 0.0
    %2430 = vmatprep.subr.mxu0 0.0
    %2431 = vmatpush1.xpose.msra.mxu0 0.0
    %2432 = vmatprep.subr.mxu0 0.0
    %2433 = vmatpush1.xpose.msra.mxu0 0.0
    %2434 = vmatprep.subr.mxu0 0.0
    %2435 = vmatpush1.xpose.msra.mxu0 0.0
    %2436 = vmatprep.subr.mxu0 0.0
    %2437 = vmatpush1.xpose.msra.mxu0 0.0
    %2438 = vmatprep.subr.mxu0 0.0
    %2439 = vmatpush1.xpose.msra.mxu0 0.0
    %2440 = vmatprep.subr.mxu0 0.0
    %2441 = vmatpush1.xpose.msra.mxu0 0.0
    %2442 = vmatprep.mubr.f32.mxu0 0.0
    %2443 = vmatmul.mubr.f32.gmra.mrb[0].mxu0 %v2374
    %v2444 = vpop.f32.mrb[0].mxu0
    %v2445 = vadd.f32 0.0, %v2444
    %v2446 = vpop.f32.mrb[0].mxu0
    %2447 = vdwg.mxu0
    %2448 = vrot.lane.b32.xlu0 %v1989, 96
    %v2449 = vpop.permute.xlu0 %2448
    %v2450 = vsel %vm181, %v1989, 0
    %v2452 = vsel %vm181, %v2449, 0
    %2454 = vmatprep.subr.mxu0 0.0
    %2455 = vmatpush1.xpose.msra.mxu0 %v2452
    %2456 = vmatprep.subr.mxu0 0.0
    %2457 = vmatpush1.xpose.msra.mxu0 0.0
    %2458 = vmatprep.subr.mxu0 0.0
    %2459 = vmatpush1.xpose.msra.mxu0 0.0
    %2460 = vmatprep.subr.mxu0 0.0
    %2461 = vmatpush1.xpose.msra.mxu0 0.0
    %2462 = vmatprep.subr.mxu0 0.0
    %2463 = vmatpush1.xpose.msra.mxu0 0.0
    %2464 = vmatprep.subr.mxu0 0.0
    %2465 = vmatpush1.xpose.msra.mxu0 0.0
    %2466 = vmatprep.subr.mxu0 0.0
    %2467 = vmatpush1.xpose.msra.mxu0 0.0
    %2468 = vmatprep.subr.mxu0 0.0
    %2469 = vmatpush1.xpose.msra.mxu0 0.0
    %2470 = vmatprep.subr.mxu0 0.0
    %2471 = vmatpush1.xpose.msra.mxu0 0.0
    %2472 = vmatprep.subr.mxu0 0.0
    %2473 = vmatpush1.xpose.msra.mxu0 0.0
    %2474 = vmatprep.subr.mxu0 0.0
    %2475 = vmatpush1.xpose.msra.mxu0 0.0
    %2476 = vmatprep.subr.mxu0 0.0
    %2477 = vmatpush1.xpose.msra.mxu0 0.0
    %2478 = vmatprep.subr.mxu0 0.0
    %2479 = vmatpush1.xpose.msra.mxu0 0.0
    %2480 = vmatprep.subr.mxu0 0.0
    %2481 = vmatpush1.xpose.msra.mxu0 0.0
    %2482 = vmatprep.subr.mxu0 0.0
    %2483 = vmatpush1.xpose.msra.mxu0 0.0
    %2484 = vmatprep.subr.mxu0 0.0
    %2485 = vmatpush1.xpose.msra.mxu0 0.0
    %2486 = vmatprep.subr.mxu0 0.0
    %2487 = vmatpush1.xpose.msra.mxu0 0.0
    %2488 = vmatprep.subr.mxu0 0.0
    %2489 = vmatpush1.xpose.msra.mxu0 0.0
    %2490 = vmatprep.subr.mxu0 0.0
    %2491 = vmatpush1.xpose.msra.mxu0 0.0
    %2492 = vmatprep.subr.mxu0 0.0
    %2493 = vmatpush1.xpose.msra.mxu0 0.0
    %2494 = vmatprep.subr.mxu0 0.0
    %2495 = vmatpush1.xpose.msra.mxu0 0.0
    %2496 = vmatprep.subr.mxu0 0.0
    %2497 = vmatpush1.xpose.msra.mxu0 0.0
    %2498 = vmatprep.subr.mxu0 0.0
    %2499 = vmatpush1.xpose.msra.mxu0 0.0
    %2500 = vmatprep.subr.mxu0 0.0
    %2501 = vmatpush1.xpose.msra.mxu0 0.0
    %2502 = vmatprep.subr.mxu0 0.0
    %2503 = vmatpush1.xpose.msra.mxu0 0.0
    %2504 = vmatprep.subr.mxu0 0.0
    %2505 = vmatpush1.xpose.msra.mxu0 0.0
    %2506 = vmatprep.subr.mxu0 0.0
    %2507 = vmatpush1.xpose.msra.mxu0 0.0
    %2508 = vmatprep.subr.mxu0 0.0
    %2509 = vmatpush1.xpose.msra.mxu0 0.0
    %2510 = vmatprep.subr.mxu0 0.0
    %2511 = vmatpush1.xpose.msra.mxu0 0.0
    %2512 = vmatprep.subr.mxu0 0.0
    %2513 = vmatpush1.xpose.msra.mxu0 0.0
    %2514 = vmatprep.subr.mxu0 0.0
    %2515 = vmatpush1.xpose.msra.mxu0 0.0
    %2516 = vmatprep.subr.mxu0 0.0
    %2517 = vmatpush1.xpose.msra.mxu0 0.0
    %2518 = vmatprep.mubr.f32.mxu0 0.0
    %2519 = vmatmul.mubr.f32.gmra.mrb[0].mxu0 %v2450
    %v2520 = vpop.f32.mrb[0].mxu0
    %v2521 = vadd.f32 0.0, %v2520
    %v2522 = vpop.f32.mrb[0].mxu0
    %2523 = vdwg.mxu0
    %2524 = vrot.lane.b32.xlu0 %v1991, 96
    %v2525 = vpop.permute.xlu0 %2524
    %v2526 = vsel %vm181, %v1991, 0
    %v2528 = vsel %vm181, %v2525, 0
    %2530 = vmatprep.subr.mxu0 0.0
    %2531 = vmatpush1.xpose.msra.mxu0 %v2528
    %2532 = vmatprep.subr.mxu0 0.0
    %2533 = vmatpush1.xpose.msra.mxu0 0.0
    %2534 = vmatprep.subr.mxu0 0.0
    %2535 = vmatpush1.xpose.msra.mxu0 0.0
    %2536 = vmatprep.subr.mxu0 0.0
    %2537 = vmatpush1.xpose.msra.mxu0 0.0
    %2538 = vmatprep.subr.mxu0 0.0
    %2539 = vmatpush1.xpose.msra.mxu0 0.0
    %2540 = vmatprep.subr.mxu0 0.0
    %2541 = vmatpush1.xpose.msra.mxu0 0.0
    %2542 = vmatprep.subr.mxu0 0.0
    %2543 = vmatpush1.xpose.msra.mxu0 0.0
    %2544 = vmatprep.subr.mxu0 0.0
    %2545 = vmatpush1.xpose.msra.mxu0 0.0
    %2546 = vmatprep.subr.mxu0 0.0
    %2547 = vmatpush1.xpose.msra.mxu0 0.0
    %2548 = vmatprep.subr.mxu0 0.0
    %2549 = vmatpush1.xpose.msra.mxu0 0.0
    %2550 = vmatprep.subr.mxu0 0.0
    %2551 = vmatpush1.xpose.msra.mxu0 0.0
    %2552 = vmatprep.subr.mxu0 0.0
    %2553 = vmatpush1.xpose.msra.mxu0 0.0
    %2554 = vmatprep.subr.mxu0 0.0
    %2555 = vmatpush1.xpose.msra.mxu0 0.0
    %2556 = vmatprep.subr.mxu0 0.0
    %2557 = vmatpush1.xpose.msra.mxu0 0.0
    %2558 = vmatprep.subr.mxu0 0.0
    %2559 = vmatpush1.xpose.msra.mxu0 0.0
    %2560 = vmatprep.subr.mxu0 0.0
    %2561 = vmatpush1.xpose.msra.mxu0 0.0
    %2562 = vmatprep.subr.mxu0 0.0
    %2563 = vmatpush1.xpose.msra.mxu0 0.0
    %2564 = vmatprep.subr.mxu0 0.0
    %2565 = vmatpush1.xpose.msra.mxu0 0.0
    %2566 = vmatprep.subr.mxu0 0.0
    %2567 = vmatpush1.xpose.msra.mxu0 0.0
    %2568 = vmatprep.subr.mxu0 0.0
    %2569 = vmatpush1.xpose.msra.mxu0 0.0
    %2570 = vmatprep.subr.mxu0 0.0
    %2571 = vmatpush1.xpose.msra.mxu0 0.0
    %2572 = vmatprep.subr.mxu0 0.0
    %2573 = vmatpush1.xpose.msra.mxu0 0.0
    %2574 = vmatprep.subr.mxu0 0.0
    %2575 = vmatpush1.xpose.msra.mxu0 0.0
    %2576 = vmatprep.subr.mxu0 0.0
    %2577 = vmatpush1.xpose.msra.mxu0 0.0
    %2578 = vmatprep.subr.mxu0 0.0
    %2579 = vmatpush1.xpose.msra.mxu0 0.0
    %2580 = vmatprep.subr.mxu0 0.0
    %2581 = vmatpush1.xpose.msra.mxu0 0.0
    %2582 = vmatprep.subr.mxu0 0.0
    %2583 = vmatpush1.xpose.msra.mxu0 0.0
    %2584 = vmatprep.subr.mxu0 0.0
    %2585 = vmatpush1.xpose.msra.mxu0 0.0
    %2586 = vmatprep.subr.mxu0 0.0
    %2587 = vmatpush1.xpose.msra.mxu0 0.0
    %2588 = vmatprep.subr.mxu0 0.0
    %2589 = vmatpush1.xpose.msra.mxu0 0.0
    %2590 = vmatprep.subr.mxu0 0.0
    %2591 = vmatpush1.xpose.msra.mxu0 0.0
    %2592 = vmatprep.subr.mxu0 0.0
    %2593 = vmatpush1.xpose.msra.mxu0 0.0
    %2594 = vmatprep.mubr.f32.mxu0 0.0
    %2595 = vmatmul.mubr.f32.gmra.mrb[0].mxu0 %v2526
    %v2596 = vpop.f32.mrb[0].mxu0
    %v2597 = vadd.f32 0.0, %v2596
    %v2598 = vpop.f32.mrb[0].mxu0
    %2599 = vdwg.mxu0
    %v2600 = vmul.f32 %v2065, 0.17677669
    %v2601 = vmul.f32 %v2141, 0.17677669
    %v2602 = vmul.f32 %v2217, 0.17677669
    %v2603 = vmul.f32 %v2293, 0.17677669
    %v2604 = vmul.f32 %v2369, 0.17677669
    %v2605 = vmul.f32 %v2445, 0.17677669
    %v2606 = vmul.f32 %v2521, 0.17677669
    %v2607 = vmul.f32 %v2597, 0.17677669
    %v2608 = vsel %vm39, %v2600, -1e+30
    %v2609 = vsel %vm39, %v2601, -1e+30
    %v2610 = vsel %vm39, %v2602, -1e+30
    %v2611 = vsel %vm39, %v2603, -1e+30
    %v2612 = vsel %vm39, %v2604, -1e+30
    %v2613 = vsel %vm39, %v2605, -1e+30
    %v2614 = vsel %vm39, %v2606, -1e+30
    %v2615 = vsel %vm39, %v2607, -1e+30
    %v2616 = vsel %vm181, %v2608, -inf
    %2617 = vmax.xlane.f32.xlu0 %v2616
    %v2618 = vpop.xlane.xlu0 %2617
    %v2619 = vsel %vm181, %v2609, -inf
    %2620 = vmax.xlane.f32.xlu0 %v2619
    %v2621 = vpop.xlane.xlu0 %2620
    %v2622 = vsel %vm181, %v2610, -inf
    %2623 = vmax.xlane.f32.xlu0 %v2622
    %v2624 = vpop.xlane.xlu0 %2623
    %v2625 = vsel %vm181, %v2611, -inf
    %2626 = vmax.xlane.f32.xlu0 %v2625
    %v2627 = vpop.xlane.xlu0 %2626
    %v2628 = vsel %vm181, %v2612, -inf
    %2629 = vmax.xlane.f32.xlu0 %v2628
    %v2630 = vpop.xlane.xlu0 %2629
    %v2631 = vsel %vm181, %v2613, -inf
    %2632 = vmax.xlane.f32.xlu0 %v2631
    %v2633 = vpop.xlane.xlu0 %2632
    %v2634 = vsel %vm181, %v2614, -inf
    %2635 = vmax.xlane.f32.xlu0 %v2634
    %v2636 = vpop.xlane.xlu0 %2635
    %v2637 = vsel %vm181, %v2615, -inf
    %2638 = vmax.xlane.f32.xlu0 %v2637
    %v2639 = vpop.xlane.xlu0 %2638
    %v2640 = vsub.f32 %v2608, %v2618
    %v2641 = vsub.f32 %v2609, %v2621
    %v2642 = vsub.f32 %v2610, %v2624
    %v2643 = vsub.f32 %v2611, %v2627
    %v2644 = vsub.f32 %v2612, %v2630
    %v2645 = vsub.f32 %v2613, %v2633
    %v2646 = vsub.f32 %v2614, %v2636
    %v2647 = vsub.f32 %v2615, %v2639
    %v2648 = vmul.f32 %v2640, 1.442695
    %v2649 = vpow.pop %v2648
    %v2650 = vmul.f32 %v2641, 1.442695
    %v2651 = vpow.pop %v2650
    %v2652 = vmul.f32 %v2642, 1.442695
    %v2653 = vpow.pop %v2652
    %v2654 = vmul.f32 %v2643, 1.442695
    %v2655 = vpow.pop %v2654
    %v2656 = vmul.f32 %v2644, 1.442695
    %v2657 = vpow.pop %v2656
    %v2658 = vmul.f32 %v2645, 1.442695
    %v2659 = vpow.pop %v2658
    %v2660 = vmul.f32 %v2646, 1.442695
    %v2661 = vpow.pop %v2660
    %v2662 = vmul.f32 %v2647, 1.442695
    %v2663 = vpow.pop %v2662
    %v2664 = vsel %vm181, %v2649, 0.0
    %2665 = vadd.xlane.f32.xlu0 %v2664
    %v2666 = vpop.xlane.xlu0 %2665
    %v2667 = vsel %vm181, %v2651, 0.0
    %2668 = vadd.xlane.f32.xlu0 %v2667
    %v2669 = vpop.xlane.xlu0 %2668
    %v2670 = vsel %vm181, %v2653, 0.0
    %2671 = vadd.xlane.f32.xlu0 %v2670
    %v2672 = vpop.xlane.xlu0 %2671
    %v2673 = vsel %vm181, %v2655, 0.0
    %2674 = vadd.xlane.f32.xlu0 %v2673
    %v2675 = vpop.xlane.xlu0 %2674
    %v2676 = vsel %vm181, %v2657, 0.0
    %2677 = vadd.xlane.f32.xlu0 %v2676
    %v2678 = vpop.xlane.xlu0 %2677
    %v2679 = vsel %vm181, %v2659, 0.0
    %2680 = vadd.xlane.f32.xlu0 %v2679
    %v2681 = vpop.xlane.xlu0 %2680
    %v2682 = vsel %vm181, %v2661, 0.0
    %2683 = vadd.xlane.f32.xlu0 %v2682
    %v2684 = vpop.xlane.xlu0 %2683
    %v2685 = vsel %vm181, %v2663, 0.0
    %2686 = vadd.xlane.f32.xlu0 %v2685
    %v2687 = vpop.xlane.xlu0 %2686
    %v2688 = vrcp.pop %v2666
    %v2689 = vrcp.pop %v2669
    %v2690 = vrcp.pop %v2672
    %v2691 = vrcp.pop %v2675
    %v2692 = vrcp.pop %v2678
    %v2693 = vrcp.pop %v2681
    %v2694 = vrcp.pop %v2684
    %v2695 = vrcp.pop %v2687
    %v2696 = vmul.f32 %v2649, %v2688
    %v2697 = vmul.f32 %v2651, %v2689
    %v2698 = vmul.f32 %v2653, %v2690
    %v2699 = vmul.f32 %v2655, %v2691
    %v2700 = vmul.f32 %v2657, %v2692
    %v2701 = vmul.f32 %v2659, %v2693
    %v2702 = vmul.f32 %v2661, %v2694
    %v2703 = vmul.f32 %v2663, %v2695
    %2704 = vrot.lane.b32.xlu0 %v1970, 64
    %v2705 = vpop.permute.xlu0 %2704
    %v2708 = vsel %vm181, %v2696, 0
    %2710 = vmatprep.subr.mxu0 0.0
    %2711 = vmatpush1.msra.mxu0 %v2705
    %2712 = vmatprep.subr.mxu0 0.0
    %2713 = vmatpush1.msra.mxu0 0.0
    %2714 = vmatprep.subr.mxu0 0.0
    %2715 = vmatpush1.msra.mxu0 0.0
    %2716 = vmatprep.subr.mxu0 0.0
    %2717 = vmatpush1.msra.mxu0 0.0
    %2718 = vmatprep.subr.mxu0 0.0
    %2719 = vmatpush1.msra.mxu0 0.0
    %2720 = vmatprep.subr.mxu0 0.0
    %2721 = vmatpush1.msra.mxu0 0.0
    %2722 = vmatprep.subr.mxu0 0.0
    %2723 = vmatpush1.msra.mxu0 0.0
    %2724 = vmatprep.subr.mxu0 0.0
    %2725 = vmatpush1.msra.mxu0 0.0
    %2726 = vmatprep.subr.mxu0 0.0
    %2727 = vmatpush1.msra.mxu0 0.0
    %2728 = vmatprep.subr.mxu0 0.0
    %2729 = vmatpush1.msra.mxu0 0.0
    %2730 = vmatprep.subr.mxu0 0.0
    %2731 = vmatpush1.msra.mxu0 0.0
    %2732 = vmatprep.subr.mxu0 0.0
    %2733 = vmatpush1.msra.mxu0 0.0
    %2734 = vmatprep.subr.mxu0 0.0
    %2735 = vmatpush1.msra.mxu0 0.0
    %2736 = vmatprep.subr.mxu0 0.0
    %2737 = vmatpush1.msra.mxu0 0.0
    %2738 = vmatprep.subr.mxu0 0.0
    %2739 = vmatpush1.msra.mxu0 0.0
    %2740 = vmatprep.subr.mxu0 0.0
    %2741 = vmatpush1.msra.mxu0 0.0
    %2742 = vmatprep.subr.mxu0 0.0
    %2743 = vmatpush1.msra.mxu0 0.0
    %2744 = vmatprep.subr.mxu0 0.0
    %2745 = vmatpush1.msra.mxu0 0.0
    %2746 = vmatprep.subr.mxu0 0.0
    %2747 = vmatpush1.msra.mxu0 0.0
    %2748 = vmatprep.subr.mxu0 0.0
    %2749 = vmatpush1.msra.mxu0 0.0
    %2750 = vmatprep.subr.mxu0 0.0
    %2751 = vmatpush1.msra.mxu0 0.0
    %2752 = vmatprep.subr.mxu0 0.0
    %2753 = vmatpush1.msra.mxu0 0.0
    %2754 = vmatprep.subr.mxu0 0.0
    %2755 = vmatpush1.msra.mxu0 0.0
    %2756 = vmatprep.subr.mxu0 0.0
    %2757 = vmatpush1.msra.mxu0 0.0
    %2758 = vmatprep.subr.mxu0 0.0
    %2759 = vmatpush1.msra.mxu0 0.0
    %2760 = vmatprep.subr.mxu0 0.0
    %2761 = vmatpush1.msra.mxu0 0.0
    %2762 = vmatprep.subr.mxu0 0.0
    %2763 = vmatpush1.msra.mxu0 0.0
    %2764 = vmatprep.subr.mxu0 0.0
    %2765 = vmatpush1.msra.mxu0 0.0
    %2766 = vmatprep.subr.mxu0 0.0
    %2767 = vmatpush1.msra.mxu0 0.0
    %2768 = vmatprep.subr.mxu0 0.0
    %2769 = vmatpush1.msra.mxu0 0.0
    %2770 = vmatprep.subr.mxu0 0.0
    %2771 = vmatpush1.msra.mxu0 0.0
    %2772 = vmatprep.subr.mxu0 0.0
    %2773 = vmatpush1.msra.mxu0 0.0
    %2774 = vmatprep.mubr.f32.mxu0 0.0
    %2775 = vmatmul.mubr.f32.gmra.mrb[0].mxu0 %v2708
    %v2776 = vpop.f32.mrb[0].mxu0
    %v2777 = vadd.f32 0.0, %v2776
    %v2778 = vpop.f32.mrb[0].mxu0
    %2779 = vdwg.mxu0
    %2780 = vrot.lane.b32.xlu0 %v1975, 64
    %v2781 = vpop.permute.xlu0 %2780
    %v2784 = vsel %vm181, %v2697, 0
    %2786 = vmatprep.subr.mxu0 0.0
    %2787 = vmatpush1.msra.mxu0 %v2781
    %2788 = vmatprep.subr.mxu0 0.0
    %2789 = vmatpush1.msra.mxu0 0.0
    %2790 = vmatprep.subr.mxu0 0.0
    %2791 = vmatpush1.msra.mxu0 0.0
    %2792 = vmatprep.subr.mxu0 0.0
    %2793 = vmatpush1.msra.mxu0 0.0
    %2794 = vmatprep.subr.mxu0 0.0
    %2795 = vmatpush1.msra.mxu0 0.0
    %2796 = vmatprep.subr.mxu0 0.0
    %2797 = vmatpush1.msra.mxu0 0.0
    %2798 = vmatprep.subr.mxu0 0.0
    %2799 = vmatpush1.msra.mxu0 0.0
    %2800 = vmatprep.subr.mxu0 0.0
    %2801 = vmatpush1.msra.mxu0 0.0
    %2802 = vmatprep.subr.mxu0 0.0
    %2803 = vmatpush1.msra.mxu0 0.0
    %2804 = vmatprep.subr.mxu0 0.0
    %2805 = vmatpush1.msra.mxu0 0.0
    %2806 = vmatprep.subr.mxu0 0.0
    %2807 = vmatpush1.msra.mxu0 0.0
    %2808 = vmatprep.subr.mxu0 0.0
    %2809 = vmatpush1.msra.mxu0 0.0
    %2810 = vmatprep.subr.mxu0 0.0
    %2811 = vmatpush1.msra.mxu0 0.0
    %2812 = vmatprep.subr.mxu0 0.0
    %2813 = vmatpush1.msra.mxu0 0.0
    %2814 = vmatprep.subr.mxu0 0.0
    %2815 = vmatpush1.msra.mxu0 0.0
    %2816 = vmatprep.subr.mxu0 0.0
    %2817 = vmatpush1.msra.mxu0 0.0
    %2818 = vmatprep.subr.mxu0 0.0
    %2819 = vmatpush1.msra.mxu0 0.0
    %2820 = vmatprep.subr.mxu0 0.0
    %2821 = vmatpush1.msra.mxu0 0.0
    %2822 = vmatprep.subr.mxu0 0.0
    %2823 = vmatpush1.msra.mxu0 0.0
    %2824 = vmatprep.subr.mxu0 0.0
    %2825 = vmatpush1.msra.mxu0 0.0
    %2826 = vmatprep.subr.mxu0 0.0
    %2827 = vmatpush1.msra.mxu0 0.0
    %2828 = vmatprep.subr.mxu0 0.0
    %2829 = vmatpush1.msra.mxu0 0.0
    %2830 = vmatprep.subr.mxu0 0.0
    %2831 = vmatpush1.msra.mxu0 0.0
    %2832 = vmatprep.subr.mxu0 0.0
    %2833 = vmatpush1.msra.mxu0 0.0
    %2834 = vmatprep.subr.mxu0 0.0
    %2835 = vmatpush1.msra.mxu0 0.0
    %2836 = vmatprep.subr.mxu0 0.0
    %2837 = vmatpush1.msra.mxu0 0.0
    %2838 = vmatprep.subr.mxu0 0.0
    %2839 = vmatpush1.msra.mxu0 0.0
    %2840 = vmatprep.subr.mxu0 0.0
    %2841 = vmatpush1.msra.mxu0 0.0
    %2842 = vmatprep.subr.mxu0 0.0
    %2843 = vmatpush1.msra.mxu0 0.0
    %2844 = vmatprep.subr.mxu0 0.0
    %2845 = vmatpush1.msra.mxu0 0.0
    %2846 = vmatprep.subr.mxu0 0.0
    %2847 = vmatpush1.msra.mxu0 0.0
    %2848 = vmatprep.subr.mxu0 0.0
    %2849 = vmatpush1.msra.mxu0 0.0
    %2850 = vmatprep.mubr.f32.mxu0 0.0
    %2851 = vmatmul.mubr.f32.gmra.mrb[0].mxu0 %v2784
    %v2852 = vpop.f32.mrb[0].mxu0
    %v2853 = vadd.f32 0.0, %v2852
    %v2854 = vpop.f32.mrb[0].mxu0
    %2855 = vdwg.mxu0
    %2856 = vrot.lane.b32.xlu0 %v1981, 64
    %v2857 = vpop.permute.xlu0 %2856
    %v2860 = vsel %vm181, %v2698, 0
    %2862 = vmatprep.subr.mxu0 0.0
    %2863 = vmatpush1.msra.mxu0 %v2857
    %2864 = vmatprep.subr.mxu0 0.0
    %2865 = vmatpush1.msra.mxu0 0.0
    %2866 = vmatprep.subr.mxu0 0.0
    %2867 = vmatpush1.msra.mxu0 0.0
    %2868 = vmatprep.subr.mxu0 0.0
    %2869 = vmatpush1.msra.mxu0 0.0
    %2870 = vmatprep.subr.mxu0 0.0
    %2871 = vmatpush1.msra.mxu0 0.0
    %2872 = vmatprep.subr.mxu0 0.0
    %2873 = vmatpush1.msra.mxu0 0.0
    %2874 = vmatprep.subr.mxu0 0.0
    %2875 = vmatpush1.msra.mxu0 0.0
    %2876 = vmatprep.subr.mxu0 0.0
    %2877 = vmatpush1.msra.mxu0 0.0
    %2878 = vmatprep.subr.mxu0 0.0
    %2879 = vmatpush1.msra.mxu0 0.0
    %2880 = vmatprep.subr.mxu0 0.0
    %2881 = vmatpush1.msra.mxu0 0.0
    %2882 = vmatprep.subr.mxu0 0.0
    %2883 = vmatpush1.msra.mxu0 0.0
    %2884 = vmatprep.subr.mxu0 0.0
    %2885 = vmatpush1.msra.mxu0 0.0
    %2886 = vmatprep.subr.mxu0 0.0
    %2887 = vmatpush1.msra.mxu0 0.0
    %2888 = vmatprep.subr.mxu0 0.0
    %2889 = vmatpush1.msra.mxu0 0.0
    %2890 = vmatprep.subr.mxu0 0.0
    %2891 = vmatpush1.msra.mxu0 0.0
    %2892 = vmatprep.subr.mxu0 0.0
    %2893 = vmatpush1.msra.mxu0 0.0
    %2894 = vmatprep.subr.mxu0 0.0
    %2895 = vmatpush1.msra.mxu0 0.0
    %2896 = vmatprep.subr.mxu0 0.0
    %2897 = vmatpush1.msra.mxu0 0.0
    %2898 = vmatprep.subr.mxu0 0.0
    %2899 = vmatpush1.msra.mxu0 0.0
    %2900 = vmatprep.subr.mxu0 0.0
    %2901 = vmatpush1.msra.mxu0 0.0
    %2902 = vmatprep.subr.mxu0 0.0
    %2903 = vmatpush1.msra.mxu0 0.0
    %2904 = vmatprep.subr.mxu0 0.0
    %2905 = vmatpush1.msra.mxu0 0.0
    %2906 = vmatprep.subr.mxu0 0.0
    %2907 = vmatpush1.msra.mxu0 0.0
    %2908 = vmatprep.subr.mxu0 0.0
    %2909 = vmatpush1.msra.mxu0 0.0
    %2910 = vmatprep.subr.mxu0 0.0
    %2911 = vmatpush1.msra.mxu0 0.0
    %2912 = vmatprep.subr.mxu0 0.0
    %2913 = vmatpush1.msra.mxu0 0.0
    %2914 = vmatprep.subr.mxu0 0.0
    %2915 = vmatpush1.msra.mxu0 0.0
    %2916 = vmatprep.subr.mxu0 0.0
    %2917 = vmatpush1.msra.mxu0 0.0
    %2918 = vmatprep.subr.mxu0 0.0
    %2919 = vmatpush1.msra.mxu0 0.0
    %2920 = vmatprep.subr.mxu0 0.0
    %2921 = vmatpush1.msra.mxu0 0.0
    %2922 = vmatprep.subr.mxu0 0.0
    %2923 = vmatpush1.msra.mxu0 0.0
    %2924 = vmatprep.subr.mxu0 0.0
    %2925 = vmatpush1.msra.mxu0 0.0
    %2926 = vmatprep.mubr.f32.mxu0 0.0
    %2927 = vmatmul.mubr.f32.gmra.mrb[0].mxu0 %v2860
    %v2928 = vpop.f32.mrb[0].mxu0
    %v2929 = vadd.f32 0.0, %v2928
    %v2930 = vpop.f32.mrb[0].mxu0
    %2931 = vdwg.mxu0
    %2932 = vrot.lane.b32.xlu0 %v1983, 64
    %v2933 = vpop.permute.xlu0 %2932
    %v2936 = vsel %vm181, %v2699, 0
    %2938 = vmatprep.subr.mxu0 0.0
    %2939 = vmatpush1.msra.mxu0 %v2933
    %2940 = vmatprep.subr.mxu0 0.0
    %2941 = vmatpush1.msra.mxu0 0.0
    %2942 = vmatprep.subr.mxu0 0.0
    %2943 = vmatpush1.msra.mxu0 0.0
    %2944 = vmatprep.subr.mxu0 0.0
    %2945 = vmatpush1.msra.mxu0 0.0
    %2946 = vmatprep.subr.mxu0 0.0
    %2947 = vmatpush1.msra.mxu0 0.0
    %2948 = vmatprep.subr.mxu0 0.0
    %2949 = vmatpush1.msra.mxu0 0.0
    %2950 = vmatprep.subr.mxu0 0.0
    %2951 = vmatpush1.msra.mxu0 0.0
    %2952 = vmatprep.subr.mxu0 0.0
    %2953 = vmatpush1.msra.mxu0 0.0
    %2954 = vmatprep.subr.mxu0 0.0
    %2955 = vmatpush1.msra.mxu0 0.0
    %2956 = vmatprep.subr.mxu0 0.0
    %2957 = vmatpush1.msra.mxu0 0.0
    %2958 = vmatprep.subr.mxu0 0.0
    %2959 = vmatpush1.msra.mxu0 0.0
    %2960 = vmatprep.subr.mxu0 0.0
    %2961 = vmatpush1.msra.mxu0 0.0
    %2962 = vmatprep.subr.mxu0 0.0
    %2963 = vmatpush1.msra.mxu0 0.0
    %2964 = vmatprep.subr.mxu0 0.0
    %2965 = vmatpush1.msra.mxu0 0.0
    %2966 = vmatprep.subr.mxu0 0.0
    %2967 = vmatpush1.msra.mxu0 0.0
    %2968 = vmatprep.subr.mxu0 0.0
    %2969 = vmatpush1.msra.mxu0 0.0
    %2970 = vmatprep.subr.mxu0 0.0
    %2971 = vmatpush1.msra.mxu0 0.0
    %2972 = vmatprep.subr.mxu0 0.0
    %2973 = vmatpush1.msra.mxu0 0.0
    %2974 = vmatprep.subr.mxu0 0.0
    %2975 = vmatpush1.msra.mxu0 0.0
    %2976 = vmatprep.subr.mxu0 0.0
    %2977 = vmatpush1.msra.mxu0 0.0
    %2978 = vmatprep.subr.mxu0 0.0
    %2979 = vmatpush1.msra.mxu0 0.0
    %2980 = vmatprep.subr.mxu0 0.0
    %2981 = vmatpush1.msra.mxu0 0.0
    %2982 = vmatprep.subr.mxu0 0.0
    %2983 = vmatpush1.msra.mxu0 0.0
    %2984 = vmatprep.subr.mxu0 0.0
    %2985 = vmatpush1.msra.mxu0 0.0
    %2986 = vmatprep.subr.mxu0 0.0
    %2987 = vmatpush1.msra.mxu0 0.0
    %2988 = vmatprep.subr.mxu0 0.0
    %2989 = vmatpush1.msra.mxu0 0.0
    %2990 = vmatprep.subr.mxu0 0.0
    %2991 = vmatpush1.msra.mxu0 0.0
    %2992 = vmatprep.subr.mxu0 0.0
    %2993 = vmatpush1.msra.mxu0 0.0
    %2994 = vmatprep.subr.mxu0 0.0
    %2995 = vmatpush1.msra.mxu0 0.0
    %2996 = vmatprep.subr.mxu0 0.0
    %2997 = vmatpush1.msra.mxu0 0.0
    %2998 = vmatprep.subr.mxu0 0.0
    %2999 = vmatpush1.msra.mxu0 0.0
    %3000 = vmatprep.subr.mxu0 0.0
    %3001 = vmatpush1.msra.mxu0 0.0
    %3002 = vmatprep.mubr.f32.mxu0 0.0
    %3003 = vmatmul.mubr.f32.gmra.mrb[0].mxu0 %v2936
    %v3004 = vpop.f32.mrb[0].mxu0
    %v3005 = vadd.f32 0.0, %v3004
    %v3006 = vpop.f32.mrb[0].mxu0
    %3007 = vdwg.mxu0
    %3008 = vrot.lane.b32.xlu0 %v1985, 64
    %v3009 = vpop.permute.xlu0 %3008
    %v3012 = vsel %vm181, %v2700, 0
    %3014 = vmatprep.subr.mxu0 0.0
    %3015 = vmatpush1.msra.mxu0 %v3009
    %3016 = vmatprep.subr.mxu0 0.0
    %3017 = vmatpush1.msra.mxu0 0.0
    %3018 = vmatprep.subr.mxu0 0.0
    %3019 = vmatpush1.msra.mxu0 0.0
    %3020 = vmatprep.subr.mxu0 0.0
    %3021 = vmatpush1.msra.mxu0 0.0
    %3022 = vmatprep.subr.mxu0 0.0
    %3023 = vmatpush1.msra.mxu0 0.0
    %3024 = vmatprep.subr.mxu0 0.0
    %3025 = vmatpush1.msra.mxu0 0.0
    %3026 = vmatprep.subr.mxu0 0.0
    %3027 = vmatpush1.msra.mxu0 0.0
    %3028 = vmatprep.subr.mxu0 0.0
    %3029 = vmatpush1.msra.mxu0 0.0
    %3030 = vmatprep.subr.mxu0 0.0
    %3031 = vmatpush1.msra.mxu0 0.0
    %3032 = vmatprep.subr.mxu0 0.0
    %3033 = vmatpush1.msra.mxu0 0.0
    %3034 = vmatprep.subr.mxu0 0.0
    %3035 = vmatpush1.msra.mxu0 0.0
    %3036 = vmatprep.subr.mxu0 0.0
    %3037 = vmatpush1.msra.mxu0 0.0
    %3038 = vmatprep.subr.mxu0 0.0
    %3039 = vmatpush1.msra.mxu0 0.0
    %3040 = vmatprep.subr.mxu0 0.0
    %3041 = vmatpush1.msra.mxu0 0.0
    %3042 = vmatprep.subr.mxu0 0.0
    %3043 = vmatpush1.msra.mxu0 0.0
    %3044 = vmatprep.subr.mxu0 0.0
    %3045 = vmatpush1.msra.mxu0 0.0
    %3046 = vmatprep.subr.mxu0 0.0
    %3047 = vmatpush1.msra.mxu0 0.0
    %3048 = vmatprep.subr.mxu0 0.0
    %3049 = vmatpush1.msra.mxu0 0.0
    %3050 = vmatprep.subr.mxu0 0.0
    %3051 = vmatpush1.msra.mxu0 0.0
    %3052 = vmatprep.subr.mxu0 0.0
    %3053 = vmatpush1.msra.mxu0 0.0
    %3054 = vmatprep.subr.mxu0 0.0
    %3055 = vmatpush1.msra.mxu0 0.0
    %3056 = vmatprep.subr.mxu0 0.0
    %3057 = vmatpush1.msra.mxu0 0.0
    %3058 = vmatprep.subr.mxu0 0.0
    %3059 = vmatpush1.msra.mxu0 0.0
    %3060 = vmatprep.subr.mxu0 0.0
    %3061 = vmatpush1.msra.mxu0 0.0
    %3062 = vmatprep.subr.mxu0 0.0
    %3063 = vmatpush1.msra.mxu0 0.0
    %3064 = vmatprep.subr.mxu0 0.0
    %3065 = vmatpush1.msra.mxu0 0.0
    %3066 = vmatprep.subr.mxu0 0.0
    %3067 = vmatpush1.msra.mxu0 0.0
    %3068 = vmatprep.subr.mxu0 0.0
    %3069 = vmatpush1.msra.mxu0 0.0
    %3070 = vmatprep.subr.mxu0 0.0
    %3071 = vmatpush1.msra.mxu0 0.0
    %3072 = vmatprep.subr.mxu0 0.0
    %3073 = vmatpush1.msra.mxu0 0.0
    %3074 = vmatprep.subr.mxu0 0.0
    %3075 = vmatpush1.msra.mxu0 0.0
    %3076 = vmatprep.subr.mxu0 0.0
    %3077 = vmatpush1.msra.mxu0 0.0
    %3078 = vmatprep.mubr.f32.mxu0 0.0
    %3079 = vmatmul.mubr.f32.gmra.mrb[0].mxu0 %v3012
    %v3080 = vpop.f32.mrb[0].mxu0
    %v3081 = vadd.f32 0.0, %v3080
    %v3082 = vpop.f32.mrb[0].mxu0
    %3083 = vdwg.mxu0
    %3084 = vrot.lane.b32.xlu0 %v1987, 64
    %v3085 = vpop.permute.xlu0 %3084
    %v3088 = vsel %vm181, %v2701, 0
    %3090 = vmatprep.subr.mxu0 0.0
    %3091 = vmatpush1.msra.mxu0 %v3085
    %3092 = vmatprep.subr.mxu0 0.0
    %3093 = vmatpush1.msra.mxu0 0.0
    %3094 = vmatprep.subr.mxu0 0.0
    %3095 = vmatpush1.msra.mxu0 0.0
    %3096 = vmatprep.subr.mxu0 0.0
    %3097 = vmatpush1.msra.mxu0 0.0
    %3098 = vmatprep.subr.mxu0 0.0
    %3099 = vmatpush1.msra.mxu0 0.0
    %3100 = vmatprep.subr.mxu0 0.0
    %3101 = vmatpush1.msra.mxu0 0.0
    %3102 = vmatprep.subr.mxu0 0.0
    %3103 = vmatpush1.msra.mxu0 0.0
    %3104 = vmatprep.subr.mxu0 0.0
    %3105 = vmatpush1.msra.mxu0 0.0
    %3106 = vmatprep.subr.mxu0 0.0
    %3107 = vmatpush1.msra.mxu0 0.0
    %3108 = vmatprep.subr.mxu0 0.0
    %3109 = vmatpush1.msra.mxu0 0.0
    %3110 = vmatprep.subr.mxu0 0.0
    %3111 = vmatpush1.msra.mxu0 0.0
    %3112 = vmatprep.subr.mxu0 0.0
    %3113 = vmatpush1.msra.mxu0 0.0
    %3114 = vmatprep.subr.mxu0 0.0
    %3115 = vmatpush1.msra.mxu0 0.0
    %3116 = vmatprep.subr.mxu0 0.0
    %3117 = vmatpush1.msra.mxu0 0.0
    %3118 = vmatprep.subr.mxu0 0.0
    %3119 = vmatpush1.msra.mxu0 0.0
    %3120 = vmatprep.subr.mxu0 0.0
    %3121 = vmatpush1.msra.mxu0 0.0
    %3122 = vmatprep.subr.mxu0 0.0
    %3123 = vmatpush1.msra.mxu0 0.0
    %3124 = vmatprep.subr.mxu0 0.0
    %3125 = vmatpush1.msra.mxu0 0.0
    %3126 = vmatprep.subr.mxu0 0.0
    %3127 = vmatpush1.msra.mxu0 0.0
    %3128 = vmatprep.subr.mxu0 0.0
    %3129 = vmatpush1.msra.mxu0 0.0
    %3130 = vmatprep.subr.mxu0 0.0
    %3131 = vmatpush1.msra.mxu0 0.0
    %3132 = vmatprep.subr.mxu0 0.0
    %3133 = vmatpush1.msra.mxu0 0.0
    %3134 = vmatprep.subr.mxu0 0.0
    %3135 = vmatpush1.msra.mxu0 0.0
    %3136 = vmatprep.subr.mxu0 0.0
    %3137 = vmatpush1.msra.mxu0 0.0
    %3138 = vmatprep.subr.mxu0 0.0
    %3139 = vmatpush1.msra.mxu0 0.0
    %3140 = vmatprep.subr.mxu0 0.0
    %3141 = vmatpush1.msra.mxu0 0.0
    %3142 = vmatprep.subr.mxu0 0.0
    %3143 = vmatpush1.msra.mxu0 0.0
    %3144 = vmatprep.subr.mxu0 0.0
    %3145 = vmatpush1.msra.mxu0 0.0
    %3146 = vmatprep.subr.mxu0 0.0
    %3147 = vmatpush1.msra.mxu0 0.0
    %3148 = vmatprep.subr.mxu0 0.0
    %3149 = vmatpush1.msra.mxu0 0.0
    %3150 = vmatprep.subr.mxu0 0.0
    %3151 = vmatpush1.msra.mxu0 0.0
    %3152 = vmatprep.subr.mxu0 0.0
    %3153 = vmatpush1.msra.mxu0 0.0
    %3154 = vmatprep.mubr.f32.mxu0 0.0
    %3155 = vmatmul.mubr.f32.gmra.mrb[0].mxu0 %v3088
    %v3156 = vpop.f32.mrb[0].mxu0
    %v3157 = vadd.f32 0.0, %v3156
    %v3158 = vpop.f32.mrb[0].mxu0
    %3159 = vdwg.mxu0
    %3160 = vrot.lane.b32.xlu0 %v1989, 64
    %v3161 = vpop.permute.xlu0 %3160
    %v3164 = vsel %vm181, %v2702, 0
    %3166 = vmatprep.subr.mxu0 0.0
    %3167 = vmatpush1.msra.mxu0 %v3161
    %3168 = vmatprep.subr.mxu0 0.0
    %3169 = vmatpush1.msra.mxu0 0.0
    %3170 = vmatprep.subr.mxu0 0.0
    %3171 = vmatpush1.msra.mxu0 0.0
    %3172 = vmatprep.subr.mxu0 0.0
    %3173 = vmatpush1.msra.mxu0 0.0
    %3174 = vmatprep.subr.mxu0 0.0
    %3175 = vmatpush1.msra.mxu0 0.0
    %3176 = vmatprep.subr.mxu0 0.0
    %3177 = vmatpush1.msra.mxu0 0.0
    %3178 = vmatprep.subr.mxu0 0.0
    %3179 = vmatpush1.msra.mxu0 0.0
    %3180 = vmatprep.subr.mxu0 0.0
    %3181 = vmatpush1.msra.mxu0 0.0
    %3182 = vmatprep.subr.mxu0 0.0
    %3183 = vmatpush1.msra.mxu0 0.0
    %3184 = vmatprep.subr.mxu0 0.0
    %3185 = vmatpush1.msra.mxu0 0.0
    %3186 = vmatprep.subr.mxu0 0.0
    %3187 = vmatpush1.msra.mxu0 0.0
    %3188 = vmatprep.subr.mxu0 0.0
    %3189 = vmatpush1.msra.mxu0 0.0
    %3190 = vmatprep.subr.mxu0 0.0
    %3191 = vmatpush1.msra.mxu0 0.0
    %3192 = vmatprep.subr.mxu0 0.0
    %3193 = vmatpush1.msra.mxu0 0.0
    %3194 = vmatprep.subr.mxu0 0.0
    %3195 = vmatpush1.msra.mxu0 0.0
    %3196 = vmatprep.subr.mxu0 0.0
    %3197 = vmatpush1.msra.mxu0 0.0
    %3198 = vmatprep.subr.mxu0 0.0
    %3199 = vmatpush1.msra.mxu0 0.0
    %3200 = vmatprep.subr.mxu0 0.0
    %3201 = vmatpush1.msra.mxu0 0.0
    %3202 = vmatprep.subr.mxu0 0.0
    %3203 = vmatpush1.msra.mxu0 0.0
    %3204 = vmatprep.subr.mxu0 0.0
    %3205 = vmatpush1.msra.mxu0 0.0
    %3206 = vmatprep.subr.mxu0 0.0
    %3207 = vmatpush1.msra.mxu0 0.0
    %3208 = vmatprep.subr.mxu0 0.0
    %3209 = vmatpush1.msra.mxu0 0.0
    %3210 = vmatprep.subr.mxu0 0.0
    %3211 = vmatpush1.msra.mxu0 0.0
    %3212 = vmatprep.subr.mxu0 0.0
    %3213 = vmatpush1.msra.mxu0 0.0
    %3214 = vmatprep.subr.mxu0 0.0
    %3215 = vmatpush1.msra.mxu0 0.0
    %3216 = vmatprep.subr.mxu0 0.0
    %3217 = vmatpush1.msra.mxu0 0.0
    %3218 = vmatprep.subr.mxu0 0.0
    %3219 = vmatpush1.msra.mxu0 0.0
    %3220 = vmatprep.subr.mxu0 0.0
    %3221 = vmatpush1.msra.mxu0 0.0
    %3222 = vmatprep.subr.mxu0 0.0
    %3223 = vmatpush1.msra.mxu0 0.0
    %3224 = vmatprep.subr.mxu0 0.0
    %3225 = vmatpush1.msra.mxu0 0.0
    %3226 = vmatprep.subr.mxu0 0.0
    %3227 = vmatpush1.msra.mxu0 0.0
    %3228 = vmatprep.subr.mxu0 0.0
    %3229 = vmatpush1.msra.mxu0 0.0
    %3230 = vmatprep.mubr.f32.mxu0 0.0
    %3231 = vmatmul.mubr.f32.gmra.mrb[0].mxu0 %v3164
    %v3232 = vpop.f32.mrb[0].mxu0
    %v3233 = vadd.f32 0.0, %v3232
    %v3234 = vpop.f32.mrb[0].mxu0
    %3235 = vdwg.mxu0
    %3236 = vrot.lane.b32.xlu0 %v1991, 64
    %v3237 = vpop.permute.xlu0 %3236
    %v3240 = vsel %vm181, %v2703, 0
    %3242 = vmatprep.subr.mxu0 0.0
    %3243 = vmatpush1.msra.mxu0 %v3237
    %3244 = vmatprep.subr.mxu0 0.0
    %3245 = vmatpush1.msra.mxu0 0.0
    %3246 = vmatprep.subr.mxu0 0.0
    %3247 = vmatpush1.msra.mxu0 0.0
    %3248 = vmatprep.subr.mxu0 0.0
    %3249 = vmatpush1.msra.mxu0 0.0
    %3250 = vmatprep.subr.mxu0 0.0
    %3251 = vmatpush1.msra.mxu0 0.0
    %3252 = vmatprep.subr.mxu0 0.0
    %3253 = vmatpush1.msra.mxu0 0.0
    %3254 = vmatprep.subr.mxu0 0.0
    %3255 = vmatpush1.msra.mxu0 0.0
    %3256 = vmatprep.subr.mxu0 0.0
    %3257 = vmatpush1.msra.mxu0 0.0
    %3258 = vmatprep.subr.mxu0 0.0
    %3259 = vmatpush1.msra.mxu0 0.0
    %3260 = vmatprep.subr.mxu0 0.0
    %3261 = vmatpush1.msra.mxu0 0.0
    %3262 = vmatprep.subr.mxu0 0.0
    %3263 = vmatpush1.msra.mxu0 0.0
    %3264 = vmatprep.subr.mxu0 0.0
    %3265 = vmatpush1.msra.mxu0 0.0
    %3266 = vmatprep.subr.mxu0 0.0
    %3267 = vmatpush1.msra.mxu0 0.0
    %3268 = vmatprep.subr.mxu0 0.0
    %3269 = vmatpush1.msra.mxu0 0.0
    %3270 = vmatprep.subr.mxu0 0.0
    %3271 = vmatpush1.msra.mxu0 0.0
    %3272 = vmatprep.subr.mxu0 0.0
    %3273 = vmatpush1.msra.mxu0 0.0
    %3274 = vmatprep.subr.mxu0 0.0
    %3275 = vmatpush1.msra.mxu0 0.0
    %3276 = vmatprep.subr.mxu0 0.0
    %3277 = vmatpush1.msra.mxu0 0.0
    %3278 = vmatprep.subr.mxu0 0.0
    %3279 = vmatpush1.msra.mxu0 0.0
    %3280 = vmatprep.subr.mxu0 0.0
    %3281 = vmatpush1.msra.mxu0 0.0
    %3282 = vmatprep.subr.mxu0 0.0
    %3283 = vmatpush1.msra.mxu0 0.0
    %3284 = vmatprep.subr.mxu0 0.0
    %3285 = vmatpush1.msra.mxu0 0.0
    %3286 = vmatprep.subr.mxu0 0.0
    %3287 = vmatpush1.msra.mxu0 0.0
    %3288 = vmatprep.subr.mxu0 0.0
    %3289 = vmatpush1.msra.mxu0 0.0
    %3290 = vmatprep.subr.mxu0 0.0
    %3291 = vmatpush1.msra.mxu0 0.0
    %3292 = vmatprep.subr.mxu0 0.0
    %3293 = vmatpush1.msra.mxu0 0.0
    %3294 = vmatprep.subr.mxu0 0.0
    %3295 = vmatpush1.msra.mxu0 0.0
    %3296 = vmatprep.subr.mxu0 0.0
    %3297 = vmatpush1.msra.mxu0 0.0
    %3298 = vmatprep.subr.mxu0 0.0
    %3299 = vmatpush1.msra.mxu0 0.0
    %3300 = vmatprep.subr.mxu0 0.0
    %3301 = vmatpush1.msra.mxu0 0.0
    %3302 = vmatprep.subr.mxu0 0.0
    %3303 = vmatpush1.msra.mxu0 0.0
    %3304 = vmatprep.subr.mxu0 0.0
    %3305 = vmatpush1.msra.mxu0 0.0
    %3306 = vmatprep.mubr.f32.mxu0 0.0
    %3307 = vmatmul.mubr.f32.gmra.mrb[0].mxu0 %v3240
    %v3308 = vpop.f32.mrb[0].mxu0
    %v3309 = vadd.f32 0.0, %v3308
    %v3310 = vpop.f32.mrb[0].mxu0
    %3311 = vdwg.mxu0
    %3314 = vrot.lane.b32.xlu0 %v2929, 8
    %v3315 = vpop.permute.xlu0 %3314
    %3316 = vrot.lane.b32.xlu0 %v3005, 8
    %v3317 = vpop.permute.xlu0 %3316
    %3322 = vrot.lane.b32.xlu0 %v3081, 16
    %v3323 = vpop.permute.xlu0 %3322
    %3324 = vrot.lane.b32.xlu0 %v3157, 16
    %v3325 = vpop.permute.xlu0 %3324
    %3330 = vrot.lane.b32.xlu0 %v3233, 24
    %v3331 = vpop.permute.xlu0 %3330
    %3332 = vrot.lane.b32.xlu0 %v3309, 24
    %v3333 = vpop.permute.xlu0 %3332
    %v3336 = vsel %vm181, %v2777, %v3315
    %v3337 = vsel %vm181, %v2853, %v3317
    %v3338 = vsel %vm1526, %v3336, %v3323
    %v3339 = vsel %vm1526, %v3337, %v3325
    %v3340 = vsel %vm1529, %v3338, %v3331
    %v3341 = vsel %vm1529, %v3339, %v3333
    %s3342 = scalar_lea.vmem %s2, 32
    %v3343 = vld [vmem:[%s3342] sm:$0xff]
    %v3344 = vld [vmem:[%s3342 + $0x8] sm:$0xff]
    %v3345 = vld [vmem:[%s3342 + $0x10] sm:$0xff]
    %v3346 = vld [vmem:[%s3342 + $0x18] sm:$0xff]
    %v3348 = vsel %vm40, %v3340, 0
    %v3351 = vsel %vm40, %v3341, 0
    %3353 = vmatprep.subr.mxu0 0.0
    %3354 = vmatpush1.msra.mxu0 %v3343
    %3355 = vmatprep.subr.mxu0 0.0
    %3356 = vmatpush1.msra.mxu0 %v3344
    %3357 = vmatprep.subr.mxu0 0.0
    %3358 = vmatpush1.msra.mxu0 %v3345
    %3359 = vmatprep.subr.mxu0 0.0
    %3360 = vmatpush1.msra.mxu0 %v3346
    %3361 = vmatprep.subr.mxu0 0.0
    %3362 = vmatpush1.msra.mxu0 0.0
    %3363 = vmatprep.subr.mxu0 0.0
    %3364 = vmatpush1.msra.mxu0 0.0
    %3365 = vmatprep.subr.mxu0 0.0
    %3366 = vmatpush1.msra.mxu0 0.0
    %3367 = vmatprep.subr.mxu0 0.0
    %3368 = vmatpush1.msra.mxu0 0.0
    %3369 = vmatprep.subr.mxu0 0.0
    %3370 = vmatpush1.msra.mxu0 0.0
    %3371 = vmatprep.subr.mxu0 0.0
    %3372 = vmatpush1.msra.mxu0 0.0
    %3373 = vmatprep.subr.mxu0 0.0
    %3374 = vmatpush1.msra.mxu0 0.0
    %3375 = vmatprep.subr.mxu0 0.0
    %3376 = vmatpush1.msra.mxu0 0.0
    %3377 = vmatprep.subr.mxu0 0.0
    %3378 = vmatpush1.msra.mxu0 0.0
    %3379 = vmatprep.subr.mxu0 0.0
    %3380 = vmatpush1.msra.mxu0 0.0
    %3381 = vmatprep.subr.mxu0 0.0
    %3382 = vmatpush1.msra.mxu0 0.0
    %3383 = vmatprep.subr.mxu0 0.0
    %3384 = vmatpush1.msra.mxu0 0.0
    %3385 = vmatprep.subr.mxu0 0.0
    %3386 = vmatpush1.msra.mxu0 0.0
    %3387 = vmatprep.subr.mxu0 0.0
    %3388 = vmatpush1.msra.mxu0 0.0
    %3389 = vmatprep.subr.mxu0 0.0
    %3390 = vmatpush1.msra.mxu0 0.0
    %3391 = vmatprep.subr.mxu0 0.0
    %3392 = vmatpush1.msra.mxu0 0.0
    %3393 = vmatprep.subr.mxu0 0.0
    %3394 = vmatpush1.msra.mxu0 0.0
    %3395 = vmatprep.subr.mxu0 0.0
    %3396 = vmatpush1.msra.mxu0 0.0
    %3397 = vmatprep.subr.mxu0 0.0
    %3398 = vmatpush1.msra.mxu0 0.0
    %3399 = vmatprep.subr.mxu0 0.0
    %3400 = vmatpush1.msra.mxu0 0.0
    %3401 = vmatprep.subr.mxu0 0.0
    %3402 = vmatpush1.msra.mxu0 0.0
    %3403 = vmatprep.subr.mxu0 0.0
    %3404 = vmatpush1.msra.mxu0 0.0
    %3405 = vmatprep.subr.mxu0 0.0
    %3406 = vmatpush1.msra.mxu0 0.0
    %3407 = vmatprep.subr.mxu0 0.0
    %3408 = vmatpush1.msra.mxu0 0.0
    %3409 = vmatprep.subr.mxu0 0.0
    %3410 = vmatpush1.msra.mxu0 0.0
    %3411 = vmatprep.subr.mxu0 0.0
    %3412 = vmatpush1.msra.mxu0 0.0
    %3413 = vmatprep.subr.mxu0 0.0
    %3414 = vmatpush1.msra.mxu0 0.0
    %3415 = vmatprep.subr.mxu0 0.0
    %3416 = vmatpush1.msra.mxu0 0.0
    %3417 = vmatprep.mubr.f32.mxu0 0.0
    %3418 = vmatmul.mubr.f32.gmra.mrb[0].mxu0 %v3348
    %v3419 = vpop.f32.mrb[0].mxu0
    %v3420 = vadd.f32 0.0, %v3419
    %v3421 = vpop.f32.mrb[0].mxu0
    %3422 = vmatprep.mubr.f32.mxu0 0.0
    %3423 = vmatmul.mubr.f32.gmra.mrb[0].mxu0 %v3351
    %v3424 = vpop.f32.mrb[0].mxu0
    %v3425 = vadd.f32 0.0, %v3424
    %v3426 = vpop.f32.mrb[0].mxu0
    %3427 = vdwg.mxu0
    %v3428 = vadd.f32 %v1852, %v3420
    %v3429 = vadd.f32 %v1853, %v3425
    %v3430 = vlaneseq
    %v3431 = vshrl.u32 %v3430, 7
    %v3432 = vsub.s32 2, %v3431
    %v3433 = vrot.slane %v33, %v3432
    %v3434 = vadd.f32 %v3428, %v3433
    %v3435 = vadd.f32 %v3429, %v3433
    %v3436 = vsel %vm40, %v3434, 0.0
    %3437 = vadd.xlane.f32.xlu0 %v3436
    %v3438 = vpop.xlane.xlu0 %3437
    %v3439 = vsel %vm40, %v3435, 0.0
    %3440 = vadd.xlane.f32.xlu0 %v3439
    %v3441 = vpop.xlane.xlu0 %3440
    %v3442 = vmul.f32 %v3438, %v47
    %v3443 = vmul.f32 %v3441, %v47
    %v3444 = vsub.f32 %v3434, %v3442
    %v3445 = vsub.f32 %v3435, %v3443
    %v3446 = vmul.f32 %v3444, %v3444
    %v3447 = vmul.f32 %v3445, %v3445
    %v3448 = vsel %vm40, %v3446, 0.0
    %3449 = vadd.xlane.f32.xlu0 %v3448
    %v3450 = vpop.xlane.xlu0 %3449
    %v3451 = vsel %vm40, %v3447, 0.0
    %3452 = vadd.xlane.f32.xlu0 %v3451
    %v3453 = vpop.xlane.xlu0 %3452
    %v3454 = vmul.f32 %v3450, %v47
    %v3455 = vmul.f32 %v3453, %v47
    %v3456 = vadd.f32 %v3454, 1e-05
    %v3457 = vadd.f32 %v3455, 1e-05
    %v3458 = vrsqrt.pop %v3456
    %v3459 = vrsqrt.pop %v3457
    %v3460 = vmul.f32 %v3444, %v3458
    %v3461 = vmul.f32 %v3445, %v3459
    %v3462 = vlaneseq
    %v3463 = vshrl.u32 %v3462, 7
    %v3464 = vsub.s32 0, %v3463
    %v3465 = vrot.slane %v33, %v3464
    %v3466 = vmul.f32 %v3460, %v3465
    %v3467 = vmul.f32 %v3461, %v3465
    %v3468 = vlaneseq
    %v3469 = vshrl.u32 %v3468, 7
    %v3470 = vsub.s32 1, %v3469
    %v3471 = vrot.slane %v33, %v3470
    %v3472 = vadd.f32 %v3466, %v3471
    %v3473 = vadd.f32 %v3467, %v3471
    %s3474 = scalar_lea.vmem %s3, 32
    %v3475 = vld [vmem:[%s3474] sm:$0xff]
    %v3476 = vld [vmem:[%s3474 + $0x8] sm:$0xff]
    %v3477 = vld [vmem:[%s3474 + $0x10] sm:$0xff]
    %v3478 = vld [vmem:[%s3474 + $0x18] sm:$0xff]
    %s3479 = scalar_lea.vmem %s4, 1
    %v3480 = vld [vmem:[%s3479] sm:$0x1]
    %v3482 = vlaneseq
    %v3483 = vshrl.u32 %v3482, 7
    %v3484 = vsub.s32 0, %v3483
    %v3485 = vrot.slane %v3480, %v3484
    %v3488 = vsel %vm40, %v3472, 0
    %v3491 = vsel %vm40, %v3473, 0
    %3493 = vmatprep.subr.mxu0 0.0
    %3494 = vmatpush1.msra.mxu0 %v3475
    %3495 = vmatprep.subr.mxu0 0.0
    %3496 = vmatpush1.msra.mxu0 %v3476
    %3497 = vmatprep.subr.mxu0 0.0
    %3498 = vmatpush1.msra.mxu0 %v3477
    %3499 = vmatprep.subr.mxu0 0.0
    %3500 = vmatpush1.msra.mxu0 %v3478
    %3501 = vmatprep.subr.mxu0 0.0
    %3502 = vmatpush1.msra.mxu0 0.0
    %3503 = vmatprep.subr.mxu0 0.0
    %3504 = vmatpush1.msra.mxu0 0.0
    %3505 = vmatprep.subr.mxu0 0.0
    %3506 = vmatpush1.msra.mxu0 0.0
    %3507 = vmatprep.subr.mxu0 0.0
    %3508 = vmatpush1.msra.mxu0 0.0
    %3509 = vmatprep.subr.mxu0 0.0
    %3510 = vmatpush1.msra.mxu0 0.0
    %3511 = vmatprep.subr.mxu0 0.0
    %3512 = vmatpush1.msra.mxu0 0.0
    %3513 = vmatprep.subr.mxu0 0.0
    %3514 = vmatpush1.msra.mxu0 0.0
    %3515 = vmatprep.subr.mxu0 0.0
    %3516 = vmatpush1.msra.mxu0 0.0
    %3517 = vmatprep.subr.mxu0 0.0
    %3518 = vmatpush1.msra.mxu0 0.0
    %3519 = vmatprep.subr.mxu0 0.0
    %3520 = vmatpush1.msra.mxu0 0.0
    %3521 = vmatprep.subr.mxu0 0.0
    %3522 = vmatpush1.msra.mxu0 0.0
    %3523 = vmatprep.subr.mxu0 0.0
    %3524 = vmatpush1.msra.mxu0 0.0
    %3525 = vmatprep.subr.mxu0 0.0
    %3526 = vmatpush1.msra.mxu0 0.0
    %3527 = vmatprep.subr.mxu0 0.0
    %3528 = vmatpush1.msra.mxu0 0.0
    %3529 = vmatprep.subr.mxu0 0.0
    %3530 = vmatpush1.msra.mxu0 0.0
    %3531 = vmatprep.subr.mxu0 0.0
    %3532 = vmatpush1.msra.mxu0 0.0
    %3533 = vmatprep.subr.mxu0 0.0
    %3534 = vmatpush1.msra.mxu0 0.0
    %3535 = vmatprep.subr.mxu0 0.0
    %3536 = vmatpush1.msra.mxu0 0.0
    %3537 = vmatprep.subr.mxu0 0.0
    %3538 = vmatpush1.msra.mxu0 0.0
    %3539 = vmatprep.subr.mxu0 0.0
    %3540 = vmatpush1.msra.mxu0 0.0
    %3541 = vmatprep.subr.mxu0 0.0
    %3542 = vmatpush1.msra.mxu0 0.0
    %3543 = vmatprep.subr.mxu0 0.0
    %3544 = vmatpush1.msra.mxu0 0.0
    %3545 = vmatprep.subr.mxu0 0.0
    %3546 = vmatpush1.msra.mxu0 0.0
    %3547 = vmatprep.subr.mxu0 0.0
    %3548 = vmatpush1.msra.mxu0 0.0
    %3549 = vmatprep.subr.mxu0 0.0
    %3550 = vmatpush1.msra.mxu0 0.0
    %3551 = vmatprep.subr.mxu0 0.0
    %3552 = vmatpush1.msra.mxu0 0.0
    %3553 = vmatprep.subr.mxu0 0.0
    %3554 = vmatpush1.msra.mxu0 0.0
    %3555 = vmatprep.subr.mxu0 0.0
    %3556 = vmatpush1.msra.mxu0 0.0
    %3557 = vmatprep.mubr.f32.mxu0 0.0
    %3558 = vmatmul.mubr.f32.gmra.mrb[0].mxu0 %v3488
    %v3559 = vpop.f32.mrb[0].mxu0
    %v3560 = vadd.f32 %v3485, %v3559
    %v3561 = vpop.f32.mrb[0].mxu0
    %3562 = vmatprep.mubr.f32.mxu0 0.0
    %3563 = vmatmul.mubr.f32.gmra.mrb[0].mxu0 %v3491
    %v3564 = vpop.f32.mrb[0].mxu0
    %v3565 = vadd.f32 %v3485, %v3564
    %v3566 = vpop.f32.mrb[0].mxu0
    %3567 = vdwg.mxu0
    %v3568 = vmax.f32 %v3560, 0.0
    %v3569 = vmax.f32 %v3565, 0.0
    %s3570 = scalar_lea.vmem %s5, 128
    %v3571 = vld [vmem:[%s3570] sm:$0xff]
    %v3572 = vld [vmem:[%s3570 + $0x8] sm:$0xff]
    %v3573 = vld [vmem:[%s3570 + $0x10] sm:$0xff]
    %v3574 = vld [vmem:[%s3570 + $0x18] sm:$0xff]
    %v3575 = vld [vmem:[%s3570 + $0x20] sm:$0xff]
    %v3576 = vld [vmem:[%s3570 + $0x28] sm:$0xff]
    %v3577 = vld [vmem:[%s3570 + $0x30] sm:$0xff]
    %v3578 = vld [vmem:[%s3570 + $0x38] sm:$0xff]
    %v3579 = vld [vmem:[%s3570 + $0x40] sm:$0xff]
    %v3580 = vld [vmem:[%s3570 + $0x48] sm:$0xff]
    %v3581 = vld [vmem:[%s3570 + $0x50] sm:$0xff]
    %v3582 = vld [vmem:[%s3570 + $0x58] sm:$0xff]
    %v3583 = vld [vmem:[%s3570 + $0x60] sm:$0xff]
    %v3584 = vld [vmem:[%s3570 + $0x68] sm:$0xff]
    %v3585 = vld [vmem:[%s3570 + $0x70] sm:$0xff]
    %v3586 = vld [vmem:[%s3570 + $0x78] sm:$0xff]
    %v3587 = vlaneseq
    %v3588 = vshrl.u32 %v3587, 7
    %v3589 = vsub.s32 3, %v3588
    %v3590 = vrot.slane %v33, %v3589
    %3591 = vmatprep.subr.mxu0 0.0
    %3592 = vmatpush1.msra.mxu0 %v3571
    %3593 = vmatprep.subr.mxu0 0.0
    %3594 = vmatpush1.msra.mxu0 %v3572
    %3595 = vmatprep.subr.mxu0 0.0
    %3596 = vmatpush1.msra.mxu0 %v3573
    %3597 = vmatprep.subr.mxu0 0.0
    %3598 = vmatpush1.msra.mxu0 %v3574
    %3599 = vmatprep.subr.mxu0 0.0
    %3600 = vmatpush1.msra.mxu0 %v3575
    %3601 = vmatprep.subr.mxu0 0.0
    %3602 = vmatpush1.msra.mxu0 %v3576
    %3603 = vmatprep.subr.mxu0 0.0
    %3604 = vmatpush1.msra.mxu0 %v3577
    %3605 = vmatprep.subr.mxu0 0.0
    %3606 = vmatpush1.msra.mxu0 %v3578
    %3607 = vmatprep.subr.mxu0 0.0
    %3608 = vmatpush1.msra.mxu0 %v3579
    %3609 = vmatprep.subr.mxu0 0.0
    %3610 = vmatpush1.msra.mxu0 %v3580
    %3611 = vmatprep.subr.mxu0 0.0
    %3612 = vmatpush1.msra.mxu0 %v3581
    %3613 = vmatprep.subr.mxu0 0.0
    %3614 = vmatpush1.msra.mxu0 %v3582
    %3615 = vmatprep.subr.mxu0 0.0
    %3616 = vmatpush1.msra.mxu0 %v3583
    %3617 = vmatprep.subr.mxu0 0.0
    %3618 = vmatpush1.msra.mxu0 %v3584
    %3619 = vmatprep.subr.mxu0 0.0
    %3620 = vmatpush1.msra.mxu0 %v3585
    %3621 = vmatprep.subr.mxu0 0.0
    %3622 = vmatpush1.msra.mxu0 %v3586
    %3623 = vmatprep.subr.mxu0 0.0
    %3624 = vmatpush1.msra.mxu0 0.0
    %3625 = vmatprep.subr.mxu0 0.0
    %3626 = vmatpush1.msra.mxu0 0.0
    %3627 = vmatprep.subr.mxu0 0.0
    %3628 = vmatpush1.msra.mxu0 0.0
    %3629 = vmatprep.subr.mxu0 0.0
    %3630 = vmatpush1.msra.mxu0 0.0
    %3631 = vmatprep.subr.mxu0 0.0
    %3632 = vmatpush1.msra.mxu0 0.0
    %3633 = vmatprep.subr.mxu0 0.0
    %3634 = vmatpush1.msra.mxu0 0.0
    %3635 = vmatprep.subr.mxu0 0.0
    %3636 = vmatpush1.msra.mxu0 0.0
    %3637 = vmatprep.subr.mxu0 0.0
    %3638 = vmatpush1.msra.mxu0 0.0
    %3639 = vmatprep.subr.mxu0 0.0
    %3640 = vmatpush1.msra.mxu0 0.0
    %3641 = vmatprep.subr.mxu0 0.0
    %3642 = vmatpush1.msra.mxu0 0.0
    %3643 = vmatprep.subr.mxu0 0.0
    %3644 = vmatpush1.msra.mxu0 0.0
    %3645 = vmatprep.subr.mxu0 0.0
    %3646 = vmatpush1.msra.mxu0 0.0
    %3647 = vmatprep.subr.mxu0 0.0
    %3648 = vmatpush1.msra.mxu0 0.0
    %3649 = vmatprep.subr.mxu0 0.0
    %3650 = vmatpush1.msra.mxu0 0.0
    %3651 = vmatprep.subr.mxu0 0.0
    %3652 = vmatpush1.msra.mxu0 0.0
    %3653 = vmatprep.subr.mxu0 0.0
    %3654 = vmatpush1.msra.mxu0 0.0
    %3655 = vmatprep.mubr.f32.mxu0 0.0
    %3656 = vmatmul.mubr.f32.gmra.mrb[0].mxu0 %v3568
    %v3657 = vpop.f32.mrb[0].mxu0
    %v3658 = vadd.f32 %v3590, %v3657
    %v3659 = vpop.f32.mrb[0].mxu0
    %3660 = vmatprep.mubr.f32.mxu0 0.0
    %3661 = vmatmul.mubr.f32.gmra.mrb[0].mxu0 %v3569
    %v3662 = vpop.f32.mrb[0].mxu0
    %v3663 = vadd.f32 %v3590, %v3662
    %v3664 = vpop.f32.mrb[0].mxu0
    %3665 = vdwg.mxu0
    %v3666 = vadd.f32 %v3434, %v3658
    %v3667 = vadd.f32 %v3435, %v3663
    %v3668 = vsel %vm40, %v3666, 0.0
    %3669 = vadd.xlane.f32.xlu0 %v3668
    %v3670 = vpop.xlane.xlu0 %3669
    %v3671 = vsel %vm40, %v3667, 0.0
    %3672 = vadd.xlane.f32.xlu0 %v3671
    %v3673 = vpop.xlane.xlu0 %3672
    %v3674 = vmul.f32 %v3670, %v47
    %v3675 = vmul.f32 %v3673, %v47
    %v3676 = vsub.f32 %v3666, %v3674
    %v3677 = vsub.f32 %v3667, %v3675
    %v3678 = vmul.f32 %v3676, %v3676
    %v3679 = vmul.f32 %v3677, %v3677
    %v3680 = vsel %vm40, %v3678, 0.0
    %3681 = vadd.xlane.f32.xlu0 %v3680
    %v3682 = vpop.xlane.xlu0 %3681
    %v3683 = vsel %vm40, %v3679, 0.0
    %3684 = vadd.xlane.f32.xlu0 %v3683
    %v3685 = vpop.xlane.xlu0 %3684
    %v3686 = vmul.f32 %v3682, %v47
    %v3687 = vmul.f32 %v3685, %v47
    %v3688 = vadd.f32 %v3686, 1e-05
    %v3689 = vadd.f32 %v3687, 1e-05
    %v3690 = vrsqrt.pop %v3688
    %v3691 = vrsqrt.pop %v3689
    %v3692 = vmul.f32 %v3676, %v3690
    %v3693 = vmul.f32 %v3677, %v3691
    %v3694 = vlaneseq
    %v3695 = vshrl.u32 %v3694, 7
    %v3696 = vsub.s32 4, %v3695
    %v3697 = vrot.slane %v33, %v3696
    %v3698 = vmul.f32 %v3692, %v3697
    %v3699 = vmul.f32 %v3693, %v3697
    %v3700 = vlaneseq
    %v3701 = vshrl.u32 %v3700, 7
    %v3702 = vsub.s32 5, %v3701
    %v3703 = vrot.slane %v33, %v3702
    %v3704 = vadd.f32 %v3698, %v3703
    %v3705 = vadd.f32 %v3699, %v3703
    %s3706 = scalar_lea.vmem %s1, 64
    %v3707 = vld [vmem:[%s3706] sm:$0xff]
    %v3708 = vld [vmem:[%s3706 + $0x8] sm:$0xff]
    %v3709 = vld [vmem:[%s3706 + $0x10] sm:$0xff]
    %v3710 = vld [vmem:[%s3706 + $0x18] sm:$0xff]
    %v3712 = vsel %vm40, %v3704, 0
    %v3715 = vsel %vm40, %v3705, 0
    %3717 = vmatprep.subr.mxu0 0.0
    %3718 = vmatpush1.msra.mxu0 %v3707
    %3719 = vmatprep.subr.mxu0 0.0
    %3720 = vmatpush1.msra.mxu0 %v3708
    %3721 = vmatprep.subr.mxu0 0.0
    %3722 = vmatpush1.msra.mxu0 %v3709
    %3723 = vmatprep.subr.mxu0 0.0
    %3724 = vmatpush1.msra.mxu0 %v3710
    %3725 = vmatprep.subr.mxu0 0.0
    %3726 = vmatpush1.msra.mxu0 0.0
    %3727 = vmatprep.subr.mxu0 0.0
    %3728 = vmatpush1.msra.mxu0 0.0
    %3729 = vmatprep.subr.mxu0 0.0
    %3730 = vmatpush1.msra.mxu0 0.0
    %3731 = vmatprep.subr.mxu0 0.0
    %3732 = vmatpush1.msra.mxu0 0.0
    %3733 = vmatprep.subr.mxu0 0.0
    %3734 = vmatpush1.msra.mxu0 0.0
    %3735 = vmatprep.subr.mxu0 0.0
    %3736 = vmatpush1.msra.mxu0 0.0
    %3737 = vmatprep.subr.mxu0 0.0
    %3738 = vmatpush1.msra.mxu0 0.0
    %3739 = vmatprep.subr.mxu0 0.0
    %3740 = vmatpush1.msra.mxu0 0.0
    %3741 = vmatprep.subr.mxu0 0.0
    %3742 = vmatpush1.msra.mxu0 0.0
    %3743 = vmatprep.subr.mxu0 0.0
    %3744 = vmatpush1.msra.mxu0 0.0
    %3745 = vmatprep.subr.mxu0 0.0
    %3746 = vmatpush1.msra.mxu0 0.0
    %3747 = vmatprep.subr.mxu0 0.0
    %3748 = vmatpush1.msra.mxu0 0.0
    %3749 = vmatprep.subr.mxu0 0.0
    %3750 = vmatpush1.msra.mxu0 0.0
    %3751 = vmatprep.subr.mxu0 0.0
    %3752 = vmatpush1.msra.mxu0 0.0
    %3753 = vmatprep.subr.mxu0 0.0
    %3754 = vmatpush1.msra.mxu0 0.0
    %3755 = vmatprep.subr.mxu0 0.0
    %3756 = vmatpush1.msra.mxu0 0.0
    %3757 = vmatprep.subr.mxu0 0.0
    %3758 = vmatpush1.msra.mxu0 0.0
    %3759 = vmatprep.subr.mxu0 0.0
    %3760 = vmatpush1.msra.mxu0 0.0
    %3761 = vmatprep.subr.mxu0 0.0
    %3762 = vmatpush1.msra.mxu0 0.0
    %3763 = vmatprep.subr.mxu0 0.0
    %3764 = vmatpush1.msra.mxu0 0.0
    %3765 = vmatprep.subr.mxu0 0.0
    %3766 = vmatpush1.msra.mxu0 0.0
    %3767 = vmatprep.subr.mxu0 0.0
    %3768 = vmatpush1.msra.mxu0 0.0
    %3769 = vmatprep.subr.mxu0 0.0
    %3770 = vmatpush1.msra.mxu0 0.0
    %3771 = vmatprep.subr.mxu0 0.0
    %3772 = vmatpush1.msra.mxu0 0.0
    %3773 = vmatprep.subr.mxu0 0.0
    %3774 = vmatpush1.msra.mxu0 0.0
    %3775 = vmatprep.subr.mxu0 0.0
    %3776 = vmatpush1.msra.mxu0 0.0
    %3777 = vmatprep.subr.mxu0 0.0
    %3778 = vmatpush1.msra.mxu0 0.0
    %3779 = vmatprep.subr.mxu0 0.0
    %3780 = vmatpush1.msra.mxu0 0.0
    %3781 = vmatprep.mubr.f32.mxu0 0.0
    %3782 = vmatmul.mubr.f32.gmra.mrb[0].mxu0 %v3712
    %v3783 = vpop.f32.mrb[0].mxu0
    %v3784 = vadd.f32 0.0, %v3783
    %v3785 = vpop.f32.mrb[0].mxu0
    %3786 = vmatprep.mubr.f32.mxu0 0.0
    %3787 = vmatmul.mubr.f32.gmra.mrb[0].mxu0 %v3715
    %v3788 = vpop.f32.mrb[0].mxu0
    %v3789 = vadd.f32 0.0, %v3788
    %v3790 = vpop.f32.mrb[0].mxu0
    %3791 = vdwg.mxu0
    %3794 = vrot.lane.b32.xlu0 %v3784, 120
    %v3795 = vpop.permute.xlu0 %3794
    %3796 = vrot.lane.b32.xlu0 %v3789, 120
    %v3797 = vpop.permute.xlu0 %3796
    %3798 = vrot.lane.b32.xlu0 %v3784, 112
    %v3799 = vpop.permute.xlu0 %3798
    %3800 = vrot.lane.b32.xlu0 %v3789, 112
    %v3801 = vpop.permute.xlu0 %3800
    %3802 = vrot.lane.b32.xlu0 %v3784, 104
    %v3803 = vpop.permute.xlu0 %3802
    %3804 = vrot.lane.b32.xlu0 %v3789, 104
    %v3805 = vpop.permute.xlu0 %3804
    %3806 = vrot.lane.b32.xlu0 %v3784, 96
    %v3807 = vpop.permute.xlu0 %3806
    %v3808 = vsel %vm181, %v3784, 0
    %v3810 = vsel %vm181, %v3807, 0
    %3812 = vmatprep.subr.mxu0 0.0
    %3813 = vmatpush1.xpose.msra.mxu0 %v3810
    %3814 = vmatprep.subr.mxu0 0.0
    %3815 = vmatpush1.xpose.msra.mxu0 0.0
    %3816 = vmatprep.subr.mxu0 0.0
    %3817 = vmatpush1.xpose.msra.mxu0 0.0
    %3818 = vmatprep.subr.mxu0 0.0
    %3819 = vmatpush1.xpose.msra.mxu0 0.0
    %3820 = vmatprep.subr.mxu0 0.0
    %3821 = vmatpush1.xpose.msra.mxu0 0.0
    %3822 = vmatprep.subr.mxu0 0.0
    %3823 = vmatpush1.xpose.msra.mxu0 0.0
    %3824 = vmatprep.subr.mxu0 0.0
    %3825 = vmatpush1.xpose.msra.mxu0 0.0
    %3826 = vmatprep.subr.mxu0 0.0
    %3827 = vmatpush1.xpose.msra.mxu0 0.0
    %3828 = vmatprep.subr.mxu0 0.0
    %3829 = vmatpush1.xpose.msra.mxu0 0.0
    %3830 = vmatprep.subr.mxu0 0.0
    %3831 = vmatpush1.xpose.msra.mxu0 0.0
    %3832 = vmatprep.subr.mxu0 0.0
    %3833 = vmatpush1.xpose.msra.mxu0 0.0
    %3834 = vmatprep.subr.mxu0 0.0
    %3835 = vmatpush1.xpose.msra.mxu0 0.0
    %3836 = vmatprep.subr.mxu0 0.0
    %3837 = vmatpush1.xpose.msra.mxu0 0.0
    %3838 = vmatprep.subr.mxu0 0.0
    %3839 = vmatpush1.xpose.msra.mxu0 0.0
    %3840 = vmatprep.subr.mxu0 0.0
    %3841 = vmatpush1.xpose.msra.mxu0 0.0
    %3842 = vmatprep.subr.mxu0 0.0
    %3843 = vmatpush1.xpose.msra.mxu0 0.0
    %3844 = vmatprep.subr.mxu0 0.0
    %3845 = vmatpush1.xpose.msra.mxu0 0.0
    %3846 = vmatprep.subr.mxu0 0.0
    %3847 = vmatpush1.xpose.msra.mxu0 0.0
    %3848 = vmatprep.subr.mxu0 0.0
    %3849 = vmatpush1.xpose.msra.mxu0 0.0
    %3850 = vmatprep.subr.mxu0 0.0
    %3851 = vmatpush1.xpose.msra.mxu0 0.0
    %3852 = vmatprep.subr.mxu0 0.0
    %3853 = vmatpush1.xpose.msra.mxu0 0.0
    %3854 = vmatprep.subr.mxu0 0.0
    %3855 = vmatpush1.xpose.msra.mxu0 0.0
    %3856 = vmatprep.subr.mxu0 0.0
    %3857 = vmatpush1.xpose.msra.mxu0 0.0
    %3858 = vmatprep.subr.mxu0 0.0
    %3859 = vmatpush1.xpose.msra.mxu0 0.0
    %3860 = vmatprep.subr.mxu0 0.0
    %3861 = vmatpush1.xpose.msra.mxu0 0.0
    %3862 = vmatprep.subr.mxu0 0.0
    %3863 = vmatpush1.xpose.msra.mxu0 0.0
    %3864 = vmatprep.subr.mxu0 0.0
    %3865 = vmatpush1.xpose.msra.mxu0 0.0
    %3866 = vmatprep.subr.mxu0 0.0
    %3867 = vmatpush1.xpose.msra.mxu0 0.0
    %3868 = vmatprep.subr.mxu0 0.0
    %3869 = vmatpush1.xpose.msra.mxu0 0.0
    %3870 = vmatprep.subr.mxu0 0.0
    %3871 = vmatpush1.xpose.msra.mxu0 0.0
    %3872 = vmatprep.subr.mxu0 0.0
    %3873 = vmatpush1.xpose.msra.mxu0 0.0
    %3874 = vmatprep.subr.mxu0 0.0
    %3875 = vmatpush1.xpose.msra.mxu0 0.0
    %3876 = vmatprep.mubr.f32.mxu0 0.0
    %3877 = vmatmul.mubr.f32.gmra.mrb[0].mxu0 %v3808
    %v3878 = vpop.f32.mrb[0].mxu0
    %v3879 = vadd.f32 0.0, %v3878
    %v3880 = vpop.f32.mrb[0].mxu0
    %3881 = vdwg.mxu0
    %3882 = vrot.lane.b32.xlu0 %v3789, 96
    %v3883 = vpop.permute.xlu0 %3882
    %v3884 = vsel %vm181, %v3789, 0
    %v3886 = vsel %vm181, %v3883, 0
    %3888 = vmatprep.subr.mxu0 0.0
    %3889 = vmatpush1.xpose.msra.mxu0 %v3886
    %3890 = vmatprep.subr.mxu0 0.0
    %3891 = vmatpush1.xpose.msra.mxu0 0.0
    %3892 = vmatprep.subr.mxu0 0.0
    %3893 = vmatpush1.xpose.msra.mxu0 0.0
    %3894 = vmatprep.subr.mxu0 0.0
    %3895 = vmatpush1.xpose.msra.mxu0 0.0
    %3896 = vmatprep.subr.mxu0 0.0
    %3897 = vmatpush1.xpose.msra.mxu0 0.0
    %3898 = vmatprep.subr.mxu0 0.0
    %3899 = vmatpush1.xpose.msra.mxu0 0.0
    %3900 = vmatprep.subr.mxu0 0.0
    %3901 = vmatpush1.xpose.msra.mxu0 0.0
    %3902 = vmatprep.subr.mxu0 0.0
    %3903 = vmatpush1.xpose.msra.mxu0 0.0
    %3904 = vmatprep.subr.mxu0 0.0
    %3905 = vmatpush1.xpose.msra.mxu0 0.0
    %3906 = vmatprep.subr.mxu0 0.0
    %3907 = vmatpush1.xpose.msra.mxu0 0.0
    %3908 = vmatprep.subr.mxu0 0.0
    %3909 = vmatpush1.xpose.msra.mxu0 0.0
    %3910 = vmatprep.subr.mxu0 0.0
    %3911 = vmatpush1.xpose.msra.mxu0 0.0
    %3912 = vmatprep.subr.mxu0 0.0
    %3913 = vmatpush1.xpose.msra.mxu0 0.0
    %3914 = vmatprep.subr.mxu0 0.0
    %3915 = vmatpush1.xpose.msra.mxu0 0.0
    %3916 = vmatprep.subr.mxu0 0.0
    %3917 = vmatpush1.xpose.msra.mxu0 0.0
    %3918 = vmatprep.subr.mxu0 0.0
    %3919 = vmatpush1.xpose.msra.mxu0 0.0
    %3920 = vmatprep.subr.mxu0 0.0
    %3921 = vmatpush1.xpose.msra.mxu0 0.0
    %3922 = vmatprep.subr.mxu0 0.0
    %3923 = vmatpush1.xpose.msra.mxu0 0.0
    %3924 = vmatprep.subr.mxu0 0.0
    %3925 = vmatpush1.xpose.msra.mxu0 0.0
    %3926 = vmatprep.subr.mxu0 0.0
    %3927 = vmatpush1.xpose.msra.mxu0 0.0
    %3928 = vmatprep.subr.mxu0 0.0
    %3929 = vmatpush1.xpose.msra.mxu0 0.0
    %3930 = vmatprep.subr.mxu0 0.0
    %3931 = vmatpush1.xpose.msra.mxu0 0.0
    %3932 = vmatprep.subr.mxu0 0.0
    %3933 = vmatpush1.xpose.msra.mxu0 0.0
    %3934 = vmatprep.subr.mxu0 0.0
    %3935 = vmatpush1.xpose.msra.mxu0 0.0
    %3936 = vmatprep.subr.mxu0 0.0
    %3937 = vmatpush1.xpose.msra.mxu0 0.0
    %3938 = vmatprep.subr.mxu0 0.0
    %3939 = vmatpush1.xpose.msra.mxu0 0.0
    %3940 = vmatprep.subr.mxu0 0.0
    %3941 = vmatpush1.xpose.msra.mxu0 0.0
    %3942 = vmatprep.subr.mxu0 0.0
    %3943 = vmatpush1.xpose.msra.mxu0 0.0
    %3944 = vmatprep.subr.mxu0 0.0
    %3945 = vmatpush1.xpose.msra.mxu0 0.0
    %3946 = vmatprep.subr.mxu0 0.0
    %3947 = vmatpush1.xpose.msra.mxu0 0.0
    %3948 = vmatprep.subr.mxu0 0.0
    %3949 = vmatpush1.xpose.msra.mxu0 0.0
    %3950 = vmatprep.subr.mxu0 0.0
    %3951 = vmatpush1.xpose.msra.mxu0 0.0
    %3952 = vmatprep.mubr.f32.mxu0 0.0
    %3953 = vmatmul.mubr.f32.gmra.mrb[0].mxu0 %v3884
    %v3954 = vpop.f32.mrb[0].mxu0
    %v3955 = vadd.f32 0.0, %v3954
    %v3956 = vpop.f32.mrb[0].mxu0
    %3957 = vdwg.mxu0
    %3958 = vrot.lane.b32.xlu0 %v3795, 96
    %v3959 = vpop.permute.xlu0 %3958
    %v3960 = vsel %vm181, %v3795, 0
    %v3962 = vsel %vm181, %v3959, 0
    %3964 = vmatprep.subr.mxu0 0.0
    %3965 = vmatpush1.xpose.msra.mxu0 %v3962
    %3966 = vmatprep.subr.mxu0 0.0
    %3967 = vmatpush1.xpose.msra.mxu0 0.0
    %3968 = vmatprep.subr.mxu0 0.0
    %3969 = vmatpush1.xpose.msra.mxu0 0.0
    %3970 = vmatprep.subr.mxu0 0.0
    %3971 = vmatpush1.xpose.msra.mxu0 0.0
    %3972 = vmatprep.subr.mxu0 0.0
    %3973 = vmatpush1.xpose.msra.mxu0 0.0
    %3974 = vmatprep.subr.mxu0 0.0
    %3975 = vmatpush1.xpose.msra.mxu0 0.0
    %3976 = vmatprep.subr.mxu0 0.0
    %3977 = vmatpush1.xpose.msra.mxu0 0.0
    %3978 = vmatprep.subr.mxu0 0.0
    %3979 = vmatpush1.xpose.msra.mxu0 0.0
    %3980 = vmatprep.subr.mxu0 0.0
    %3981 = vmatpush1.xpose.msra.mxu0 0.0
    %3982 = vmatprep.subr.mxu0 0.0
    %3983 = vmatpush1.xpose.msra.mxu0 0.0
    %3984 = vmatprep.subr.mxu0 0.0
    %3985 = vmatpush1.xpose.msra.mxu0 0.0
    %3986 = vmatprep.subr.mxu0 0.0
    %3987 = vmatpush1.xpose.msra.mxu0 0.0
    %3988 = vmatprep.subr.mxu0 0.0
    %3989 = vmatpush1.xpose.msra.mxu0 0.0
    %3990 = vmatprep.subr.mxu0 0.0
    %3991 = vmatpush1.xpose.msra.mxu0 0.0
    %3992 = vmatprep.subr.mxu0 0.0
    %3993 = vmatpush1.xpose.msra.mxu0 0.0
    %3994 = vmatprep.subr.mxu0 0.0
    %3995 = vmatpush1.xpose.msra.mxu0 0.0
    %3996 = vmatprep.subr.mxu0 0.0
    %3997 = vmatpush1.xpose.msra.mxu0 0.0
    %3998 = vmatprep.subr.mxu0 0.0
    %3999 = vmatpush1.xpose.msra.mxu0 0.0
    %4000 = vmatprep.subr.mxu0 0.0
    %4001 = vmatpush1.xpose.msra.mxu0 0.0
    %4002 = vmatprep.subr.mxu0 0.0
    %4003 = vmatpush1.xpose.msra.mxu0 0.0
    %4004 = vmatprep.subr.mxu0 0.0
    %4005 = vmatpush1.xpose.msra.mxu0 0.0
    %4006 = vmatprep.subr.mxu0 0.0
    %4007 = vmatpush1.xpose.msra.mxu0 0.0
    %4008 = vmatprep.subr.mxu0 0.0
    %4009 = vmatpush1.xpose.msra.mxu0 0.0
    %4010 = vmatprep.subr.mxu0 0.0
    %4011 = vmatpush1.xpose.msra.mxu0 0.0
    %4012 = vmatprep.subr.mxu0 0.0
    %4013 = vmatpush1.xpose.msra.mxu0 0.0
    %4014 = vmatprep.subr.mxu0 0.0
    %4015 = vmatpush1.xpose.msra.mxu0 0.0
    %4016 = vmatprep.subr.mxu0 0.0
    %4017 = vmatpush1.xpose.msra.mxu0 0.0
    %4018 = vmatprep.subr.mxu0 0.0
    %4019 = vmatpush1.xpose.msra.mxu0 0.0
    %4020 = vmatprep.subr.mxu0 0.0
    %4021 = vmatpush1.xpose.msra.mxu0 0.0
    %4022 = vmatprep.subr.mxu0 0.0
    %4023 = vmatpush1.xpose.msra.mxu0 0.0
    %4024 = vmatprep.subr.mxu0 0.0
    %4025 = vmatpush1.xpose.msra.mxu0 0.0
    %4026 = vmatprep.subr.mxu0 0.0
    %4027 = vmatpush1.xpose.msra.mxu0 0.0
    %4028 = vmatprep.mubr.f32.mxu0 0.0
    %4029 = vmatmul.mubr.f32.gmra.mrb[0].mxu0 %v3960
    %v4030 = vpop.f32.mrb[0].mxu0
    %v4031 = vadd.f32 0.0, %v4030
    %v4032 = vpop.f32.mrb[0].mxu0
    %4033 = vdwg.mxu0
    %4034 = vrot.lane.b32.xlu0 %v3797, 96
    %v4035 = vpop.permute.xlu0 %4034
    %v4036 = vsel %vm181, %v3797, 0
    %v4038 = vsel %vm181, %v4035, 0
    %4040 = vmatprep.subr.mxu0 0.0
    %4041 = vmatpush1.xpose.msra.mxu0 %v4038
    %4042 = vmatprep.subr.mxu0 0.0
    %4043 = vmatpush1.xpose.msra.mxu0 0.0
    %4044 = vmatprep.subr.mxu0 0.0
    %4045 = vmatpush1.xpose.msra.mxu0 0.0
    %4046 = vmatprep.subr.mxu0 0.0
    %4047 = vmatpush1.xpose.msra.mxu0 0.0
    %4048 = vmatprep.subr.mxu0 0.0
    %4049 = vmatpush1.xpose.msra.mxu0 0.0
    %4050 = vmatprep.subr.mxu0 0.0
    %4051 = vmatpush1.xpose.msra.mxu0 0.0
    %4052 = vmatprep.subr.mxu0 0.0
    %4053 = vmatpush1.xpose.msra.mxu0 0.0
    %4054 = vmatprep.subr.mxu0 0.0
    %4055 = vmatpush1.xpose.msra.mxu0 0.0
    %4056 = vmatprep.subr.mxu0 0.0
    %4057 = vmatpush1.xpose.msra.mxu0 0.0
    %4058 = vmatprep.subr.mxu0 0.0
    %4059 = vmatpush1.xpose.msra.mxu0 0.0
    %4060 = vmatprep.subr.mxu0 0.0
    %4061 = vmatpush1.xpose.msra.mxu0 0.0
    %4062 = vmatprep.subr.mxu0 0.0
    %4063 = vmatpush1.xpose.msra.mxu0 0.0
    %4064 = vmatprep.subr.mxu0 0.0
    %4065 = vmatpush1.xpose.msra.mxu0 0.0
    %4066 = vmatprep.subr.mxu0 0.0
    %4067 = vmatpush1.xpose.msra.mxu0 0.0
    %4068 = vmatprep.subr.mxu0 0.0
    %4069 = vmatpush1.xpose.msra.mxu0 0.0
    %4070 = vmatprep.subr.mxu0 0.0
    %4071 = vmatpush1.xpose.msra.mxu0 0.0
    %4072 = vmatprep.subr.mxu0 0.0
    %4073 = vmatpush1.xpose.msra.mxu0 0.0
    %4074 = vmatprep.subr.mxu0 0.0
    %4075 = vmatpush1.xpose.msra.mxu0 0.0
    %4076 = vmatprep.subr.mxu0 0.0
    %4077 = vmatpush1.xpose.msra.mxu0 0.0
    %4078 = vmatprep.subr.mxu0 0.0
    %4079 = vmatpush1.xpose.msra.mxu0 0.0
    %4080 = vmatprep.subr.mxu0 0.0
    %4081 = vmatpush1.xpose.msra.mxu0 0.0
    %4082 = vmatprep.subr.mxu0 0.0
    %4083 = vmatpush1.xpose.msra.mxu0 0.0
    %4084 = vmatprep.subr.mxu0 0.0
    %4085 = vmatpush1.xpose.msra.mxu0 0.0
    %4086 = vmatprep.subr.mxu0 0.0
    %4087 = vmatpush1.xpose.msra.mxu0 0.0
    %4088 = vmatprep.subr.mxu0 0.0
    %4089 = vmatpush1.xpose.msra.mxu0 0.0
    %4090 = vmatprep.subr.mxu0 0.0
    %4091 = vmatpush1.xpose.msra.mxu0 0.0
    %4092 = vmatprep.subr.mxu0 0.0
    %4093 = vmatpush1.xpose.msra.mxu0 0.0
    %4094 = vmatprep.subr.mxu0 0.0
    %4095 = vmatpush1.xpose.msra.mxu0 0.0
    %4096 = vmatprep.subr.mxu0 0.0
    %4097 = vmatpush1.xpose.msra.mxu0 0.0
    %4098 = vmatprep.subr.mxu0 0.0
    %4099 = vmatpush1.xpose.msra.mxu0 0.0
    %4100 = vmatprep.subr.mxu0 0.0
    %4101 = vmatpush1.xpose.msra.mxu0 0.0
    %4102 = vmatprep.subr.mxu0 0.0
    %4103 = vmatpush1.xpose.msra.mxu0 0.0
    %4104 = vmatprep.mubr.f32.mxu0 0.0
    %4105 = vmatmul.mubr.f32.gmra.mrb[0].mxu0 %v4036
    %v4106 = vpop.f32.mrb[0].mxu0
    %v4107 = vadd.f32 0.0, %v4106
    %v4108 = vpop.f32.mrb[0].mxu0
    %4109 = vdwg.mxu0
    %4110 = vrot.lane.b32.xlu0 %v3799, 96
    %v4111 = vpop.permute.xlu0 %4110
    %v4112 = vsel %vm181, %v3799, 0
    %v4114 = vsel %vm181, %v4111, 0
    %4116 = vmatprep.subr.mxu0 0.0
    %4117 = vmatpush1.xpose.msra.mxu0 %v4114
    %4118 = vmatprep.subr.mxu0 0.0
    %4119 = vmatpush1.xpose.msra.mxu0 0.0
    %4120 = vmatprep.subr.mxu0 0.0
    %4121 = vmatpush1.xpose.msra.mxu0 0.0
    %4122 = vmatprep.subr.mxu0 0.0
    %4123 = vmatpush1.xpose.msra.mxu0 0.0
    %4124 = vmatprep.subr.mxu0 0.0
    %4125 = vmatpush1.xpose.msra.mxu0 0.0
    %4126 = vmatprep.subr.mxu0 0.0
    %4127 = vmatpush1.xpose.msra.mxu0 0.0
    %4128 = vmatprep.subr.mxu0 0.0
    %4129 = vmatpush1.xpose.msra.mxu0 0.0
    %4130 = vmatprep.subr.mxu0 0.0
    %4131 = vmatpush1.xpose.msra.mxu0 0.0
    %4132 = vmatprep.subr.mxu0 0.0
    %4133 = vmatpush1.xpose.msra.mxu0 0.0
    %4134 = vmatprep.subr.mxu0 0.0
    %4135 = vmatpush1.xpose.msra.mxu0 0.0
    %4136 = vmatprep.subr.mxu0 0.0
    %4137 = vmatpush1.xpose.msra.mxu0 0.0
    %4138 = vmatprep.subr.mxu0 0.0
    %4139 = vmatpush1.xpose.msra.mxu0 0.0
    %4140 = vmatprep.subr.mxu0 0.0
    %4141 = vmatpush1.xpose.msra.mxu0 0.0
    %4142 = vmatprep.subr.mxu0 0.0
    %4143 = vmatpush1.xpose.msra.mxu0 0.0
    %4144 = vmatprep.subr.mxu0 0.0
    %4145 = vmatpush1.xpose.msra.mxu0 0.0
    %4146 = vmatprep.subr.mxu0 0.0
    %4147 = vmatpush1.xpose.msra.mxu0 0.0
    %4148 = vmatprep.subr.mxu0 0.0
    %4149 = vmatpush1.xpose.msra.mxu0 0.0
    %4150 = vmatprep.subr.mxu0 0.0
    %4151 = vmatpush1.xpose.msra.mxu0 0.0
    %4152 = vmatprep.subr.mxu0 0.0
    %4153 = vmatpush1.xpose.msra.mxu0 0.0
    %4154 = vmatprep.subr.mxu0 0.0
    %4155 = vmatpush1.xpose.msra.mxu0 0.0
    %4156 = vmatprep.subr.mxu0 0.0
    %4157 = vmatpush1.xpose.msra.mxu0 0.0
    %4158 = vmatprep.subr.mxu0 0.0
    %4159 = vmatpush1.xpose.msra.mxu0 0.0
    %4160 = vmatprep.subr.mxu0 0.0
    %4161 = vmatpush1.xpose.msra.mxu0 0.0
    %4162 = vmatprep.subr.mxu0 0.0
    %4163 = vmatpush1.xpose.msra.mxu0 0.0
    %4164 = vmatprep.subr.mxu0 0.0
    %4165 = vmatpush1.xpose.msra.mxu0 0.0
    %4166 = vmatprep.subr.mxu0 0.0
    %4167 = vmatpush1.xpose.msra.mxu0 0.0
    %4168 = vmatprep.subr.mxu0 0.0
    %4169 = vmatpush1.xpose.msra.mxu0 0.0
    %4170 = vmatprep.subr.mxu0 0.0
    %4171 = vmatpush1.xpose.msra.mxu0 0.0
    %4172 = vmatprep.subr.mxu0 0.0
    %4173 = vmatpush1.xpose.msra.mxu0 0.0
    %4174 = vmatprep.subr.mxu0 0.0
    %4175 = vmatpush1.xpose.msra.mxu0 0.0
    %4176 = vmatprep.subr.mxu0 0.0
    %4177 = vmatpush1.xpose.msra.mxu0 0.0
    %4178 = vmatprep.subr.mxu0 0.0
    %4179 = vmatpush1.xpose.msra.mxu0 0.0
    %4180 = vmatprep.mubr.f32.mxu0 0.0
    %4181 = vmatmul.mubr.f32.gmra.mrb[0].mxu0 %v4112
    %v4182 = vpop.f32.mrb[0].mxu0
    %v4183 = vadd.f32 0.0, %v4182
    %v4184 = vpop.f32.mrb[0].mxu0
    %4185 = vdwg.mxu0
    %4186 = vrot.lane.b32.xlu0 %v3801, 96
    %v4187 = vpop.permute.xlu0 %4186
    %v4188 = vsel %vm181, %v3801, 0
    %v4190 = vsel %vm181, %v4187, 0
    %4192 = vmatprep.subr.mxu0 0.0
    %4193 = vmatpush1.xpose.msra.mxu0 %v4190
    %4194 = vmatprep.subr.mxu0 0.0
    %4195 = vmatpush1.xpose.msra.mxu0 0.0
    %4196 = vmatprep.subr.mxu0 0.0
    %4197 = vmatpush1.xpose.msra.mxu0 0.0
    %4198 = vmatprep.subr.mxu0 0.0
    %4199 = vmatpush1.xpose.msra.mxu0 0.0
    %4200 = vmatprep.subr.mxu0 0.0
    %4201 = vmatpush1.xpose.msra.mxu0 0.0
    %4202 = vmatprep.subr.mxu0 0.0
    %4203 = vmatpush1.xpose.msra.mxu0 0.0
    %4204 = vmatprep.subr.mxu0 0.0
    %4205 = vmatpush1.xpose.msra.mxu0 0.0
    %4206 = vmatprep.subr.mxu0 0.0
    %4207 = vmatpush1.xpose.msra.mxu0 0.0
    %4208 = vmatprep.subr.mxu0 0.0
    %4209 = vmatpush1.xpose.msra.mxu0 0.0
    %4210 = vmatprep.subr.mxu0 0.0
    %4211 = vmatpush1.xpose.msra.mxu0 0.0
    %4212 = vmatprep.subr.mxu0 0.0
    %4213 = vmatpush1.xpose.msra.mxu0 0.0
    %4214 = vmatprep.subr.mxu0 0.0
    %4215 = vmatpush1.xpose.msra.mxu0 0.0
    %4216 = vmatprep.subr.mxu0 0.0
    %4217 = vmatpush1.xpose.msra.mxu0 0.0
    %4218 = vmatprep.subr.mxu0 0.0
    %4219 = vmatpush1.xpose.msra.mxu0 0.0
    %4220 = vmatprep.subr.mxu0 0.0
    %4221 = vmatpush1.xpose.msra.mxu0 0.0
    %4222 = vmatprep.subr.mxu0 0.0
    %4223 = vmatpush1.xpose.msra.mxu0 0.0
    %4224 = vmatprep.subr.mxu0 0.0
    %4225 = vmatpush1.xpose.msra.mxu0 0.0
    %4226 = vmatprep.subr.mxu0 0.0
    %4227 = vmatpush1.xpose.msra.mxu0 0.0
    %4228 = vmatprep.subr.mxu0 0.0
    %4229 = vmatpush1.xpose.msra.mxu0 0.0
    %4230 = vmatprep.subr.mxu0 0.0
    %4231 = vmatpush1.xpose.msra.mxu0 0.0
    %4232 = vmatprep.subr.mxu0 0.0
    %4233 = vmatpush1.xpose.msra.mxu0 0.0
    %4234 = vmatprep.subr.mxu0 0.0
    %4235 = vmatpush1.xpose.msra.mxu0 0.0
    %4236 = vmatprep.subr.mxu0 0.0
    %4237 = vmatpush1.xpose.msra.mxu0 0.0
    %4238 = vmatprep.subr.mxu0 0.0
    %4239 = vmatpush1.xpose.msra.mxu0 0.0
    %4240 = vmatprep.subr.mxu0 0.0
    %4241 = vmatpush1.xpose.msra.mxu0 0.0
    %4242 = vmatprep.subr.mxu0 0.0
    %4243 = vmatpush1.xpose.msra.mxu0 0.0
    %4244 = vmatprep.subr.mxu0 0.0
    %4245 = vmatpush1.xpose.msra.mxu0 0.0
    %4246 = vmatprep.subr.mxu0 0.0
    %4247 = vmatpush1.xpose.msra.mxu0 0.0
    %4248 = vmatprep.subr.mxu0 0.0
    %4249 = vmatpush1.xpose.msra.mxu0 0.0
    %4250 = vmatprep.subr.mxu0 0.0
    %4251 = vmatpush1.xpose.msra.mxu0 0.0
    %4252 = vmatprep.subr.mxu0 0.0
    %4253 = vmatpush1.xpose.msra.mxu0 0.0
    %4254 = vmatprep.subr.mxu0 0.0
    %4255 = vmatpush1.xpose.msra.mxu0 0.0
    %4256 = vmatprep.mubr.f32.mxu0 0.0
    %4257 = vmatmul.mubr.f32.gmra.mrb[0].mxu0 %v4188
    %v4258 = vpop.f32.mrb[0].mxu0
    %v4259 = vadd.f32 0.0, %v4258
    %v4260 = vpop.f32.mrb[0].mxu0
    %4261 = vdwg.mxu0
    %4262 = vrot.lane.b32.xlu0 %v3803, 96
    %v4263 = vpop.permute.xlu0 %4262
    %v4264 = vsel %vm181, %v3803, 0
    %v4266 = vsel %vm181, %v4263, 0
    %4268 = vmatprep.subr.mxu0 0.0
    %4269 = vmatpush1.xpose.msra.mxu0 %v4266
    %4270 = vmatprep.subr.mxu0 0.0
    %4271 = vmatpush1.xpose.msra.mxu0 0.0
    %4272 = vmatprep.subr.mxu0 0.0
    %4273 = vmatpush1.xpose.msra.mxu0 0.0
    %4274 = vmatprep.subr.mxu0 0.0
    %4275 = vmatpush1.xpose.msra.mxu0 0.0
    %4276 = vmatprep.subr.mxu0 0.0
    %4277 = vmatpush1.xpose.msra.mxu0 0.0
    %4278 = vmatprep.subr.mxu0 0.0
    %4279 = vmatpush1.xpose.msra.mxu0 0.0
    %4280 = vmatprep.subr.mxu0 0.0
    %4281 = vmatpush1.xpose.msra.mxu0 0.0
    %4282 = vmatprep.subr.mxu0 0.0
    %4283 = vmatpush1.xpose.msra.mxu0 0.0
    %4284 = vmatprep.subr.mxu0 0.0
    %4285 = vmatpush1.xpose.msra.mxu0 0.0
    %4286 = vmatprep.subr.mxu0 0.0
    %4287 = vmatpush1.xpose.msra.mxu0 0.0
    %4288 = vmatprep.subr.mxu0 0.0
    %4289 = vmatpush1.xpose.msra.mxu0 0.0
    %4290 = vmatprep.subr.mxu0 0.0
    %4291 = vmatpush1.xpose.msra.mxu0 0.0
    %4292 = vmatprep.subr.mxu0 0.0
    %4293 = vmatpush1.xpose.msra.mxu0 0.0
    %4294 = vmatprep.subr.mxu0 0.0
    %4295 = vmatpush1.xpose.msra.mxu0 0.0
    %4296 = vmatprep.subr.mxu0 0.0
    %4297 = vmatpush1.xpose.msra.mxu0 0.0
    %4298 = vmatprep.subr.mxu0 0.0
    %4299 = vmatpush1.xpose.msra.mxu0 0.0
    %4300 = vmatprep.subr.mxu0 0.0
    %4301 = vmatpush1.xpose.msra.mxu0 0.0
    %4302 = vmatprep.subr.mxu0 0.0
    %4303 = vmatpush1.xpose.msra.mxu0 0.0
    %4304 = vmatprep.subr.mxu0 0.0
    %4305 = vmatpush1.xpose.msra.mxu0 0.0
    %4306 = vmatprep.subr.mxu0 0.0
    %4307 = vmatpush1.xpose.msra.mxu0 0.0
    %4308 = vmatprep.subr.mxu0 0.0
    %4309 = vmatpush1.xpose.msra.mxu0 0.0
    %4310 = vmatprep.subr.mxu0 0.0
    %4311 = vmatpush1.xpose.msra.mxu0 0.0
    %4312 = vmatprep.subr.mxu0 0.0
    %4313 = vmatpush1.xpose.msra.mxu0 0.0
    %4314 = vmatprep.subr.mxu0 0.0
    %4315 = vmatpush1.xpose.msra.mxu0 0.0
    %4316 = vmatprep.subr.mxu0 0.0
    %4317 = vmatpush1.xpose.msra.mxu0 0.0
    %4318 = vmatprep.subr.mxu0 0.0
    %4319 = vmatpush1.xpose.msra.mxu0 0.0
    %4320 = vmatprep.subr.mxu0 0.0
    %4321 = vmatpush1.xpose.msra.mxu0 0.0
    %4322 = vmatprep.subr.mxu0 0.0
    %4323 = vmatpush1.xpose.msra.mxu0 0.0
    %4324 = vmatprep.subr.mxu0 0.0
    %4325 = vmatpush1.xpose.msra.mxu0 0.0
    %4326 = vmatprep.subr.mxu0 0.0
    %4327 = vmatpush1.xpose.msra.mxu0 0.0
    %4328 = vmatprep.subr.mxu0 0.0
    %4329 = vmatpush1.xpose.msra.mxu0 0.0
    %4330 = vmatprep.subr.mxu0 0.0
    %4331 = vmatpush1.xpose.msra.mxu0 0.0
    %4332 = vmatprep.mubr.f32.mxu0 0.0
    %4333 = vmatmul.mubr.f32.gmra.mrb[0].mxu0 %v4264
    %v4334 = vpop.f32.mrb[0].mxu0
    %v4335 = vadd.f32 0.0, %v4334
    %v4336 = vpop.f32.mrb[0].mxu0
    %4337 = vdwg.mxu0
    %4338 = vrot.lane.b32.xlu0 %v3805, 96
    %v4339 = vpop.permute.xlu0 %4338
    %v4340 = vsel %vm181, %v3805, 0
    %v4342 = vsel %vm181, %v4339, 0
    %4344 = vmatprep.subr.mxu0 0.0
    %4345 = vmatpush1.xpose.msra.mxu0 %v4342
    %4346 = vmatprep.subr.mxu0 0.0
    %4347 = vmatpush1.xpose.msra.mxu0 0.0
    %4348 = vmatprep.subr.mxu0 0.0
    %4349 = vmatpush1.xpose.msra.mxu0 0.0
    %4350 = vmatprep.subr.mxu0 0.0
    %4351 = vmatpush1.xpose.msra.mxu0 0.0
    %4352 = vmatprep.subr.mxu0 0.0
    %4353 = vmatpush1.xpose.msra.mxu0 0.0
    %4354 = vmatprep.subr.mxu0 0.0
    %4355 = vmatpush1.xpose.msra.mxu0 0.0
    %4356 = vmatprep.subr.mxu0 0.0
    %4357 = vmatpush1.xpose.msra.mxu0 0.0
    %4358 = vmatprep.subr.mxu0 0.0
    %4359 = vmatpush1.xpose.msra.mxu0 0.0
    %4360 = vmatprep.subr.mxu0 0.0
    %4361 = vmatpush1.xpose.msra.mxu0 0.0
    %4362 = vmatprep.subr.mxu0 0.0
    %4363 = vmatpush1.xpose.msra.mxu0 0.0
    %4364 = vmatprep.subr.mxu0 0.0
    %4365 = vmatpush1.xpose.msra.mxu0 0.0
    %4366 = vmatprep.subr.mxu0 0.0
    %4367 = vmatpush1.xpose.msra.mxu0 0.0
    %4368 = vmatprep.subr.mxu0 0.0
    %4369 = vmatpush1.xpose.msra.mxu0 0.0
    %4370 = vmatprep.subr.mxu0 0.0
    %4371 = vmatpush1.xpose.msra.mxu0 0.0
    %4372 = vmatprep.subr.mxu0 0.0
    %4373 = vmatpush1.xpose.msra.mxu0 0.0
    %4374 = vmatprep.subr.mxu0 0.0
    %4375 = vmatpush1.xpose.msra.mxu0 0.0
    %4376 = vmatprep.subr.mxu0 0.0
    %4377 = vmatpush1.xpose.msra.mxu0 0.0
    %4378 = vmatprep.subr.mxu0 0.0
    %4379 = vmatpush1.xpose.msra.mxu0 0.0
    %4380 = vmatprep.subr.mxu0 0.0
    %4381 = vmatpush1.xpose.msra.mxu0 0.0
    %4382 = vmatprep.subr.mxu0 0.0
    %4383 = vmatpush1.xpose.msra.mxu0 0.0
    %4384 = vmatprep.subr.mxu0 0.0
    %4385 = vmatpush1.xpose.msra.mxu0 0.0
    %4386 = vmatprep.subr.mxu0 0.0
    %4387 = vmatpush1.xpose.msra.mxu0 0.0
    %4388 = vmatprep.subr.mxu0 0.0
    %4389 = vmatpush1.xpose.msra.mxu0 0.0
    %4390 = vmatprep.subr.mxu0 0.0
    %4391 = vmatpush1.xpose.msra.mxu0 0.0
    %4392 = vmatprep.subr.mxu0 0.0
    %4393 = vmatpush1.xpose.msra.mxu0 0.0
    %4394 = vmatprep.subr.mxu0 0.0
    %4395 = vmatpush1.xpose.msra.mxu0 0.0
    %4396 = vmatprep.subr.mxu0 0.0
    %4397 = vmatpush1.xpose.msra.mxu0 0.0
    %4398 = vmatprep.subr.mxu0 0.0
    %4399 = vmatpush1.xpose.msra.mxu0 0.0
    %4400 = vmatprep.subr.mxu0 0.0
    %4401 = vmatpush1.xpose.msra.mxu0 0.0
    %4402 = vmatprep.subr.mxu0 0.0
    %4403 = vmatpush1.xpose.msra.mxu0 0.0
    %4404 = vmatprep.subr.mxu0 0.0
    %4405 = vmatpush1.xpose.msra.mxu0 0.0
    %4406 = vmatprep.subr.mxu0 0.0
    %4407 = vmatpush1.xpose.msra.mxu0 0.0
    %4408 = vmatprep.mubr.f32.mxu0 0.0
    %4409 = vmatmul.mubr.f32.gmra.mrb[0].mxu0 %v4340
    %v4410 = vpop.f32.mrb[0].mxu0
    %v4411 = vadd.f32 0.0, %v4410
    %v4412 = vpop.f32.mrb[0].mxu0
    %4413 = vdwg.mxu0
    %v4414 = vmul.f32 %v3879, 0.17677669
    %v4415 = vmul.f32 %v3955, 0.17677669
    %v4416 = vmul.f32 %v4031, 0.17677669
    %v4417 = vmul.f32 %v4107, 0.17677669
    %v4418 = vmul.f32 %v4183, 0.17677669
    %v4419 = vmul.f32 %v4259, 0.17677669
    %v4420 = vmul.f32 %v4335, 0.17677669
    %v4421 = vmul.f32 %v4411, 0.17677669
    %v4422 = vsel %vm39, %v4414, -1e+30
    %v4423 = vsel %vm39, %v4415, -1e+30
    %v4424 = vsel %vm39, %v4416, -1e+30
    %v4425 = vsel %vm39, %v4417, -1e+30
    %v4426 = vsel %vm39, %v4418, -1e+30
    %v4427 = vsel %vm39, %v4419, -1e+30
    %v4428 = vsel %vm39, %v4420, -1e+30
    %v4429 = vsel %vm39, %v4421, -1e+30
    %v4430 = vsel %vm181, %v4422, -inf
    %4431 = vmax.xlane.f32.xlu0 %v4430
    %v4432 = vpop.xlane.xlu0 %4431
    %v4433 = vsel %vm181, %v4423, -inf
    %4434 = vmax.xlane.f32.xlu0 %v4433
    %v4435 = vpop.xlane.xlu0 %4434
    %v4436 = vsel %vm181, %v4424, -inf
    %4437 = vmax.xlane.f32.xlu0 %v4436
    %v4438 = vpop.xlane.xlu0 %4437
    %v4439 = vsel %vm181, %v4425, -inf
    %4440 = vmax.xlane.f32.xlu0 %v4439
    %v4441 = vpop.xlane.xlu0 %4440
    %v4442 = vsel %vm181, %v4426, -inf
    %4443 = vmax.xlane.f32.xlu0 %v4442
    %v4444 = vpop.xlane.xlu0 %4443
    %v4445 = vsel %vm181, %v4427, -inf
    %4446 = vmax.xlane.f32.xlu0 %v4445
    %v4447 = vpop.xlane.xlu0 %4446
    %v4448 = vsel %vm181, %v4428, -inf
    %4449 = vmax.xlane.f32.xlu0 %v4448
    %v4450 = vpop.xlane.xlu0 %4449
    %v4451 = vsel %vm181, %v4429, -inf
    %4452 = vmax.xlane.f32.xlu0 %v4451
    %v4453 = vpop.xlane.xlu0 %4452
    %v4454 = vsub.f32 %v4422, %v4432
    %v4455 = vsub.f32 %v4423, %v4435
    %v4456 = vsub.f32 %v4424, %v4438
    %v4457 = vsub.f32 %v4425, %v4441
    %v4458 = vsub.f32 %v4426, %v4444
    %v4459 = vsub.f32 %v4427, %v4447
    %v4460 = vsub.f32 %v4428, %v4450
    %v4461 = vsub.f32 %v4429, %v4453
    %v4462 = vmul.f32 %v4454, 1.442695
    %v4463 = vpow.pop %v4462
    %v4464 = vmul.f32 %v4455, 1.442695
    %v4465 = vpow.pop %v4464
    %v4466 = vmul.f32 %v4456, 1.442695
    %v4467 = vpow.pop %v4466
    %v4468 = vmul.f32 %v4457, 1.442695
    %v4469 = vpow.pop %v4468
    %v4470 = vmul.f32 %v4458, 1.442695
    %v4471 = vpow.pop %v4470
    %v4472 = vmul.f32 %v4459, 1.442695
    %v4473 = vpow.pop %v4472
    %v4474 = vmul.f32 %v4460, 1.442695
    %v4475 = vpow.pop %v4474
    %v4476 = vmul.f32 %v4461, 1.442695
    %v4477 = vpow.pop %v4476
    %v4478 = vsel %vm181, %v4463, 0.0
    %4479 = vadd.xlane.f32.xlu0 %v4478
    %v4480 = vpop.xlane.xlu0 %4479
    %v4481 = vsel %vm181, %v4465, 0.0
    %4482 = vadd.xlane.f32.xlu0 %v4481
    %v4483 = vpop.xlane.xlu0 %4482
    %v4484 = vsel %vm181, %v4467, 0.0
    %4485 = vadd.xlane.f32.xlu0 %v4484
    %v4486 = vpop.xlane.xlu0 %4485
    %v4487 = vsel %vm181, %v4469, 0.0
    %4488 = vadd.xlane.f32.xlu0 %v4487
    %v4489 = vpop.xlane.xlu0 %4488
    %v4490 = vsel %vm181, %v4471, 0.0
    %4491 = vadd.xlane.f32.xlu0 %v4490
    %v4492 = vpop.xlane.xlu0 %4491
    %v4493 = vsel %vm181, %v4473, 0.0
    %4494 = vadd.xlane.f32.xlu0 %v4493
    %v4495 = vpop.xlane.xlu0 %4494
    %v4496 = vsel %vm181, %v4475, 0.0
    %4497 = vadd.xlane.f32.xlu0 %v4496
    %v4498 = vpop.xlane.xlu0 %4497
    %v4499 = vsel %vm181, %v4477, 0.0
    %4500 = vadd.xlane.f32.xlu0 %v4499
    %v4501 = vpop.xlane.xlu0 %4500
    %v4502 = vrcp.pop %v4480
    %v4503 = vrcp.pop %v4483
    %v4504 = vrcp.pop %v4486
    %v4505 = vrcp.pop %v4489
    %v4506 = vrcp.pop %v4492
    %v4507 = vrcp.pop %v4495
    %v4508 = vrcp.pop %v4498
    %v4509 = vrcp.pop %v4501
    %v4510 = vmul.f32 %v4463, %v4502
    %v4511 = vmul.f32 %v4465, %v4503
    %v4512 = vmul.f32 %v4467, %v4504
    %v4513 = vmul.f32 %v4469, %v4505
    %v4514 = vmul.f32 %v4471, %v4506
    %v4515 = vmul.f32 %v4473, %v4507
    %v4516 = vmul.f32 %v4475, %v4508
    %v4517 = vmul.f32 %v4477, %v4509
    %4518 = vrot.lane.b32.xlu0 %v3784, 64
    %v4519 = vpop.permute.xlu0 %4518
    %v4522 = vsel %vm181, %v4510, 0
    %4524 = vmatprep.subr.mxu0 0.0
    %4525 = vmatpush1.msra.mxu0 %v4519
    %4526 = vmatprep.subr.mxu0 0.0
    %4527 = vmatpush1.msra.mxu0 0.0
    %4528 = vmatprep.subr.mxu0 0.0
    %4529 = vmatpush1.msra.mxu0 0.0
    %4530 = vmatprep.subr.mxu0 0.0
    %4531 = vmatpush1.msra.mxu0 0.0
    %4532 = vmatprep.subr.mxu0 0.0
    %4533 = vmatpush1.msra.mxu0 0.0
    %4534 = vmatprep.subr.mxu0 0.0
    %4535 = vmatpush1.msra.mxu0 0.0
    %4536 = vmatprep.subr.mxu0 0.0
    %4537 = vmatpush1.msra.mxu0 0.0
    %4538 = vmatprep.subr.mxu0 0.0
    %4539 = vmatpush1.msra.mxu0 0.0
    %4540 = vmatprep.subr.mxu0 0.0
    %4541 = vmatpush1.msra.mxu0 0.0
    %4542 = vmatprep.subr.mxu0 0.0
    %4543 = vmatpush1.msra.mxu0 0.0
    %4544 = vmatprep.subr.mxu0 0.0
    %4545 = vmatpush1.msra.mxu0 0.0
    %4546 = vmatprep.subr.mxu0 0.0
    %4547 = vmatpush1.msra.mxu0 0.0
    %4548 = vmatprep.subr.mxu0 0.0
    %4549 = vmatpush1.msra.mxu0 0.0
    %4550 = vmatprep.subr.mxu0 0.0
    %4551 = vmatpush1.msra.mxu0 0.0
    %4552 = vmatprep.subr.mxu0 0.0
    %4553 = vmatpush1.msra.mxu0 0.0
    %4554 = vmatprep.subr.mxu0 0.0
    %4555 = vmatpush1.msra.mxu0 0.0
    %4556 = vmatprep.subr.mxu0 0.0
    %4557 = vmatpush1.msra.mxu0 0.0
    %4558 = vmatprep.subr.mxu0 0.0
    %4559 = vmatpush1.msra.mxu0 0.0
    %4560 = vmatprep.subr.mxu0 0.0
    %4561 = vmatpush1.msra.mxu0 0.0
    %4562 = vmatprep.subr.mxu0 0.0
    %4563 = vmatpush1.msra.mxu0 0.0
    %4564 = vmatprep.subr.mxu0 0.0
    %4565 = vmatpush1.msra.mxu0 0.0
    %4566 = vmatprep.subr.mxu0 0.0
    %4567 = vmatpush1.msra.mxu0 0.0
    %4568 = vmatprep.subr.mxu0 0.0
    %4569 = vmatpush1.msra.mxu0 0.0
    %4570 = vmatprep.subr.mxu0 0.0
    %4571 = vmatpush1.msra.mxu0 0.0
    %4572 = vmatprep.subr.mxu0 0.0
    %4573 = vmatpush1.msra.mxu0 0.0
    %4574 = vmatprep.subr.mxu0 0.0
    %4575 = vmatpush1.msra.mxu0 0.0
    %4576 = vmatprep.subr.mxu0 0.0
    %4577 = vmatpush1.msra.mxu0 0.0
    %4578 = vmatprep.subr.mxu0 0.0
    %4579 = vmatpush1.msra.mxu0 0.0
    %4580 = vmatprep.subr.mxu0 0.0
    %4581 = vmatpush1.msra.mxu0 0.0
    %4582 = vmatprep.subr.mxu0 0.0
    %4583 = vmatpush1.msra.mxu0 0.0
    %4584 = vmatprep.subr.mxu0 0.0
    %4585 = vmatpush1.msra.mxu0 0.0
    %4586 = vmatprep.subr.mxu0 0.0
    %4587 = vmatpush1.msra.mxu0 0.0
    %4588 = vmatprep.mubr.f32.mxu0 0.0
    %4589 = vmatmul.mubr.f32.gmra.mrb[0].mxu0 %v4522
    %v4590 = vpop.f32.mrb[0].mxu0
    %v4591 = vadd.f32 0.0, %v4590
    %v4592 = vpop.f32.mrb[0].mxu0
    %4593 = vdwg.mxu0
    %4594 = vrot.lane.b32.xlu0 %v3789, 64
    %v4595 = vpop.permute.xlu0 %4594
    %v4598 = vsel %vm181, %v4511, 0
    %4600 = vmatprep.subr.mxu0 0.0
    %4601 = vmatpush1.msra.mxu0 %v4595
    %4602 = vmatprep.subr.mxu0 0.0
    %4603 = vmatpush1.msra.mxu0 0.0
    %4604 = vmatprep.subr.mxu0 0.0
    %4605 = vmatpush1.msra.mxu0 0.0
    %4606 = vmatprep.subr.mxu0 0.0
    %4607 = vmatpush1.msra.mxu0 0.0
    %4608 = vmatprep.subr.mxu0 0.0
    %4609 = vmatpush1.msra.mxu0 0.0
    %4610 = vmatprep.subr.mxu0 0.0
    %4611 = vmatpush1.msra.mxu0 0.0
    %4612 = vmatprep.subr.mxu0 0.0
    %4613 = vmatpush1.msra.mxu0 0.0
    %4614 = vmatprep.subr.mxu0 0.0
    %4615 = vmatpush1.msra.mxu0 0.0
    %4616 = vmatprep.subr.mxu0 0.0
    %4617 = vmatpush1.msra.mxu0 0.0
    %4618 = vmatprep.subr.mxu0 0.0
    %4619 = vmatpush1.msra.mxu0 0.0
    %4620 = vmatprep.subr.mxu0 0.0
    %4621 = vmatpush1.msra.mxu0 0.0
    %4622 = vmatprep.subr.mxu0 0.0
    %4623 = vmatpush1.msra.mxu0 0.0
    %4624 = vmatprep.subr.mxu0 0.0
    %4625 = vmatpush1.msra.mxu0 0.0
    %4626 = vmatprep.subr.mxu0 0.0
    %4627 = vmatpush1.msra.mxu0 0.0
    %4628 = vmatprep.subr.mxu0 0.0
    %4629 = vmatpush1.msra.mxu0 0.0
    %4630 = vmatprep.subr.mxu0 0.0
    %4631 = vmatpush1.msra.mxu0 0.0
    %4632 = vmatprep.subr.mxu0 0.0
    %4633 = vmatpush1.msra.mxu0 0.0
    %4634 = vmatprep.subr.mxu0 0.0
    %4635 = vmatpush1.msra.mxu0 0.0
    %4636 = vmatprep.subr.mxu0 0.0
    %4637 = vmatpush1.msra.mxu0 0.0
    %4638 = vmatprep.subr.mxu0 0.0
    %4639 = vmatpush1.msra.mxu0 0.0
    %4640 = vmatprep.subr.mxu0 0.0
    %4641 = vmatpush1.msra.mxu0 0.0
    %4642 = vmatprep.subr.mxu0 0.0
    %4643 = vmatpush1.msra.mxu0 0.0
    %4644 = vmatprep.subr.mxu0 0.0
    %4645 = vmatpush1.msra.mxu0 0.0
    %4646 = vmatprep.subr.mxu0 0.0
    %4647 = vmatpush1.msra.mxu0 0.0
    %4648 = vmatprep.subr.mxu0 0.0
    %4649 = vmatpush1.msra.mxu0 0.0
    %4650 = vmatprep.subr.mxu0 0.0
    %4651 = vmatpush1.msra.mxu0 0.0
    %4652 = vmatprep.subr.mxu0 0.0
    %4653 = vmatpush1.msra.mxu0 0.0
    %4654 = vmatprep.subr.mxu0 0.0
    %4655 = vmatpush1.msra.mxu0 0.0
    %4656 = vmatprep.subr.mxu0 0.0
    %4657 = vmatpush1.msra.mxu0 0.0
    %4658 = vmatprep.subr.mxu0 0.0
    %4659 = vmatpush1.msra.mxu0 0.0
    %4660 = vmatprep.subr.mxu0 0.0
    %4661 = vmatpush1.msra.mxu0 0.0
    %4662 = vmatprep.subr.mxu0 0.0
    %4663 = vmatpush1.msra.mxu0 0.0
    %4664 = vmatprep.mubr.f32.mxu0 0.0
    %4665 = vmatmul.mubr.f32.gmra.mrb[0].mxu0 %v4598
    %v4666 = vpop.f32.mrb[0].mxu0
    %v4667 = vadd.f32 0.0, %v4666
    %v4668 = vpop.f32.mrb[0].mxu0
    %4669 = vdwg.mxu0
    %4670 = vrot.lane.b32.xlu0 %v3795, 64
    %v4671 = vpop.permute.xlu0 %4670
    %v4674 = vsel %vm181, %v4512, 0
    %4676 = vmatprep.subr.mxu0 0.0
    %4677 = vmatpush1.msra.mxu0 %v4671
    %4678 = vmatprep.subr.mxu0 0.0
    %4679 = vmatpush1.msra.mxu0 0.0
    %4680 = vmatprep.subr.mxu0 0.0
    %4681 = vmatpush1.msra.mxu0 0.0
    %4682 = vmatprep.subr.mxu0 0.0
    %4683 = vmatpush1.msra.mxu0 0.0
    %4684 = vmatprep.subr.mxu0 0.0
    %4685 = vmatpush1.msra.mxu0 0.0
    %4686 = vmatprep.subr.mxu0 0.0
    %4687 = vmatpush1.msra.mxu0 0.0
    %4688 = vmatprep.subr.mxu0 0.0
    %4689 = vmatpush1.msra.mxu0 0.0
    %4690 = vmatprep.subr.mxu0 0.0
    %4691 = vmatpush1.msra.mxu0 0.0
    %4692 = vmatprep.subr.mxu0 0.0
    %4693 = vmatpush1.msra.mxu0 0.0
    %4694 = vmatprep.subr.mxu0 0.0
    %4695 = vmatpush1.msra.mxu0 0.0
    %4696 = vmatprep.subr.mxu0 0.0
    %4697 = vmatpush1.msra.mxu0 0.0
    %4698 = vmatprep.subr.mxu0 0.0
    %4699 = vmatpush1.msra.mxu0 0.0
    %4700 = vmatprep.subr.mxu0 0.0
    %4701 = vmatpush1.msra.mxu0 0.0
    %4702 = vmatprep.subr.mxu0 0.0
    %4703 = vmatpush1.msra.mxu0 0.0
    %4704 = vmatprep.subr.mxu0 0.0
    %4705 = vmatpush1.msra.mxu0 0.0
    %4706 = vmatprep.subr.mxu0 0.0
    %4707 = vmatpush1.msra.mxu0 0.0
    %4708 = vmatprep.subr.mxu0 0.0
    %4709 = vmatpush1.msra.mxu0 0.0
    %4710 = vmatprep.subr.mxu0 0.0
    %4711 = vmatpush1.msra.mxu0 0.0
    %4712 = vmatprep.subr.mxu0 0.0
    %4713 = vmatpush1.msra.mxu0 0.0
    %4714 = vmatprep.subr.mxu0 0.0
    %4715 = vmatpush1.msra.mxu0 0.0
    %4716 = vmatprep.subr.mxu0 0.0
    %4717 = vmatpush1.msra.mxu0 0.0
    %4718 = vmatprep.subr.mxu0 0.0
    %4719 = vmatpush1.msra.mxu0 0.0
    %4720 = vmatprep.subr.mxu0 0.0
    %4721 = vmatpush1.msra.mxu0 0.0
    %4722 = vmatprep.subr.mxu0 0.0
    %4723 = vmatpush1.msra.mxu0 0.0
    %4724 = vmatprep.subr.mxu0 0.0
    %4725 = vmatpush1.msra.mxu0 0.0
    %4726 = vmatprep.subr.mxu0 0.0
    %4727 = vmatpush1.msra.mxu0 0.0
    %4728 = vmatprep.subr.mxu0 0.0
    %4729 = vmatpush1.msra.mxu0 0.0
    %4730 = vmatprep.subr.mxu0 0.0
    %4731 = vmatpush1.msra.mxu0 0.0
    %4732 = vmatprep.subr.mxu0 0.0
    %4733 = vmatpush1.msra.mxu0 0.0
    %4734 = vmatprep.subr.mxu0 0.0
    %4735 = vmatpush1.msra.mxu0 0.0
    %4736 = vmatprep.subr.mxu0 0.0
    %4737 = vmatpush1.msra.mxu0 0.0
    %4738 = vmatprep.subr.mxu0 0.0
    %4739 = vmatpush1.msra.mxu0 0.0
    %4740 = vmatprep.mubr.f32.mxu0 0.0
    %4741 = vmatmul.mubr.f32.gmra.mrb[0].mxu0 %v4674
    %v4742 = vpop.f32.mrb[0].mxu0
    %v4743 = vadd.f32 0.0, %v4742
    %v4744 = vpop.f32.mrb[0].mxu0
    %4745 = vdwg.mxu0
    %4746 = vrot.lane.b32.xlu0 %v3797, 64
    %v4747 = vpop.permute.xlu0 %4746
    %v4750 = vsel %vm181, %v4513, 0
    %4752 = vmatprep.subr.mxu0 0.0
    %4753 = vmatpush1.msra.mxu0 %v4747
    %4754 = vmatprep.subr.mxu0 0.0
    %4755 = vmatpush1.msra.mxu0 0.0
    %4756 = vmatprep.subr.mxu0 0.0
    %4757 = vmatpush1.msra.mxu0 0.0
    %4758 = vmatprep.subr.mxu0 0.0
    %4759 = vmatpush1.msra.mxu0 0.0
    %4760 = vmatprep.subr.mxu0 0.0
    %4761 = vmatpush1.msra.mxu0 0.0
    %4762 = vmatprep.subr.mxu0 0.0
    %4763 = vmatpush1.msra.mxu0 0.0
    %4764 = vmatprep.subr.mxu0 0.0
    %4765 = vmatpush1.msra.mxu0 0.0
    %4766 = vmatprep.subr.mxu0 0.0
    %4767 = vmatpush1.msra.mxu0 0.0
    %4768 = vmatprep.subr.mxu0 0.0
    %4769 = vmatpush1.msra.mxu0 0.0
    %4770 = vmatprep.subr.mxu0 0.0
    %4771 = vmatpush1.msra.mxu0 0.0
    %4772 = vmatprep.subr.mxu0 0.0
    %4773 = vmatpush1.msra.mxu0 0.0
    %4774 = vmatprep.subr.mxu0 0.0
    %4775 = vmatpush1.msra.mxu0 0.0
    %4776 = vmatprep.subr.mxu0 0.0
    %4777 = vmatpush1.msra.mxu0 0.0
    %4778 = vmatprep.subr.mxu0 0.0
    %4779 = vmatpush1.msra.mxu0 0.0
    %4780 = vmatprep.subr.mxu0 0.0
    %4781 = vmatpush1.msra.mxu0 0.0
    %4782 = vmatprep.subr.mxu0 0.0
    %4783 = vmatpush1.msra.mxu0 0.0
    %4784 = vmatprep.subr.mxu0 0.0
    %4785 = vmatpush1.msra.mxu0 0.0
    %4786 = vmatprep.subr.mxu0 0.0
    %4787 = vmatpush1.msra.mxu0 0.0
    %4788 = vmatprep.subr.mxu0 0.0
    %4789 = vmatpush1.msra.mxu0 0.0
    %4790 = vmatprep.subr.mxu0 0.0
    %4791 = vmatpush1.msra.mxu0 0.0
    %4792 = vmatprep.subr.mxu0 0.0
    %4793 = vmatpush1.msra.mxu0 0.0
    %4794 = vmatprep.subr.mxu0 0.0
    %4795 = vmatpush1.msra.mxu0 0.0
    %4796 = vmatprep.subr.mxu0 0.0
    %4797 = vmatpush1.msra.mxu0 0.0
    %4798 = vmatprep.subr.mxu0 0.0
    %4799 = vmatpush1.msra.mxu0 0.0
    %4800 = vmatprep.subr.mxu0 0.0
    %4801 = vmatpush1.msra.mxu0 0.0
    %4802 = vmatprep.subr.mxu0 0.0
    %4803 = vmatpush1.msra.mxu0 0.0
    %4804 = vmatprep.subr.mxu0 0.0
    %4805 = vmatpush1.msra.mxu0 0.0
    %4806 = vmatprep.subr.mxu0 0.0
    %4807 = vmatpush1.msra.mxu0 0.0
    %4808 = vmatprep.subr.mxu0 0.0
    %4809 = vmatpush1.msra.mxu0 0.0
    %4810 = vmatprep.subr.mxu0 0.0
    %4811 = vmatpush1.msra.mxu0 0.0
    %4812 = vmatprep.subr.mxu0 0.0
    %4813 = vmatpush1.msra.mxu0 0.0
    %4814 = vmatprep.subr.mxu0 0.0
    %4815 = vmatpush1.msra.mxu0 0.0
    %4816 = vmatprep.mubr.f32.mxu0 0.0
    %4817 = vmatmul.mubr.f32.gmra.mrb[0].mxu0 %v4750
    %v4818 = vpop.f32.mrb[0].mxu0
    %v4819 = vadd.f32 0.0, %v4818
    %v4820 = vpop.f32.mrb[0].mxu0
    %4821 = vdwg.mxu0
    %4822 = vrot.lane.b32.xlu0 %v3799, 64
    %v4823 = vpop.permute.xlu0 %4822
    %v4826 = vsel %vm181, %v4514, 0
    %4828 = vmatprep.subr.mxu0 0.0
    %4829 = vmatpush1.msra.mxu0 %v4823
    %4830 = vmatprep.subr.mxu0 0.0
    %4831 = vmatpush1.msra.mxu0 0.0
    %4832 = vmatprep.subr.mxu0 0.0
    %4833 = vmatpush1.msra.mxu0 0.0
    %4834 = vmatprep.subr.mxu0 0.0
    %4835 = vmatpush1.msra.mxu0 0.0
    %4836 = vmatprep.subr.mxu0 0.0
    %4837 = vmatpush1.msra.mxu0 0.0
    %4838 = vmatprep.subr.mxu0 0.0
    %4839 = vmatpush1.msra.mxu0 0.0
    %4840 = vmatprep.subr.mxu0 0.0
    %4841 = vmatpush1.msra.mxu0 0.0
    %4842 = vmatprep.subr.mxu0 0.0
    %4843 = vmatpush1.msra.mxu0 0.0
    %4844 = vmatprep.subr.mxu0 0.0
    %4845 = vmatpush1.msra.mxu0 0.0
    %4846 = vmatprep.subr.mxu0 0.0
    %4847 = vmatpush1.msra.mxu0 0.0
    %4848 = vmatprep.subr.mxu0 0.0
    %4849 = vmatpush1.msra.mxu0 0.0
    %4850 = vmatprep.subr.mxu0 0.0
    %4851 = vmatpush1.msra.mxu0 0.0
    %4852 = vmatprep.subr.mxu0 0.0
    %4853 = vmatpush1.msra.mxu0 0.0
    %4854 = vmatprep.subr.mxu0 0.0
    %4855 = vmatpush1.msra.mxu0 0.0
    %4856 = vmatprep.subr.mxu0 0.0
    %4857 = vmatpush1.msra.mxu0 0.0
    %4858 = vmatprep.subr.mxu0 0.0
    %4859 = vmatpush1.msra.mxu0 0.0
    %4860 = vmatprep.subr.mxu0 0.0
    %4861 = vmatpush1.msra.mxu0 0.0
    %4862 = vmatprep.subr.mxu0 0.0
    %4863 = vmatpush1.msra.mxu0 0.0
    %4864 = vmatprep.subr.mxu0 0.0
    %4865 = vmatpush1.msra.mxu0 0.0
    %4866 = vmatprep.subr.mxu0 0.0
    %4867 = vmatpush1.msra.mxu0 0.0
    %4868 = vmatprep.subr.mxu0 0.0
    %4869 = vmatpush1.msra.mxu0 0.0
    %4870 = vmatprep.subr.mxu0 0.0
    %4871 = vmatpush1.msra.mxu0 0.0
    %4872 = vmatprep.subr.mxu0 0.0
    %4873 = vmatpush1.msra.mxu0 0.0
    %4874 = vmatprep.subr.mxu0 0.0
    %4875 = vmatpush1.msra.mxu0 0.0
    %4876 = vmatprep.subr.mxu0 0.0
    %4877 = vmatpush1.msra.mxu0 0.0
    %4878 = vmatprep.subr.mxu0 0.0
    %4879 = vmatpush1.msra.mxu0 0.0
    %4880 = vmatprep.subr.mxu0 0.0
    %4881 = vmatpush1.msra.mxu0 0.0
    %4882 = vmatprep.subr.mxu0 0.0
    %4883 = vmatpush1.msra.mxu0 0.0
    %4884 = vmatprep.subr.mxu0 0.0
    %4885 = vmatpush1.msra.mxu0 0.0
    %4886 = vmatprep.subr.mxu0 0.0
    %4887 = vmatpush1.msra.mxu0 0.0
    %4888 = vmatprep.subr.mxu0 0.0
    %4889 = vmatpush1.msra.mxu0 0.0
    %4890 = vmatprep.subr.mxu0 0.0
    %4891 = vmatpush1.msra.mxu0 0.0
    %4892 = vmatprep.mubr.f32.mxu0 0.0
    %4893 = vmatmul.mubr.f32.gmra.mrb[0].mxu0 %v4826
    %v4894 = vpop.f32.mrb[0].mxu0
    %v4895 = vadd.f32 0.0, %v4894
    %v4896 = vpop.f32.mrb[0].mxu0
    %4897 = vdwg.mxu0
    %4898 = vrot.lane.b32.xlu0 %v3801, 64
    %v4899 = vpop.permute.xlu0 %4898
    %v4902 = vsel %vm181, %v4515, 0
    %4904 = vmatprep.subr.mxu0 0.0
    %4905 = vmatpush1.msra.mxu0 %v4899
    %4906 = vmatprep.subr.mxu0 0.0
    %4907 = vmatpush1.msra.mxu0 0.0
    %4908 = vmatprep.subr.mxu0 0.0
    %4909 = vmatpush1.msra.mxu0 0.0
    %4910 = vmatprep.subr.mxu0 0.0
    %4911 = vmatpush1.msra.mxu0 0.0
    %4912 = vmatprep.subr.mxu0 0.0
    %4913 = vmatpush1.msra.mxu0 0.0
    %4914 = vmatprep.subr.mxu0 0.0
    %4915 = vmatpush1.msra.mxu0 0.0
    %4916 = vmatprep.subr.mxu0 0.0
    %4917 = vmatpush1.msra.mxu0 0.0
    %4918 = vmatprep.subr.mxu0 0.0
    %4919 = vmatpush1.msra.mxu0 0.0
    %4920 = vmatprep.subr.mxu0 0.0
    %4921 = vmatpush1.msra.mxu0 0.0
    %4922 = vmatprep.subr.mxu0 0.0
    %4923 = vmatpush1.msra.mxu0 0.0
    %4924 = vmatprep.subr.mxu0 0.0
    %4925 = vmatpush1.msra.mxu0 0.0
    %4926 = vmatprep.subr.mxu0 0.0
    %4927 = vmatpush1.msra.mxu0 0.0
    %4928 = vmatprep.subr.mxu0 0.0
    %4929 = vmatpush1.msra.mxu0 0.0
    %4930 = vmatprep.subr.mxu0 0.0
    %4931 = vmatpush1.msra.mxu0 0.0
    %4932 = vmatprep.subr.mxu0 0.0
    %4933 = vmatpush1.msra.mxu0 0.0
    %4934 = vmatprep.subr.mxu0 0.0
    %4935 = vmatpush1.msra.mxu0 0.0
    %4936 = vmatprep.subr.mxu0 0.0
    %4937 = vmatpush1.msra.mxu0 0.0
    %4938 = vmatprep.subr.mxu0 0.0
    %4939 = vmatpush1.msra.mxu0 0.0
    %4940 = vmatprep.subr.mxu0 0.0
    %4941 = vmatpush1.msra.mxu0 0.0
    %4942 = vmatprep.subr.mxu0 0.0
    %4943 = vmatpush1.msra.mxu0 0.0
    %4944 = vmatprep.subr.mxu0 0.0
    %4945 = vmatpush1.msra.mxu0 0.0
    %4946 = vmatprep.subr.mxu0 0.0
    %4947 = vmatpush1.msra.mxu0 0.0
    %4948 = vmatprep.subr.mxu0 0.0
    %4949 = vmatpush1.msra.mxu0 0.0
    %4950 = vmatprep.subr.mxu0 0.0
    %4951 = vmatpush1.msra.mxu0 0.0
    %4952 = vmatprep.subr.mxu0 0.0
    %4953 = vmatpush1.msra.mxu0 0.0
    %4954 = vmatprep.subr.mxu0 0.0
    %4955 = vmatpush1.msra.mxu0 0.0
    %4956 = vmatprep.subr.mxu0 0.0
    %4957 = vmatpush1.msra.mxu0 0.0
    %4958 = vmatprep.subr.mxu0 0.0
    %4959 = vmatpush1.msra.mxu0 0.0
    %4960 = vmatprep.subr.mxu0 0.0
    %4961 = vmatpush1.msra.mxu0 0.0
    %4962 = vmatprep.subr.mxu0 0.0
    %4963 = vmatpush1.msra.mxu0 0.0
    %4964 = vmatprep.subr.mxu0 0.0
    %4965 = vmatpush1.msra.mxu0 0.0
    %4966 = vmatprep.subr.mxu0 0.0
    %4967 = vmatpush1.msra.mxu0 0.0
    %4968 = vmatprep.mubr.f32.mxu0 0.0
    %4969 = vmatmul.mubr.f32.gmra.mrb[0].mxu0 %v4902
    %v4970 = vpop.f32.mrb[0].mxu0
    %v4971 = vadd.f32 0.0, %v4970
    %v4972 = vpop.f32.mrb[0].mxu0
    %4973 = vdwg.mxu0
    %4974 = vrot.lane.b32.xlu0 %v3803, 64
    %v4975 = vpop.permute.xlu0 %4974
    %v4978 = vsel %vm181, %v4516, 0
    %4980 = vmatprep.subr.mxu0 0.0
    %4981 = vmatpush1.msra.mxu0 %v4975
    %4982 = vmatprep.subr.mxu0 0.0
    %4983 = vmatpush1.msra.mxu0 0.0
    %4984 = vmatprep.subr.mxu0 0.0
    %4985 = vmatpush1.msra.mxu0 0.0
    %4986 = vmatprep.subr.mxu0 0.0
    %4987 = vmatpush1.msra.mxu0 0.0
    %4988 = vmatprep.subr.mxu0 0.0
    %4989 = vmatpush1.msra.mxu0 0.0
    %4990 = vmatprep.subr.mxu0 0.0
    %4991 = vmatpush1.msra.mxu0 0.0
    %4992 = vmatprep.subr.mxu0 0.0
    %4993 = vmatpush1.msra.mxu0 0.0
    %4994 = vmatprep.subr.mxu0 0.0
    %4995 = vmatpush1.msra.mxu0 0.0
    %4996 = vmatprep.subr.mxu0 0.0
    %4997 = vmatpush1.msra.mxu0 0.0
    %4998 = vmatprep.subr.mxu0 0.0
    %4999 = vmatpush1.msra.mxu0 0.0
    %5000 = vmatprep.subr.mxu0 0.0
    %5001 = vmatpush1.msra.mxu0 0.0
    %5002 = vmatprep.subr.mxu0 0.0
    %5003 = vmatpush1.msra.mxu0 0.0
    %5004 = vmatprep.subr.mxu0 0.0
    %5005 = vmatpush1.msra.mxu0 0.0
    %5006 = vmatprep.subr.mxu0 0.0
    %5007 = vmatpush1.msra.mxu0 0.0
    %5008 = vmatprep.subr.mxu0 0.0
    %5009 = vmatpush1.msra.mxu0 0.0
    %5010 = vmatprep.subr.mxu0 0.0
    %5011 = vmatpush1.msra.mxu0 0.0
    %5012 = vmatprep.subr.mxu0 0.0
    %5013 = vmatpush1.msra.mxu0 0.0
    %5014 = vmatprep.subr.mxu0 0.0
    %5015 = vmatpush1.msra.mxu0 0.0
    %5016 = vmatprep.subr.mxu0 0.0
    %5017 = vmatpush1.msra.mxu0 0.0
    %5018 = vmatprep.subr.mxu0 0.0
    %5019 = vmatpush1.msra.mxu0 0.0
    %5020 = vmatprep.subr.mxu0 0.0
    %5021 = vmatpush1.msra.mxu0 0.0
    %5022 = vmatprep.subr.mxu0 0.0
    %5023 = vmatpush1.msra.mxu0 0.0
    %5024 = vmatprep.subr.mxu0 0.0
    %5025 = vmatpush1.msra.mxu0 0.0
    %5026 = vmatprep.subr.mxu0 0.0
    %5027 = vmatpush1.msra.mxu0 0.0
    %5028 = vmatprep.subr.mxu0 0.0
    %5029 = vmatpush1.msra.mxu0 0.0
    %5030 = vmatprep.subr.mxu0 0.0
    %5031 = vmatpush1.msra.mxu0 0.0
    %5032 = vmatprep.subr.mxu0 0.0
    %5033 = vmatpush1.msra.mxu0 0.0
    %5034 = vmatprep.subr.mxu0 0.0
    %5035 = vmatpush1.msra.mxu0 0.0
    %5036 = vmatprep.subr.mxu0 0.0
    %5037 = vmatpush1.msra.mxu0 0.0
    %5038 = vmatprep.subr.mxu0 0.0
    %5039 = vmatpush1.msra.mxu0 0.0
    %5040 = vmatprep.subr.mxu0 0.0
    %5041 = vmatpush1.msra.mxu0 0.0
    %5042 = vmatprep.subr.mxu0 0.0
    %5043 = vmatpush1.msra.mxu0 0.0
    %5044 = vmatprep.mubr.f32.mxu0 0.0
    %5045 = vmatmul.mubr.f32.gmra.mrb[0].mxu0 %v4978
    %v5046 = vpop.f32.mrb[0].mxu0
    %v5047 = vadd.f32 0.0, %v5046
    %v5048 = vpop.f32.mrb[0].mxu0
    %5049 = vdwg.mxu0
    %5050 = vrot.lane.b32.xlu0 %v3805, 64
    %v5051 = vpop.permute.xlu0 %5050
    %v5054 = vsel %vm181, %v4517, 0
    %5056 = vmatprep.subr.mxu0 0.0
    %5057 = vmatpush1.msra.mxu0 %v5051
    %5058 = vmatprep.subr.mxu0 0.0
    %5059 = vmatpush1.msra.mxu0 0.0
    %5060 = vmatprep.subr.mxu0 0.0
    %5061 = vmatpush1.msra.mxu0 0.0
    %5062 = vmatprep.subr.mxu0 0.0
    %5063 = vmatpush1.msra.mxu0 0.0
    %5064 = vmatprep.subr.mxu0 0.0
    %5065 = vmatpush1.msra.mxu0 0.0
    %5066 = vmatprep.subr.mxu0 0.0
    %5067 = vmatpush1.msra.mxu0 0.0
    %5068 = vmatprep.subr.mxu0 0.0
    %5069 = vmatpush1.msra.mxu0 0.0
    %5070 = vmatprep.subr.mxu0 0.0
    %5071 = vmatpush1.msra.mxu0 0.0
    %5072 = vmatprep.subr.mxu0 0.0
    %5073 = vmatpush1.msra.mxu0 0.0
    %5074 = vmatprep.subr.mxu0 0.0
    %5075 = vmatpush1.msra.mxu0 0.0
    %5076 = vmatprep.subr.mxu0 0.0
    %5077 = vmatpush1.msra.mxu0 0.0
    %5078 = vmatprep.subr.mxu0 0.0
    %5079 = vmatpush1.msra.mxu0 0.0
    %5080 = vmatprep.subr.mxu0 0.0
    %5081 = vmatpush1.msra.mxu0 0.0
    %5082 = vmatprep.subr.mxu0 0.0
    %5083 = vmatpush1.msra.mxu0 0.0
    %5084 = vmatprep.subr.mxu0 0.0
    %5085 = vmatpush1.msra.mxu0 0.0
    %5086 = vmatprep.subr.mxu0 0.0
    %5087 = vmatpush1.msra.mxu0 0.0
    %5088 = vmatprep.subr.mxu0 0.0
    %5089 = vmatpush1.msra.mxu0 0.0
    %5090 = vmatprep.subr.mxu0 0.0
    %5091 = vmatpush1.msra.mxu0 0.0
    %5092 = vmatprep.subr.mxu0 0.0
    %5093 = vmatpush1.msra.mxu0 0.0
    %5094 = vmatprep.subr.mxu0 0.0
    %5095 = vmatpush1.msra.mxu0 0.0
    %5096 = vmatprep.subr.mxu0 0.0
    %5097 = vmatpush1.msra.mxu0 0.0
    %5098 = vmatprep.subr.mxu0 0.0
    %5099 = vmatpush1.msra.mxu0 0.0
    %5100 = vmatprep.subr.mxu0 0.0
    %5101 = vmatpush1.msra.mxu0 0.0
    %5102 = vmatprep.subr.mxu0 0.0
    %5103 = vmatpush1.msra.mxu0 0.0
    %5104 = vmatprep.subr.mxu0 0.0
    %5105 = vmatpush1.msra.mxu0 0.0
    %5106 = vmatprep.subr.mxu0 0.0
    %5107 = vmatpush1.msra.mxu0 0.0
    %5108 = vmatprep.subr.mxu0 0.0
    %5109 = vmatpush1.msra.mxu0 0.0
    %5110 = vmatprep.subr.mxu0 0.0
    %5111 = vmatpush1.msra.mxu0 0.0
    %5112 = vmatprep.subr.mxu0 0.0
    %5113 = vmatpush1.msra.mxu0 0.0
    %5114 = vmatprep.subr.mxu0 0.0
    %5115 = vmatpush1.msra.mxu0 0.0
    %5116 = vmatprep.subr.mxu0 0.0
    %5117 = vmatpush1.msra.mxu0 0.0
    %5118 = vmatprep.subr.mxu0 0.0
    %5119 = vmatpush1.msra.mxu0 0.0
    %5120 = vmatprep.mubr.f32.mxu0 0.0
    %5121 = vmatmul.mubr.f32.gmra.mrb[0].mxu0 %v5054
    %v5122 = vpop.f32.mrb[0].mxu0
    %v5123 = vadd.f32 0.0, %v5122
    %v5124 = vpop.f32.mrb[0].mxu0
    %5125 = vdwg.mxu0
    %5128 = vrot.lane.b32.xlu0 %v4743, 8
    %v5129 = vpop.permute.xlu0 %5128
    %5130 = vrot.lane.b32.xlu0 %v4819, 8
    %v5131 = vpop.permute.xlu0 %5130
    %5136 = vrot.lane.b32.xlu0 %v4895, 16
    %v5137 = vpop.permute.xlu0 %5136
    %5138 = vrot.lane.b32.xlu0 %v4971, 16
    %v5139 = vpop.permute.xlu0 %5138
    %5144 = vrot.lane.b32.xlu0 %v5047, 24
    %v5145 = vpop.permute.xlu0 %5144
    %5146 = vrot.lane.b32.xlu0 %v5123, 24
    %v5147 = vpop.permute.xlu0 %5146
    %v5150 = vsel %vm181, %v4591, %v5129
    %v5151 = vsel %vm181, %v4667, %v5131
    %v5152 = vsel %vm1526, %v5150, %v5137
    %v5153 = vsel %vm1526, %v5151, %v5139
    %v5154 = vsel %vm1529, %v5152, %v5145
    %v5155 = vsel %vm1529, %v5153, %v5147
    %s5156 = scalar_lea.vmem %s2, 64
    %v5157 = vld [vmem:[%s5156] sm:$0xff]
    %v5158 = vld [vmem:[%s5156 + $0x8] sm:$0xff]
    %v5159 = vld [vmem:[%s5156 + $0x10] sm:$0xff]
    %v5160 = vld [vmem:[%s5156 + $0x18] sm:$0xff]
    %v5162 = vsel %vm40, %v5154, 0
    %v5165 = vsel %vm40, %v5155, 0
    %5167 = vmatprep.subr.mxu0 0.0
    %5168 = vmatpush1.msra.mxu0 %v5157
    %5169 = vmatprep.subr.mxu0 0.0
    %5170 = vmatpush1.msra.mxu0 %v5158
    %5171 = vmatprep.subr.mxu0 0.0
    %5172 = vmatpush1.msra.mxu0 %v5159
    %5173 = vmatprep.subr.mxu0 0.0
    %5174 = vmatpush1.msra.mxu0 %v5160
    %5175 = vmatprep.subr.mxu0 0.0
    %5176 = vmatpush1.msra.mxu0 0.0
    %5177 = vmatprep.subr.mxu0 0.0
    %5178 = vmatpush1.msra.mxu0 0.0
    %5179 = vmatprep.subr.mxu0 0.0
    %5180 = vmatpush1.msra.mxu0 0.0
    %5181 = vmatprep.subr.mxu0 0.0
    %5182 = vmatpush1.msra.mxu0 0.0
    %5183 = vmatprep.subr.mxu0 0.0
    %5184 = vmatpush1.msra.mxu0 0.0
    %5185 = vmatprep.subr.mxu0 0.0
    %5186 = vmatpush1.msra.mxu0 0.0
    %5187 = vmatprep.subr.mxu0 0.0
    %5188 = vmatpush1.msra.mxu0 0.0
    %5189 = vmatprep.subr.mxu0 0.0
    %5190 = vmatpush1.msra.mxu0 0.0
    %5191 = vmatprep.subr.mxu0 0.0
    %5192 = vmatpush1.msra.mxu0 0.0
    %5193 = vmatprep.subr.mxu0 0.0
    %5194 = vmatpush1.msra.mxu0 0.0
    %5195 = vmatprep.subr.mxu0 0.0
    %5196 = vmatpush1.msra.mxu0 0.0
    %5197 = vmatprep.subr.mxu0 0.0
    %5198 = vmatpush1.msra.mxu0 0.0
    %5199 = vmatprep.subr.mxu0 0.0
    %5200 = vmatpush1.msra.mxu0 0.0
    %5201 = vmatprep.subr.mxu0 0.0
    %5202 = vmatpush1.msra.mxu0 0.0
    %5203 = vmatprep.subr.mxu0 0.0
    %5204 = vmatpush1.msra.mxu0 0.0
    %5205 = vmatprep.subr.mxu0 0.0
    %5206 = vmatpush1.msra.mxu0 0.0
    %5207 = vmatprep.subr.mxu0 0.0
    %5208 = vmatpush1.msra.mxu0 0.0
    %5209 = vmatprep.subr.mxu0 0.0
    %5210 = vmatpush1.msra.mxu0 0.0
    %5211 = vmatprep.subr.mxu0 0.0
    %5212 = vmatpush1.msra.mxu0 0.0
    %5213 = vmatprep.subr.mxu0 0.0
    %5214 = vmatpush1.msra.mxu0 0.0
    %5215 = vmatprep.subr.mxu0 0.0
    %5216 = vmatpush1.msra.mxu0 0.0
    %5217 = vmatprep.subr.mxu0 0.0
    %5218 = vmatpush1.msra.mxu0 0.0
    %5219 = vmatprep.subr.mxu0 0.0
    %5220 = vmatpush1.msra.mxu0 0.0
    %5221 = vmatprep.subr.mxu0 0.0
    %5222 = vmatpush1.msra.mxu0 0.0
    %5223 = vmatprep.subr.mxu0 0.0
    %5224 = vmatpush1.msra.mxu0 0.0
    %5225 = vmatprep.subr.mxu0 0.0
    %5226 = vmatpush1.msra.mxu0 0.0
    %5227 = vmatprep.subr.mxu0 0.0
    %5228 = vmatpush1.msra.mxu0 0.0
    %5229 = vmatprep.subr.mxu0 0.0
    %5230 = vmatpush1.msra.mxu0 0.0
    %5231 = vmatprep.mubr.f32.mxu0 0.0
    %5232 = vmatmul.mubr.f32.gmra.mrb[0].mxu0 %v5162
    %v5233 = vpop.f32.mrb[0].mxu0
    %v5234 = vadd.f32 0.0, %v5233
    %v5235 = vpop.f32.mrb[0].mxu0
    %5236 = vmatprep.mubr.f32.mxu0 0.0
    %5237 = vmatmul.mubr.f32.gmra.mrb[0].mxu0 %v5165
    %v5238 = vpop.f32.mrb[0].mxu0
    %v5239 = vadd.f32 0.0, %v5238
    %v5240 = vpop.f32.mrb[0].mxu0
    %5241 = vdwg.mxu0
    %v5242 = vadd.f32 %v3666, %v5234
    %v5243 = vadd.f32 %v3667, %v5239
    %v5244 = vlaneseq
    %v5245 = vshrl.u32 %v5244, 7
    %v5246 = vsub.s32 0, %v5245
    %v5247 = vrot.slane %v34, %v5246
    %v5248 = vadd.f32 %v5242, %v5247
    %v5249 = vadd.f32 %v5243, %v5247
    %v5250 = vsel %vm40, %v5248, 0.0
    %5251 = vadd.xlane.f32.xlu0 %v5250
    %v5252 = vpop.xlane.xlu0 %5251
    %v5253 = vsel %vm40, %v5249, 0.0
    %5254 = vadd.xlane.f32.xlu0 %v5253
    %v5255 = vpop.xlane.xlu0 %5254
    %v5256 = vmul.f32 %v5252, %v47
    %v5257 = vmul.f32 %v5255, %v47
    %v5258 = vsub.f32 %v5248, %v5256
    %v5259 = vsub.f32 %v5249, %v5257
    %v5260 = vmul.f32 %v5258, %v5258
    %v5261 = vmul.f32 %v5259, %v5259
    %v5262 = vsel %vm40, %v5260, 0.0
    %5263 = vadd.xlane.f32.xlu0 %v5262
    %v5264 = vpop.xlane.xlu0 %5263
    %v5265 = vsel %vm40, %v5261, 0.0
    %5266 = vadd.xlane.f32.xlu0 %v5265
    %v5267 = vpop.xlane.xlu0 %5266
    %v5268 = vmul.f32 %v5264, %v47
    %v5269 = vmul.f32 %v5267, %v47
    %v5270 = vadd.f32 %v5268, 1e-05
    %v5271 = vadd.f32 %v5269, 1e-05
    %v5272 = vrsqrt.pop %v5270
    %v5273 = vrsqrt.pop %v5271
    %v5274 = vmul.f32 %v5258, %v5272
    %v5275 = vmul.f32 %v5259, %v5273
    %v5276 = vlaneseq
    %v5277 = vshrl.u32 %v5276, 7
    %v5278 = vsub.s32 6, %v5277
    %v5279 = vrot.slane %v33, %v5278
    %v5280 = vmul.f32 %v5274, %v5279
    %v5281 = vmul.f32 %v5275, %v5279
    %v5282 = vlaneseq
    %v5283 = vshrl.u32 %v5282, 7
    %v5284 = vsub.s32 7, %v5283
    %v5285 = vrot.slane %v33, %v5284
    %v5286 = vadd.f32 %v5280, %v5285
    %v5287 = vadd.f32 %v5281, %v5285
    %s5288 = scalar_lea.vmem %s3, 64
    %v5289 = vld [vmem:[%s5288] sm:$0xff]
    %v5290 = vld [vmem:[%s5288 + $0x8] sm:$0xff]
    %v5291 = vld [vmem:[%s5288 + $0x10] sm:$0xff]
    %v5292 = vld [vmem:[%s5288 + $0x18] sm:$0xff]
    %s5293 = scalar_lea.vmem %s4, 2
    %v5294 = vld [vmem:[%s5293] sm:$0x1]
    %v5296 = vlaneseq
    %v5297 = vshrl.u32 %v5296, 7
    %v5298 = vsub.s32 0, %v5297
    %v5299 = vrot.slane %v5294, %v5298
    %v5302 = vsel %vm40, %v5286, 0
    %v5305 = vsel %vm40, %v5287, 0
    %5307 = vmatprep.subr.mxu0 0.0
    %5308 = vmatpush1.msra.mxu0 %v5289
    %5309 = vmatprep.subr.mxu0 0.0
    %5310 = vmatpush1.msra.mxu0 %v5290
    %5311 = vmatprep.subr.mxu0 0.0
    %5312 = vmatpush1.msra.mxu0 %v5291
    %5313 = vmatprep.subr.mxu0 0.0
    %5314 = vmatpush1.msra.mxu0 %v5292
    %5315 = vmatprep.subr.mxu0 0.0
    %5316 = vmatpush1.msra.mxu0 0.0
    %5317 = vmatprep.subr.mxu0 0.0
    %5318 = vmatpush1.msra.mxu0 0.0
    %5319 = vmatprep.subr.mxu0 0.0
    %5320 = vmatpush1.msra.mxu0 0.0
    %5321 = vmatprep.subr.mxu0 0.0
    %5322 = vmatpush1.msra.mxu0 0.0
    %5323 = vmatprep.subr.mxu0 0.0
    %5324 = vmatpush1.msra.mxu0 0.0
    %5325 = vmatprep.subr.mxu0 0.0
    %5326 = vmatpush1.msra.mxu0 0.0
    %5327 = vmatprep.subr.mxu0 0.0
    %5328 = vmatpush1.msra.mxu0 0.0
    %5329 = vmatprep.subr.mxu0 0.0
    %5330 = vmatpush1.msra.mxu0 0.0
    %5331 = vmatprep.subr.mxu0 0.0
    %5332 = vmatpush1.msra.mxu0 0.0
    %5333 = vmatprep.subr.mxu0 0.0
    %5334 = vmatpush1.msra.mxu0 0.0
    %5335 = vmatprep.subr.mxu0 0.0
    %5336 = vmatpush1.msra.mxu0 0.0
    %5337 = vmatprep.subr.mxu0 0.0
    %5338 = vmatpush1.msra.mxu0 0.0
    %5339 = vmatprep.subr.mxu0 0.0
    %5340 = vmatpush1.msra.mxu0 0.0
    %5341 = vmatprep.subr.mxu0 0.0
    %5342 = vmatpush1.msra.mxu0 0.0
    %5343 = vmatprep.subr.mxu0 0.0
    %5344 = vmatpush1.msra.mxu0 0.0
    %5345 = vmatprep.subr.mxu0 0.0
    %5346 = vmatpush1.msra.mxu0 0.0
    %5347 = vmatprep.subr.mxu0 0.0
    %5348 = vmatpush1.msra.mxu0 0.0
    %5349 = vmatprep.subr.mxu0 0.0
    %5350 = vmatpush1.msra.mxu0 0.0
    %5351 = vmatprep.subr.mxu0 0.0
    %5352 = vmatpush1.msra.mxu0 0.0
    %5353 = vmatprep.subr.mxu0 0.0
    %5354 = vmatpush1.msra.mxu0 0.0
    %5355 = vmatprep.subr.mxu0 0.0
    %5356 = vmatpush1.msra.mxu0 0.0
    %5357 = vmatprep.subr.mxu0 0.0
    %5358 = vmatpush1.msra.mxu0 0.0
    %5359 = vmatprep.subr.mxu0 0.0
    %5360 = vmatpush1.msra.mxu0 0.0
    %5361 = vmatprep.subr.mxu0 0.0
    %5362 = vmatpush1.msra.mxu0 0.0
    %5363 = vmatprep.subr.mxu0 0.0
    %5364 = vmatpush1.msra.mxu0 0.0
    %5365 = vmatprep.subr.mxu0 0.0
    %5366 = vmatpush1.msra.mxu0 0.0
    %5367 = vmatprep.subr.mxu0 0.0
    %5368 = vmatpush1.msra.mxu0 0.0
    %5369 = vmatprep.subr.mxu0 0.0
    %5370 = vmatpush1.msra.mxu0 0.0
    %5371 = vmatprep.mubr.f32.mxu0 0.0
    %5372 = vmatmul.mubr.f32.gmra.mrb[0].mxu0 %v5302
    %v5373 = vpop.f32.mrb[0].mxu0
    %v5374 = vadd.f32 %v5299, %v5373
    %v5375 = vpop.f32.mrb[0].mxu0
    %5376 = vmatprep.mubr.f32.mxu0 0.0
    %5377 = vmatmul.mubr.f32.gmra.mrb[0].mxu0 %v5305
    %v5378 = vpop.f32.mrb[0].mxu0
    %v5379 = vadd.f32 %v5299, %v5378
    %v5380 = vpop.f32.mrb[0].mxu0
    %5381 = vdwg.mxu0
    %v5382 = vmax.f32 %v5374, 0.0
    %v5383 = vmax.f32 %v5379, 0.0
    %s5384 = scalar_lea.vmem %s5, 256
    %v5385 = vld [vmem:[%s5384] sm:$0xff]
    %v5386 = vld [vmem:[%s5384 + $0x8] sm:$0xff]
    %v5387 = vld [vmem:[%s5384 + $0x10] sm:$0xff]
    %v5388 = vld [vmem:[%s5384 + $0x18] sm:$0xff]
    %v5389 = vld [vmem:[%s5384 + $0x20] sm:$0xff]
    %v5390 = vld [vmem:[%s5384 + $0x28] sm:$0xff]
    %v5391 = vld [vmem:[%s5384 + $0x30] sm:$0xff]
    %v5392 = vld [vmem:[%s5384 + $0x38] sm:$0xff]
    %v5393 = vld [vmem:[%s5384 + $0x40] sm:$0xff]
    %v5394 = vld [vmem:[%s5384 + $0x48] sm:$0xff]
    %v5395 = vld [vmem:[%s5384 + $0x50] sm:$0xff]
    %v5396 = vld [vmem:[%s5384 + $0x58] sm:$0xff]
    %v5397 = vld [vmem:[%s5384 + $0x60] sm:$0xff]
    %v5398 = vld [vmem:[%s5384 + $0x68] sm:$0xff]
    %v5399 = vld [vmem:[%s5384 + $0x70] sm:$0xff]
    %v5400 = vld [vmem:[%s5384 + $0x78] sm:$0xff]
    %v5401 = vlaneseq
    %v5402 = vshrl.u32 %v5401, 7
    %v5403 = vsub.s32 1, %v5402
    %v5404 = vrot.slane %v34, %v5403
    %5405 = vmatprep.subr.mxu0 0.0
    %5406 = vmatpush1.msra.mxu0 %v5385
    %5407 = vmatprep.subr.mxu0 0.0
    %5408 = vmatpush1.msra.mxu0 %v5386
    %5409 = vmatprep.subr.mxu0 0.0
    %5410 = vmatpush1.msra.mxu0 %v5387
    %5411 = vmatprep.subr.mxu0 0.0
    %5412 = vmatpush1.msra.mxu0 %v5388
    %5413 = vmatprep.subr.mxu0 0.0
    %5414 = vmatpush1.msra.mxu0 %v5389
    %5415 = vmatprep.subr.mxu0 0.0
    %5416 = vmatpush1.msra.mxu0 %v5390
    %5417 = vmatprep.subr.mxu0 0.0
    %5418 = vmatpush1.msra.mxu0 %v5391
    %5419 = vmatprep.subr.mxu0 0.0
    %5420 = vmatpush1.msra.mxu0 %v5392
    %5421 = vmatprep.subr.mxu0 0.0
    %5422 = vmatpush1.msra.mxu0 %v5393
    %5423 = vmatprep.subr.mxu0 0.0
    %5424 = vmatpush1.msra.mxu0 %v5394
    %5425 = vmatprep.subr.mxu0 0.0
    %5426 = vmatpush1.msra.mxu0 %v5395
    %5427 = vmatprep.subr.mxu0 0.0
    %5428 = vmatpush1.msra.mxu0 %v5396
    %5429 = vmatprep.subr.mxu0 0.0
    %5430 = vmatpush1.msra.mxu0 %v5397
    %5431 = vmatprep.subr.mxu0 0.0
    %5432 = vmatpush1.msra.mxu0 %v5398
    %5433 = vmatprep.subr.mxu0 0.0
    %5434 = vmatpush1.msra.mxu0 %v5399
    %5435 = vmatprep.subr.mxu0 0.0
    %5436 = vmatpush1.msra.mxu0 %v5400
    %5437 = vmatprep.subr.mxu0 0.0
    %5438 = vmatpush1.msra.mxu0 0.0
    %5439 = vmatprep.subr.mxu0 0.0
    %5440 = vmatpush1.msra.mxu0 0.0
    %5441 = vmatprep.subr.mxu0 0.0
    %5442 = vmatpush1.msra.mxu0 0.0
    %5443 = vmatprep.subr.mxu0 0.0
    %5444 = vmatpush1.msra.mxu0 0.0
    %5445 = vmatprep.subr.mxu0 0.0
    %5446 = vmatpush1.msra.mxu0 0.0
    %5447 = vmatprep.subr.mxu0 0.0
    %5448 = vmatpush1.msra.mxu0 0.0
    %5449 = vmatprep.subr.mxu0 0.0
    %5450 = vmatpush1.msra.mxu0 0.0
    %5451 = vmatprep.subr.mxu0 0.0
    %5452 = vmatpush1.msra.mxu0 0.0
    %5453 = vmatprep.subr.mxu0 0.0
    %5454 = vmatpush1.msra.mxu0 0.0
    %5455 = vmatprep.subr.mxu0 0.0
    %5456 = vmatpush1.msra.mxu0 0.0
    %5457 = vmatprep.subr.mxu0 0.0
    %5458 = vmatpush1.msra.mxu0 0.0
    %5459 = vmatprep.subr.mxu0 0.0
    %5460 = vmatpush1.msra.mxu0 0.0
    %5461 = vmatprep.subr.mxu0 0.0
    %5462 = vmatpush1.msra.mxu0 0.0
    %5463 = vmatprep.subr.mxu0 0.0
    %5464 = vmatpush1.msra.mxu0 0.0
    %5465 = vmatprep.subr.mxu0 0.0
    %5466 = vmatpush1.msra.mxu0 0.0
    %5467 = vmatprep.subr.mxu0 0.0
    %5468 = vmatpush1.msra.mxu0 0.0
    %5469 = vmatprep.mubr.f32.mxu0 0.0
    %5470 = vmatmul.mubr.f32.gmra.mrb[0].mxu0 %v5382
    %v5471 = vpop.f32.mrb[0].mxu0
    %v5472 = vadd.f32 %v5404, %v5471
    %v5473 = vpop.f32.mrb[0].mxu0
    %5474 = vmatprep.mubr.f32.mxu0 0.0
    %5475 = vmatmul.mubr.f32.gmra.mrb[0].mxu0 %v5383
    %v5476 = vpop.f32.mrb[0].mxu0
    %v5477 = vadd.f32 %v5404, %v5476
    %v5478 = vpop.f32.mrb[0].mxu0
    %5479 = vdwg.mxu0
    %v5480 = vadd.f32 %v5248, %v5472
    %v5481 = vadd.f32 %v5249, %v5477
    %v5482 = vsel %vm40, %v5480, 0.0
    %5483 = vadd.xlane.f32.xlu0 %v5482
    %v5484 = vpop.xlane.xlu0 %5483
    %v5485 = vsel %vm40, %v5481, 0.0
    %5486 = vadd.xlane.f32.xlu0 %v5485
    %v5487 = vpop.xlane.xlu0 %5486
    %v5488 = vmul.f32 %v5484, %v47
    %v5489 = vmul.f32 %v5487, %v47
    %v5490 = vsub.f32 %v5480, %v5488
    %v5491 = vsub.f32 %v5481, %v5489
    %v5492 = vmul.f32 %v5490, %v5490
    %v5493 = vmul.f32 %v5491, %v5491
    %v5494 = vsel %vm40, %v5492, 0.0
    %5495 = vadd.xlane.f32.xlu0 %v5494
    %v5496 = vpop.xlane.xlu0 %5495
    %v5497 = vsel %vm40, %v5493, 0.0
    %5498 = vadd.xlane.f32.xlu0 %v5497
    %v5499 = vpop.xlane.xlu0 %5498
    %v5500 = vmul.f32 %v5496, %v47
    %v5501 = vmul.f32 %v5499, %v47
    %v5502 = vadd.f32 %v5500, 1e-05
    %v5503 = vadd.f32 %v5501, 1e-05
    %v5504 = vrsqrt.pop %v5502
    %v5505 = vrsqrt.pop %v5503
    %v5506 = vmul.f32 %v5490, %v5504
    %v5507 = vmul.f32 %v5491, %v5505
    %v5508 = vlaneseq
    %v5509 = vshrl.u32 %v5508, 7
    %v5510 = vsub.s32 2, %v5509
    %v5511 = vrot.slane %v34, %v5510
    %v5512 = vmul.f32 %v5506, %v5511
    %v5513 = vmul.f32 %v5507, %v5511
    %v5514 = vlaneseq
    %v5515 = vshrl.u32 %v5514, 7
    %v5516 = vsub.s32 3, %v5515
    %v5517 = vrot.slane %v34, %v5516
    %v5518 = vadd.f32 %v5512, %v5517
    %v5519 = vadd.f32 %v5513, %v5517
    %v5520 = vld [vmem:[%s7] sm:$0xff]
    %v5521 = vld [vmem:[%s7 + $0x8] sm:$0xff]
    %v5522 = vld [vmem:[%s7 + $0x10] sm:$0xff]
    %v5523 = vld [vmem:[%s7 + $0x18] sm:$0xff]
    %v5524 = vld [vmem:[%s7 + $0x20] sm:$0x1]
    %v5525 = vlaneseq
    %v5526 = vshrl.u32 %v5525, 7
    %v5527 = vsub.s32 0, %v5526
    %v5528 = vrot.slane %v5520, %v5527
    %vm5534 = vcmask 1046528
    %v5535 = vrot.slane %v5520, 1
    %v5536 = vrot.slane %v5521, 1
    %v5537 = vsel %vm5534, %v5535, %v5536
    %v5538 = vrot.slane %v5522, 1
    %v5539 = vsel %vm5534, %v5536, %v5538
    %v5540 = vrot.slane %v5523, 1
    %v5541 = vsel %vm5534, %v5538, %v5540
    %v5542 = vrot.slane %v5524, 1
    %v5543 = vsel %vm5534, %v5540, %v5542
    %v5549 = vsel %vm40, %v5518, 0
    %v5552 = vsel %vm40, %v5519, 0
    %5554 = vmatprep.subr.mxu0 0.0
    %5555 = vmatpush1.msra.mxu0 %v5537
    %5556 = vmatprep.subr.mxu0 0.0
    %5557 = vmatpush1.msra.mxu0 %v5539
    %5558 = vmatprep.subr.mxu0 0.0
    %5559 = vmatpush1.msra.mxu0 %v5541
    %5560 = vmatprep.subr.mxu0 0.0
    %5561 = vmatpush1.msra.mxu0 %v5543
    %5562 = vmatprep.subr.mxu0 0.0
    %5563 = vmatpush1.msra.mxu0 0.0
    %5564 = vmatprep.subr.mxu0 0.0
    %5565 = vmatpush1.msra.mxu0 0.0
    %5566 = vmatprep.subr.mxu0 0.0
    %5567 = vmatpush1.msra.mxu0 0.0
    %5568 = vmatprep.subr.mxu0 0.0
    %5569 = vmatpush1.msra.mxu0 0.0
    %5570 = vmatprep.subr.mxu0 0.0
    %5571 = vmatpush1.msra.mxu0 0.0
    %5572 = vmatprep.subr.mxu0 0.0
    %5573 = vmatpush1.msra.mxu0 0.0
    %5574 = vmatprep.subr.mxu0 0.0
    %5575 = vmatpush1.msra.mxu0 0.0
    %5576 = vmatprep.subr.mxu0 0.0
    %5577 = vmatpush1.msra.mxu0 0.0
    %5578 = vmatprep.subr.mxu0 0.0
    %5579 = vmatpush1.msra.mxu0 0.0
    %5580 = vmatprep.subr.mxu0 0.0
    %5581 = vmatpush1.msra.mxu0 0.0
    %5582 = vmatprep.subr.mxu0 0.0
    %5583 = vmatpush1.msra.mxu0 0.0
    %5584 = vmatprep.subr.mxu0 0.0
    %5585 = vmatpush1.msra.mxu0 0.0
    %5586 = vmatprep.subr.mxu0 0.0
    %5587 = vmatpush1.msra.mxu0 0.0
    %5588 = vmatprep.subr.mxu0 0.0
    %5589 = vmatpush1.msra.mxu0 0.0
    %5590 = vmatprep.subr.mxu0 0.0
    %5591 = vmatpush1.msra.mxu0 0.0
    %5592 = vmatprep.subr.mxu0 0.0
    %5593 = vmatpush1.msra.mxu0 0.0
    %5594 = vmatprep.subr.mxu0 0.0
    %5595 = vmatpush1.msra.mxu0 0.0
    %5596 = vmatprep.subr.mxu0 0.0
    %5597 = vmatpush1.msra.mxu0 0.0
    %5598 = vmatprep.subr.mxu0 0.0
    %5599 = vmatpush1.msra.mxu0 0.0
    %5600 = vmatprep.subr.mxu0 0.0
    %5601 = vmatpush1.msra.mxu0 0.0
    %5602 = vmatprep.subr.mxu0 0.0
    %5603 = vmatpush1.msra.mxu0 0.0
    %5604 = vmatprep.subr.mxu0 0.0
    %5605 = vmatpush1.msra.mxu0 0.0
    %5606 = vmatprep.subr.mxu0 0.0
    %5607 = vmatpush1.msra.mxu0 0.0
    %5608 = vmatprep.subr.mxu0 0.0
    %5609 = vmatpush1.msra.mxu0 0.0
    %5610 = vmatprep.subr.mxu0 0.0
    %5611 = vmatpush1.msra.mxu0 0.0
    %5612 = vmatprep.subr.mxu0 0.0
    %5613 = vmatpush1.msra.mxu0 0.0
    %5614 = vmatprep.subr.mxu0 0.0
    %5615 = vmatpush1.msra.mxu0 0.0
    %5616 = vmatprep.subr.mxu0 0.0
    %5617 = vmatpush1.msra.mxu0 0.0
    %5618 = vmatprep.mubr.f32.mxu0 0.0
    %5619 = vmatmul.mubr.f32.gmra.mrb[0].mxu0 %v5549
    %v5620 = vpop.f32.mrb[0].mxu0
    %v5621 = vadd.f32 %v5528, %v5620
    %v5622 = vpop.f32.mrb[0].mxu0
    %5623 = vmatprep.mubr.f32.mxu0 0.0
    %5624 = vmatmul.mubr.f32.gmra.mrb[0].mxu0 %v5552
    %v5625 = vpop.f32.mrb[0].mxu0
    %v5626 = vadd.f32 %v5528, %v5625
    %v5627 = vpop.f32.mrb[0].mxu0
    %5628 = vdwg.mxu0
    %5629 = vst [vmem:[#allocation2] sm:$0xff] %v5621
    %5630 = vst [vmem:[#allocation2 + $0x8] sm:$0xff] %v5626
    // Predicated region
    $region34: #{bigram_forward.1} parent=1 // pred_check
      _
    $region35: #{bigram_forward.1} parent=1 // pred_check_branch
      %5632 = sbr.rel (0) target = $region37
    $region36: #{bigram_forward.1} parent=1 // pred_region
      %s5634 = ssub.s32 256, 256
      %5635 = vsyncadd [#allocation3], %s5634
      %s5636 = sshll.u32 [#allocation2], 4
      %s5637 = int_to_ptr.vmem [resolvable:$true] %s5636
      %5642 = dma.vmem_to_hbm [thread:$0]  %s5637, 256, %s8, [#allocation3], 128, 128, 8
    $region37: #{bigram_forward.1} parent=1 // pred_fallthru
      _
    // Predicated region
    $region38: #{bigram_forward.1} parent=1 // pred_check
      _
    $region39: #{bigram_forward.1} parent=1 // pred_check_branch
      %5644 = sbr.rel (0) target = $region41
    $region40: #{bigram_forward.1} parent=1 // pred_region
      %5645 = dma.done [#allocation3], 256
    $region41: #{bigram_forward.1} parent=1 // pred_fallthru
      _
    %5646 = vsyncpa [#allocation3], 1

</llo_original>
